<compile_context>
chip_gen: v7x
topology: tpu7x:2x2x1
jax: 0.10.0
libtpu: 0.0.40
codegen_flags: <defaults>
</compile_context>

<pallas_src>
import functools

import jax
import jax.numpy as jnp
from jax import lax
from jax.experimental import pallas as pl
from jax.experimental.pallas import tpu as pltpu


def _round_up(x, m):
    return (x + m - 1) // m * m


def _relu6(v):
    return jnp.minimum(jnp.maximum(v, 0.0), 6.0)


def residual_block_kernel(x_ref, w1s_ref, b1s_ref, w2_ref, b2_ref, w3_ref,
                          b3_ref, out_ref, pad_ref, *, M, S, Wp, H, W, Cmid,
                          base):
    pad_rows = pad_ref.shape[0]

    # Hygiene: zero the few head/tail scratch rows that are read by the 3x3
    # taps of (discarded) halo output rows but never written below.  Done
    # unconditionally every step (≈48 rows x 128 lanes bf16, trivially cheap),
    # so it stays correct if the grid axis is ever sharded across cores.
    pad_ref[0:base, :] = jnp.zeros((base, Cmid), pad_ref.dtype)
    pad_ref[base + M:pad_rows, :] = jnp.zeros((pad_rows - base - M, Cmid),
                                              pad_ref.dtype)

    x = x_ref[...]                                           # (M, Cin_p) bf16

    # --- fused conv1 (1x1) + shortcut (1x1), BN folded, ReLU6: one wide matmul ---
    y = _relu6(jnp.dot(x, w1s_ref[...], preferred_element_type=jnp.float32)
               + b1s_ref[...])                               # (M, Cmid+Cout) f32

    # Park the shortcut branch in the output block (bf16) immediately instead
    # of keeping an (M, Cout) f32 value live across the next two matmuls.
    out_ref[...] = y[:, Cmid:].astype(out_ref.dtype)

    # Interior (non-halo) predicate computed in-kernel (no mask operand/DMA).
    # f32 floor-divide with a +0.5 guard band is exact at these magnitudes and
    # avoids vector integer div/mod.
    q = lax.broadcasted_iota(jnp.int32, (M, 1), 0).astype(jnp.float32)
    img = jnp.floor((q + 0.5) / S)
    p = q - img * S                                          # flat pos in image
    r = jnp.floor((p + 0.5) / Wp)
    c = p - r * Wp
    interior = (r >= 1) & (r <= H) & (c >= 1) & (c <= W)

    # Stage the bottleneck branch at an 8-aligned base (unmasked stores).  The
    # interior mask zeroes the 1-pixel halo (conv1's bias + ReLU6 would make it
    # nonzero, breaking the 3x3 conv's zero padding).
    h1 = jnp.where(interior, y[:, :Cmid], 0.0)
    pad_ref[base:base + M, :] = h1.astype(pad_ref.dtype)

    # --- conv2: 3x3 conv (padding=1) as 9 accumulating K=Cmid matmuls ---
    # Every tap is a constant row shift in the padded-width layout; no im2col
    # materialization, the f32 accumulator carries the sum.
    delta = base - (Wp + 1)
    acc = None
    for kh in range(3):
        for kw in range(3):
            off = delta + kh * Wp + kw
            t = jnp.dot(pad_ref[off:off + M, :], w2_ref[kh * 3 + kw],
                        preferred_element_type=jnp.float32)
            acc = t if acc is None else acc + t
    h2 = _relu6(acc + b2_ref[...])                           # (M, Cmid) f32

    # --- conv3 (1x1) + residual add with the parked shortcut ---
    h3 = _relu6(jnp.dot(h2.astype(w3_ref.dtype), w3_ref[...],
                        preferred_element_type=jnp.float32) + b3_ref[...])
    out_ref[...] = (h3 + out_ref[...].astype(jnp.float32)).astype(out_ref.dtype)


def residual_block(x_nchw, params):
    w1, b1, w2, b2, w3, b3, ws, bs = params
    N, Cin, H, W = x_nchw.shape
    Cmid = w1.shape[1]
    Cout = w3.shape[1]

    # Pad channel dims to lane width (zero weights/bias => padded channels stay 0).
    Cin_p = _round_up(Cin, 128)
    Cmid_p = _round_up(Cmid, 128)
    Cout_p = _round_up(Cout, 128)

    Hp, Wp = H + 2, W + 2
    S = Hp * Wp

    # Fold whole images into the matmul M dimension.  Each grid step handles a
    # whole number of images, so the 3x3 tap shifts stay inside each image's
    # own zero halo.  At the test shape this is a single step (M = N*S rows).
    ROW_BUDGET = 4096
    ipt = N
    if N * S > ROW_BUDGET:
        for d in range(N - 1, 0, -1):
            if N % d == 0 and d * S <= ROW_BUDGET and (d * S) % 8 == 0:
                ipt = d
                break
    M_tile = ipt * S
    grid = (N // ipt,)

    base = _round_up(Wp + 1, 8)                    # 8-aligned staging write base
    pad_rows = _round_up(base + M_tile + Wp + 1, 8)

    # channels-last + 1-pixel zero spatial halo, bf16 operands for the MXU.
    x = jnp.transpose(x_nchw, (0, 2, 3, 1))
    x = jnp.pad(x, ((0, 0), (1, 1), (1, 1), (0, Cin_p - Cin)))
    x = x.reshape(N * S, Cin_p).astype(jnp.bfloat16)

    # fused conv1 + shortcut weights: (Cin_p, Cmid_p + Cout_p)
    w1p = jnp.pad(w1, ((0, Cin_p - Cin), (0, Cmid_p - Cmid)))
    wsp = jnp.pad(ws, ((0, Cin_p - Cin), (0, Cout_p - Cout)))
    w1s = jnp.concatenate([w1p, wsp], axis=1).astype(jnp.bfloat16)
    b1s = jnp.concatenate(
        [jnp.pad(b1, (0, Cmid_p - Cmid)), jnp.pad(bs, (0, Cout_p - Cout))]
    ).reshape(1, -1).astype(jnp.float32)

    # 3x3 conv weights as 9 per-tap (Cmid_p, Cmid_p) matrices (kh*3+kw major).
    w2p = jnp.pad(w2, ((0, 0), (0, 0), (0, Cmid_p - Cmid), (0, Cmid_p - Cmid)))
    w2f = w2p.reshape(9, Cmid_p, Cmid_p).astype(jnp.bfloat16)
    b2p = jnp.pad(b2, (0, Cmid_p - Cmid)).reshape(1, -1).astype(jnp.float32)

    w3p = jnp.pad(w3, ((0, Cmid_p - Cmid), (0, Cout_p - Cout))).astype(jnp.bfloat16)
    b3p = jnp.pad(b3, (0, Cout_p - Cout)).reshape(1, -1).astype(jnp.float32)

    kernel = functools.partial(residual_block_kernel, M=M_tile, S=S, Wp=Wp,
                               H=H, W=W, Cmid=Cmid_p, base=base)
    out_flat = pl.pallas_call(
        kernel,
        out_shape=jax.ShapeDtypeStruct((N * S, Cout_p), jnp.bfloat16),
        grid_spec=pltpu.PrefetchScalarGridSpec(
            num_scalar_prefetch=0,
            grid=grid,
            in_specs=[
                pl.BlockSpec((M_tile, Cin_p), lambda i: (i, 0)),
                pl.BlockSpec((Cin_p, Cmid_p + Cout_p), lambda i: (0, 0)),
                pl.BlockSpec((1, Cmid_p + Cout_p), lambda i: (0, 0)),
                pl.BlockSpec((9, Cmid_p, Cmid_p), lambda i: (0, 0, 0)),
                pl.BlockSpec((1, Cmid_p), lambda i: (0, 0)),
                pl.BlockSpec((Cmid_p, Cout_p), lambda i: (0, 0)),
                pl.BlockSpec((1, Cout_p), lambda i: (0, 0)),
            ],
            out_specs=pl.BlockSpec((M_tile, Cout_p), lambda i: (i, 0)),
            scratch_shapes=[pltpu.VMEM((pad_rows, Cmid_p), jnp.bfloat16)],
        ),
        compiler_params=pltpu.CompilerParams(
            dimension_semantics=("parallel",),
            vmem_limit_bytes=32 * 1024 * 1024,
        ),
    )(x, w1s, b1s, w2f, b2p, w3p, b3p)

    out = out_flat.reshape(N, Hp, Wp, Cout_p)[:, 1:H + 1, 1:W + 1, :Cout]
    return jnp.transpose(out, (0, 3, 1, 2)).astype(jnp.float32)


# ---------------- parameter construction (deterministic, BN folded) ----------------

def _folded_conv_params(key, cin, cout, ksize, eps=1e-5):
    kw_, kb_, kg_, kbt_, km_, kv_ = jax.random.split(key, 6)
    fan_in = cin * ksize * ksize
    bound = 1.0 / (fan_in ** 0.5)
    w = jax.random.uniform(kw_, (cout, cin, ksize, ksize), jnp.float32, -bound, bound)
    b = jax.random.uniform(kb_, (cout,), jnp.float32, -bound, bound)
    gamma = jax.random.uniform(kg_, (cout,), jnp.float32, 0.5, 1.5)
    beta = jax.random.uniform(kbt_, (cout,), jnp.float32, -0.2, 0.2)
    mean = jax.random.uniform(km_, (cout,), jnp.float32, -0.2, 0.2)
    var = jax.random.uniform(kv_, (cout,), jnp.float32, 0.5, 1.5)
    scale = gamma / jnp.sqrt(var + eps)
    w_f = w * scale[:, None, None, None]          # (cout, cin, k, k)
    b_f = (b - mean) * scale + beta               # (cout,)
    return w_f, b_f


def make_params(key, cin, cout):
    mid = cout // 2
    k1, k2, k3, ks = jax.random.split(key, 4)
    w1f, b1f = _folded_conv_params(k1, cin, mid, 1)
    w2f, b2f = _folded_conv_params(k2, mid, mid, 3)
    w3f, b3f = _folded_conv_params(k3, mid, cout, 1)
    wsf, bsf = _folded_conv_params(ks, cin, cout, 1)
    w1 = jnp.transpose(w1f[:, :, 0, 0])                    # (cin, mid)
    w2 = jnp.transpose(w2f, (2, 3, 1, 0))                  # (kh, kw, cin, cout) HWIO
    w3 = jnp.transpose(w3f[:, :, 0, 0])                    # (mid, cout)
    ws = jnp.transpose(wsf[:, :, 0, 0])                    # (cin, cout)
    return (w1, b1f, w2, b2f, w3, b3f, ws, bsf)


# ---------------- pure-JAX reference (mirrors the kernel's bf16 operand casts) -------

def ref_forward_nhwc(x_nhwc, params):
    w1, b1, w2, b2, w3, b3, ws, bs = params
    cin, mid = w1.shape
    cout = w3.shape[1]
    bf = jnp.bfloat16

    def conv(x, w_hwio, b, pad):
        y = lax.conv_general_dilated(
            x.astype(bf), w_hwio.astype(bf), (1, 1), pad,
            dimension_numbers=('NHWC', 'HWIO', 'NHWC'),
            preferred_element_type=jnp.float32)
        return _relu6(y + b.reshape(1, 1, 1, -1))

    h = conv(x_nhwc, w1.reshape(1, 1, cin, mid), b1, 'VALID')
    h = conv(h, w2, b2, 'SAME')
    h = conv(h, w3.reshape(1, 1, mid, cout), b3, 'VALID')
    s = conv(x_nhwc, ws.reshape(1, 1, cin, cout), bs, 'VALID')
    return h + s


if __name__ == "__main__":
    key = jax.random.PRNGKey(0)
    kx, kp = jax.random.split(key)

    N, Cin, H, W = 2, 4, 16, 16
    Cout = 8

    x = jax.random.normal(kx, (N, Cin, H, W), jnp.float32)
    params = make_params(kp, Cin, Cout)

    out = residual_block(x, params)
    out = jax.block_until_ready(out)
    assert out.shape == (N, Cout, H, W)

    ref = jnp.transpose(
        ref_forward_nhwc(jnp.transpose(x, (0, 2, 3, 1)), params), (0, 3, 1, 2))
    max_err = float(jnp.max(jnp.abs(out - ref)))
    # bf16 matmul operands are mirrored in the reference; the extra slack covers
    # the bf16 output/shortcut storage rounding.
    assert jnp.allclose(out, ref, atol=2e-2, rtol=2e-2), max_err

    print("KERNEL_OK")
</pallas_src>

<mosaic_0001>
module attributes {stable_mosaic.version = 11 : i64} {
  func.func @residual_block_kernel(%arg0: i32, %arg1: memref<648x128xbf16, #tpu.memory_space<vmem>>, %arg2: memref<128x256xbf16, #tpu.memory_space<vmem>>, %arg3: memref<1x256xf32, #tpu.memory_space<vmem>>, %arg4: memref<9x128x128xbf16, #tpu.memory_space<vmem>>, %arg5: memref<1x128xf32, #tpu.memory_space<vmem>>, %arg6: memref<128x128xbf16, #tpu.memory_space<vmem>>, %arg7: memref<1x128xf32, #tpu.memory_space<vmem>>, %arg8: memref<648x128xbf16, #tpu.memory_space<vmem>>, %arg9: memref<696x128xbf16, #tpu.memory_space<vmem>>) attributes {dimension_semantics = [#tpu.dimension_semantics<parallel>], iteration_bounds = array<i64: 1>, scalar_prefetch = 0 : i64, scratch_operands = 1 : i64, tpu.core_type = #tpu.core_type<tc>, window_params = [{transform_indices = @transform_0, window_bounds = array<i64: 648, 128>}, {pipeline_mode = #tpu.pipeline_mode<synchronous>, transform_indices = @transform_1, window_bounds = array<i64: 128, 256>}, {pipeline_mode = #tpu.pipeline_mode<synchronous>, transform_indices = @transform_2, window_bounds = array<i64: 1, 256>}, {pipeline_mode = #tpu.pipeline_mode<synchronous>, transform_indices = @transform_3, window_bounds = array<i64: 9, 128, 128>}, {pipeline_mode = #tpu.pipeline_mode<synchronous>, transform_indices = @transform_4, window_bounds = array<i64: 1, 128>}, {pipeline_mode = #tpu.pipeline_mode<synchronous>, transform_indices = @transform_5, window_bounds = array<i64: 128, 128>}, {pipeline_mode = #tpu.pipeline_mode<synchronous>, transform_indices = @transform_6, window_bounds = array<i64: 1, 128>}, {transform_indices = @transform_7, window_bounds = array<i64: 648, 128>}]} {
    %cst = arith.constant 0.000000e+00 : bf16
    %0 = vector.broadcast %cst : bf16 to vector<24x128xbf16>
    %c0 = arith.constant 0 : index
    %c0_0 = arith.constant 0 : index
    %1 = vector.load %arg9[%c0, %c0_0] : memref<696x128xbf16, #tpu.memory_space<vmem>>, vector<24x128xbf16>
    tpu.vector_store %arg9[%c0, %c0_0], %0 {strides = array<i32>} : memref<696x128xbf16, #tpu.memory_space<vmem>>, vector<24x128xbf16>,
    %cst_1 = arith.constant 0.000000e+00 : bf16
    %2 = vector.broadcast %cst_1 : bf16 to vector<24x128xbf16>
    %c672 = arith.constant 672 : index
    %c0_2 = arith.constant 0 : index
    %3 = vector.load %arg9[%c672, %c0_2] : memref<696x128xbf16, #tpu.memory_space<vmem>>, vector<24x128xbf16>
    tpu.vector_store %arg9[%c672, %c0_2], %2 {strides = array<i32>} : memref<696x128xbf16, #tpu.memory_space<vmem>>, vector<24x128xbf16>,
    %c0_3 = arith.constant 0 : index
    %c0_4 = arith.constant 0 : index
    %4 = vector.load %arg1[%c0_3, %c0_4] : memref<648x128xbf16, #tpu.memory_space<vmem>>, vector<648x128xbf16>
    %c0_5 = arith.constant 0 : index
    %c0_6 = arith.constant 0 : index
    %5 = vector.load %arg2[%c0_5, %c0_6] : memref<128x256xbf16, #tpu.memory_space<vmem>>, vector<128x256xbf16>
    %cst_7 = arith.constant dense<0.000000e+00> : vector<648x256xf32>
    %6 = tpu.matmul %4, %5, %cst_7 {dimension_numbers = #tpu.dot_dimension_numbers<[1], [0], [0], [1], [0, 0, 1, 1], [], []>} : vector<648x128xbf16>, vector<128x256xbf16>, vector<648x256xf32> -> vector<648x256xf32>
    %c0_8 = arith.constant 0 : index
    %c0_9 = arith.constant 0 : index
    %7 = vector.load %arg3[%c0_8, %c0_9] : memref<1x256xf32, #tpu.memory_space<vmem>>, vector<1x256xf32>
    %8 = vector.broadcast %7 : vector<1x256xf32> to vector<648x256xf32>
    %9 = arith.addf %6, %8 : vector<648x256xf32>
    %cst_10 = arith.constant 0.000000e+00 : f32
    %10 = vector.broadcast %cst_10 : f32 to vector<648x256xf32>
    %11 = arith.maximumf %9, %10 : vector<648x256xf32>
    %cst_11 = arith.constant 6.000000e+00 : f32
    %12 = vector.broadcast %cst_11 : f32 to vector<648x256xf32>
    %13 = arith.minimumf %11, %12 : vector<648x256xf32>
    %14 = vector.extract_strided_slice %13 {offsets = [0, 128], sizes = [648, 128], strides = [1, 1]} : vector<648x256xf32> to vector<648x128xf32>
    %15 = arith.truncf %14 : vector<648x128xf32> to vector<648x128xbf16>
    %c0_12 = arith.constant 0 : index
    %c0_13 = arith.constant 0 : index
    %16 = vector.load %arg8[%c0_12, %c0_13] : memref<648x128xbf16, #tpu.memory_space<vmem>>, vector<648x128xbf16>
    tpu.vector_store %arg8[%c0_12, %c0_13], %15 {strides = array<i32>} : memref<648x128xbf16, #tpu.memory_space<vmem>>, vector<648x128xbf16>,
    %17 = tpu.iota {dimensions = array<i32: 0>} : vector<648x1xi32>
    %18 = arith.sitofp %17 : vector<648x1xi32> to vector<648x1xf32>
    %cst_14 = arith.constant 5.000000e-01 : f32
    %19 = vector.broadcast %cst_14 : f32 to vector<648x1xf32>
    %20 = arith.addf %18, %19 : vector<648x1xf32>
    %cst_15 = arith.constant 3.240000e+02 : f32
    %21 = vector.broadcast %cst_15 : f32 to vector<648x1xf32>
    %22 = arith.divf %20, %21 : vector<648x1xf32>
    %23 = math.floor %22 : vector<648x1xf32>
    %cst_16 = arith.constant 3.240000e+02 : f32
    %24 = vector.broadcast %cst_16 : f32 to vector<648x1xf32>
    %25 = arith.mulf %23, %24 : vector<648x1xf32>
    %26 = arith.subf %18, %25 : vector<648x1xf32>
    %cst_17 = arith.constant 5.000000e-01 : f32
    %27 = vector.broadcast %cst_17 : f32 to vector<648x1xf32>
    %28 = arith.addf %26, %27 : vector<648x1xf32>
    %cst_18 = arith.constant 1.800000e+01 : f32
    %29 = vector.broadcast %cst_18 : f32 to vector<648x1xf32>
    %30 = arith.divf %28, %29 : vector<648x1xf32>
    %31 = math.floor %30 : vector<648x1xf32>
    %cst_19 = arith.constant 1.800000e+01 : f32
    %32 = vector.broadcast %cst_19 : f32 to vector<648x1xf32>
    %33 = arith.mulf %31, %32 : vector<648x1xf32>
    %34 = arith.subf %26, %33 : vector<648x1xf32>
    %cst_20 = arith.constant 1.000000e+00 : f32
    %35 = vector.broadcast %cst_20 : f32 to vector<648x1xf32>
    %36 = arith.cmpf oge, %31, %35 : vector<648x1xf32>
    %cst_21 = arith.constant 1.600000e+01 : f32
    %37 = vector.broadcast %cst_21 : f32 to vector<648x1xf32>
    %38 = arith.cmpf ole, %31, %37 : vector<648x1xf32>
    %39 = arith.andi %36, %38 : vector<648x1xi1>
    %cst_22 = arith.constant 1.000000e+00 : f32
    %40 = vector.broadcast %cst_22 : f32 to vector<648x1xf32>
    %41 = arith.cmpf oge, %34, %40 : vector<648x1xf32>
    %42 = arith.andi %39, %41 : vector<648x1xi1>
    %cst_23 = arith.constant 1.600000e+01 : f32
    %43 = vector.broadcast %cst_23 : f32 to vector<648x1xf32>
    %44 = arith.cmpf ole, %34, %43 : vector<648x1xf32>
    %45 = arith.andi %42, %44 : vector<648x1xi1>
    %46 = vector.extract_strided_slice %13 {offsets = [0, 0], sizes = [648, 128], strides = [1, 1]} : vector<648x256xf32> to vector<648x128xf32>
    %cst_24 = arith.constant 0.000000e+00 : f32
    %47 = vector.shape_cast %45 : vector<648x1xi1> to vector<648x1xi1>
    %48 = vector.broadcast %47 : vector<648x1xi1> to vector<648x128xi1>
    %49 = vector.broadcast %cst_24 : f32 to vector<648x128xf32>
    %50 = arith.select %48, %46, %49 : vector<648x128xi1>, vector<648x128xf32>
    %51 = arith.truncf %50 : vector<648x128xf32> to vector<648x128xbf16>
    %c24 = arith.constant 24 : index
    %c0_25 = arith.constant 0 : index
    %52 = vector.load %arg9[%c24, %c0_25] : memref<696x128xbf16, #tpu.memory_space<vmem>>, vector<648x128xbf16>
    tpu.vector_store %arg9[%c24, %c0_25], %51 {strides = array<i32>} : memref<696x128xbf16, #tpu.memory_space<vmem>>, vector<648x128xbf16>,
    %c5 = arith.constant 5 : index
    %c0_26 = arith.constant 0 : index
    %53 = vector.load %arg9[%c5, %c0_26] : memref<696x128xbf16, #tpu.memory_space<vmem>>, vector<648x128xbf16>
    %c0_27 = arith.constant 0 : index
    %c0_28 = arith.constant 0 : index
    %c0_29 = arith.constant 0 : index
    %54 = vector.load %arg4[%c0_27, %c0_28, %c0_29] : memref<9x128x128xbf16, #tpu.memory_space<vmem>>, vector<1x128x128xbf16>
    %55 = vector.shape_cast %54 : vector<1x128x128xbf16> to vector<128x128xbf16>
    %cst_30 = arith.constant dense<0.000000e+00> : vector<648x128xf32>
    %56 = tpu.matmul %53, %55, %cst_30 {dimension_numbers = #tpu.dot_dimension_numbers<[1], [0], [0], [1], [0, 0, 1, 1], [], []>} : vector<648x128xbf16>, vector<128x128xbf16>, vector<648x128xf32> -> vector<648x128xf32>
    %c6 = arith.constant 6 : index
    %c0_31 = arith.constant 0 : index
    %57 = vector.load %arg9[%c6, %c0_31] : memref<696x128xbf16, #tpu.memory_space<vmem>>, vector<648x128xbf16>
    %c1 = arith.constant 1 : index
    %c0_32 = arith.constant 0 : index
    %c0_33 = arith.constant 0 : index
    %58 = vector.load %arg4[%c1, %c0_32, %c0_33] : memref<9x128x128xbf16, #tpu.memory_space<vmem>>, vector<1x128x128xbf16>
    %59 = vector.shape_cast %58 : vector<1x128x128xbf16> to vector<128x128xbf16>
    %cst_34 = arith.constant dense<0.000000e+00> : vector<648x128xf32>
    %60 = tpu.matmul %57, %59, %cst_34 {dimension_numbers = #tpu.dot_dimension_numbers<[1], [0], [0], [1], [0, 0, 1, 1], [], []>} : vector<648x128xbf16>, vector<128x128xbf16>, vector<648x128xf32> -> vector<648x128xf32>
    %61 = arith.addf %56, %60 : vector<648x128xf32>
    %c7 = arith.constant 7 : index
    %c0_35 = arith.constant 0 : index
    %62 = vector.load %arg9[%c7, %c0_35] : memref<696x128xbf16, #tpu.memory_space<vmem>>, vector<648x128xbf16>
    %c2 = arith.constant 2 : index
    %c0_36 = arith.constant 0 : index
    %c0_37 = arith.constant 0 : index
    %63 = vector.load %arg4[%c2, %c0_36, %c0_37] : memref<9x128x128xbf16, #tpu.memory_space<vmem>>, vector<1x128x128xbf16>
    %64 = vector.shape_cast %63 : vector<1x128x128xbf16> to vector<128x128xbf16>
    %cst_38 = arith.constant dense<0.000000e+00> : vector<648x128xf32>
    %65 = tpu.matmul %62, %64, %cst_38 {dimension_numbers = #tpu.dot_dimension_numbers<[1], [0], [0], [1], [0, 0, 1, 1], [], []>} : vector<648x128xbf16>, vector<128x128xbf16>, vector<648x128xf32> -> vector<648x128xf32>
    %66 = arith.addf %61, %65 : vector<648x128xf32>
    %c23 = arith.constant 23 : index
    %c0_39 = arith.constant 0 : index
    %67 = vector.load %arg9[%c23, %c0_39] : memref<696x128xbf16, #tpu.memory_space<vmem>>, vector<648x128xbf16>
    %c3 = arith.constant 3 : index
    %c0_40 = arith.constant 0 : index
    %c0_41 = arith.constant 0 : index
    %68 = vector.load %arg4[%c3, %c0_40, %c0_41] : memref<9x128x128xbf16, #tpu.memory_space<vmem>>, vector<1x128x128xbf16>
    %69 = vector.shape_cast %68 : vector<1x128x128xbf16> to vector<128x128xbf16>
    %cst_42 = arith.constant dense<0.000000e+00> : vector<648x128xf32>
    %70 = tpu.matmul %67, %69, %cst_42 {dimension_numbers = #tpu.dot_dimension_numbers<[1], [0], [0], [1], [0, 0, 1, 1], [], []>} : vector<648x128xbf16>, vector<128x128xbf16>, vector<648x128xf32> -> vector<648x128xf32>
    %71 = arith.addf %66, %70 : vector<648x128xf32>
    %c24_43 = arith.constant 24 : index
    %c0_44 = arith.constant 0 : index
    %72 = vector.load %arg9[%c24_43, %c0_44] : memref<696x128xbf16, #tpu.memory_space<vmem>>, vector<648x128xbf16>
    %c4 = arith.constant 4 : index
    %c0_45 = arith.constant 0 : index
    %c0_46 = arith.constant 0 : index
    %73 = vector.load %arg4[%c4, %c0_45, %c0_46] : memref<9x128x128xbf16, #tpu.memory_space<vmem>>, vector<1x128x128xbf16>
    %74 = vector.shape_cast %73 : vector<1x128x128xbf16> to vector<128x128xbf16>
    %cst_47 = arith.constant dense<0.000000e+00> : vector<648x128xf32>
    %75 = tpu.matmul %72, %74, %cst_47 {dimension_numbers = #tpu.dot_dimension_numbers<[1], [0], [0], [1], [0, 0, 1, 1], [], []>} : vector<648x128xbf16>, vector<128x128xbf16>, vector<648x128xf32> -> vector<648x128xf32>
    %76 = arith.addf %71, %75 : vector<648x128xf32>
    %c25 = arith.constant 25 : index
    %c0_48 = arith.constant 0 : index
    %77 = vector.load %arg9[%c25, %c0_48] : memref<696x128xbf16, #tpu.memory_space<vmem>>, vector<648x128xbf16>
    %c5_49 = arith.constant 5 : index
    %c0_50 = arith.constant 0 : index
    %c0_51 = arith.constant 0 : index
    %78 = vector.load %arg4[%c5_49, %c0_50, %c0_51] : memref<9x128x128xbf16, #tpu.memory_space<vmem>>, vector<1x128x128xbf16>
    %79 = vector.shape_cast %78 : vector<1x128x128xbf16> to vector<128x128xbf16>
    %cst_52 = arith.constant dense<0.000000e+00> : vector<648x128xf32>
    %80 = tpu.matmul %77, %79, %cst_52 {dimension_numbers = #tpu.dot_dimension_numbers<[1], [0], [0], [1], [0, 0, 1, 1], [], []>} : vector<648x128xbf16>, vector<128x128xbf16>, vector<648x128xf32> -> vector<648x128xf32>
    %81 = arith.addf %76, %80 : vector<648x128xf32>
    %c41 = arith.constant 41 : index
    %c0_53 = arith.constant 0 : index
    %82 = vector.load %arg9[%c41, %c0_53] : memref<696x128xbf16, #tpu.memory_space<vmem>>, vector<648x128xbf16>
    %c6_54 = arith.constant 6 : index
    %c0_55 = arith.constant 0 : index
    %c0_56 = arith.constant 0 : index
    %83 = vector.load %arg4[%c6_54, %c0_55, %c0_56] : memref<9x128x128xbf16, #tpu.memory_space<vmem>>, vector<1x128x128xbf16>
    %84 = vector.shape_cast %83 : vector<1x128x128xbf16> to vector<128x128xbf16>
    %cst_57 = arith.constant dense<0.000000e+00> : vector<648x128xf32>
    %85 = tpu.matmul %82, %84, %cst_57 {dimension_numbers = #tpu.dot_dimension_numbers<[1], [0], [0], [1], [0, 0, 1, 1], [], []>} : vector<648x128xbf16>, vector<128x128xbf16>, vector<648x128xf32> -> vector<648x128xf32>
    %86 = arith.addf %81, %85 : vector<648x128xf32>
    %c42 = arith.constant 42 : index
    %c0_58 = arith.constant 0 : index
    %87 = vector.load %arg9[%c42, %c0_58] : memref<696x128xbf16, #tpu.memory_space<vmem>>, vector<648x128xbf16>
    %c7_59 = arith.constant 7 : index
    %c0_60 = arith.constant 0 : index
    %c0_61 = arith.constant 0 : index
    %88 = vector.load %arg4[%c7_59, %c0_60, %c0_61] : memref<9x128x128xbf16, #tpu.memory_space<vmem>>, vector<1x128x128xbf16>
    %89 = vector.shape_cast %88 : vector<1x128x128xbf16> to vector<128x128xbf16>
    %cst_62 = arith.constant dense<0.000000e+00> : vector<648x128xf32>
    %90 = tpu.matmul %87, %89, %cst_62 {dimension_numbers = #tpu.dot_dimension_numbers<[1], [0], [0], [1], [0, 0, 1, 1], [], []>} : vector<648x128xbf16>, vector<128x128xbf16>, vector<648x128xf32> -> vector<648x128xf32>
    %91 = arith.addf %86, %90 : vector<648x128xf32>
    %c43 = arith.constant 43 : index
    %c0_63 = arith.constant 0 : index
    %92 = vector.load %arg9[%c43, %c0_63] : memref<696x128xbf16, #tpu.memory_space<vmem>>, vector<648x128xbf16>
    %c8 = arith.constant 8 : index
    %c0_64 = arith.constant 0 : index
    %c0_65 = arith.constant 0 : index
    %93 = vector.load %arg4[%c8, %c0_64, %c0_65] : memref<9x128x128xbf16, #tpu.memory_space<vmem>>, vector<1x128x128xbf16>
    %94 = vector.shape_cast %93 : vector<1x128x128xbf16> to vector<128x128xbf16>
    %cst_66 = arith.constant dense<0.000000e+00> : vector<648x128xf32>
    %95 = tpu.matmul %92, %94, %cst_66 {dimension_numbers = #tpu.dot_dimension_numbers<[1], [0], [0], [1], [0, 0, 1, 1], [], []>} : vector<648x128xbf16>, vector<128x128xbf16>, vector<648x128xf32> -> vector<648x128xf32>
    %96 = arith.addf %91, %95 : vector<648x128xf32>
    %c0_67 = arith.constant 0 : index
    %c0_68 = arith.constant 0 : index
    %97 = vector.load %arg5[%c0_67, %c0_68] : memref<1x128xf32, #tpu.memory_space<vmem>>, vector<1x128xf32>
    %98 = vector.broadcast %97 : vector<1x128xf32> to vector<648x128xf32>
    %99 = arith.addf %96, %98 : vector<648x128xf32>
    %cst_69 = arith.constant 0.000000e+00 : f32
    %100 = vector.broadcast %cst_69 : f32 to vector<648x128xf32>
    %101 = arith.maximumf %99, %100 : vector<648x128xf32>
    %cst_70 = arith.constant 6.000000e+00 : f32
    %102 = vector.broadcast %cst_70 : f32 to vector<648x128xf32>
    %103 = arith.minimumf %101, %102 : vector<648x128xf32>
    %104 = arith.truncf %103 : vector<648x128xf32> to vector<648x128xbf16>
    %c0_71 = arith.constant 0 : index
    %c0_72 = arith.constant 0 : index
    %105 = vector.load %arg6[%c0_71, %c0_72] : memref<128x128xbf16, #tpu.memory_space<vmem>>, vector<128x128xbf16>
    %cst_73 = arith.constant dense<0.000000e+00> : vector<648x128xf32>
    %106 = tpu.matmul %104, %105, %cst_73 {dimension_numbers = #tpu.dot_dimension_numbers<[1], [0], [0], [1], [0, 0, 1, 1], [], []>} : vector<648x128xbf16>, vector<128x128xbf16>, vector<648x128xf32> -> vector<648x128xf32>
    %c0_74 = arith.constant 0 : index
    %c0_75 = arith.constant 0 : index
    %107 = vector.load %arg7[%c0_74, %c0_75] : memref<1x128xf32, #tpu.memory_space<vmem>>, vector<1x128xf32>
    %108 = vector.broadcast %107 : vector<1x128xf32> to vector<648x128xf32>
    %109 = arith.addf %106, %108 : vector<648x128xf32>
    %cst_76 = arith.constant 0.000000e+00 : f32
    %110 = vector.broadcast %cst_76 : f32 to vector<648x128xf32>
    %111 = arith.maximumf %109, %110 : vector<648x128xf32>
    %cst_77 = arith.constant 6.000000e+00 : f32
    %112 = vector.broadcast %cst_77 : f32 to vector<648x128xf32>
    %113 = arith.minimumf %111, %112 : vector<648x128xf32>
    %c0_78 = arith.constant 0 : index
    %c0_79 = arith.constant 0 : index
    %114 = vector.load %arg8[%c0_78, %c0_79] : memref<648x128xbf16, #tpu.memory_space<vmem>>, vector<648x128xbf16>
    %115 = arith.extf %114 : vector<648x128xbf16> to vector<648x128xf32>
    %116 = arith.addf %113, %115 : vector<648x128xf32>
    %117 = arith.truncf %116 : vector<648x128xf32> to vector<648x128xbf16>
    %c0_80 = arith.constant 0 : index
    %c0_81 = arith.constant 0 : index
    %118 = vector.load %arg8[%c0_80, %c0_81] : memref<648x128xbf16, #tpu.memory_space<vmem>>, vector<648x128xbf16>
    tpu.vector_store %arg8[%c0_80, %c0_81], %117 {strides = array<i32>} : memref<648x128xbf16, #tpu.memory_space<vmem>>, vector<648x128xbf16>,
    return
  }
  func.func @transform_0(%arg0: i32) -> (i32, i32) {
    %c0_i32 = arith.constant 0 : i32
    %c0_i32_0 = arith.constant 0 : i32
    return %arg0, %c0_i32 : i32, i32
  }
  func.func @transform_1(%arg0: i32) -> (i32, i32) {
    %c0_i32 = arith.constant 0 : i32
    %c0_i32_0 = arith.constant 0 : i32
    %c0_i32_1 = arith.constant 0 : i32
    return %c0_i32, %c0_i32_0 : i32, i32
  }
  func.func @transform_2(%arg0: i32) -> (i32, i32) {
    %c0_i32 = arith.constant 0 : i32
    %c0_i32_0 = arith.constant 0 : i32
    %c0_i32_1 = arith.constant 0 : i32
    return %c0_i32, %c0_i32_0 : i32, i32
  }
  func.func @transform_3(%arg0: i32) -> (i32, i32, i32) {
    %c0_i32 = arith.constant 0 : i32
    %c0_i32_0 = arith.constant 0 : i32
    %c0_i32_1 = arith.constant 0 : i32
    %c0_i32_2 = arith.constant 0 : i32
    return %c0_i32, %c0_i32_0, %c0_i32_1 : i32, i32, i32
  }
  func.func @transform_4(%arg0: i32) -> (i32, i32) {
    %c0_i32 = arith.constant 0 : i32
    %c0_i32_0 = arith.constant 0 : i32
    %c0_i32_1 = arith.constant 0 : i32
    return %c0_i32, %c0_i32_0 : i32, i32
  }
  func.func @transform_5(%arg0: i32) -> (i32, i32) {
    %c0_i32 = arith.constant 0 : i32
    %c0_i32_0 = arith.constant 0 : i32
    %c0_i32_1 = arith.constant 0 : i32
    return %c0_i32, %c0_i32_0 : i32, i32
  }
  func.func @transform_6(%arg0: i32) -> (i32, i32) {
    %c0_i32 = arith.constant 0 : i32
    %c0_i32_0 = arith.constant 0 : i32
    %c0_i32_1 = arith.constant 0 : i32
    return %c0_i32, %c0_i32_0 : i32, i32
  }
  func.func @transform_7(%arg0: i32) -> (i32, i32) {
    %c0_i32 = arith.constant 0 : i32
    %c0_i32_0 = arith.constant 0 : i32
    return %arg0, %c0_i32 : i32, i32
  }
}

</mosaic_0001>

<llo_original>
// kernel: tpu_custom_call.1
$region0: #{tpu_custom_call.1}
  #allocation0 [shape = 'u32[]', space=smem, size = 0x4, offset = 0x4, fixed_abs, tag = 'smem constant byte address 0x4 - core index']
  #allocation1 [shape = 'u32[144,128]{1,0:T(1,128)}', space=vmem, size = 0x12000, scoped, tag = 'internal scratch']
  #allocation2 [shape = 'bf16[696,128]{1,0:T(8,128)(2,1)}', space=vmem, size = 0x2b800, scoped, tag = 'scratch operand']
  %s0 = inlined_call_operand.hbm [shape: bf16[648,128], index: 0, kind: input, shape index: {}]
  %s1 = inlined_call_operand.hbm [shape: bf16[128,256], index: 1, kind: input, shape index: {}]
  %s2 = inlined_call_operand.vmem [shape: f32[1,256], index: 2, kind: input, shape index: {}]
  %s3 = inlined_call_operand.hbm [shape: bf16[9,128,128], index: 3, kind: input, shape index: {}]
  %s4 = inlined_call_operand.vmem [shape: f32[1,128], index: 4, kind: input, shape index: {}]
  %s5 = inlined_call_operand.hbm [shape: bf16[128,128], index: 5, kind: input, shape index: {}]
  %s6 = inlined_call_operand.vmem [shape: f32[1,128], index: 6, kind: input, shape index: {}]
  %s7 = inlined_call_operand.hbm [shape: bf16[648,128], index: 7, kind: output, shape index: {}]
  %s8 = sld [smem:[#allocation0]]
  $region54: #{tpu_custom_call.1} parent=0
    _
  %s10 = ssub.s32 1, %s8
  %s11 = scalar_select 0, %s10, %s8
  $region1: #{tpu_custom_call.1} parent=0
    #allocation3 [shape = 'u8[165888]{0}', space=vmem, size = 0x28800, scoped, tag = 'input window, operand 0, single buffered']
    #allocation4 [shape = 's32[1]{0}', space=sflag, size = 0x4, scoped, tag = 'scoped memory for tpu_custom_call.1']
    #allocation5 [shape = 's32[1]{0}', space=sflag, size = 0x4, scoped, tag = 'scoped memory for tpu_custom_call.1']
    #allocation6 [shape = 'u8[65536]{0}', space=vmem, size = 0x10000, scoped, tag = 'input window, operand 1, single buffered']
    #allocation7 [shape = 's32[1]{0}', space=sflag, size = 0x4, scoped, tag = 'scoped memory for tpu_custom_call.1']
    #allocation8 [shape = 'u8[294912]{0}', space=vmem, size = 0x48000, scoped, tag = 'input window, operand 3, single buffered']
    #allocation9 [shape = 'u8[32768]{0}', space=vmem, size = 0x8000, scoped, tag = 'input window, operand 5, single buffered']
    #allocation10 [shape = 's32[1]{0}', space=sflag, size = 0x4, scoped, tag = 'scoped memory for tpu_custom_call.1']
    #allocation11 [shape = 'u8[165888]{0}', space=vmem, size = 0x28800, scoped, tag = 'output window, operand 0, single buffered']
    %12 = vsyncpa [#allocation4], 0
    %13 = vsyncpa [#allocation7], 0
    %14 = vsyncpa [#allocation10], 0
    %15 = vsyncpa [#allocation5], 0
    // Predicated region
    $region2: #{tpu_custom_call.1} parent=1 // pred_check
      _
    $region3: #{tpu_custom_call.1} parent=1 // pred_check_branch
      %17 = sbr.rel (0) target = $region5
    $region4: #{tpu_custom_call.1} parent=1 // pred_region
      %s19 = ssub.s32 5184, 5184
      %20 = vsyncadd [#allocation4], %s19
      %s21 = sshll.u32 [#allocation3], 4
      %s22 = int_to_ptr.vmem [resolvable:$true] %s21
      %27 = dma.hbm_to_vmem [thread:$0]  %s0, 5184, %s22, [#allocation4], 64, 64, 4
    $region5: #{tpu_custom_call.1} parent=1 // pred_fallthru
      _
    // Predicated region
    $region6: #{tpu_custom_call.1} parent=1 // pred_check
      _
    $region7: #{tpu_custom_call.1} parent=1 // pred_check_branch
      %29 = sbr.rel (0) target = $region9
    $region8: #{tpu_custom_call.1} parent=1 // pred_region
      %s31 = ssub.s32 2048, 2048
      %32 = vsyncadd [#allocation7], %s31
      %s33 = sshll.u32 [#allocation6], 4
      %s34 = int_to_ptr.vmem [resolvable:$true] %s33
      %39 = dma.hbm_to_vmem [thread:$0]  %s1, 2048, %s34, [#allocation7], 128, 128, 8
    $region9: #{tpu_custom_call.1} parent=1 // pred_fallthru
      _
    // Predicated region
    $region10: #{tpu_custom_call.1} parent=1 // pred_check
      _
    $region11: #{tpu_custom_call.1} parent=1 // pred_check_branch
      %41 = sbr.rel (0) target = $region13
    $region12: #{tpu_custom_call.1} parent=1 // pred_region
      _
    $region13: #{tpu_custom_call.1} parent=1 // pred_fallthru
      _
    // Predicated region
    $region14: #{tpu_custom_call.1} parent=1 // pred_check
      _
    $region15: #{tpu_custom_call.1} parent=1 // pred_check_branch
      %43 = sbr.rel (0) target = $region17
    $region16: #{tpu_custom_call.1} parent=1 // pred_region
      %s45 = ssub.s32 9216, 9216
      %46 = vsyncadd [#allocation7], %s45
      %s47 = sshll.u32 [#allocation8], 4
      %s48 = int_to_ptr.vmem [resolvable:$true] %s47
      %53 = dma.hbm_to_vmem [thread:$0]  %s3, 9216, %s48, [#allocation7], 64, 64, 4
    $region17: #{tpu_custom_call.1} parent=1 // pred_fallthru
      _
    // Predicated region
    $region18: #{tpu_custom_call.1} parent=1 // pred_check
      _
    $region19: #{tpu_custom_call.1} parent=1 // pred_check_branch
      %55 = sbr.rel (0) target = $region21
    $region20: #{tpu_custom_call.1} parent=1 // pred_region
      _
    $region21: #{tpu_custom_call.1} parent=1 // pred_fallthru
      _
    // Predicated region
    $region22: #{tpu_custom_call.1} parent=1 // pred_check
      _
    $region23: #{tpu_custom_call.1} parent=1 // pred_check_branch
      %57 = sbr.rel (0) target = $region25
    $region24: #{tpu_custom_call.1} parent=1 // pred_region
      %s59 = ssub.s32 1024, 1024
      %60 = vsyncadd [#allocation10], %s59
      %s61 = sshll.u32 [#allocation9], 4
      %s62 = int_to_ptr.vmem [resolvable:$true] %s61
      %67 = dma.hbm_to_vmem [thread:$0]  %s5, 1024, %s62, [#allocation10], 64, 64, 4
    $region25: #{tpu_custom_call.1} parent=1 // pred_fallthru
      _
    // Predicated region
    $region26: #{tpu_custom_call.1} parent=1 // pred_check
      _
    $region27: #{tpu_custom_call.1} parent=1 // pred_check_branch
      %69 = sbr.rel (0) target = $region29
    $region28: #{tpu_custom_call.1} parent=1 // pred_region
      _
    $region29: #{tpu_custom_call.1} parent=1 // pred_fallthru
      _
    // Predicated region
    $region30: #{tpu_custom_call.1} parent=1 // pred_check
      _
    $region31: #{tpu_custom_call.1} parent=1 // pred_check_branch
      %71 = sbr.rel (0) target = $region33
    $region32: #{tpu_custom_call.1} parent=1 // pred_region
      %72 = dma.done [#allocation4], 5184
    $region33: #{tpu_custom_call.1} parent=1 // pred_fallthru
      _
    // Predicated region
    $region34: #{tpu_custom_call.1} parent=1 // pred_check
      _
    $region35: #{tpu_custom_call.1} parent=1 // pred_check_branch
      %74 = sbr.rel (0) target = $region37
    $region36: #{tpu_custom_call.1} parent=1 // pred_region
      %75 = dma.done [#allocation7], 2048
    $region37: #{tpu_custom_call.1} parent=1 // pred_fallthru
      _
    // Predicated region
    $region38: #{tpu_custom_call.1} parent=1 // pred_check
      _
    $region39: #{tpu_custom_call.1} parent=1 // pred_check_branch
      %77 = sbr.rel (0) target = $region41
    $region40: #{tpu_custom_call.1} parent=1 // pred_region
      %78 = dma.done [#allocation7], 9216
    $region41: #{tpu_custom_call.1} parent=1 // pred_fallthru
      _
    // Predicated region
    $region42: #{tpu_custom_call.1} parent=1 // pred_check
      _
    $region43: #{tpu_custom_call.1} parent=1 // pred_check_branch
      %80 = sbr.rel (0) target = $region45
    $region44: #{tpu_custom_call.1} parent=1 // pred_region
      %81 = dma.done [#allocation10], 1024
    $region45: #{tpu_custom_call.1} parent=1 // pred_fallthru
      _
    %83 = vst [vmem:[#allocation2] sm:$0xf] 0
    %84 = vst [vmem:[#allocation2 + $0x4] sm:$0xf] 0
    %85 = vst [vmem:[#allocation2 + $0x8] sm:$0xf] 0
    %86 = vst [vmem:[#allocation2 + $0x150] sm:$0xf] 0
    %87 = vst [vmem:[#allocation2 + $0x154] sm:$0xf] 0
    %88 = vst [vmem:[#allocation2 + $0x158] sm:$0xf] 0
    %v89 = vld [vmem:[#allocation3] sm:$0xf]
    %v90 = vld [vmem:[#allocation3 + $0x4] sm:$0xf]
    %v91 = vld [vmem:[#allocation3 + $0x8] sm:$0xf]
    %v92 = vld [vmem:[#allocation3 + $0xc] sm:$0xf]
    %v93 = vld [vmem:[#allocation3 + $0x10] sm:$0xf]
    %v94 = vld [vmem:[#allocation3 + $0x14] sm:$0xf]
    %v95 = vld [vmem:[#allocation3 + $0x18] sm:$0xf]
    %v96 = vld [vmem:[#allocation3 + $0x1c] sm:$0xf]
    %v97 = vld [vmem:[#allocation3 + $0x20] sm:$0xf]
    %v98 = vld [vmem:[#allocation3 + $0x24] sm:$0xf]
    %v99 = vld [vmem:[#allocation3 + $0x28] sm:$0xf]
    %v100 = vld [vmem:[#allocation3 + $0x2c] sm:$0xf]
    %v101 = vld [vmem:[#allocation3 + $0x30] sm:$0xf]
    %v102 = vld [vmem:[#allocation3 + $0x34] sm:$0xf]
    %v103 = vld [vmem:[#allocation3 + $0x38] sm:$0xf]
    %v104 = vld [vmem:[#allocation3 + $0x3c] sm:$0xf]
    %v105 = vld [vmem:[#allocation3 + $0x40] sm:$0xf]
    %v106 = vld [vmem:[#allocation3 + $0x44] sm:$0xf]
    %v107 = vld [vmem:[#allocation3 + $0x48] sm:$0xf]
    %v108 = vld [vmem:[#allocation3 + $0x4c] sm:$0xf]
    %v109 = vld [vmem:[#allocation3 + $0x50] sm:$0xf]
    %v110 = vld [vmem:[#allocation3 + $0x54] sm:$0xf]
    %v111 = vld [vmem:[#allocation3 + $0x58] sm:$0xf]
    %v112 = vld [vmem:[#allocation3 + $0x5c] sm:$0xf]
    %v113 = vld [vmem:[#allocation3 + $0x60] sm:$0xf]
    %v114 = vld [vmem:[#allocation3 + $0x64] sm:$0xf]
    %v115 = vld [vmem:[#allocation3 + $0x68] sm:$0xf]
    %v116 = vld [vmem:[#allocation3 + $0x6c] sm:$0xf]
    %v117 = vld [vmem:[#allocation3 + $0x70] sm:$0xf]
    %v118 = vld [vmem:[#allocation3 + $0x74] sm:$0xf]
    %v119 = vld [vmem:[#allocation3 + $0x78] sm:$0xf]
    %v120 = vld [vmem:[#allocation3 + $0x7c] sm:$0xf]
    %v121 = vld [vmem:[#allocation3 + $0x80] sm:$0xf]
    %v122 = vld [vmem:[#allocation3 + $0x84] sm:$0xf]
    %v123 = vld [vmem:[#allocation3 + $0x88] sm:$0xf]
    %v124 = vld [vmem:[#allocation3 + $0x8c] sm:$0xf]
    %v125 = vld [vmem:[#allocation3 + $0x90] sm:$0xf]
    %v126 = vld [vmem:[#allocation3 + $0x94] sm:$0xf]
    %v127 = vld [vmem:[#allocation3 + $0x98] sm:$0xf]
    %v128 = vld [vmem:[#allocation3 + $0x9c] sm:$0xf]
    %v129 = vld [vmem:[#allocation3 + $0xa0] sm:$0xf]
    %v130 = vld [vmem:[#allocation3 + $0xa4] sm:$0xf]
    %v131 = vld [vmem:[#allocation3 + $0xa8] sm:$0xf]
    %v132 = vld [vmem:[#allocation3 + $0xac] sm:$0xf]
    %v133 = vld [vmem:[#allocation3 + $0xb0] sm:$0xf]
    %v134 = vld [vmem:[#allocation3 + $0xb4] sm:$0xf]
    %v135 = vld [vmem:[#allocation3 + $0xb8] sm:$0xf]
    %v136 = vld [vmem:[#allocation3 + $0xbc] sm:$0xf]
    %v137 = vld [vmem:[#allocation3 + $0xc0] sm:$0xf]
    %v138 = vld [vmem:[#allocation3 + $0xc4] sm:$0xf]
    %v139 = vld [vmem:[#allocation3 + $0xc8] sm:$0xf]
    %v140 = vld [vmem:[#allocation3 + $0xcc] sm:$0xf]
    %v141 = vld [vmem:[#allocation3 + $0xd0] sm:$0xf]
    %v142 = vld [vmem:[#allocation3 + $0xd4] sm:$0xf]
    %v143 = vld [vmem:[#allocation3 + $0xd8] sm:$0xf]
    %v144 = vld [vmem:[#allocation3 + $0xdc] sm:$0xf]
    %v145 = vld [vmem:[#allocation3 + $0xe0] sm:$0xf]
    %v146 = vld [vmem:[#allocation3 + $0xe4] sm:$0xf]
    %v147 = vld [vmem:[#allocation3 + $0xe8] sm:$0xf]
    %v148 = vld [vmem:[#allocation3 + $0xec] sm:$0xf]
    %v149 = vld [vmem:[#allocation3 + $0xf0] sm:$0xf]
    %v150 = vld [vmem:[#allocation3 + $0xf4] sm:$0xf]
    %v151 = vld [vmem:[#allocation3 + $0xf8] sm:$0xf]
    %v152 = vld [vmem:[#allocation3 + $0xfc] sm:$0xf]
    %v153 = vld [vmem:[#allocation3 + $0x100] sm:$0xf]
    %v154 = vld [vmem:[#allocation3 + $0x104] sm:$0xf]
    %v155 = vld [vmem:[#allocation3 + $0x108] sm:$0xf]
    %v156 = vld [vmem:[#allocation3 + $0x10c] sm:$0xf]
    %v157 = vld [vmem:[#allocation3 + $0x110] sm:$0xf]
    %v158 = vld [vmem:[#allocation3 + $0x114] sm:$0xf]
    %v159 = vld [vmem:[#allocation3 + $0x118] sm:$0xf]
    %v160 = vld [vmem:[#allocation3 + $0x11c] sm:$0xf]
    %v161 = vld [vmem:[#allocation3 + $0x120] sm:$0xf]
    %v162 = vld [vmem:[#allocation3 + $0x124] sm:$0xf]
    %v163 = vld [vmem:[#allocation3 + $0x128] sm:$0xf]
    %v164 = vld [vmem:[#allocation3 + $0x12c] sm:$0xf]
    %v165 = vld [vmem:[#allocation3 + $0x130] sm:$0xf]
    %v166 = vld [vmem:[#allocation3 + $0x134] sm:$0xf]
    %v167 = vld [vmem:[#allocation3 + $0x138] sm:$0xf]
    %v168 = vld [vmem:[#allocation3 + $0x13c] sm:$0xf]
    %v169 = vld [vmem:[#allocation3 + $0x140] sm:$0xf]
    %v170 = vld [vmem:[#allocation6] sm:$0xff]
    %v171 = vld [vmem:[#allocation6 + $0x8] sm:$0xff]
    %v172 = vld [vmem:[#allocation6 + $0x10] sm:$0xff]
    %v173 = vld [vmem:[#allocation6 + $0x18] sm:$0xff]
    %v174 = vld [vmem:[#allocation6 + $0x20] sm:$0xff]
    %v175 = vld [vmem:[#allocation6 + $0x28] sm:$0xff]
    %v176 = vld [vmem:[#allocation6 + $0x30] sm:$0xff]
    %v177 = vld [vmem:[#allocation6 + $0x38] sm:$0xff]
    %v178 = vld [vmem:[#allocation6 + $0x40] sm:$0xff]
    %v179 = vld [vmem:[#allocation6 + $0x48] sm:$0xff]
    %v180 = vld [vmem:[#allocation6 + $0x50] sm:$0xff]
    %v181 = vld [vmem:[#allocation6 + $0x58] sm:$0xff]
    %v182 = vld [vmem:[#allocation6 + $0x60] sm:$0xff]
    %v183 = vld [vmem:[#allocation6 + $0x68] sm:$0xff]
    %v184 = vld [vmem:[#allocation6 + $0x70] sm:$0xff]
    %v185 = vld [vmem:[#allocation6 + $0x78] sm:$0xff]
    %v186 = vld [vmem:[%s2] sm:$0x3]
    %v188 = vlaneseq
    %v189 = vshrl.u32 %v188, 7
    %v190 = vsub.s32 0, %v189
    %v191 = vrot.slane %v186, %v190
    %v192 = vlaneseq
    %v193 = vshrl.u32 %v192, 7
    %v194 = vsub.s32 1, %v193
    %v195 = vrot.slane %v186, %v194
    %v279 = vunpack.c.l.b16 %v89
    %v280 = vunpack.c.l.b16 %v90
    %v281 = vunpack.c.l.b16 %v91
    %v282 = vunpack.c.l.b16 %v92
    %v283 = vunpack.c.l.b16 %v93
    %v284 = vunpack.c.l.b16 %v94
    %v285 = vunpack.c.l.b16 %v95
    %v286 = vunpack.c.l.b16 %v96
    %v287 = vunpack.c.l.b16 %v97
    %v288 = vunpack.c.l.b16 %v98
    %v289 = vunpack.c.l.b16 %v99
    %v290 = vunpack.c.l.b16 %v100
    %v291 = vunpack.c.l.b16 %v101
    %v292 = vunpack.c.l.b16 %v102
    %v293 = vunpack.c.l.b16 %v103
    %v294 = vunpack.c.l.b16 %v104
    %v295 = vunpack.c.l.b16 %v105
    %v296 = vunpack.c.l.b16 %v106
    %v297 = vunpack.c.l.b16 %v107
    %v298 = vunpack.c.l.b16 %v108
    %v299 = vunpack.c.l.b16 %v109
    %v300 = vunpack.c.l.b16 %v110
    %v301 = vunpack.c.l.b16 %v111
    %v302 = vunpack.c.l.b16 %v112
    %v303 = vunpack.c.l.b16 %v113
    %v304 = vunpack.c.l.b16 %v114
    %v305 = vunpack.c.l.b16 %v115
    %v306 = vunpack.c.l.b16 %v116
    %v307 = vunpack.c.l.b16 %v117
    %v308 = vunpack.c.l.b16 %v118
    %v309 = vunpack.c.l.b16 %v119
    %v310 = vunpack.c.l.b16 %v120
    %v311 = vunpack.c.l.b16 %v121
    %v312 = vunpack.c.l.b16 %v122
    %v313 = vunpack.c.l.b16 %v123
    %v314 = vunpack.c.l.b16 %v124
    %v315 = vunpack.c.l.b16 %v125
    %v316 = vunpack.c.l.b16 %v126
    %v317 = vunpack.c.l.b16 %v127
    %v318 = vunpack.c.l.b16 %v128
    %v319 = vunpack.c.l.b16 %v129
    %v320 = vunpack.c.l.b16 %v130
    %v321 = vunpack.c.l.b16 %v131
    %v322 = vunpack.c.l.b16 %v132
    %v323 = vunpack.c.l.b16 %v133
    %v324 = vunpack.c.l.b16 %v134
    %v325 = vunpack.c.l.b16 %v135
    %v326 = vunpack.c.l.b16 %v136
    %v327 = vunpack.c.l.b16 %v137
    %v328 = vunpack.c.l.b16 %v138
    %v329 = vunpack.c.l.b16 %v139
    %v330 = vunpack.c.l.b16 %v140
    %v331 = vunpack.c.l.b16 %v141
    %v332 = vunpack.c.l.b16 %v142
    %v333 = vunpack.c.l.b16 %v143
    %v334 = vunpack.c.l.b16 %v144
    %v335 = vunpack.c.l.b16 %v145
    %v336 = vunpack.c.l.b16 %v146
    %v337 = vunpack.c.l.b16 %v147
    %v338 = vunpack.c.l.b16 %v148
    %v339 = vunpack.c.l.b16 %v149
    %v340 = vunpack.c.l.b16 %v150
    %v341 = vunpack.c.l.b16 %v151
    %v342 = vunpack.c.l.b16 %v152
    %v343 = vunpack.c.l.b16 %v153
    %v344 = vunpack.c.l.b16 %v154
    %v345 = vunpack.c.l.b16 %v155
    %v346 = vunpack.c.l.b16 %v156
    %v347 = vunpack.c.l.b16 %v157
    %v348 = vunpack.c.l.b16 %v158
    %v349 = vunpack.c.l.b16 %v159
    %v350 = vunpack.c.l.b16 %v160
    %v351 = vunpack.c.l.b16 %v161
    %v352 = vunpack.c.l.b16 %v162
    %v353 = vunpack.c.l.b16 %v163
    %v354 = vunpack.c.l.b16 %v164
    %v355 = vunpack.c.l.b16 %v165
    %v356 = vunpack.c.l.b16 %v166
    %v357 = vunpack.c.l.b16 %v167
    %v358 = vunpack.c.l.b16 %v168
    %v359 = vunpack.c.l.b16 %v169
    %v360 = vpack.c.b16 %v280, %v279
    %v361 = vpack.c.b16 %v282, %v281
    %v362 = vpack.c.b16 %v284, %v283
    %v363 = vpack.c.b16 %v286, %v285
    %v364 = vpack.c.b16 %v288, %v287
    %v365 = vpack.c.b16 %v290, %v289
    %v366 = vpack.c.b16 %v292, %v291
    %v367 = vpack.c.b16 %v294, %v293
    %v368 = vpack.c.b16 %v296, %v295
    %v369 = vpack.c.b16 %v298, %v297
    %v370 = vpack.c.b16 %v300, %v299
    %v371 = vpack.c.b16 %v302, %v301
    %v372 = vpack.c.b16 %v304, %v303
    %v373 = vpack.c.b16 %v306, %v305
    %v374 = vpack.c.b16 %v308, %v307
    %v375 = vpack.c.b16 %v310, %v309
    %v376 = vpack.c.b16 %v312, %v311
    %v377 = vpack.c.b16 %v314, %v313
    %v378 = vpack.c.b16 %v316, %v315
    %v379 = vpack.c.b16 %v318, %v317
    %v380 = vpack.c.b16 %v320, %v319
    %v381 = vpack.c.b16 %v322, %v321
    %v382 = vpack.c.b16 %v324, %v323
    %v383 = vpack.c.b16 %v326, %v325
    %v384 = vpack.c.b16 %v328, %v327
    %v385 = vpack.c.b16 %v330, %v329
    %v386 = vpack.c.b16 %v332, %v331
    %v387 = vpack.c.b16 %v334, %v333
    %v388 = vpack.c.b16 %v336, %v335
    %v389 = vpack.c.b16 %v338, %v337
    %v390 = vpack.c.b16 %v340, %v339
    %v391 = vpack.c.b16 %v342, %v341
    %v392 = vpack.c.b16 %v344, %v343
    %v393 = vpack.c.b16 %v346, %v345
    %v394 = vpack.c.b16 %v348, %v347
    %v395 = vpack.c.b16 %v350, %v349
    %v396 = vpack.c.b16 %v352, %v351
    %v397 = vpack.c.b16 %v354, %v353
    %v398 = vpack.c.b16 %v356, %v355
    %v399 = vpack.c.b16 %v358, %v357
    %v400 = vpack.c.b16 %v359, %v359
    %v458 = vunpack.c.l.b16 %v170
    %v459 = vunpack.c.h.b16 %v170
    %v460 = vunpack.c.l.b16 %v171
    %v461 = vunpack.c.h.b16 %v171
    %v462 = vunpack.c.l.b16 %v172
    %v463 = vunpack.c.h.b16 %v172
    %v464 = vunpack.c.l.b16 %v173
    %v465 = vunpack.c.h.b16 %v173
    %v466 = vunpack.c.l.b16 %v174
    %v467 = vunpack.c.h.b16 %v174
    %v468 = vunpack.c.l.b16 %v175
    %v469 = vunpack.c.h.b16 %v175
    %v470 = vunpack.c.l.b16 %v176
    %v471 = vunpack.c.h.b16 %v176
    %v472 = vunpack.c.l.b16 %v177
    %v473 = vunpack.c.h.b16 %v177
    %v474 = vunpack.c.l.b16 %v178
    %v475 = vunpack.c.h.b16 %v178
    %v476 = vunpack.c.l.b16 %v179
    %v477 = vunpack.c.h.b16 %v179
    %v478 = vunpack.c.l.b16 %v180
    %v479 = vunpack.c.h.b16 %v180
    %v480 = vunpack.c.l.b16 %v181
    %v481 = vunpack.c.h.b16 %v181
    %v482 = vunpack.c.l.b16 %v182
    %v483 = vunpack.c.h.b16 %v182
    %v484 = vunpack.c.l.b16 %v183
    %v485 = vunpack.c.h.b16 %v183
    %v486 = vunpack.c.l.b16 %v184
    %v487 = vunpack.c.h.b16 %v184
    %v488 = vunpack.c.l.b16 %v185
    %v489 = vunpack.c.h.b16 %v185
    %v490 = vpack.c.b16 %v460, %v458
    %v491 = vpack.c.b16 %v461, %v459
    %v492 = vpack.c.b16 %v464, %v462
    %v493 = vpack.c.b16 %v465, %v463
    %v494 = vpack.c.b16 %v468, %v466
    %v495 = vpack.c.b16 %v469, %v467
    %v496 = vpack.c.b16 %v472, %v470
    %v497 = vpack.c.b16 %v473, %v471
    %v498 = vpack.c.b16 %v476, %v474
    %v499 = vpack.c.b16 %v477, %v475
    %v500 = vpack.c.b16 %v480, %v478
    %v501 = vpack.c.b16 %v481, %v479
    %v502 = vpack.c.b16 %v484, %v482
    %v503 = vpack.c.b16 %v485, %v483
    %v504 = vpack.c.b16 %v488, %v486
    %v505 = vpack.c.b16 %v489, %v487
    %522 = vmatprep.subr.bf16.mxu0 %v491
    %523 = vmatpush1.bf16.msra.mxu0 %v490
    %524 = vmatprep.subr.bf16.mxu0 %v493
    %525 = vmatpush1.bf16.msra.mxu0 %v492
    %526 = vmatprep.subr.bf16.mxu0 %v495
    %527 = vmatpush1.bf16.msra.mxu0 %v494
    %528 = vmatprep.subr.bf16.mxu0 %v497
    %529 = vmatpush1.bf16.msra.mxu0 %v496
    %530 = vmatprep.subr.bf16.mxu0 %v499
    %531 = vmatpush1.bf16.msra.mxu0 %v498
    %532 = vmatprep.subr.bf16.mxu0 %v501
    %533 = vmatpush1.bf16.msra.mxu0 %v500
    %534 = vmatprep.subr.bf16.mxu0 %v503
    %535 = vmatpush1.bf16.msra.mxu0 %v502
    %536 = vmatprep.subr.bf16.mxu0 %v505
    %537 = vmatpush1.bf16.msra.mxu0 %v504
    %538 = vmatprep.subr.bf16.mxu0 0
    %539 = vmatpush1.bf16.msra.mxu0 0
    %540 = vmatprep.subr.bf16.mxu0 0
    %541 = vmatpush1.bf16.msra.mxu0 0
    %542 = vmatprep.subr.bf16.mxu0 0
    %543 = vmatpush1.bf16.msra.mxu0 0
    %544 = vmatprep.subr.bf16.mxu0 0
    %545 = vmatpush1.bf16.msra.mxu0 0
    %546 = vmatprep.subr.bf16.mxu0 0
    %547 = vmatpush1.bf16.msra.mxu0 0
    %548 = vmatprep.subr.bf16.mxu0 0
    %549 = vmatpush1.bf16.msra.mxu0 0
    %550 = vmatprep.subr.bf16.mxu0 0
    %551 = vmatpush1.bf16.msra.mxu0 0
    %552 = vmatprep.subr.bf16.mxu0 0
    %553 = vmatpush1.bf16.msra.mxu0 0
    %554 = vmatprep.mubr.bf16.mxu0 0
    %555 = vmatmul.mubr.bf16.gmra.mrb[0].mxu0 %v360
    %v556 = vpop.f32.mrb[0].mxu0
    %v557 = vadd.f32 %v191, %v556
    %v558 = vpop.f32.mrb[0].mxu0
    %v559 = vadd.f32 %v195, %v558
    %v560 = vpop.f32.mrb[0].mxu0
    %v561 = vadd.f32 %v191, %v560
    %v562 = vpop.f32.mrb[0].mxu0
    %v563 = vadd.f32 %v195, %v562
    %564 = vmatprep.mubr.bf16.mxu0 0
    %565 = vmatmul.mubr.bf16.gmra.mrb[0].mxu0 %v361
    %v566 = vpop.f32.mrb[0].mxu0
    %v567 = vadd.f32 %v191, %v566
    %v568 = vpop.f32.mrb[0].mxu0
    %v569 = vadd.f32 %v195, %v568
    %v570 = vpop.f32.mrb[0].mxu0
    %v571 = vadd.f32 %v191, %v570
    %v572 = vpop.f32.mrb[0].mxu0
    %v573 = vadd.f32 %v195, %v572
    %574 = vmatprep.mubr.bf16.mxu0 0
    %575 = vmatmul.mubr.bf16.gmra.mrb[0].mxu0 %v362
    %v576 = vpop.f32.mrb[0].mxu0
    %v577 = vadd.f32 %v191, %v576
    %v578 = vpop.f32.mrb[0].mxu0
    %v579 = vadd.f32 %v195, %v578
    %v580 = vpop.f32.mrb[0].mxu0
    %v581 = vadd.f32 %v191, %v580
    %v582 = vpop.f32.mrb[0].mxu0
    %v583 = vadd.f32 %v195, %v582
    %584 = vmatprep.mubr.bf16.mxu0 0
    %585 = vmatmul.mubr.bf16.gmra.mrb[0].mxu0 %v363
    %v586 = vpop.f32.mrb[0].mxu0
    %v587 = vadd.f32 %v191, %v586
    %v588 = vpop.f32.mrb[0].mxu0
    %v589 = vadd.f32 %v195, %v588
    %v590 = vpop.f32.mrb[0].mxu0
    %v591 = vadd.f32 %v191, %v590
    %v592 = vpop.f32.mrb[0].mxu0
    %v593 = vadd.f32 %v195, %v592
    %594 = vmatprep.mubr.bf16.mxu0 0
    %595 = vmatmul.mubr.bf16.gmra.mrb[0].mxu0 %v364
    %v596 = vpop.f32.mrb[0].mxu0
    %v597 = vadd.f32 %v191, %v596
    %v598 = vpop.f32.mrb[0].mxu0
    %v599 = vadd.f32 %v195, %v598
    %v600 = vpop.f32.mrb[0].mxu0
    %v601 = vadd.f32 %v191, %v600
    %v602 = vpop.f32.mrb[0].mxu0
    %v603 = vadd.f32 %v195, %v602
    %604 = vmatprep.mubr.bf16.mxu0 0
    %605 = vmatmul.mubr.bf16.gmra.mrb[0].mxu0 %v365
    %v606 = vpop.f32.mrb[0].mxu0
    %v607 = vadd.f32 %v191, %v606
    %v608 = vpop.f32.mrb[0].mxu0
    %v609 = vadd.f32 %v195, %v608
    %v610 = vpop.f32.mrb[0].mxu0
    %v611 = vadd.f32 %v191, %v610
    %v612 = vpop.f32.mrb[0].mxu0
    %v613 = vadd.f32 %v195, %v612
    %614 = vmatprep.mubr.bf16.mxu0 0
    %615 = vmatmul.mubr.bf16.gmra.mrb[0].mxu0 %v366
    %v616 = vpop.f32.mrb[0].mxu0
    %v617 = vadd.f32 %v191, %v616
    %v618 = vpop.f32.mrb[0].mxu0
    %v619 = vadd.f32 %v195, %v618
    %v620 = vpop.f32.mrb[0].mxu0
    %v621 = vadd.f32 %v191, %v620
    %v622 = vpop.f32.mrb[0].mxu0
    %v623 = vadd.f32 %v195, %v622
    %624 = vmatprep.mubr.bf16.mxu0 0
    %625 = vmatmul.mubr.bf16.gmra.mrb[0].mxu0 %v367
    %v626 = vpop.f32.mrb[0].mxu0
    %v627 = vadd.f32 %v191, %v626
    %v628 = vpop.f32.mrb[0].mxu0
    %v629 = vadd.f32 %v195, %v628
    %v630 = vpop.f32.mrb[0].mxu0
    %v631 = vadd.f32 %v191, %v630
    %v632 = vpop.f32.mrb[0].mxu0
    %v633 = vadd.f32 %v195, %v632
    %634 = vmatprep.mubr.bf16.mxu0 0
    %635 = vmatmul.mubr.bf16.gmra.mrb[0].mxu0 %v368
    %v636 = vpop.f32.mrb[0].mxu0
    %v637 = vadd.f32 %v191, %v636
    %v638 = vpop.f32.mrb[0].mxu0
    %v639 = vadd.f32 %v195, %v638
    %v640 = vpop.f32.mrb[0].mxu0
    %v641 = vadd.f32 %v191, %v640
    %v642 = vpop.f32.mrb[0].mxu0
    %v643 = vadd.f32 %v195, %v642
    %644 = vmatprep.mubr.bf16.mxu0 0
    %645 = vmatmul.mubr.bf16.gmra.mrb[0].mxu0 %v369
    %v646 = vpop.f32.mrb[0].mxu0
    %v647 = vadd.f32 %v191, %v646
    %v648 = vpop.f32.mrb[0].mxu0
    %v649 = vadd.f32 %v195, %v648
    %v650 = vpop.f32.mrb[0].mxu0
    %v651 = vadd.f32 %v191, %v650
    %v652 = vpop.f32.mrb[0].mxu0
    %v653 = vadd.f32 %v195, %v652
    %654 = vmatprep.mubr.bf16.mxu0 0
    %655 = vmatmul.mubr.bf16.gmra.mrb[0].mxu0 %v370
    %v656 = vpop.f32.mrb[0].mxu0
    %v657 = vadd.f32 %v191, %v656
    %v658 = vpop.f32.mrb[0].mxu0
    %v659 = vadd.f32 %v195, %v658
    %v660 = vpop.f32.mrb[0].mxu0
    %v661 = vadd.f32 %v191, %v660
    %v662 = vpop.f32.mrb[0].mxu0
    %v663 = vadd.f32 %v195, %v662
    %664 = vmatprep.mubr.bf16.mxu0 0
    %665 = vmatmul.mubr.bf16.gmra.mrb[0].mxu0 %v371
    %v666 = vpop.f32.mrb[0].mxu0
    %v667 = vadd.f32 %v191, %v666
    %v668 = vpop.f32.mrb[0].mxu0
    %v669 = vadd.f32 %v195, %v668
    %v670 = vpop.f32.mrb[0].mxu0
    %v671 = vadd.f32 %v191, %v670
    %v672 = vpop.f32.mrb[0].mxu0
    %v673 = vadd.f32 %v195, %v672
    %674 = vmatprep.mubr.bf16.mxu0 0
    %675 = vmatmul.mubr.bf16.gmra.mrb[0].mxu0 %v372
    %v676 = vpop.f32.mrb[0].mxu0
    %v677 = vadd.f32 %v191, %v676
    %v678 = vpop.f32.mrb[0].mxu0
    %v679 = vadd.f32 %v195, %v678
    %v680 = vpop.f32.mrb[0].mxu0
    %v681 = vadd.f32 %v191, %v680
    %v682 = vpop.f32.mrb[0].mxu0
    %v683 = vadd.f32 %v195, %v682
    %684 = vmatprep.mubr.bf16.mxu0 0
    %685 = vmatmul.mubr.bf16.gmra.mrb[0].mxu0 %v373
    %v686 = vpop.f32.mrb[0].mxu0
    %v687 = vadd.f32 %v191, %v686
    %v688 = vpop.f32.mrb[0].mxu0
    %v689 = vadd.f32 %v195, %v688
    %v690 = vpop.f32.mrb[0].mxu0
    %v691 = vadd.f32 %v191, %v690
    %v692 = vpop.f32.mrb[0].mxu0
    %v693 = vadd.f32 %v195, %v692
    %694 = vmatprep.mubr.bf16.mxu0 0
    %695 = vmatmul.mubr.bf16.gmra.mrb[0].mxu0 %v374
    %v696 = vpop.f32.mrb[0].mxu0
    %v697 = vadd.f32 %v191, %v696
    %v698 = vpop.f32.mrb[0].mxu0
    %v699 = vadd.f32 %v195, %v698
    %v700 = vpop.f32.mrb[0].mxu0
    %v701 = vadd.f32 %v191, %v700
    %v702 = vpop.f32.mrb[0].mxu0
    %v703 = vadd.f32 %v195, %v702
    %704 = vmatprep.mubr.bf16.mxu0 0
    %705 = vmatmul.mubr.bf16.gmra.mrb[0].mxu0 %v375
    %v706 = vpop.f32.mrb[0].mxu0
    %v707 = vadd.f32 %v191, %v706
    %v708 = vpop.f32.mrb[0].mxu0
    %v709 = vadd.f32 %v195, %v708
    %v710 = vpop.f32.mrb[0].mxu0
    %v711 = vadd.f32 %v191, %v710
    %v712 = vpop.f32.mrb[0].mxu0
    %v713 = vadd.f32 %v195, %v712
    %714 = vmatprep.mubr.bf16.mxu0 0
    %715 = vmatmul.mubr.bf16.gmra.mrb[0].mxu0 %v376
    %v716 = vpop.f32.mrb[0].mxu0
    %v717 = vadd.f32 %v191, %v716
    %v718 = vpop.f32.mrb[0].mxu0
    %v719 = vadd.f32 %v195, %v718
    %v720 = vpop.f32.mrb[0].mxu0
    %v721 = vadd.f32 %v191, %v720
    %v722 = vpop.f32.mrb[0].mxu0
    %v723 = vadd.f32 %v195, %v722
    %724 = vmatprep.mubr.bf16.mxu0 0
    %725 = vmatmul.mubr.bf16.gmra.mrb[0].mxu0 %v377
    %v726 = vpop.f32.mrb[0].mxu0
    %v727 = vadd.f32 %v191, %v726
    %v728 = vpop.f32.mrb[0].mxu0
    %v729 = vadd.f32 %v195, %v728
    %v730 = vpop.f32.mrb[0].mxu0
    %v731 = vadd.f32 %v191, %v730
    %v732 = vpop.f32.mrb[0].mxu0
    %v733 = vadd.f32 %v195, %v732
    %734 = vmatprep.mubr.bf16.mxu0 0
    %735 = vmatmul.mubr.bf16.gmra.mrb[0].mxu0 %v378
    %v736 = vpop.f32.mrb[0].mxu0
    %v737 = vadd.f32 %v191, %v736
    %v738 = vpop.f32.mrb[0].mxu0
    %v739 = vadd.f32 %v195, %v738
    %v740 = vpop.f32.mrb[0].mxu0
    %v741 = vadd.f32 %v191, %v740
    %v742 = vpop.f32.mrb[0].mxu0
    %v743 = vadd.f32 %v195, %v742
    %744 = vmatprep.mubr.bf16.mxu0 0
    %745 = vmatmul.mubr.bf16.gmra.mrb[0].mxu0 %v379
    %v746 = vpop.f32.mrb[0].mxu0
    %v747 = vadd.f32 %v191, %v746
    %v748 = vpop.f32.mrb[0].mxu0
    %v749 = vadd.f32 %v195, %v748
    %v750 = vpop.f32.mrb[0].mxu0
    %v751 = vadd.f32 %v191, %v750
    %v752 = vpop.f32.mrb[0].mxu0
    %v753 = vadd.f32 %v195, %v752
    %754 = vmatprep.mubr.bf16.mxu0 0
    %755 = vmatmul.mubr.bf16.gmra.mrb[0].mxu0 %v380
    %v756 = vpop.f32.mrb[0].mxu0
    %v757 = vadd.f32 %v191, %v756
    %v758 = vpop.f32.mrb[0].mxu0
    %v759 = vadd.f32 %v195, %v758
    %v760 = vpop.f32.mrb[0].mxu0
    %v761 = vadd.f32 %v191, %v760
    %v762 = vpop.f32.mrb[0].mxu0
    %v763 = vadd.f32 %v195, %v762
    %764 = vmatprep.mubr.bf16.mxu0 0
    %765 = vmatmul.mubr.bf16.gmra.mrb[0].mxu0 %v381
    %v766 = vpop.f32.mrb[0].mxu0
    %v767 = vadd.f32 %v191, %v766
    %v768 = vpop.f32.mrb[0].mxu0
    %v769 = vadd.f32 %v195, %v768
    %v770 = vpop.f32.mrb[0].mxu0
    %v771 = vadd.f32 %v191, %v770
    %v772 = vpop.f32.mrb[0].mxu0
    %v773 = vadd.f32 %v195, %v772
    %774 = vmatprep.mubr.bf16.mxu0 0
    %775 = vmatmul.mubr.bf16.gmra.mrb[0].mxu0 %v382
    %v776 = vpop.f32.mrb[0].mxu0
    %v777 = vadd.f32 %v191, %v776
    %v778 = vpop.f32.mrb[0].mxu0
    %v779 = vadd.f32 %v195, %v778
    %v780 = vpop.f32.mrb[0].mxu0
    %v781 = vadd.f32 %v191, %v780
    %v782 = vpop.f32.mrb[0].mxu0
    %v783 = vadd.f32 %v195, %v782
    %784 = vmatprep.mubr.bf16.mxu0 0
    %785 = vmatmul.mubr.bf16.gmra.mrb[0].mxu0 %v383
    %v786 = vpop.f32.mrb[0].mxu0
    %v787 = vadd.f32 %v191, %v786
    %v788 = vpop.f32.mrb[0].mxu0
    %v789 = vadd.f32 %v195, %v788
    %v790 = vpop.f32.mrb[0].mxu0
    %v791 = vadd.f32 %v191, %v790
    %v792 = vpop.f32.mrb[0].mxu0
    %v793 = vadd.f32 %v195, %v792
    %794 = vmatprep.mubr.bf16.mxu0 0
    %795 = vmatmul.mubr.bf16.gmra.mrb[0].mxu0 %v384
    %v796 = vpop.f32.mrb[0].mxu0
    %v797 = vadd.f32 %v191, %v796
    %v798 = vpop.f32.mrb[0].mxu0
    %v799 = vadd.f32 %v195, %v798
    %v800 = vpop.f32.mrb[0].mxu0
    %v801 = vadd.f32 %v191, %v800
    %v802 = vpop.f32.mrb[0].mxu0
    %v803 = vadd.f32 %v195, %v802
    %804 = vmatprep.mubr.bf16.mxu0 0
    %805 = vmatmul.mubr.bf16.gmra.mrb[0].mxu0 %v385
    %v806 = vpop.f32.mrb[0].mxu0
    %v807 = vadd.f32 %v191, %v806
    %v808 = vpop.f32.mrb[0].mxu0
    %v809 = vadd.f32 %v195, %v808
    %v810 = vpop.f32.mrb[0].mxu0
    %v811 = vadd.f32 %v191, %v810
    %v812 = vpop.f32.mrb[0].mxu0
    %v813 = vadd.f32 %v195, %v812
    %814 = vmatprep.mubr.bf16.mxu0 0
    %815 = vmatmul.mubr.bf16.gmra.mrb[0].mxu0 %v386
    %v816 = vpop.f32.mrb[0].mxu0
    %v817 = vadd.f32 %v191, %v816
    %v818 = vpop.f32.mrb[0].mxu0
    %v819 = vadd.f32 %v195, %v818
    %v820 = vpop.f32.mrb[0].mxu0
    %v821 = vadd.f32 %v191, %v820
    %v822 = vpop.f32.mrb[0].mxu0
    %v823 = vadd.f32 %v195, %v822
    %824 = vmatprep.mubr.bf16.mxu0 0
    %825 = vmatmul.mubr.bf16.gmra.mrb[0].mxu0 %v387
    %v826 = vpop.f32.mrb[0].mxu0
    %v827 = vadd.f32 %v191, %v826
    %v828 = vpop.f32.mrb[0].mxu0
    %v829 = vadd.f32 %v195, %v828
    %v830 = vpop.f32.mrb[0].mxu0
    %v831 = vadd.f32 %v191, %v830
    %v832 = vpop.f32.mrb[0].mxu0
    %v833 = vadd.f32 %v195, %v832
    %834 = vmatprep.mubr.bf16.mxu0 0
    %835 = vmatmul.mubr.bf16.gmra.mrb[0].mxu0 %v388
    %v836 = vpop.f32.mrb[0].mxu0
    %v837 = vadd.f32 %v191, %v836
    %v838 = vpop.f32.mrb[0].mxu0
    %v839 = vadd.f32 %v195, %v838
    %v840 = vpop.f32.mrb[0].mxu0
    %v841 = vadd.f32 %v191, %v840
    %v842 = vpop.f32.mrb[0].mxu0
    %v843 = vadd.f32 %v195, %v842
    %844 = vmatprep.mubr.bf16.mxu0 0
    %845 = vmatmul.mubr.bf16.gmra.mrb[0].mxu0 %v389
    %v846 = vpop.f32.mrb[0].mxu0
    %v847 = vadd.f32 %v191, %v846
    %v848 = vpop.f32.mrb[0].mxu0
    %v849 = vadd.f32 %v195, %v848
    %v850 = vpop.f32.mrb[0].mxu0
    %v851 = vadd.f32 %v191, %v850
    %v852 = vpop.f32.mrb[0].mxu0
    %v853 = vadd.f32 %v195, %v852
    %854 = vmatprep.mubr.bf16.mxu0 0
    %855 = vmatmul.mubr.bf16.gmra.mrb[0].mxu0 %v390
    %v856 = vpop.f32.mrb[0].mxu0
    %v857 = vadd.f32 %v191, %v856
    %v858 = vpop.f32.mrb[0].mxu0
    %v859 = vadd.f32 %v195, %v858
    %v860 = vpop.f32.mrb[0].mxu0
    %v861 = vadd.f32 %v191, %v860
    %v862 = vpop.f32.mrb[0].mxu0
    %v863 = vadd.f32 %v195, %v862
    %864 = vmatprep.mubr.bf16.mxu0 0
    %865 = vmatmul.mubr.bf16.gmra.mrb[0].mxu0 %v391
    %v866 = vpop.f32.mrb[0].mxu0
    %v867 = vadd.f32 %v191, %v866
    %v868 = vpop.f32.mrb[0].mxu0
    %v869 = vadd.f32 %v195, %v868
    %v870 = vpop.f32.mrb[0].mxu0
    %v871 = vadd.f32 %v191, %v870
    %v872 = vpop.f32.mrb[0].mxu0
    %v873 = vadd.f32 %v195, %v872
    %874 = vmatprep.mubr.bf16.mxu0 0
    %875 = vmatmul.mubr.bf16.gmra.mrb[0].mxu0 %v392
    %v876 = vpop.f32.mrb[0].mxu0
    %v877 = vadd.f32 %v191, %v876
    %v878 = vpop.f32.mrb[0].mxu0
    %v879 = vadd.f32 %v195, %v878
    %v880 = vpop.f32.mrb[0].mxu0
    %v881 = vadd.f32 %v191, %v880
    %v882 = vpop.f32.mrb[0].mxu0
    %v883 = vadd.f32 %v195, %v882
    %884 = vmatprep.mubr.bf16.mxu0 0
    %885 = vmatmul.mubr.bf16.gmra.mrb[0].mxu0 %v393
    %v886 = vpop.f32.mrb[0].mxu0
    %v887 = vadd.f32 %v191, %v886
    %v888 = vpop.f32.mrb[0].mxu0
    %v889 = vadd.f32 %v195, %v888
    %v890 = vpop.f32.mrb[0].mxu0
    %v891 = vadd.f32 %v191, %v890
    %v892 = vpop.f32.mrb[0].mxu0
    %v893 = vadd.f32 %v195, %v892
    %894 = vmatprep.mubr.bf16.mxu0 0
    %895 = vmatmul.mubr.bf16.gmra.mrb[0].mxu0 %v394
    %v896 = vpop.f32.mrb[0].mxu0
    %v897 = vadd.f32 %v191, %v896
    %v898 = vpop.f32.mrb[0].mxu0
    %v899 = vadd.f32 %v195, %v898
    %v900 = vpop.f32.mrb[0].mxu0
    %v901 = vadd.f32 %v191, %v900
    %v902 = vpop.f32.mrb[0].mxu0
    %v903 = vadd.f32 %v195, %v902
    %904 = vmatprep.mubr.bf16.mxu0 0
    %905 = vmatmul.mubr.bf16.gmra.mrb[0].mxu0 %v395
    %v906 = vpop.f32.mrb[0].mxu0
    %v907 = vadd.f32 %v191, %v906
    %v908 = vpop.f32.mrb[0].mxu0
    %v909 = vadd.f32 %v195, %v908
    %v910 = vpop.f32.mrb[0].mxu0
    %v911 = vadd.f32 %v191, %v910
    %v912 = vpop.f32.mrb[0].mxu0
    %v913 = vadd.f32 %v195, %v912
    %914 = vmatprep.mubr.bf16.mxu0 0
    %915 = vmatmul.mubr.bf16.gmra.mrb[0].mxu0 %v396
    %v916 = vpop.f32.mrb[0].mxu0
    %v917 = vadd.f32 %v191, %v916
    %v918 = vpop.f32.mrb[0].mxu0
    %v919 = vadd.f32 %v195, %v918
    %v920 = vpop.f32.mrb[0].mxu0
    %v921 = vadd.f32 %v191, %v920
    %v922 = vpop.f32.mrb[0].mxu0
    %v923 = vadd.f32 %v195, %v922
    %924 = vmatprep.mubr.bf16.mxu0 0
    %925 = vmatmul.mubr.bf16.gmra.mrb[0].mxu0 %v397
    %v926 = vpop.f32.mrb[0].mxu0
    %v927 = vadd.f32 %v191, %v926
    %v928 = vpop.f32.mrb[0].mxu0
    %v929 = vadd.f32 %v195, %v928
    %v930 = vpop.f32.mrb[0].mxu0
    %v931 = vadd.f32 %v191, %v930
    %v932 = vpop.f32.mrb[0].mxu0
    %v933 = vadd.f32 %v195, %v932
    %934 = vmatprep.mubr.bf16.mxu0 0
    %935 = vmatmul.mubr.bf16.gmra.mrb[0].mxu0 %v398
    %v936 = vpop.f32.mrb[0].mxu0
    %v937 = vadd.f32 %v191, %v936
    %v938 = vpop.f32.mrb[0].mxu0
    %v939 = vadd.f32 %v195, %v938
    %v940 = vpop.f32.mrb[0].mxu0
    %v941 = vadd.f32 %v191, %v940
    %v942 = vpop.f32.mrb[0].mxu0
    %v943 = vadd.f32 %v195, %v942
    %944 = vmatprep.mubr.bf16.mxu0 0
    %945 = vmatmul.mubr.bf16.gmra.mrb[0].mxu0 %v399
    %v946 = vpop.f32.mrb[0].mxu0
    %v947 = vadd.f32 %v191, %v946
    %v948 = vpop.f32.mrb[0].mxu0
    %v949 = vadd.f32 %v195, %v948
    %v950 = vpop.f32.mrb[0].mxu0
    %v951 = vadd.f32 %v191, %v950
    %v952 = vpop.f32.mrb[0].mxu0
    %v953 = vadd.f32 %v195, %v952
    %954 = vmatprep.mubr.bf16.mxu0 0
    %955 = vmatmul.mubr.bf16.gmra.mrb[0].mxu0 %v400
    %v956 = vpop.f32.mrb[0].mxu0
    %v957 = vadd.f32 %v191, %v956
    %v958 = vpop.f32.mrb[0].mxu0
    %v959 = vadd.f32 %v195, %v958
    %v960 = vpop.f32.mrb[0].mxu0
    %v961 = vpop.f32.mrb[0].mxu0
    %962 = vdwg.mxu0
    %v963 = vmax.f32 %v557, 0.0
    %v964 = vmax.f32 %v559, 0.0
    %v965 = vmax.f32 %v561, 0.0
    %v966 = vmax.f32 %v563, 0.0
    %v967 = vmax.f32 %v567, 0.0
    %v968 = vmax.f32 %v569, 0.0
    %v969 = vmax.f32 %v571, 0.0
    %v970 = vmax.f32 %v573, 0.0
    %v971 = vmax.f32 %v577, 0.0
    %v972 = vmax.f32 %v579, 0.0
    %v973 = vmax.f32 %v581, 0.0
    %v974 = vmax.f32 %v583, 0.0
    %v975 = vmax.f32 %v587, 0.0
    %v976 = vmax.f32 %v589, 0.0
    %v977 = vmax.f32 %v591, 0.0
    %v978 = vmax.f32 %v593, 0.0
    %v979 = vmax.f32 %v597, 0.0
    %v980 = vmax.f32 %v599, 0.0
    %v981 = vmax.f32 %v601, 0.0
    %v982 = vmax.f32 %v603, 0.0
    %v983 = vmax.f32 %v607, 0.0
    %v984 = vmax.f32 %v609, 0.0
    %v985 = vmax.f32 %v611, 0.0
    %v986 = vmax.f32 %v613, 0.0
    %v987 = vmax.f32 %v617, 0.0
    %v988 = vmax.f32 %v619, 0.0
    %v989 = vmax.f32 %v621, 0.0
    %v990 = vmax.f32 %v623, 0.0
    %v991 = vmax.f32 %v627, 0.0
    %v992 = vmax.f32 %v629, 0.0
    %v993 = vmax.f32 %v631, 0.0
    %v994 = vmax.f32 %v633, 0.0
    %v995 = vmax.f32 %v637, 0.0
    %v996 = vmax.f32 %v639, 0.0
    %v997 = vmax.f32 %v641, 0.0
    %v998 = vmax.f32 %v643, 0.0
    %v999 = vmax.f32 %v647, 0.0
    %v1000 = vmax.f32 %v649, 0.0
    %v1001 = vmax.f32 %v651, 0.0
    %v1002 = vmax.f32 %v653, 0.0
    %v1003 = vmax.f32 %v657, 0.0
    %v1004 = vmax.f32 %v659, 0.0
    %v1005 = vmax.f32 %v661, 0.0
    %v1006 = vmax.f32 %v663, 0.0
    %v1007 = vmax.f32 %v667, 0.0
    %v1008 = vmax.f32 %v669, 0.0
    %v1009 = vmax.f32 %v671, 0.0
    %v1010 = vmax.f32 %v673, 0.0
    %v1011 = vmax.f32 %v677, 0.0
    %v1012 = vmax.f32 %v679, 0.0
    %v1013 = vmax.f32 %v681, 0.0
    %v1014 = vmax.f32 %v683, 0.0
    %v1015 = vmax.f32 %v687, 0.0
    %v1016 = vmax.f32 %v689, 0.0
    %v1017 = vmax.f32 %v691, 0.0
    %v1018 = vmax.f32 %v693, 0.0
    %v1019 = vmax.f32 %v697, 0.0
    %v1020 = vmax.f32 %v699, 0.0
    %v1021 = vmax.f32 %v701, 0.0
    %v1022 = vmax.f32 %v703, 0.0
    %v1023 = vmax.f32 %v707, 0.0
    %v1024 = vmax.f32 %v709, 0.0
    %v1025 = vmax.f32 %v711, 0.0
    %v1026 = vmax.f32 %v713, 0.0
    %v1027 = vmax.f32 %v717, 0.0
    %v1028 = vmax.f32 %v719, 0.0
    %v1029 = vmax.f32 %v721, 0.0
    %v1030 = vmax.f32 %v723, 0.0
    %v1031 = vmax.f32 %v727, 0.0
    %v1032 = vmax.f32 %v729, 0.0
    %v1033 = vmax.f32 %v731, 0.0
    %v1034 = vmax.f32 %v733, 0.0
    %v1035 = vmax.f32 %v737, 0.0
    %v1036 = vmax.f32 %v739, 0.0
    %v1037 = vmax.f32 %v741, 0.0
    %v1038 = vmax.f32 %v743, 0.0
    %v1039 = vmax.f32 %v747, 0.0
    %v1040 = vmax.f32 %v749, 0.0
    %v1041 = vmax.f32 %v751, 0.0
    %v1042 = vmax.f32 %v753, 0.0
    %v1043 = vmax.f32 %v757, 0.0
    %v1044 = vmax.f32 %v759, 0.0
    %v1045 = vmax.f32 %v761, 0.0
    %v1046 = vmax.f32 %v763, 0.0
    %v1047 = vmax.f32 %v767, 0.0
    %v1048 = vmax.f32 %v769, 0.0
    %v1049 = vmax.f32 %v771, 0.0
    %v1050 = vmax.f32 %v773, 0.0
    %v1051 = vmax.f32 %v777, 0.0
    %v1052 = vmax.f32 %v779, 0.0
    %v1053 = vmax.f32 %v781, 0.0
    %v1054 = vmax.f32 %v783, 0.0
    %v1055 = vmax.f32 %v787, 0.0
    %v1056 = vmax.f32 %v789, 0.0
    %v1057 = vmax.f32 %v791, 0.0
    %v1058 = vmax.f32 %v793, 0.0
    %v1059 = vmax.f32 %v797, 0.0
    %v1060 = vmax.f32 %v799, 0.0
    %v1061 = vmax.f32 %v801, 0.0
    %v1062 = vmax.f32 %v803, 0.0
    %v1063 = vmax.f32 %v807, 0.0
    %v1064 = vmax.f32 %v809, 0.0
    %v1065 = vmax.f32 %v811, 0.0
    %v1066 = vmax.f32 %v813, 0.0
    %v1067 = vmax.f32 %v817, 0.0
    %v1068 = vmax.f32 %v819, 0.0
    %v1069 = vmax.f32 %v821, 0.0
    %v1070 = vmax.f32 %v823, 0.0
    %v1071 = vmax.f32 %v827, 0.0
    %v1072 = vmax.f32 %v829, 0.0
    %v1073 = vmax.f32 %v831, 0.0
    %v1074 = vmax.f32 %v833, 0.0
    %v1075 = vmax.f32 %v837, 0.0
    %v1076 = vmax.f32 %v839, 0.0
    %v1077 = vmax.f32 %v841, 0.0
    %v1078 = vmax.f32 %v843, 0.0
    %v1079 = vmax.f32 %v847, 0.0
    %v1080 = vmax.f32 %v849, 0.0
    %v1081 = vmax.f32 %v851, 0.0
    %v1082 = vmax.f32 %v853, 0.0
    %v1083 = vmax.f32 %v857, 0.0
    %v1084 = vmax.f32 %v859, 0.0
    %v1085 = vmax.f32 %v861, 0.0
    %v1086 = vmax.f32 %v863, 0.0
    %v1087 = vmax.f32 %v867, 0.0
    %v1088 = vmax.f32 %v869, 0.0
    %v1089 = vmax.f32 %v871, 0.0
    %v1090 = vmax.f32 %v873, 0.0
    %v1091 = vmax.f32 %v877, 0.0
    %v1092 = vmax.f32 %v879, 0.0
    %v1093 = vmax.f32 %v881, 0.0
    %v1094 = vmax.f32 %v883, 0.0
    %v1095 = vmax.f32 %v887, 0.0
    %v1096 = vmax.f32 %v889, 0.0
    %v1097 = vmax.f32 %v891, 0.0
    %v1098 = vmax.f32 %v893, 0.0
    %v1099 = vmax.f32 %v897, 0.0
    %v1100 = vmax.f32 %v899, 0.0
    %v1101 = vmax.f32 %v901, 0.0
    %v1102 = vmax.f32 %v903, 0.0
    %v1103 = vmax.f32 %v907, 0.0
    %v1104 = vmax.f32 %v909, 0.0
    %v1105 = vmax.f32 %v911, 0.0
    %v1106 = vmax.f32 %v913, 0.0
    %v1107 = vmax.f32 %v917, 0.0
    %v1108 = vmax.f32 %v919, 0.0
    %v1109 = vmax.f32 %v921, 0.0
    %v1110 = vmax.f32 %v923, 0.0
    %v1111 = vmax.f32 %v927, 0.0
    %v1112 = vmax.f32 %v929, 0.0
    %v1113 = vmax.f32 %v931, 0.0
    %v1114 = vmax.f32 %v933, 0.0
    %v1115 = vmax.f32 %v937, 0.0
    %v1116 = vmax.f32 %v939, 0.0
    %v1117 = vmax.f32 %v941, 0.0
    %v1118 = vmax.f32 %v943, 0.0
    %v1119 = vmax.f32 %v947, 0.0
    %v1120 = vmax.f32 %v949, 0.0
    %v1121 = vmax.f32 %v951, 0.0
    %v1122 = vmax.f32 %v953, 0.0
    %v1123 = vmax.f32 %v957, 0.0
    %v1124 = vmax.f32 %v959, 0.0
    %v1125 = vmin.f32 %v963, 6.0
    %v1126 = vmin.f32 %v964, 6.0
    %v1127 = vmin.f32 %v965, 6.0
    %v1128 = vmin.f32 %v966, 6.0
    %v1129 = vmin.f32 %v967, 6.0
    %v1130 = vmin.f32 %v968, 6.0
    %v1131 = vmin.f32 %v969, 6.0
    %v1132 = vmin.f32 %v970, 6.0
    %v1133 = vmin.f32 %v971, 6.0
    %v1134 = vmin.f32 %v972, 6.0
    %v1135 = vmin.f32 %v973, 6.0
    %v1136 = vmin.f32 %v974, 6.0
    %v1137 = vmin.f32 %v975, 6.0
    %v1138 = vmin.f32 %v976, 6.0
    %v1139 = vmin.f32 %v977, 6.0
    %v1140 = vmin.f32 %v978, 6.0
    %v1141 = vmin.f32 %v979, 6.0
    %v1142 = vmin.f32 %v980, 6.0
    %v1143 = vmin.f32 %v981, 6.0
    %v1144 = vmin.f32 %v982, 6.0
    %v1145 = vmin.f32 %v983, 6.0
    %v1146 = vmin.f32 %v984, 6.0
    %v1147 = vmin.f32 %v985, 6.0
    %v1148 = vmin.f32 %v986, 6.0
    %v1149 = vmin.f32 %v987, 6.0
    %v1150 = vmin.f32 %v988, 6.0
    %v1151 = vmin.f32 %v989, 6.0
    %v1152 = vmin.f32 %v990, 6.0
    %v1153 = vmin.f32 %v991, 6.0
    %v1154 = vmin.f32 %v992, 6.0
    %v1155 = vmin.f32 %v993, 6.0
    %v1156 = vmin.f32 %v994, 6.0
    %v1157 = vmin.f32 %v995, 6.0
    %v1158 = vmin.f32 %v996, 6.0
    %v1159 = vmin.f32 %v997, 6.0
    %v1160 = vmin.f32 %v998, 6.0
    %v1161 = vmin.f32 %v999, 6.0
    %v1162 = vmin.f32 %v1000, 6.0
    %v1163 = vmin.f32 %v1001, 6.0
    %v1164 = vmin.f32 %v1002, 6.0
    %v1165 = vmin.f32 %v1003, 6.0
    %v1166 = vmin.f32 %v1004, 6.0
    %v1167 = vmin.f32 %v1005, 6.0
    %v1168 = vmin.f32 %v1006, 6.0
    %v1169 = vmin.f32 %v1007, 6.0
    %v1170 = vmin.f32 %v1008, 6.0
    %v1171 = vmin.f32 %v1009, 6.0
    %v1172 = vmin.f32 %v1010, 6.0
    %v1173 = vmin.f32 %v1011, 6.0
    %v1174 = vmin.f32 %v1012, 6.0
    %v1175 = vmin.f32 %v1013, 6.0
    %v1176 = vmin.f32 %v1014, 6.0
    %v1177 = vmin.f32 %v1015, 6.0
    %v1178 = vmin.f32 %v1016, 6.0
    %v1179 = vmin.f32 %v1017, 6.0
    %v1180 = vmin.f32 %v1018, 6.0
    %v1181 = vmin.f32 %v1019, 6.0
    %v1182 = vmin.f32 %v1020, 6.0
    %v1183 = vmin.f32 %v1021, 6.0
    %v1184 = vmin.f32 %v1022, 6.0
    %v1185 = vmin.f32 %v1023, 6.0
    %v1186 = vmin.f32 %v1024, 6.0
    %v1187 = vmin.f32 %v1025, 6.0
    %v1188 = vmin.f32 %v1026, 6.0
    %v1189 = vmin.f32 %v1027, 6.0
    %v1190 = vmin.f32 %v1028, 6.0
    %v1191 = vmin.f32 %v1029, 6.0
    %v1192 = vmin.f32 %v1030, 6.0
    %v1193 = vmin.f32 %v1031, 6.0
    %v1194 = vmin.f32 %v1032, 6.0
    %v1195 = vmin.f32 %v1033, 6.0
    %v1196 = vmin.f32 %v1034, 6.0
    %v1197 = vmin.f32 %v1035, 6.0
    %v1198 = vmin.f32 %v1036, 6.0
    %v1199 = vmin.f32 %v1037, 6.0
    %v1200 = vmin.f32 %v1038, 6.0
    %v1201 = vmin.f32 %v1039, 6.0
    %v1202 = vmin.f32 %v1040, 6.0
    %v1203 = vmin.f32 %v1041, 6.0
    %v1204 = vmin.f32 %v1042, 6.0
    %v1205 = vmin.f32 %v1043, 6.0
    %v1206 = vmin.f32 %v1044, 6.0
    %v1207 = vmin.f32 %v1045, 6.0
    %v1208 = vmin.f32 %v1046, 6.0
    %v1209 = vmin.f32 %v1047, 6.0
    %v1210 = vmin.f32 %v1048, 6.0
    %v1211 = vmin.f32 %v1049, 6.0
    %v1212 = vmin.f32 %v1050, 6.0
    %v1213 = vmin.f32 %v1051, 6.0
    %v1214 = vmin.f32 %v1052, 6.0
    %v1215 = vmin.f32 %v1053, 6.0
    %v1216 = vmin.f32 %v1054, 6.0
    %v1217 = vmin.f32 %v1055, 6.0
    %v1218 = vmin.f32 %v1056, 6.0
    %v1219 = vmin.f32 %v1057, 6.0
    %v1220 = vmin.f32 %v1058, 6.0
    %v1221 = vmin.f32 %v1059, 6.0
    %v1222 = vmin.f32 %v1060, 6.0
    %v1223 = vmin.f32 %v1061, 6.0
    %v1224 = vmin.f32 %v1062, 6.0
    %v1225 = vmin.f32 %v1063, 6.0
    %v1226 = vmin.f32 %v1064, 6.0
    %v1227 = vmin.f32 %v1065, 6.0
    %v1228 = vmin.f32 %v1066, 6.0
    %v1229 = vmin.f32 %v1067, 6.0
    %v1230 = vmin.f32 %v1068, 6.0
    %v1231 = vmin.f32 %v1069, 6.0
    %v1232 = vmin.f32 %v1070, 6.0
    %v1233 = vmin.f32 %v1071, 6.0
    %v1234 = vmin.f32 %v1072, 6.0
    %v1235 = vmin.f32 %v1073, 6.0
    %v1236 = vmin.f32 %v1074, 6.0
    %v1237 = vmin.f32 %v1075, 6.0
    %v1238 = vmin.f32 %v1076, 6.0
    %v1239 = vmin.f32 %v1077, 6.0
    %v1240 = vmin.f32 %v1078, 6.0
    %v1241 = vmin.f32 %v1079, 6.0
    %v1242 = vmin.f32 %v1080, 6.0
    %v1243 = vmin.f32 %v1081, 6.0
    %v1244 = vmin.f32 %v1082, 6.0
    %v1245 = vmin.f32 %v1083, 6.0
    %v1246 = vmin.f32 %v1084, 6.0
    %v1247 = vmin.f32 %v1085, 6.0
    %v1248 = vmin.f32 %v1086, 6.0
    %v1249 = vmin.f32 %v1087, 6.0
    %v1250 = vmin.f32 %v1088, 6.0
    %v1251 = vmin.f32 %v1089, 6.0
    %v1252 = vmin.f32 %v1090, 6.0
    %v1253 = vmin.f32 %v1091, 6.0
    %v1254 = vmin.f32 %v1092, 6.0
    %v1255 = vmin.f32 %v1093, 6.0
    %v1256 = vmin.f32 %v1094, 6.0
    %v1257 = vmin.f32 %v1095, 6.0
    %v1258 = vmin.f32 %v1096, 6.0
    %v1259 = vmin.f32 %v1097, 6.0
    %v1260 = vmin.f32 %v1098, 6.0
    %v1261 = vmin.f32 %v1099, 6.0
    %v1262 = vmin.f32 %v1100, 6.0
    %v1263 = vmin.f32 %v1101, 6.0
    %v1264 = vmin.f32 %v1102, 6.0
    %v1265 = vmin.f32 %v1103, 6.0
    %v1266 = vmin.f32 %v1104, 6.0
    %v1267 = vmin.f32 %v1105, 6.0
    %v1268 = vmin.f32 %v1106, 6.0
    %v1269 = vmin.f32 %v1107, 6.0
    %v1270 = vmin.f32 %v1108, 6.0
    %v1271 = vmin.f32 %v1109, 6.0
    %v1272 = vmin.f32 %v1110, 6.0
    %v1273 = vmin.f32 %v1111, 6.0
    %v1274 = vmin.f32 %v1112, 6.0
    %v1275 = vmin.f32 %v1113, 6.0
    %v1276 = vmin.f32 %v1114, 6.0
    %v1277 = vmin.f32 %v1115, 6.0
    %v1278 = vmin.f32 %v1116, 6.0
    %v1279 = vmin.f32 %v1117, 6.0
    %v1280 = vmin.f32 %v1118, 6.0
    %v1281 = vmin.f32 %v1119, 6.0
    %v1282 = vmin.f32 %v1120, 6.0
    %v1283 = vmin.f32 %v1121, 6.0
    %v1284 = vmin.f32 %v1122, 6.0
    %v1285 = vmin.f32 %v1123, 6.0
    %v1286 = vmin.f32 %v1124, 6.0
    %v1287 = vpack.c.bf16 %v1128, %v1126
    %v1288 = vpack.c.bf16 %v1132, %v1130
    %v1289 = vpack.c.bf16 %v1136, %v1134
    %v1290 = vpack.c.bf16 %v1140, %v1138
    %v1291 = vpack.c.bf16 %v1144, %v1142
    %v1292 = vpack.c.bf16 %v1148, %v1146
    %v1293 = vpack.c.bf16 %v1152, %v1150
    %v1294 = vpack.c.bf16 %v1156, %v1154
    %v1295 = vpack.c.bf16 %v1160, %v1158
    %v1296 = vpack.c.bf16 %v1164, %v1162
    %v1297 = vpack.c.bf16 %v1168, %v1166
    %v1298 = vpack.c.bf16 %v1172, %v1170
    %v1299 = vpack.c.bf16 %v1176, %v1174
    %v1300 = vpack.c.bf16 %v1180, %v1178
    %v1301 = vpack.c.bf16 %v1184, %v1182
    %v1302 = vpack.c.bf16 %v1188, %v1186
    %v1303 = vpack.c.bf16 %v1192, %v1190
    %v1304 = vpack.c.bf16 %v1196, %v1194
    %v1305 = vpack.c.bf16 %v1200, %v1198
    %v1306 = vpack.c.bf16 %v1204, %v1202
    %v1307 = vpack.c.bf16 %v1208, %v1206
    %v1308 = vpack.c.bf16 %v1212, %v1210
    %v1309 = vpack.c.bf16 %v1216, %v1214
    %v1310 = vpack.c.bf16 %v1220, %v1218
    %v1311 = vpack.c.bf16 %v1224, %v1222
    %v1312 = vpack.c.bf16 %v1228, %v1226
    %v1313 = vpack.c.bf16 %v1232, %v1230
    %v1314 = vpack.c.bf16 %v1236, %v1234
    %v1315 = vpack.c.bf16 %v1240, %v1238
    %v1316 = vpack.c.bf16 %v1244, %v1242
    %v1317 = vpack.c.bf16 %v1248, %v1246
    %v1318 = vpack.c.bf16 %v1252, %v1250
    %v1319 = vpack.c.bf16 %v1256, %v1254
    %v1320 = vpack.c.bf16 %v1260, %v1258
    %v1321 = vpack.c.bf16 %v1264, %v1262
    %v1322 = vpack.c.bf16 %v1268, %v1266
    %v1323 = vpack.c.bf16 %v1272, %v1270
    %v1324 = vpack.c.bf16 %v1276, %v1274
    %v1325 = vpack.c.bf16 %v1280, %v1278
    %v1326 = vpack.c.bf16 %v1284, %v1282
    %v1327 = vpack.c.bf16 %v1286, %v1286
    %v1369 = vunpack.c.l.b16 %v1287
    %v1370 = vunpack.c.h.b16 %v1287
    %v1371 = vunpack.c.l.b16 %v1288
    %v1372 = vunpack.c.h.b16 %v1288
    %v1373 = vunpack.c.l.b16 %v1289
    %v1374 = vunpack.c.h.b16 %v1289
    %v1375 = vunpack.c.l.b16 %v1290
    %v1376 = vunpack.c.h.b16 %v1290
    %v1377 = vunpack.c.l.b16 %v1291
    %v1378 = vunpack.c.h.b16 %v1291
    %v1379 = vunpack.c.l.b16 %v1292
    %v1380 = vunpack.c.h.b16 %v1292
    %v1381 = vunpack.c.l.b16 %v1293
    %v1382 = vunpack.c.h.b16 %v1293
    %v1383 = vunpack.c.l.b16 %v1294
    %v1384 = vunpack.c.h.b16 %v1294
    %v1385 = vunpack.c.l.b16 %v1295
    %v1386 = vunpack.c.h.b16 %v1295
    %v1387 = vunpack.c.l.b16 %v1296
    %v1388 = vunpack.c.h.b16 %v1296
    %v1389 = vunpack.c.l.b16 %v1297
    %v1390 = vunpack.c.h.b16 %v1297
    %v1391 = vunpack.c.l.b16 %v1298
    %v1392 = vunpack.c.h.b16 %v1298
    %v1393 = vunpack.c.l.b16 %v1299
    %v1394 = vunpack.c.h.b16 %v1299
    %v1395 = vunpack.c.l.b16 %v1300
    %v1396 = vunpack.c.h.b16 %v1300
    %v1397 = vunpack.c.l.b16 %v1301
    %v1398 = vunpack.c.h.b16 %v1301
    %v1399 = vunpack.c.l.b16 %v1302
    %v1400 = vunpack.c.h.b16 %v1302
    %v1401 = vunpack.c.l.b16 %v1303
    %v1402 = vunpack.c.h.b16 %v1303
    %v1403 = vunpack.c.l.b16 %v1304
    %v1404 = vunpack.c.h.b16 %v1304
    %v1405 = vunpack.c.l.b16 %v1305
    %v1406 = vunpack.c.h.b16 %v1305
    %v1407 = vunpack.c.l.b16 %v1306
    %v1408 = vunpack.c.h.b16 %v1306
    %v1409 = vunpack.c.l.b16 %v1307
    %v1410 = vunpack.c.h.b16 %v1307
    %v1411 = vunpack.c.l.b16 %v1308
    %v1412 = vunpack.c.h.b16 %v1308
    %v1413 = vunpack.c.l.b16 %v1309
    %v1414 = vunpack.c.h.b16 %v1309
    %v1415 = vunpack.c.l.b16 %v1310
    %v1416 = vunpack.c.h.b16 %v1310
    %v1417 = vunpack.c.l.b16 %v1311
    %v1418 = vunpack.c.h.b16 %v1311
    %v1419 = vunpack.c.l.b16 %v1312
    %v1420 = vunpack.c.h.b16 %v1312
    %v1421 = vunpack.c.l.b16 %v1313
    %v1422 = vunpack.c.h.b16 %v1313
    %v1423 = vunpack.c.l.b16 %v1314
    %v1424 = vunpack.c.h.b16 %v1314
    %v1425 = vunpack.c.l.b16 %v1315
    %v1426 = vunpack.c.h.b16 %v1315
    %v1427 = vunpack.c.l.b16 %v1316
    %v1428 = vunpack.c.h.b16 %v1316
    %v1429 = vunpack.c.l.b16 %v1317
    %v1430 = vunpack.c.h.b16 %v1317
    %v1431 = vunpack.c.l.b16 %v1318
    %v1432 = vunpack.c.h.b16 %v1318
    %v1433 = vunpack.c.l.b16 %v1319
    %v1434 = vunpack.c.h.b16 %v1319
    %v1435 = vunpack.c.l.b16 %v1320
    %v1436 = vunpack.c.h.b16 %v1320
    %v1437 = vunpack.c.l.b16 %v1321
    %v1438 = vunpack.c.h.b16 %v1321
    %v1439 = vunpack.c.l.b16 %v1322
    %v1440 = vunpack.c.h.b16 %v1322
    %v1441 = vunpack.c.l.b16 %v1323
    %v1442 = vunpack.c.h.b16 %v1323
    %v1443 = vunpack.c.l.b16 %v1324
    %v1444 = vunpack.c.h.b16 %v1324
    %v1445 = vunpack.c.l.b16 %v1325
    %v1446 = vunpack.c.h.b16 %v1325
    %v1447 = vunpack.c.l.b16 %v1326
    %v1448 = vunpack.c.h.b16 %v1326
    %v1449 = vunpack.c.l.b16 %v1327
    %v1450 = vpack.c.b16 %v1369, %v1369
    %v1451 = vpack.c.b16 %v1370, %v1370
    %v1452 = vpack.c.b16 %v1371, %v1371
    %v1453 = vpack.c.b16 %v1372, %v1372
    %v1454 = vpack.c.b16 %v1373, %v1373
    %v1455 = vpack.c.b16 %v1374, %v1374
    %v1456 = vpack.c.b16 %v1375, %v1375
    %v1457 = vpack.c.b16 %v1376, %v1376
    %v1458 = vpack.c.b16 %v1377, %v1377
    %v1459 = vpack.c.b16 %v1378, %v1378
    %v1460 = vpack.c.b16 %v1379, %v1379
    %v1461 = vpack.c.b16 %v1380, %v1380
    %v1462 = vpack.c.b16 %v1381, %v1381
    %v1463 = vpack.c.b16 %v1382, %v1382
    %v1464 = vpack.c.b16 %v1383, %v1383
    %v1465 = vpack.c.b16 %v1384, %v1384
    %v1466 = vpack.c.b16 %v1385, %v1385
    %v1467 = vpack.c.b16 %v1386, %v1386
    %v1468 = vpack.c.b16 %v1387, %v1387
    %v1469 = vpack.c.b16 %v1388, %v1388
    %v1470 = vpack.c.b16 %v1389, %v1389
    %v1471 = vpack.c.b16 %v1390, %v1390
    %v1472 = vpack.c.b16 %v1391, %v1391
    %v1473 = vpack.c.b16 %v1392, %v1392
    %v1474 = vpack.c.b16 %v1393, %v1393
    %v1475 = vpack.c.b16 %v1394, %v1394
    %v1476 = vpack.c.b16 %v1395, %v1395
    %v1477 = vpack.c.b16 %v1396, %v1396
    %v1478 = vpack.c.b16 %v1397, %v1397
    %v1479 = vpack.c.b16 %v1398, %v1398
    %v1480 = vpack.c.b16 %v1399, %v1399
    %v1481 = vpack.c.b16 %v1400, %v1400
    %v1482 = vpack.c.b16 %v1401, %v1401
    %v1483 = vpack.c.b16 %v1402, %v1402
    %v1484 = vpack.c.b16 %v1403, %v1403
    %v1485 = vpack.c.b16 %v1404, %v1404
    %v1486 = vpack.c.b16 %v1405, %v1405
    %v1487 = vpack.c.b16 %v1406, %v1406
    %v1488 = vpack.c.b16 %v1407, %v1407
    %v1489 = vpack.c.b16 %v1408, %v1408
    %v1490 = vpack.c.b16 %v1409, %v1409
    %v1491 = vpack.c.b16 %v1410, %v1410
    %v1492 = vpack.c.b16 %v1411, %v1411
    %v1493 = vpack.c.b16 %v1412, %v1412
    %v1494 = vpack.c.b16 %v1413, %v1413
    %v1495 = vpack.c.b16 %v1414, %v1414
    %v1496 = vpack.c.b16 %v1415, %v1415
    %v1497 = vpack.c.b16 %v1416, %v1416
    %v1498 = vpack.c.b16 %v1417, %v1417
    %v1499 = vpack.c.b16 %v1418, %v1418
    %v1500 = vpack.c.b16 %v1419, %v1419
    %v1501 = vpack.c.b16 %v1420, %v1420
    %v1502 = vpack.c.b16 %v1421, %v1421
    %v1503 = vpack.c.b16 %v1422, %v1422
    %v1504 = vpack.c.b16 %v1423, %v1423
    %v1505 = vpack.c.b16 %v1424, %v1424
    %v1506 = vpack.c.b16 %v1425, %v1425
    %v1507 = vpack.c.b16 %v1426, %v1426
    %v1508 = vpack.c.b16 %v1427, %v1427
    %v1509 = vpack.c.b16 %v1428, %v1428
    %v1510 = vpack.c.b16 %v1429, %v1429
    %v1511 = vpack.c.b16 %v1430, %v1430
    %v1512 = vpack.c.b16 %v1431, %v1431
    %v1513 = vpack.c.b16 %v1432, %v1432
    %v1514 = vpack.c.b16 %v1433, %v1433
    %v1515 = vpack.c.b16 %v1434, %v1434
    %v1516 = vpack.c.b16 %v1435, %v1435
    %v1517 = vpack.c.b16 %v1436, %v1436
    %v1518 = vpack.c.b16 %v1437, %v1437
    %v1519 = vpack.c.b16 %v1438, %v1438
    %v1520 = vpack.c.b16 %v1439, %v1439
    %v1521 = vpack.c.b16 %v1440, %v1440
    %v1522 = vpack.c.b16 %v1441, %v1441
    %v1523 = vpack.c.b16 %v1442, %v1442
    %v1524 = vpack.c.b16 %v1443, %v1443
    %v1525 = vpack.c.b16 %v1444, %v1444
    %v1526 = vpack.c.b16 %v1445, %v1445
    %v1527 = vpack.c.b16 %v1446, %v1446
    %v1528 = vpack.c.b16 %v1447, %v1447
    %v1529 = vpack.c.b16 %v1448, %v1448
    %v1530 = vpack.c.b16 %v1449, %v1449
    %1612 = vst [vmem:[#allocation11] sm:$0xf] %v1450
    %1613 = vst [vmem:[#allocation11 + $0x4] sm:$0xf] %v1451
    %1614 = vst [vmem:[#allocation11 + $0x8] sm:$0xf] %v1452
    %1615 = vst [vmem:[#allocation11 + $0xc] sm:$0xf] %v1453
    %1616 = vst [vmem:[#allocation11 + $0x10] sm:$0xf] %v1454
    %1617 = vst [vmem:[#allocation11 + $0x14] sm:$0xf] %v1455
    %1618 = vst [vmem:[#allocation11 + $0x18] sm:$0xf] %v1456
    %1619 = vst [vmem:[#allocation11 + $0x1c] sm:$0xf] %v1457
    %1620 = vst [vmem:[#allocation11 + $0x20] sm:$0xf] %v1458
    %1621 = vst [vmem:[#allocation11 + $0x24] sm:$0xf] %v1459
    %1622 = vst [vmem:[#allocation11 + $0x28] sm:$0xf] %v1460
    %1623 = vst [vmem:[#allocation11 + $0x2c] sm:$0xf] %v1461
    %1624 = vst [vmem:[#allocation11 + $0x30] sm:$0xf] %v1462
    %1625 = vst [vmem:[#allocation11 + $0x34] sm:$0xf] %v1463
    %1626 = vst [vmem:[#allocation11 + $0x38] sm:$0xf] %v1464
    %1627 = vst [vmem:[#allocation11 + $0x3c] sm:$0xf] %v1465
    %1628 = vst [vmem:[#allocation11 + $0x40] sm:$0xf] %v1466
    %1629 = vst [vmem:[#allocation11 + $0x44] sm:$0xf] %v1467
    %1630 = vst [vmem:[#allocation11 + $0x48] sm:$0xf] %v1468
    %1631 = vst [vmem:[#allocation11 + $0x4c] sm:$0xf] %v1469
    %1632 = vst [vmem:[#allocation11 + $0x50] sm:$0xf] %v1470
    %1633 = vst [vmem:[#allocation11 + $0x54] sm:$0xf] %v1471
    %1634 = vst [vmem:[#allocation11 + $0x58] sm:$0xf] %v1472
    %1635 = vst [vmem:[#allocation11 + $0x5c] sm:$0xf] %v1473
    %1636 = vst [vmem:[#allocation11 + $0x60] sm:$0xf] %v1474
    %1637 = vst [vmem:[#allocation11 + $0x64] sm:$0xf] %v1475
    %1638 = vst [vmem:[#allocation11 + $0x68] sm:$0xf] %v1476
    %1639 = vst [vmem:[#allocation11 + $0x6c] sm:$0xf] %v1477
    %1640 = vst [vmem:[#allocation11 + $0x70] sm:$0xf] %v1478
    %1641 = vst [vmem:[#allocation11 + $0x74] sm:$0xf] %v1479
    %1642 = vst [vmem:[#allocation11 + $0x78] sm:$0xf] %v1480
    %1643 = vst [vmem:[#allocation11 + $0x7c] sm:$0xf] %v1481
    %1644 = vst [vmem:[#allocation11 + $0x80] sm:$0xf] %v1482
    %1645 = vst [vmem:[#allocation11 + $0x84] sm:$0xf] %v1483
    %1646 = vst [vmem:[#allocation11 + $0x88] sm:$0xf] %v1484
    %1647 = vst [vmem:[#allocation11 + $0x8c] sm:$0xf] %v1485
    %1648 = vst [vmem:[#allocation11 + $0x90] sm:$0xf] %v1486
    %1649 = vst [vmem:[#allocation11 + $0x94] sm:$0xf] %v1487
    %1650 = vst [vmem:[#allocation11 + $0x98] sm:$0xf] %v1488
    %1651 = vst [vmem:[#allocation11 + $0x9c] sm:$0xf] %v1489
    %1652 = vst [vmem:[#allocation11 + $0xa0] sm:$0xf] %v1490
    %1653 = vst [vmem:[#allocation11 + $0xa4] sm:$0xf] %v1491
    %1654 = vst [vmem:[#allocation11 + $0xa8] sm:$0xf] %v1492
    %1655 = vst [vmem:[#allocation11 + $0xac] sm:$0xf] %v1493
    %1656 = vst [vmem:[#allocation11 + $0xb0] sm:$0xf] %v1494
    %1657 = vst [vmem:[#allocation11 + $0xb4] sm:$0xf] %v1495
    %1658 = vst [vmem:[#allocation11 + $0xb8] sm:$0xf] %v1496
    %1659 = vst [vmem:[#allocation11 + $0xbc] sm:$0xf] %v1497
    %1660 = vst [vmem:[#allocation11 + $0xc0] sm:$0xf] %v1498
    %1661 = vst [vmem:[#allocation11 + $0xc4] sm:$0xf] %v1499
    %1662 = vst [vmem:[#allocation11 + $0xc8] sm:$0xf] %v1500
    %1663 = vst [vmem:[#allocation11 + $0xcc] sm:$0xf] %v1501
    %1664 = vst [vmem:[#allocation11 + $0xd0] sm:$0xf] %v1502
    %1665 = vst [vmem:[#allocation11 + $0xd4] sm:$0xf] %v1503
    %1666 = vst [vmem:[#allocation11 + $0xd8] sm:$0xf] %v1504
    %1667 = vst [vmem:[#allocation11 + $0xdc] sm:$0xf] %v1505
    %1668 = vst [vmem:[#allocation11 + $0xe0] sm:$0xf] %v1506
    %1669 = vst [vmem:[#allocation11 + $0xe4] sm:$0xf] %v1507
    %1670 = vst [vmem:[#allocation11 + $0xe8] sm:$0xf] %v1508
    %1671 = vst [vmem:[#allocation11 + $0xec] sm:$0xf] %v1509
    %1672 = vst [vmem:[#allocation11 + $0xf0] sm:$0xf] %v1510
    %1673 = vst [vmem:[#allocation11 + $0xf4] sm:$0xf] %v1511
    %1674 = vst [vmem:[#allocation11 + $0xf8] sm:$0xf] %v1512
    %1675 = vst [vmem:[#allocation11 + $0xfc] sm:$0xf] %v1513
    %1676 = vst [vmem:[#allocation11 + $0x100] sm:$0xf] %v1514
    %1677 = vst [vmem:[#allocation11 + $0x104] sm:$0xf] %v1515
    %1678 = vst [vmem:[#allocation11 + $0x108] sm:$0xf] %v1516
    %1679 = vst [vmem:[#allocation11 + $0x10c] sm:$0xf] %v1517
    %1680 = vst [vmem:[#allocation11 + $0x110] sm:$0xf] %v1518
    %1681 = vst [vmem:[#allocation11 + $0x114] sm:$0xf] %v1519
    %1682 = vst [vmem:[#allocation11 + $0x118] sm:$0xf] %v1520
    %1683 = vst [vmem:[#allocation11 + $0x11c] sm:$0xf] %v1521
    %1684 = vst [vmem:[#allocation11 + $0x120] sm:$0xf] %v1522
    %1685 = vst [vmem:[#allocation11 + $0x124] sm:$0xf] %v1523
    %1686 = vst [vmem:[#allocation11 + $0x128] sm:$0xf] %v1524
    %1687 = vst [vmem:[#allocation11 + $0x12c] sm:$0xf] %v1525
    %1688 = vst [vmem:[#allocation11 + $0x130] sm:$0xf] %v1526
    %1689 = vst [vmem:[#allocation11 + $0x134] sm:$0xf] %v1527
    %1690 = vst [vmem:[#allocation11 + $0x138] sm:$0xf] %v1528
    %1691 = vst [vmem:[#allocation11 + $0x13c] sm:$0xf] %v1529
    %1692 = vst [vmem:[#allocation11 + $0x140] sm:$0xf] %v1530
    %v1693 = vlaneseq
    %v1694 = vshrl.u32 %v1693, 7
    %v1695 = vadd.s32 %v1694, 8
    %v1696 = vadd.s32 %v1694, 16
    %v1697 = vadd.s32 %v1694, 24
    %v1698 = vadd.s32 %v1694, 32
    %v1699 = vadd.s32 %v1694, 40
    %v1700 = vadd.s32 %v1694, 48
    %v1701 = vadd.s32 %v1694, 56
    %v1702 = vadd.s32 %v1694, 64
    %v1703 = vadd.s32 %v1694, 72
    %v1704 = vadd.s32 %v1694, 80
    %v1705 = vadd.s32 %v1694, 88
    %v1706 = vadd.s32 %v1694, 96
    %v1707 = vadd.s32 %v1694, 104
    %v1708 = vadd.s32 %v1694, 112
    %v1709 = vadd.s32 %v1694, 120
    %v1710 = vadd.s32 %v1694, 128
    %v1711 = vadd.s32 %v1694, 136
    %v1712 = vadd.s32 %v1694, 144
    %v1713 = vadd.s32 %v1694, 152
    %v1714 = vadd.s32 %v1694, 160
    %v1715 = vadd.s32 %v1694, 168
    %v1716 = vadd.s32 %v1694, 176
    %v1717 = vadd.s32 %v1694, 184
    %v1718 = vadd.s32 %v1694, 192
    %v1719 = vadd.s32 %v1694, 200
    %v1720 = vadd.s32 %v1694, 208
    %v1721 = vadd.s32 %v1694, 216
    %v1722 = vadd.s32 %v1694, 224
    %v1723 = vadd.s32 %v1694, 232
    %v1724 = vadd.s32 %v1694, 240
    %v1725 = vadd.s32 %v1694, 248
    %v1726 = vadd.s32 %v1694, 256
    %v1727 = vadd.s32 %v1694, 264
    %v1728 = vadd.s32 %v1694, 272
    %v1729 = vadd.s32 %v1694, 280
    %v1730 = vadd.s32 %v1694, 288
    %v1731 = vadd.s32 %v1694, 296
    %v1732 = vadd.s32 %v1694, 304
    %v1733 = vadd.s32 %v1694, 312
    %v1734 = vadd.s32 %v1694, 320
    %v1735 = vadd.s32 %v1694, 328
    %v1736 = vadd.s32 %v1694, 336
    %v1737 = vadd.s32 %v1694, 344
    %v1738 = vadd.s32 %v1694, 352
    %v1739 = vadd.s32 %v1694, 360
    %v1740 = vadd.s32 %v1694, 368
    %v1741 = vadd.s32 %v1694, 376
    %v1742 = vadd.s32 %v1694, 384
    %v1743 = vadd.s32 %v1694, 392
    %v1744 = vadd.s32 %v1694, 400
    %v1745 = vadd.s32 %v1694, 408
    %v1746 = vadd.s32 %v1694, 416
    %v1747 = vadd.s32 %v1694, 424
    %v1748 = vadd.s32 %v1694, 432
    %v1749 = vadd.s32 %v1694, 440
    %v1750 = vadd.s32 %v1694, 448
    %v1751 = vadd.s32 %v1694, 456
    %v1752 = vadd.s32 %v1694, 464
    %v1753 = vadd.s32 %v1694, 472
    %v1754 = vadd.s32 %v1694, 480
    %v1755 = vadd.s32 %v1694, 488
    %v1756 = vadd.s32 %v1694, 496
    %v1757 = vadd.s32 %v1694, 504
    %v1758 = vadd.s32 %v1694, 512
    %v1759 = vadd.s32 %v1694, 520
    %v1760 = vadd.s32 %v1694, 528
    %v1761 = vadd.s32 %v1694, 536
    %v1762 = vadd.s32 %v1694, 544
    %v1763 = vadd.s32 %v1694, 552
    %v1764 = vadd.s32 %v1694, 560
    %v1765 = vadd.s32 %v1694, 568
    %v1766 = vadd.s32 %v1694, 576
    %v1767 = vadd.s32 %v1694, 584
    %v1768 = vadd.s32 %v1694, 592
    %v1769 = vadd.s32 %v1694, 600
    %v1770 = vadd.s32 %v1694, 608
    %v1771 = vadd.s32 %v1694, 616
    %v1772 = vadd.s32 %v1694, 624
    %v1773 = vadd.s32 %v1694, 632
    %v1774 = vadd.s32 %v1694, 640
    %v1775 = vcvt.s32.f32 %v1694
    %v1776 = vcvt.s32.f32 %v1695
    %v1777 = vcvt.s32.f32 %v1696
    %v1778 = vcvt.s32.f32 %v1697
    %v1779 = vcvt.s32.f32 %v1698
    %v1780 = vcvt.s32.f32 %v1699
    %v1781 = vcvt.s32.f32 %v1700
    %v1782 = vcvt.s32.f32 %v1701
    %v1783 = vcvt.s32.f32 %v1702
    %v1784 = vcvt.s32.f32 %v1703
    %v1785 = vcvt.s32.f32 %v1704
    %v1786 = vcvt.s32.f32 %v1705
    %v1787 = vcvt.s32.f32 %v1706
    %v1788 = vcvt.s32.f32 %v1707
    %v1789 = vcvt.s32.f32 %v1708
    %v1790 = vcvt.s32.f32 %v1709
    %v1791 = vcvt.s32.f32 %v1710
    %v1792 = vcvt.s32.f32 %v1711
    %v1793 = vcvt.s32.f32 %v1712
    %v1794 = vcvt.s32.f32 %v1713
    %v1795 = vcvt.s32.f32 %v1714
    %v1796 = vcvt.s32.f32 %v1715
    %v1797 = vcvt.s32.f32 %v1716
    %v1798 = vcvt.s32.f32 %v1717
    %v1799 = vcvt.s32.f32 %v1718
    %v1800 = vcvt.s32.f32 %v1719
    %v1801 = vcvt.s32.f32 %v1720
    %v1802 = vcvt.s32.f32 %v1721
    %v1803 = vcvt.s32.f32 %v1722
    %v1804 = vcvt.s32.f32 %v1723
    %v1805 = vcvt.s32.f32 %v1724
    %v1806 = vcvt.s32.f32 %v1725
    %v1807 = vcvt.s32.f32 %v1726
    %v1808 = vcvt.s32.f32 %v1727
    %v1809 = vcvt.s32.f32 %v1728
    %v1810 = vcvt.s32.f32 %v1729
    %v1811 = vcvt.s32.f32 %v1730
    %v1812 = vcvt.s32.f32 %v1731
    %v1813 = vcvt.s32.f32 %v1732
    %v1814 = vcvt.s32.f32 %v1733
    %v1815 = vcvt.s32.f32 %v1734
    %v1816 = vcvt.s32.f32 %v1735
    %v1817 = vcvt.s32.f32 %v1736
    %v1818 = vcvt.s32.f32 %v1737
    %v1819 = vcvt.s32.f32 %v1738
    %v1820 = vcvt.s32.f32 %v1739
    %v1821 = vcvt.s32.f32 %v1740
    %v1822 = vcvt.s32.f32 %v1741
    %v1823 = vcvt.s32.f32 %v1742
    %v1824 = vcvt.s32.f32 %v1743
    %v1825 = vcvt.s32.f32 %v1744
    %v1826 = vcvt.s32.f32 %v1745
    %v1827 = vcvt.s32.f32 %v1746
    %v1828 = vcvt.s32.f32 %v1747
    %v1829 = vcvt.s32.f32 %v1748
    %v1830 = vcvt.s32.f32 %v1749
    %v1831 = vcvt.s32.f32 %v1750
    %v1832 = vcvt.s32.f32 %v1751
    %v1833 = vcvt.s32.f32 %v1752
    %v1834 = vcvt.s32.f32 %v1753
    %v1835 = vcvt.s32.f32 %v1754
    %v1836 = vcvt.s32.f32 %v1755
    %v1837 = vcvt.s32.f32 %v1756
    %v1838 = vcvt.s32.f32 %v1757
    %v1839 = vcvt.s32.f32 %v1758
    %v1840 = vcvt.s32.f32 %v1759
    %v1841 = vcvt.s32.f32 %v1760
    %v1842 = vcvt.s32.f32 %v1761
    %v1843 = vcvt.s32.f32 %v1762
    %v1844 = vcvt.s32.f32 %v1763
    %v1845 = vcvt.s32.f32 %v1764
    %v1846 = vcvt.s32.f32 %v1765
    %v1847 = vcvt.s32.f32 %v1766
    %v1848 = vcvt.s32.f32 %v1767
    %v1849 = vcvt.s32.f32 %v1768
    %v1850 = vcvt.s32.f32 %v1769
    %v1851 = vcvt.s32.f32 %v1770
    %v1852 = vcvt.s32.f32 %v1771
    %v1853 = vcvt.s32.f32 %v1772
    %v1854 = vcvt.s32.f32 %v1773
    %v1855 = vcvt.s32.f32 %v1774
    %v1856 = vadd.f32 %v1775, 0.5
    %v1857 = vadd.f32 %v1776, 0.5
    %v1858 = vadd.f32 %v1777, 0.5
    %v1859 = vadd.f32 %v1778, 0.5
    %v1860 = vadd.f32 %v1779, 0.5
    %v1861 = vadd.f32 %v1780, 0.5
    %v1862 = vadd.f32 %v1781, 0.5
    %v1863 = vadd.f32 %v1782, 0.5
    %v1864 = vadd.f32 %v1783, 0.5
    %v1865 = vadd.f32 %v1784, 0.5
    %v1866 = vadd.f32 %v1785, 0.5
    %v1867 = vadd.f32 %v1786, 0.5
    %v1868 = vadd.f32 %v1787, 0.5
    %v1869 = vadd.f32 %v1788, 0.5
    %v1870 = vadd.f32 %v1789, 0.5
    %v1871 = vadd.f32 %v1790, 0.5
    %v1872 = vadd.f32 %v1791, 0.5
    %v1873 = vadd.f32 %v1792, 0.5
    %v1874 = vadd.f32 %v1793, 0.5
    %v1875 = vadd.f32 %v1794, 0.5
    %v1876 = vadd.f32 %v1795, 0.5
    %v1877 = vadd.f32 %v1796, 0.5
    %v1878 = vadd.f32 %v1797, 0.5
    %v1879 = vadd.f32 %v1798, 0.5
    %v1880 = vadd.f32 %v1799, 0.5
    %v1881 = vadd.f32 %v1800, 0.5
    %v1882 = vadd.f32 %v1801, 0.5
    %v1883 = vadd.f32 %v1802, 0.5
    %v1884 = vadd.f32 %v1803, 0.5
    %v1885 = vadd.f32 %v1804, 0.5
    %v1886 = vadd.f32 %v1805, 0.5
    %v1887 = vadd.f32 %v1806, 0.5
    %v1888 = vadd.f32 %v1807, 0.5
    %v1889 = vadd.f32 %v1808, 0.5
    %v1890 = vadd.f32 %v1809, 0.5
    %v1891 = vadd.f32 %v1810, 0.5
    %v1892 = vadd.f32 %v1811, 0.5
    %v1893 = vadd.f32 %v1812, 0.5
    %v1894 = vadd.f32 %v1813, 0.5
    %v1895 = vadd.f32 %v1814, 0.5
    %v1896 = vadd.f32 %v1815, 0.5
    %v1897 = vadd.f32 %v1816, 0.5
    %v1898 = vadd.f32 %v1817, 0.5
    %v1899 = vadd.f32 %v1818, 0.5
    %v1900 = vadd.f32 %v1819, 0.5
    %v1901 = vadd.f32 %v1820, 0.5
    %v1902 = vadd.f32 %v1821, 0.5
    %v1903 = vadd.f32 %v1822, 0.5
    %v1904 = vadd.f32 %v1823, 0.5
    %v1905 = vadd.f32 %v1824, 0.5
    %v1906 = vadd.f32 %v1825, 0.5
    %v1907 = vadd.f32 %v1826, 0.5
    %v1908 = vadd.f32 %v1827, 0.5
    %v1909 = vadd.f32 %v1828, 0.5
    %v1910 = vadd.f32 %v1829, 0.5
    %v1911 = vadd.f32 %v1830, 0.5
    %v1912 = vadd.f32 %v1831, 0.5
    %v1913 = vadd.f32 %v1832, 0.5
    %v1914 = vadd.f32 %v1833, 0.5
    %v1915 = vadd.f32 %v1834, 0.5
    %v1916 = vadd.f32 %v1835, 0.5
    %v1917 = vadd.f32 %v1836, 0.5
    %v1918 = vadd.f32 %v1837, 0.5
    %v1919 = vadd.f32 %v1838, 0.5
    %v1920 = vadd.f32 %v1839, 0.5
    %v1921 = vadd.f32 %v1840, 0.5
    %v1922 = vadd.f32 %v1841, 0.5
    %v1923 = vadd.f32 %v1842, 0.5
    %v1924 = vadd.f32 %v1843, 0.5
    %v1925 = vadd.f32 %v1844, 0.5
    %v1926 = vadd.f32 %v1845, 0.5
    %v1927 = vadd.f32 %v1846, 0.5
    %v1928 = vadd.f32 %v1847, 0.5
    %v1929 = vadd.f32 %v1848, 0.5
    %v1930 = vadd.f32 %v1849, 0.5
    %v1931 = vadd.f32 %v1850, 0.5
    %v1932 = vadd.f32 %v1851, 0.5
    %v1933 = vadd.f32 %v1852, 0.5
    %v1934 = vadd.f32 %v1853, 0.5
    %v1935 = vadd.f32 %v1854, 0.5
    %v1936 = vadd.f32 %v1855, 0.5
    %v1937 = vrcp.pop 324.0
    %v1938 = vmul.f32 %v1856, %v1937
    %v1939 = vmul.f32 %v1857, %v1937
    %v1940 = vmul.f32 %v1858, %v1937
    %v1941 = vmul.f32 %v1859, %v1937
    %v1942 = vmul.f32 %v1860, %v1937
    %v1943 = vmul.f32 %v1861, %v1937
    %v1944 = vmul.f32 %v1862, %v1937
    %v1945 = vmul.f32 %v1863, %v1937
    %v1946 = vmul.f32 %v1864, %v1937
    %v1947 = vmul.f32 %v1865, %v1937
    %v1948 = vmul.f32 %v1866, %v1937
    %v1949 = vmul.f32 %v1867, %v1937
    %v1950 = vmul.f32 %v1868, %v1937
    %v1951 = vmul.f32 %v1869, %v1937
    %v1952 = vmul.f32 %v1870, %v1937
    %v1953 = vmul.f32 %v1871, %v1937
    %v1954 = vmul.f32 %v1872, %v1937
    %v1955 = vmul.f32 %v1873, %v1937
    %v1956 = vmul.f32 %v1874, %v1937
    %v1957 = vmul.f32 %v1875, %v1937
    %v1958 = vmul.f32 %v1876, %v1937
    %v1959 = vmul.f32 %v1877, %v1937
    %v1960 = vmul.f32 %v1878, %v1937
    %v1961 = vmul.f32 %v1879, %v1937
    %v1962 = vmul.f32 %v1880, %v1937
    %v1963 = vmul.f32 %v1881, %v1937
    %v1964 = vmul.f32 %v1882, %v1937
    %v1965 = vmul.f32 %v1883, %v1937
    %v1966 = vmul.f32 %v1884, %v1937
    %v1967 = vmul.f32 %v1885, %v1937
    %v1968 = vmul.f32 %v1886, %v1937
    %v1969 = vmul.f32 %v1887, %v1937
    %v1970 = vmul.f32 %v1888, %v1937
    %v1971 = vmul.f32 %v1889, %v1937
    %v1972 = vmul.f32 %v1890, %v1937
    %v1973 = vmul.f32 %v1891, %v1937
    %v1974 = vmul.f32 %v1892, %v1937
    %v1975 = vmul.f32 %v1893, %v1937
    %v1976 = vmul.f32 %v1894, %v1937
    %v1977 = vmul.f32 %v1895, %v1937
    %v1978 = vmul.f32 %v1896, %v1937
    %v1979 = vmul.f32 %v1897, %v1937
    %v1980 = vmul.f32 %v1898, %v1937
    %v1981 = vmul.f32 %v1899, %v1937
    %v1982 = vmul.f32 %v1900, %v1937
    %v1983 = vmul.f32 %v1901, %v1937
    %v1984 = vmul.f32 %v1902, %v1937
    %v1985 = vmul.f32 %v1903, %v1937
    %v1986 = vmul.f32 %v1904, %v1937
    %v1987 = vmul.f32 %v1905, %v1937
    %v1988 = vmul.f32 %v1906, %v1937
    %v1989 = vmul.f32 %v1907, %v1937
    %v1990 = vmul.f32 %v1908, %v1937
    %v1991 = vmul.f32 %v1909, %v1937
    %v1992 = vmul.f32 %v1910, %v1937
    %v1993 = vmul.f32 %v1911, %v1937
    %v1994 = vmul.f32 %v1912, %v1937
    %v1995 = vmul.f32 %v1913, %v1937
    %v1996 = vmul.f32 %v1914, %v1937
    %v1997 = vmul.f32 %v1915, %v1937
    %v1998 = vmul.f32 %v1916, %v1937
    %v1999 = vmul.f32 %v1917, %v1937
    %v2000 = vmul.f32 %v1918, %v1937
    %v2001 = vmul.f32 %v1919, %v1937
    %v2002 = vmul.f32 %v1920, %v1937
    %v2003 = vmul.f32 %v1921, %v1937
    %v2004 = vmul.f32 %v1922, %v1937
    %v2005 = vmul.f32 %v1923, %v1937
    %v2006 = vmul.f32 %v1924, %v1937
    %v2007 = vmul.f32 %v1925, %v1937
    %v2008 = vmul.f32 %v1926, %v1937
    %v2009 = vmul.f32 %v1927, %v1937
    %v2010 = vmul.f32 %v1928, %v1937
    %v2011 = vmul.f32 %v1929, %v1937
    %v2012 = vmul.f32 %v1930, %v1937
    %v2013 = vmul.f32 %v1931, %v1937
    %v2014 = vmul.f32 %v1932, %v1937
    %v2015 = vmul.f32 %v1933, %v1937
    %v2016 = vmul.f32 %v1934, %v1937
    %v2017 = vmul.f32 %v1935, %v1937
    %v2018 = vmul.f32 %v1936, %v1937
    %v2019 = vfloor.f32 %v1938
    %v2020 = vfloor.f32 %v1939
    %v2021 = vfloor.f32 %v1940
    %v2022 = vfloor.f32 %v1941
    %v2023 = vfloor.f32 %v1942
    %v2024 = vfloor.f32 %v1943
    %v2025 = vfloor.f32 %v1944
    %v2026 = vfloor.f32 %v1945
    %v2027 = vfloor.f32 %v1946
    %v2028 = vfloor.f32 %v1947
    %v2029 = vfloor.f32 %v1948
    %v2030 = vfloor.f32 %v1949
    %v2031 = vfloor.f32 %v1950
    %v2032 = vfloor.f32 %v1951
    %v2033 = vfloor.f32 %v1952
    %v2034 = vfloor.f32 %v1953
    %v2035 = vfloor.f32 %v1954
    %v2036 = vfloor.f32 %v1955
    %v2037 = vfloor.f32 %v1956
    %v2038 = vfloor.f32 %v1957
    %v2039 = vfloor.f32 %v1958
    %v2040 = vfloor.f32 %v1959
    %v2041 = vfloor.f32 %v1960
    %v2042 = vfloor.f32 %v1961
    %v2043 = vfloor.f32 %v1962
    %v2044 = vfloor.f32 %v1963
    %v2045 = vfloor.f32 %v1964
    %v2046 = vfloor.f32 %v1965
    %v2047 = vfloor.f32 %v1966
    %v2048 = vfloor.f32 %v1967
    %v2049 = vfloor.f32 %v1968
    %v2050 = vfloor.f32 %v1969
    %v2051 = vfloor.f32 %v1970
    %v2052 = vfloor.f32 %v1971
    %v2053 = vfloor.f32 %v1972
    %v2054 = vfloor.f32 %v1973
    %v2055 = vfloor.f32 %v1974
    %v2056 = vfloor.f32 %v1975
    %v2057 = vfloor.f32 %v1976
    %v2058 = vfloor.f32 %v1977
    %v2059 = vfloor.f32 %v1978
    %v2060 = vfloor.f32 %v1979
    %v2061 = vfloor.f32 %v1980
    %v2062 = vfloor.f32 %v1981
    %v2063 = vfloor.f32 %v1982
    %v2064 = vfloor.f32 %v1983
    %v2065 = vfloor.f32 %v1984
    %v2066 = vfloor.f32 %v1985
    %v2067 = vfloor.f32 %v1986
    %v2068 = vfloor.f32 %v1987
    %v2069 = vfloor.f32 %v1988
    %v2070 = vfloor.f32 %v1989
    %v2071 = vfloor.f32 %v1990
    %v2072 = vfloor.f32 %v1991
    %v2073 = vfloor.f32 %v1992
    %v2074 = vfloor.f32 %v1993
    %v2075 = vfloor.f32 %v1994
    %v2076 = vfloor.f32 %v1995
    %v2077 = vfloor.f32 %v1996
    %v2078 = vfloor.f32 %v1997
    %v2079 = vfloor.f32 %v1998
    %v2080 = vfloor.f32 %v1999
    %v2081 = vfloor.f32 %v2000
    %v2082 = vfloor.f32 %v2001
    %v2083 = vfloor.f32 %v2002
    %v2084 = vfloor.f32 %v2003
    %v2085 = vfloor.f32 %v2004
    %v2086 = vfloor.f32 %v2005
    %v2087 = vfloor.f32 %v2006
    %v2088 = vfloor.f32 %v2007
    %v2089 = vfloor.f32 %v2008
    %v2090 = vfloor.f32 %v2009
    %v2091 = vfloor.f32 %v2010
    %v2092 = vfloor.f32 %v2011
    %v2093 = vfloor.f32 %v2012
    %v2094 = vfloor.f32 %v2013
    %v2095 = vfloor.f32 %v2014
    %v2096 = vfloor.f32 %v2015
    %v2097 = vfloor.f32 %v2016
    %v2098 = vfloor.f32 %v2017
    %v2099 = vfloor.f32 %v2018
    %v2100 = vmul.f32 %v2019, 324.0
    %v2101 = vmul.f32 %v2020, 324.0
    %v2102 = vmul.f32 %v2021, 324.0
    %v2103 = vmul.f32 %v2022, 324.0
    %v2104 = vmul.f32 %v2023, 324.0
    %v2105 = vmul.f32 %v2024, 324.0
    %v2106 = vmul.f32 %v2025, 324.0
    %v2107 = vmul.f32 %v2026, 324.0
    %v2108 = vmul.f32 %v2027, 324.0
    %v2109 = vmul.f32 %v2028, 324.0
    %v2110 = vmul.f32 %v2029, 324.0
    %v2111 = vmul.f32 %v2030, 324.0
    %v2112 = vmul.f32 %v2031, 324.0
    %v2113 = vmul.f32 %v2032, 324.0
    %v2114 = vmul.f32 %v2033, 324.0
    %v2115 = vmul.f32 %v2034, 324.0
    %v2116 = vmul.f32 %v2035, 324.0
    %v2117 = vmul.f32 %v2036, 324.0
    %v2118 = vmul.f32 %v2037, 324.0
    %v2119 = vmul.f32 %v2038, 324.0
    %v2120 = vmul.f32 %v2039, 324.0
    %v2121 = vmul.f32 %v2040, 324.0
    %v2122 = vmul.f32 %v2041, 324.0
    %v2123 = vmul.f32 %v2042, 324.0
    %v2124 = vmul.f32 %v2043, 324.0
    %v2125 = vmul.f32 %v2044, 324.0
    %v2126 = vmul.f32 %v2045, 324.0
    %v2127 = vmul.f32 %v2046, 324.0
    %v2128 = vmul.f32 %v2047, 324.0
    %v2129 = vmul.f32 %v2048, 324.0
    %v2130 = vmul.f32 %v2049, 324.0
    %v2131 = vmul.f32 %v2050, 324.0
    %v2132 = vmul.f32 %v2051, 324.0
    %v2133 = vmul.f32 %v2052, 324.0
    %v2134 = vmul.f32 %v2053, 324.0
    %v2135 = vmul.f32 %v2054, 324.0
    %v2136 = vmul.f32 %v2055, 324.0
    %v2137 = vmul.f32 %v2056, 324.0
    %v2138 = vmul.f32 %v2057, 324.0
    %v2139 = vmul.f32 %v2058, 324.0
    %v2140 = vmul.f32 %v2059, 324.0
    %v2141 = vmul.f32 %v2060, 324.0
    %v2142 = vmul.f32 %v2061, 324.0
    %v2143 = vmul.f32 %v2062, 324.0
    %v2144 = vmul.f32 %v2063, 324.0
    %v2145 = vmul.f32 %v2064, 324.0
    %v2146 = vmul.f32 %v2065, 324.0
    %v2147 = vmul.f32 %v2066, 324.0
    %v2148 = vmul.f32 %v2067, 324.0
    %v2149 = vmul.f32 %v2068, 324.0
    %v2150 = vmul.f32 %v2069, 324.0
    %v2151 = vmul.f32 %v2070, 324.0
    %v2152 = vmul.f32 %v2071, 324.0
    %v2153 = vmul.f32 %v2072, 324.0
    %v2154 = vmul.f32 %v2073, 324.0
    %v2155 = vmul.f32 %v2074, 324.0
    %v2156 = vmul.f32 %v2075, 324.0
    %v2157 = vmul.f32 %v2076, 324.0
    %v2158 = vmul.f32 %v2077, 324.0
    %v2159 = vmul.f32 %v2078, 324.0
    %v2160 = vmul.f32 %v2079, 324.0
    %v2161 = vmul.f32 %v2080, 324.0
    %v2162 = vmul.f32 %v2081, 324.0
    %v2163 = vmul.f32 %v2082, 324.0
    %v2164 = vmul.f32 %v2083, 324.0
    %v2165 = vmul.f32 %v2084, 324.0
    %v2166 = vmul.f32 %v2085, 324.0
    %v2167 = vmul.f32 %v2086, 324.0
    %v2168 = vmul.f32 %v2087, 324.0
    %v2169 = vmul.f32 %v2088, 324.0
    %v2170 = vmul.f32 %v2089, 324.0
    %v2171 = vmul.f32 %v2090, 324.0
    %v2172 = vmul.f32 %v2091, 324.0
    %v2173 = vmul.f32 %v2092, 324.0
    %v2174 = vmul.f32 %v2093, 324.0
    %v2175 = vmul.f32 %v2094, 324.0
    %v2176 = vmul.f32 %v2095, 324.0
    %v2177 = vmul.f32 %v2096, 324.0
    %v2178 = vmul.f32 %v2097, 324.0
    %v2179 = vmul.f32 %v2098, 324.0
    %v2180 = vmul.f32 %v2099, 324.0
    %v2181 = vsub.f32 %v1775, %v2100
    %v2182 = vsub.f32 %v1776, %v2101
    %v2183 = vsub.f32 %v1777, %v2102
    %v2184 = vsub.f32 %v1778, %v2103
    %v2185 = vsub.f32 %v1779, %v2104
    %v2186 = vsub.f32 %v1780, %v2105
    %v2187 = vsub.f32 %v1781, %v2106
    %v2188 = vsub.f32 %v1782, %v2107
    %v2189 = vsub.f32 %v1783, %v2108
    %v2190 = vsub.f32 %v1784, %v2109
    %v2191 = vsub.f32 %v1785, %v2110
    %v2192 = vsub.f32 %v1786, %v2111
    %v2193 = vsub.f32 %v1787, %v2112
    %v2194 = vsub.f32 %v1788, %v2113
    %v2195 = vsub.f32 %v1789, %v2114
    %v2196 = vsub.f32 %v1790, %v2115
    %v2197 = vsub.f32 %v1791, %v2116
    %v2198 = vsub.f32 %v1792, %v2117
    %v2199 = vsub.f32 %v1793, %v2118
    %v2200 = vsub.f32 %v1794, %v2119
    %v2201 = vsub.f32 %v1795, %v2120
    %v2202 = vsub.f32 %v1796, %v2121
    %v2203 = vsub.f32 %v1797, %v2122
    %v2204 = vsub.f32 %v1798, %v2123
    %v2205 = vsub.f32 %v1799, %v2124
    %v2206 = vsub.f32 %v1800, %v2125
    %v2207 = vsub.f32 %v1801, %v2126
    %v2208 = vsub.f32 %v1802, %v2127
    %v2209 = vsub.f32 %v1803, %v2128
    %v2210 = vsub.f32 %v1804, %v2129
    %v2211 = vsub.f32 %v1805, %v2130
    %v2212 = vsub.f32 %v1806, %v2131
    %v2213 = vsub.f32 %v1807, %v2132
    %v2214 = vsub.f32 %v1808, %v2133
    %v2215 = vsub.f32 %v1809, %v2134
    %v2216 = vsub.f32 %v1810, %v2135
    %v2217 = vsub.f32 %v1811, %v2136
    %v2218 = vsub.f32 %v1812, %v2137
    %v2219 = vsub.f32 %v1813, %v2138
    %v2220 = vsub.f32 %v1814, %v2139
    %v2221 = vsub.f32 %v1815, %v2140
    %v2222 = vsub.f32 %v1816, %v2141
    %v2223 = vsub.f32 %v1817, %v2142
    %v2224 = vsub.f32 %v1818, %v2143
    %v2225 = vsub.f32 %v1819, %v2144
    %v2226 = vsub.f32 %v1820, %v2145
    %v2227 = vsub.f32 %v1821, %v2146
    %v2228 = vsub.f32 %v1822, %v2147
    %v2229 = vsub.f32 %v1823, %v2148
    %v2230 = vsub.f32 %v1824, %v2149
    %v2231 = vsub.f32 %v1825, %v2150
    %v2232 = vsub.f32 %v1826, %v2151
    %v2233 = vsub.f32 %v1827, %v2152
    %v2234 = vsub.f32 %v1828, %v2153
    %v2235 = vsub.f32 %v1829, %v2154
    %v2236 = vsub.f32 %v1830, %v2155
    %v2237 = vsub.f32 %v1831, %v2156
    %v2238 = vsub.f32 %v1832, %v2157
    %v2239 = vsub.f32 %v1833, %v2158
    %v2240 = vsub.f32 %v1834, %v2159
    %v2241 = vsub.f32 %v1835, %v2160
    %v2242 = vsub.f32 %v1836, %v2161
    %v2243 = vsub.f32 %v1837, %v2162
    %v2244 = vsub.f32 %v1838, %v2163
    %v2245 = vsub.f32 %v1839, %v2164
    %v2246 = vsub.f32 %v1840, %v2165
    %v2247 = vsub.f32 %v1841, %v2166
    %v2248 = vsub.f32 %v1842, %v2167
    %v2249 = vsub.f32 %v1843, %v2168
    %v2250 = vsub.f32 %v1844, %v2169
    %v2251 = vsub.f32 %v1845, %v2170
    %v2252 = vsub.f32 %v1846, %v2171
    %v2253 = vsub.f32 %v1847, %v2172
    %v2254 = vsub.f32 %v1848, %v2173
    %v2255 = vsub.f32 %v1849, %v2174
    %v2256 = vsub.f32 %v1850, %v2175
    %v2257 = vsub.f32 %v1851, %v2176
    %v2258 = vsub.f32 %v1852, %v2177
    %v2259 = vsub.f32 %v1853, %v2178
    %v2260 = vsub.f32 %v1854, %v2179
    %v2261 = vsub.f32 %v1855, %v2180
    %v2262 = vadd.f32 %v2181, 0.5
    %v2263 = vadd.f32 %v2182, 0.5
    %v2264 = vadd.f32 %v2183, 0.5
    %v2265 = vadd.f32 %v2184, 0.5
    %v2266 = vadd.f32 %v2185, 0.5
    %v2267 = vadd.f32 %v2186, 0.5
    %v2268 = vadd.f32 %v2187, 0.5
    %v2269 = vadd.f32 %v2188, 0.5
    %v2270 = vadd.f32 %v2189, 0.5
    %v2271 = vadd.f32 %v2190, 0.5
    %v2272 = vadd.f32 %v2191, 0.5
    %v2273 = vadd.f32 %v2192, 0.5
    %v2274 = vadd.f32 %v2193, 0.5
    %v2275 = vadd.f32 %v2194, 0.5
    %v2276 = vadd.f32 %v2195, 0.5
    %v2277 = vadd.f32 %v2196, 0.5
    %v2278 = vadd.f32 %v2197, 0.5
    %v2279 = vadd.f32 %v2198, 0.5
    %v2280 = vadd.f32 %v2199, 0.5
    %v2281 = vadd.f32 %v2200, 0.5
    %v2282 = vadd.f32 %v2201, 0.5
    %v2283 = vadd.f32 %v2202, 0.5
    %v2284 = vadd.f32 %v2203, 0.5
    %v2285 = vadd.f32 %v2204, 0.5
    %v2286 = vadd.f32 %v2205, 0.5
    %v2287 = vadd.f32 %v2206, 0.5
    %v2288 = vadd.f32 %v2207, 0.5
    %v2289 = vadd.f32 %v2208, 0.5
    %v2290 = vadd.f32 %v2209, 0.5
    %v2291 = vadd.f32 %v2210, 0.5
    %v2292 = vadd.f32 %v2211, 0.5
    %v2293 = vadd.f32 %v2212, 0.5
    %v2294 = vadd.f32 %v2213, 0.5
    %v2295 = vadd.f32 %v2214, 0.5
    %v2296 = vadd.f32 %v2215, 0.5
    %v2297 = vadd.f32 %v2216, 0.5
    %v2298 = vadd.f32 %v2217, 0.5
    %v2299 = vadd.f32 %v2218, 0.5
    %v2300 = vadd.f32 %v2219, 0.5
    %v2301 = vadd.f32 %v2220, 0.5
    %v2302 = vadd.f32 %v2221, 0.5
    %v2303 = vadd.f32 %v2222, 0.5
    %v2304 = vadd.f32 %v2223, 0.5
    %v2305 = vadd.f32 %v2224, 0.5
    %v2306 = vadd.f32 %v2225, 0.5
    %v2307 = vadd.f32 %v2226, 0.5
    %v2308 = vadd.f32 %v2227, 0.5
    %v2309 = vadd.f32 %v2228, 0.5
    %v2310 = vadd.f32 %v2229, 0.5
    %v2311 = vadd.f32 %v2230, 0.5
    %v2312 = vadd.f32 %v2231, 0.5
    %v2313 = vadd.f32 %v2232, 0.5
    %v2314 = vadd.f32 %v2233, 0.5
    %v2315 = vadd.f32 %v2234, 0.5
    %v2316 = vadd.f32 %v2235, 0.5
    %v2317 = vadd.f32 %v2236, 0.5
    %v2318 = vadd.f32 %v2237, 0.5
    %v2319 = vadd.f32 %v2238, 0.5
    %v2320 = vadd.f32 %v2239, 0.5
    %v2321 = vadd.f32 %v2240, 0.5
    %v2322 = vadd.f32 %v2241, 0.5
    %v2323 = vadd.f32 %v2242, 0.5
    %v2324 = vadd.f32 %v2243, 0.5
    %v2325 = vadd.f32 %v2244, 0.5
    %v2326 = vadd.f32 %v2245, 0.5
    %v2327 = vadd.f32 %v2246, 0.5
    %v2328 = vadd.f32 %v2247, 0.5
    %v2329 = vadd.f32 %v2248, 0.5
    %v2330 = vadd.f32 %v2249, 0.5
    %v2331 = vadd.f32 %v2250, 0.5
    %v2332 = vadd.f32 %v2251, 0.5
    %v2333 = vadd.f32 %v2252, 0.5
    %v2334 = vadd.f32 %v2253, 0.5
    %v2335 = vadd.f32 %v2254, 0.5
    %v2336 = vadd.f32 %v2255, 0.5
    %v2337 = vadd.f32 %v2256, 0.5
    %v2338 = vadd.f32 %v2257, 0.5
    %v2339 = vadd.f32 %v2258, 0.5
    %v2340 = vadd.f32 %v2259, 0.5
    %v2341 = vadd.f32 %v2260, 0.5
    %v2342 = vadd.f32 %v2261, 0.5
    %v2343 = vrcp.pop 18.0
    %v2344 = vmul.f32 %v2262, %v2343
    %v2345 = vmul.f32 %v2263, %v2343
    %v2346 = vmul.f32 %v2264, %v2343
    %v2347 = vmul.f32 %v2265, %v2343
    %v2348 = vmul.f32 %v2266, %v2343
    %v2349 = vmul.f32 %v2267, %v2343
    %v2350 = vmul.f32 %v2268, %v2343
    %v2351 = vmul.f32 %v2269, %v2343
    %v2352 = vmul.f32 %v2270, %v2343
    %v2353 = vmul.f32 %v2271, %v2343
    %v2354 = vmul.f32 %v2272, %v2343
    %v2355 = vmul.f32 %v2273, %v2343
    %v2356 = vmul.f32 %v2274, %v2343
    %v2357 = vmul.f32 %v2275, %v2343
    %v2358 = vmul.f32 %v2276, %v2343
    %v2359 = vmul.f32 %v2277, %v2343
    %v2360 = vmul.f32 %v2278, %v2343
    %v2361 = vmul.f32 %v2279, %v2343
    %v2362 = vmul.f32 %v2280, %v2343
    %v2363 = vmul.f32 %v2281, %v2343
    %v2364 = vmul.f32 %v2282, %v2343
    %v2365 = vmul.f32 %v2283, %v2343
    %v2366 = vmul.f32 %v2284, %v2343
    %v2367 = vmul.f32 %v2285, %v2343
    %v2368 = vmul.f32 %v2286, %v2343
    %v2369 = vmul.f32 %v2287, %v2343
    %v2370 = vmul.f32 %v2288, %v2343
    %v2371 = vmul.f32 %v2289, %v2343
    %v2372 = vmul.f32 %v2290, %v2343
    %v2373 = vmul.f32 %v2291, %v2343
    %v2374 = vmul.f32 %v2292, %v2343
    %v2375 = vmul.f32 %v2293, %v2343
    %v2376 = vmul.f32 %v2294, %v2343
    %v2377 = vmul.f32 %v2295, %v2343
    %v2378 = vmul.f32 %v2296, %v2343
    %v2379 = vmul.f32 %v2297, %v2343
    %v2380 = vmul.f32 %v2298, %v2343
    %v2381 = vmul.f32 %v2299, %v2343
    %v2382 = vmul.f32 %v2300, %v2343
    %v2383 = vmul.f32 %v2301, %v2343
    %v2384 = vmul.f32 %v2302, %v2343
    %v2385 = vmul.f32 %v2303, %v2343
    %v2386 = vmul.f32 %v2304, %v2343
    %v2387 = vmul.f32 %v2305, %v2343
    %v2388 = vmul.f32 %v2306, %v2343
    %v2389 = vmul.f32 %v2307, %v2343
    %v2390 = vmul.f32 %v2308, %v2343
    %v2391 = vmul.f32 %v2309, %v2343
    %v2392 = vmul.f32 %v2310, %v2343
    %v2393 = vmul.f32 %v2311, %v2343
    %v2394 = vmul.f32 %v2312, %v2343
    %v2395 = vmul.f32 %v2313, %v2343
    %v2396 = vmul.f32 %v2314, %v2343
    %v2397 = vmul.f32 %v2315, %v2343
    %v2398 = vmul.f32 %v2316, %v2343
    %v2399 = vmul.f32 %v2317, %v2343
    %v2400 = vmul.f32 %v2318, %v2343
    %v2401 = vmul.f32 %v2319, %v2343
    %v2402 = vmul.f32 %v2320, %v2343
    %v2403 = vmul.f32 %v2321, %v2343
    %v2404 = vmul.f32 %v2322, %v2343
    %v2405 = vmul.f32 %v2323, %v2343
    %v2406 = vmul.f32 %v2324, %v2343
    %v2407 = vmul.f32 %v2325, %v2343
    %v2408 = vmul.f32 %v2326, %v2343
    %v2409 = vmul.f32 %v2327, %v2343
    %v2410 = vmul.f32 %v2328, %v2343
    %v2411 = vmul.f32 %v2329, %v2343
    %v2412 = vmul.f32 %v2330, %v2343
    %v2413 = vmul.f32 %v2331, %v2343
    %v2414 = vmul.f32 %v2332, %v2343
    %v2415 = vmul.f32 %v2333, %v2343
    %v2416 = vmul.f32 %v2334, %v2343
    %v2417 = vmul.f32 %v2335, %v2343
    %v2418 = vmul.f32 %v2336, %v2343
    %v2419 = vmul.f32 %v2337, %v2343
    %v2420 = vmul.f32 %v2338, %v2343
    %v2421 = vmul.f32 %v2339, %v2343
    %v2422 = vmul.f32 %v2340, %v2343
    %v2423 = vmul.f32 %v2341, %v2343
    %v2424 = vmul.f32 %v2342, %v2343
    %v2425 = vfloor.f32 %v2344
    %v2426 = vfloor.f32 %v2345
    %v2427 = vfloor.f32 %v2346
    %v2428 = vfloor.f32 %v2347
    %v2429 = vfloor.f32 %v2348
    %v2430 = vfloor.f32 %v2349
    %v2431 = vfloor.f32 %v2350
    %v2432 = vfloor.f32 %v2351
    %v2433 = vfloor.f32 %v2352
    %v2434 = vfloor.f32 %v2353
    %v2435 = vfloor.f32 %v2354
    %v2436 = vfloor.f32 %v2355
    %v2437 = vfloor.f32 %v2356
    %v2438 = vfloor.f32 %v2357
    %v2439 = vfloor.f32 %v2358
    %v2440 = vfloor.f32 %v2359
    %v2441 = vfloor.f32 %v2360
    %v2442 = vfloor.f32 %v2361
    %v2443 = vfloor.f32 %v2362
    %v2444 = vfloor.f32 %v2363
    %v2445 = vfloor.f32 %v2364
    %v2446 = vfloor.f32 %v2365
    %v2447 = vfloor.f32 %v2366
    %v2448 = vfloor.f32 %v2367
    %v2449 = vfloor.f32 %v2368
    %v2450 = vfloor.f32 %v2369
    %v2451 = vfloor.f32 %v2370
    %v2452 = vfloor.f32 %v2371
    %v2453 = vfloor.f32 %v2372
    %v2454 = vfloor.f32 %v2373
    %v2455 = vfloor.f32 %v2374
    %v2456 = vfloor.f32 %v2375
    %v2457 = vfloor.f32 %v2376
    %v2458 = vfloor.f32 %v2377
    %v2459 = vfloor.f32 %v2378
    %v2460 = vfloor.f32 %v2379
    %v2461 = vfloor.f32 %v2380
    %v2462 = vfloor.f32 %v2381
    %v2463 = vfloor.f32 %v2382
    %v2464 = vfloor.f32 %v2383
    %v2465 = vfloor.f32 %v2384
    %v2466 = vfloor.f32 %v2385
    %v2467 = vfloor.f32 %v2386
    %v2468 = vfloor.f32 %v2387
    %v2469 = vfloor.f32 %v2388
    %v2470 = vfloor.f32 %v2389
    %v2471 = vfloor.f32 %v2390
    %v2472 = vfloor.f32 %v2391
    %v2473 = vfloor.f32 %v2392
    %v2474 = vfloor.f32 %v2393
    %v2475 = vfloor.f32 %v2394
    %v2476 = vfloor.f32 %v2395
    %v2477 = vfloor.f32 %v2396
    %v2478 = vfloor.f32 %v2397
    %v2479 = vfloor.f32 %v2398
    %v2480 = vfloor.f32 %v2399
    %v2481 = vfloor.f32 %v2400
    %v2482 = vfloor.f32 %v2401
    %v2483 = vfloor.f32 %v2402
    %v2484 = vfloor.f32 %v2403
    %v2485 = vfloor.f32 %v2404
    %v2486 = vfloor.f32 %v2405
    %v2487 = vfloor.f32 %v2406
    %v2488 = vfloor.f32 %v2407
    %v2489 = vfloor.f32 %v2408
    %v2490 = vfloor.f32 %v2409
    %v2491 = vfloor.f32 %v2410
    %v2492 = vfloor.f32 %v2411
    %v2493 = vfloor.f32 %v2412
    %v2494 = vfloor.f32 %v2413
    %v2495 = vfloor.f32 %v2414
    %v2496 = vfloor.f32 %v2415
    %v2497 = vfloor.f32 %v2416
    %v2498 = vfloor.f32 %v2417
    %v2499 = vfloor.f32 %v2418
    %v2500 = vfloor.f32 %v2419
    %v2501 = vfloor.f32 %v2420
    %v2502 = vfloor.f32 %v2421
    %v2503 = vfloor.f32 %v2422
    %v2504 = vfloor.f32 %v2423
    %v2505 = vfloor.f32 %v2424
    %v2506 = vmul.f32 %v2425, 18.0
    %v2507 = vmul.f32 %v2426, 18.0
    %v2508 = vmul.f32 %v2427, 18.0
    %v2509 = vmul.f32 %v2428, 18.0
    %v2510 = vmul.f32 %v2429, 18.0
    %v2511 = vmul.f32 %v2430, 18.0
    %v2512 = vmul.f32 %v2431, 18.0
    %v2513 = vmul.f32 %v2432, 18.0
    %v2514 = vmul.f32 %v2433, 18.0
    %v2515 = vmul.f32 %v2434, 18.0
    %v2516 = vmul.f32 %v2435, 18.0
    %v2517 = vmul.f32 %v2436, 18.0
    %v2518 = vmul.f32 %v2437, 18.0
    %v2519 = vmul.f32 %v2438, 18.0
    %v2520 = vmul.f32 %v2439, 18.0
    %v2521 = vmul.f32 %v2440, 18.0
    %v2522 = vmul.f32 %v2441, 18.0
    %v2523 = vmul.f32 %v2442, 18.0
    %v2524 = vmul.f32 %v2443, 18.0
    %v2525 = vmul.f32 %v2444, 18.0
    %v2526 = vmul.f32 %v2445, 18.0
    %v2527 = vmul.f32 %v2446, 18.0
    %v2528 = vmul.f32 %v2447, 18.0
    %v2529 = vmul.f32 %v2448, 18.0
    %v2530 = vmul.f32 %v2449, 18.0
    %v2531 = vmul.f32 %v2450, 18.0
    %v2532 = vmul.f32 %v2451, 18.0
    %v2533 = vmul.f32 %v2452, 18.0
    %v2534 = vmul.f32 %v2453, 18.0
    %v2535 = vmul.f32 %v2454, 18.0
    %v2536 = vmul.f32 %v2455, 18.0
    %v2537 = vmul.f32 %v2456, 18.0
    %v2538 = vmul.f32 %v2457, 18.0
    %v2539 = vmul.f32 %v2458, 18.0
    %v2540 = vmul.f32 %v2459, 18.0
    %v2541 = vmul.f32 %v2460, 18.0
    %v2542 = vmul.f32 %v2461, 18.0
    %v2543 = vmul.f32 %v2462, 18.0
    %v2544 = vmul.f32 %v2463, 18.0
    %v2545 = vmul.f32 %v2464, 18.0
    %v2546 = vmul.f32 %v2465, 18.0
    %v2547 = vmul.f32 %v2466, 18.0
    %v2548 = vmul.f32 %v2467, 18.0
    %v2549 = vmul.f32 %v2468, 18.0
    %v2550 = vmul.f32 %v2469, 18.0
    %v2551 = vmul.f32 %v2470, 18.0
    %v2552 = vmul.f32 %v2471, 18.0
    %v2553 = vmul.f32 %v2472, 18.0
    %v2554 = vmul.f32 %v2473, 18.0
    %v2555 = vmul.f32 %v2474, 18.0
    %v2556 = vmul.f32 %v2475, 18.0
    %v2557 = vmul.f32 %v2476, 18.0
    %v2558 = vmul.f32 %v2477, 18.0
    %v2559 = vmul.f32 %v2478, 18.0
    %v2560 = vmul.f32 %v2479, 18.0
    %v2561 = vmul.f32 %v2480, 18.0
    %v2562 = vmul.f32 %v2481, 18.0
    %v2563 = vmul.f32 %v2482, 18.0
    %v2564 = vmul.f32 %v2483, 18.0
    %v2565 = vmul.f32 %v2484, 18.0
    %v2566 = vmul.f32 %v2485, 18.0
    %v2567 = vmul.f32 %v2486, 18.0
    %v2568 = vmul.f32 %v2487, 18.0
    %v2569 = vmul.f32 %v2488, 18.0
    %v2570 = vmul.f32 %v2489, 18.0
    %v2571 = vmul.f32 %v2490, 18.0
    %v2572 = vmul.f32 %v2491, 18.0
    %v2573 = vmul.f32 %v2492, 18.0
    %v2574 = vmul.f32 %v2493, 18.0
    %v2575 = vmul.f32 %v2494, 18.0
    %v2576 = vmul.f32 %v2495, 18.0
    %v2577 = vmul.f32 %v2496, 18.0
    %v2578 = vmul.f32 %v2497, 18.0
    %v2579 = vmul.f32 %v2498, 18.0
    %v2580 = vmul.f32 %v2499, 18.0
    %v2581 = vmul.f32 %v2500, 18.0
    %v2582 = vmul.f32 %v2501, 18.0
    %v2583 = vmul.f32 %v2502, 18.0
    %v2584 = vmul.f32 %v2503, 18.0
    %v2585 = vmul.f32 %v2504, 18.0
    %v2586 = vmul.f32 %v2505, 18.0
    %v2587 = vsub.f32 %v2181, %v2506
    %v2588 = vsub.f32 %v2182, %v2507
    %v2589 = vsub.f32 %v2183, %v2508
    %v2590 = vsub.f32 %v2184, %v2509
    %v2591 = vsub.f32 %v2185, %v2510
    %v2592 = vsub.f32 %v2186, %v2511
    %v2593 = vsub.f32 %v2187, %v2512
    %v2594 = vsub.f32 %v2188, %v2513
    %v2595 = vsub.f32 %v2189, %v2514
    %v2596 = vsub.f32 %v2190, %v2515
    %v2597 = vsub.f32 %v2191, %v2516
    %v2598 = vsub.f32 %v2192, %v2517
    %v2599 = vsub.f32 %v2193, %v2518
    %v2600 = vsub.f32 %v2194, %v2519
    %v2601 = vsub.f32 %v2195, %v2520
    %v2602 = vsub.f32 %v2196, %v2521
    %v2603 = vsub.f32 %v2197, %v2522
    %v2604 = vsub.f32 %v2198, %v2523
    %v2605 = vsub.f32 %v2199, %v2524
    %v2606 = vsub.f32 %v2200, %v2525
    %v2607 = vsub.f32 %v2201, %v2526
    %v2608 = vsub.f32 %v2202, %v2527
    %v2609 = vsub.f32 %v2203, %v2528
    %v2610 = vsub.f32 %v2204, %v2529
    %v2611 = vsub.f32 %v2205, %v2530
    %v2612 = vsub.f32 %v2206, %v2531
    %v2613 = vsub.f32 %v2207, %v2532
    %v2614 = vsub.f32 %v2208, %v2533
    %v2615 = vsub.f32 %v2209, %v2534
    %v2616 = vsub.f32 %v2210, %v2535
    %v2617 = vsub.f32 %v2211, %v2536
    %v2618 = vsub.f32 %v2212, %v2537
    %v2619 = vsub.f32 %v2213, %v2538
    %v2620 = vsub.f32 %v2214, %v2539
    %v2621 = vsub.f32 %v2215, %v2540
    %v2622 = vsub.f32 %v2216, %v2541
    %v2623 = vsub.f32 %v2217, %v2542
    %v2624 = vsub.f32 %v2218, %v2543
    %v2625 = vsub.f32 %v2219, %v2544
    %v2626 = vsub.f32 %v2220, %v2545
    %v2627 = vsub.f32 %v2221, %v2546
    %v2628 = vsub.f32 %v2222, %v2547
    %v2629 = vsub.f32 %v2223, %v2548
    %v2630 = vsub.f32 %v2224, %v2549
    %v2631 = vsub.f32 %v2225, %v2550
    %v2632 = vsub.f32 %v2226, %v2551
    %v2633 = vsub.f32 %v2227, %v2552
    %v2634 = vsub.f32 %v2228, %v2553
    %v2635 = vsub.f32 %v2229, %v2554
    %v2636 = vsub.f32 %v2230, %v2555
    %v2637 = vsub.f32 %v2231, %v2556
    %v2638 = vsub.f32 %v2232, %v2557
    %v2639 = vsub.f32 %v2233, %v2558
    %v2640 = vsub.f32 %v2234, %v2559
    %v2641 = vsub.f32 %v2235, %v2560
    %v2642 = vsub.f32 %v2236, %v2561
    %v2643 = vsub.f32 %v2237, %v2562
    %v2644 = vsub.f32 %v2238, %v2563
    %v2645 = vsub.f32 %v2239, %v2564
    %v2646 = vsub.f32 %v2240, %v2565
    %v2647 = vsub.f32 %v2241, %v2566
    %v2648 = vsub.f32 %v2242, %v2567
    %v2649 = vsub.f32 %v2243, %v2568
    %v2650 = vsub.f32 %v2244, %v2569
    %v2651 = vsub.f32 %v2245, %v2570
    %v2652 = vsub.f32 %v2246, %v2571
    %v2653 = vsub.f32 %v2247, %v2572
    %v2654 = vsub.f32 %v2248, %v2573
    %v2655 = vsub.f32 %v2249, %v2574
    %v2656 = vsub.f32 %v2250, %v2575
    %v2657 = vsub.f32 %v2251, %v2576
    %v2658 = vsub.f32 %v2252, %v2577
    %v2659 = vsub.f32 %v2253, %v2578
    %v2660 = vsub.f32 %v2254, %v2579
    %v2661 = vsub.f32 %v2255, %v2580
    %v2662 = vsub.f32 %v2256, %v2581
    %v2663 = vsub.f32 %v2257, %v2582
    %v2664 = vsub.f32 %v2258, %v2583
    %v2665 = vsub.f32 %v2259, %v2584
    %v2666 = vsub.f32 %v2260, %v2585
    %v2667 = vsub.f32 %v2261, %v2586
    %vm2668 = vcmp.ge.f32.partialorder %v2425, 1.0
    %vm2669 = vcmp.ge.f32.partialorder %v2426, 1.0
    %vm2670 = vcmp.ge.f32.partialorder %v2427, 1.0
    %vm2671 = vcmp.ge.f32.partialorder %v2428, 1.0
    %vm2672 = vcmp.ge.f32.partialorder %v2429, 1.0
    %vm2673 = vcmp.ge.f32.partialorder %v2430, 1.0
    %vm2674 = vcmp.ge.f32.partialorder %v2431, 1.0
    %vm2675 = vcmp.ge.f32.partialorder %v2432, 1.0
    %vm2676 = vcmp.ge.f32.partialorder %v2433, 1.0
    %vm2677 = vcmp.ge.f32.partialorder %v2434, 1.0
    %vm2678 = vcmp.ge.f32.partialorder %v2435, 1.0
    %vm2679 = vcmp.ge.f32.partialorder %v2436, 1.0
    %vm2680 = vcmp.ge.f32.partialorder %v2437, 1.0
    %vm2681 = vcmp.ge.f32.partialorder %v2438, 1.0
    %vm2682 = vcmp.ge.f32.partialorder %v2439, 1.0
    %vm2683 = vcmp.ge.f32.partialorder %v2440, 1.0
    %vm2684 = vcmp.ge.f32.partialorder %v2441, 1.0
    %vm2685 = vcmp.ge.f32.partialorder %v2442, 1.0
    %vm2686 = vcmp.ge.f32.partialorder %v2443, 1.0
    %vm2687 = vcmp.ge.f32.partialorder %v2444, 1.0
    %vm2688 = vcmp.ge.f32.partialorder %v2445, 1.0
    %vm2689 = vcmp.ge.f32.partialorder %v2446, 1.0
    %vm2690 = vcmp.ge.f32.partialorder %v2447, 1.0
    %vm2691 = vcmp.ge.f32.partialorder %v2448, 1.0
    %vm2692 = vcmp.ge.f32.partialorder %v2449, 1.0
    %vm2693 = vcmp.ge.f32.partialorder %v2450, 1.0
    %vm2694 = vcmp.ge.f32.partialorder %v2451, 1.0
    %vm2695 = vcmp.ge.f32.partialorder %v2452, 1.0
    %vm2696 = vcmp.ge.f32.partialorder %v2453, 1.0
    %vm2697 = vcmp.ge.f32.partialorder %v2454, 1.0
    %vm2698 = vcmp.ge.f32.partialorder %v2455, 1.0
    %vm2699 = vcmp.ge.f32.partialorder %v2456, 1.0
    %vm2700 = vcmp.ge.f32.partialorder %v2457, 1.0
    %vm2701 = vcmp.ge.f32.partialorder %v2458, 1.0
    %vm2702 = vcmp.ge.f32.partialorder %v2459, 1.0
    %vm2703 = vcmp.ge.f32.partialorder %v2460, 1.0
    %vm2704 = vcmp.ge.f32.partialorder %v2461, 1.0
    %vm2705 = vcmp.ge.f32.partialorder %v2462, 1.0
    %vm2706 = vcmp.ge.f32.partialorder %v2463, 1.0
    %vm2707 = vcmp.ge.f32.partialorder %v2464, 1.0
    %vm2708 = vcmp.ge.f32.partialorder %v2465, 1.0
    %vm2709 = vcmp.ge.f32.partialorder %v2466, 1.0
    %vm2710 = vcmp.ge.f32.partialorder %v2467, 1.0
    %vm2711 = vcmp.ge.f32.partialorder %v2468, 1.0
    %vm2712 = vcmp.ge.f32.partialorder %v2469, 1.0
    %vm2713 = vcmp.ge.f32.partialorder %v2470, 1.0
    %vm2714 = vcmp.ge.f32.partialorder %v2471, 1.0
    %vm2715 = vcmp.ge.f32.partialorder %v2472, 1.0
    %vm2716 = vcmp.ge.f32.partialorder %v2473, 1.0
    %vm2717 = vcmp.ge.f32.partialorder %v2474, 1.0
    %vm2718 = vcmp.ge.f32.partialorder %v2475, 1.0
    %vm2719 = vcmp.ge.f32.partialorder %v2476, 1.0
    %vm2720 = vcmp.ge.f32.partialorder %v2477, 1.0
    %vm2721 = vcmp.ge.f32.partialorder %v2478, 1.0
    %vm2722 = vcmp.ge.f32.partialorder %v2479, 1.0
    %vm2723 = vcmp.ge.f32.partialorder %v2480, 1.0
    %vm2724 = vcmp.ge.f32.partialorder %v2481, 1.0
    %vm2725 = vcmp.ge.f32.partialorder %v2482, 1.0
    %vm2726 = vcmp.ge.f32.partialorder %v2483, 1.0
    %vm2727 = vcmp.ge.f32.partialorder %v2484, 1.0
    %vm2728 = vcmp.ge.f32.partialorder %v2485, 1.0
    %vm2729 = vcmp.ge.f32.partialorder %v2486, 1.0
    %vm2730 = vcmp.ge.f32.partialorder %v2487, 1.0
    %vm2731 = vcmp.ge.f32.partialorder %v2488, 1.0
    %vm2732 = vcmp.ge.f32.partialorder %v2489, 1.0
    %vm2733 = vcmp.ge.f32.partialorder %v2490, 1.0
    %vm2734 = vcmp.ge.f32.partialorder %v2491, 1.0
    %vm2735 = vcmp.ge.f32.partialorder %v2492, 1.0
    %vm2736 = vcmp.ge.f32.partialorder %v2493, 1.0
    %vm2737 = vcmp.ge.f32.partialorder %v2494, 1.0
    %vm2738 = vcmp.ge.f32.partialorder %v2495, 1.0
    %vm2739 = vcmp.ge.f32.partialorder %v2496, 1.0
    %vm2740 = vcmp.ge.f32.partialorder %v2497, 1.0
    %vm2741 = vcmp.ge.f32.partialorder %v2498, 1.0
    %vm2742 = vcmp.ge.f32.partialorder %v2499, 1.0
    %vm2743 = vcmp.ge.f32.partialorder %v2500, 1.0
    %vm2744 = vcmp.ge.f32.partialorder %v2501, 1.0
    %vm2745 = vcmp.ge.f32.partialorder %v2502, 1.0
    %vm2746 = vcmp.ge.f32.partialorder %v2503, 1.0
    %vm2747 = vcmp.ge.f32.partialorder %v2504, 1.0
    %vm2748 = vcmp.ge.f32.partialorder %v2505, 1.0
    %vm2749 = vcmp.le.f32.partialorder %v2425, 16.0
    %vm2750 = vcmp.le.f32.partialorder %v2426, 16.0
    %vm2751 = vcmp.le.f32.partialorder %v2427, 16.0
    %vm2752 = vcmp.le.f32.partialorder %v2428, 16.0
    %vm2753 = vcmp.le.f32.partialorder %v2429, 16.0
    %vm2754 = vcmp.le.f32.partialorder %v2430, 16.0
    %vm2755 = vcmp.le.f32.partialorder %v2431, 16.0
    %vm2756 = vcmp.le.f32.partialorder %v2432, 16.0
    %vm2757 = vcmp.le.f32.partialorder %v2433, 16.0
    %vm2758 = vcmp.le.f32.partialorder %v2434, 16.0
    %vm2759 = vcmp.le.f32.partialorder %v2435, 16.0
    %vm2760 = vcmp.le.f32.partialorder %v2436, 16.0
    %vm2761 = vcmp.le.f32.partialorder %v2437, 16.0
    %vm2762 = vcmp.le.f32.partialorder %v2438, 16.0
    %vm2763 = vcmp.le.f32.partialorder %v2439, 16.0
    %vm2764 = vcmp.le.f32.partialorder %v2440, 16.0
    %vm2765 = vcmp.le.f32.partialorder %v2441, 16.0
    %vm2766 = vcmp.le.f32.partialorder %v2442, 16.0
    %vm2767 = vcmp.le.f32.partialorder %v2443, 16.0
    %vm2768 = vcmp.le.f32.partialorder %v2444, 16.0
    %vm2769 = vcmp.le.f32.partialorder %v2445, 16.0
    %vm2770 = vcmp.le.f32.partialorder %v2446, 16.0
    %vm2771 = vcmp.le.f32.partialorder %v2447, 16.0
    %vm2772 = vcmp.le.f32.partialorder %v2448, 16.0
    %vm2773 = vcmp.le.f32.partialorder %v2449, 16.0
    %vm2774 = vcmp.le.f32.partialorder %v2450, 16.0
    %vm2775 = vcmp.le.f32.partialorder %v2451, 16.0
    %vm2776 = vcmp.le.f32.partialorder %v2452, 16.0
    %vm2777 = vcmp.le.f32.partialorder %v2453, 16.0
    %vm2778 = vcmp.le.f32.partialorder %v2454, 16.0
    %vm2779 = vcmp.le.f32.partialorder %v2455, 16.0
    %vm2780 = vcmp.le.f32.partialorder %v2456, 16.0
    %vm2781 = vcmp.le.f32.partialorder %v2457, 16.0
    %vm2782 = vcmp.le.f32.partialorder %v2458, 16.0
    %vm2783 = vcmp.le.f32.partialorder %v2459, 16.0
    %vm2784 = vcmp.le.f32.partialorder %v2460, 16.0
    %vm2785 = vcmp.le.f32.partialorder %v2461, 16.0
    %vm2786 = vcmp.le.f32.partialorder %v2462, 16.0
    %vm2787 = vcmp.le.f32.partialorder %v2463, 16.0
    %vm2788 = vcmp.le.f32.partialorder %v2464, 16.0
    %vm2789 = vcmp.le.f32.partialorder %v2465, 16.0
    %vm2790 = vcmp.le.f32.partialorder %v2466, 16.0
    %vm2791 = vcmp.le.f32.partialorder %v2467, 16.0
    %vm2792 = vcmp.le.f32.partialorder %v2468, 16.0
    %vm2793 = vcmp.le.f32.partialorder %v2469, 16.0
    %vm2794 = vcmp.le.f32.partialorder %v2470, 16.0
    %vm2795 = vcmp.le.f32.partialorder %v2471, 16.0
    %vm2796 = vcmp.le.f32.partialorder %v2472, 16.0
    %vm2797 = vcmp.le.f32.partialorder %v2473, 16.0
    %vm2798 = vcmp.le.f32.partialorder %v2474, 16.0
    %vm2799 = vcmp.le.f32.partialorder %v2475, 16.0
    %vm2800 = vcmp.le.f32.partialorder %v2476, 16.0
    %vm2801 = vcmp.le.f32.partialorder %v2477, 16.0
    %vm2802 = vcmp.le.f32.partialorder %v2478, 16.0
    %vm2803 = vcmp.le.f32.partialorder %v2479, 16.0
    %vm2804 = vcmp.le.f32.partialorder %v2480, 16.0
    %vm2805 = vcmp.le.f32.partialorder %v2481, 16.0
    %vm2806 = vcmp.le.f32.partialorder %v2482, 16.0
    %vm2807 = vcmp.le.f32.partialorder %v2483, 16.0
    %vm2808 = vcmp.le.f32.partialorder %v2484, 16.0
    %vm2809 = vcmp.le.f32.partialorder %v2485, 16.0
    %vm2810 = vcmp.le.f32.partialorder %v2486, 16.0
    %vm2811 = vcmp.le.f32.partialorder %v2487, 16.0
    %vm2812 = vcmp.le.f32.partialorder %v2488, 16.0
    %vm2813 = vcmp.le.f32.partialorder %v2489, 16.0
    %vm2814 = vcmp.le.f32.partialorder %v2490, 16.0
    %vm2815 = vcmp.le.f32.partialorder %v2491, 16.0
    %vm2816 = vcmp.le.f32.partialorder %v2492, 16.0
    %vm2817 = vcmp.le.f32.partialorder %v2493, 16.0
    %vm2818 = vcmp.le.f32.partialorder %v2494, 16.0
    %vm2819 = vcmp.le.f32.partialorder %v2495, 16.0
    %vm2820 = vcmp.le.f32.partialorder %v2496, 16.0
    %vm2821 = vcmp.le.f32.partialorder %v2497, 16.0
    %vm2822 = vcmp.le.f32.partialorder %v2498, 16.0
    %vm2823 = vcmp.le.f32.partialorder %v2499, 16.0
    %vm2824 = vcmp.le.f32.partialorder %v2500, 16.0
    %vm2825 = vcmp.le.f32.partialorder %v2501, 16.0
    %vm2826 = vcmp.le.f32.partialorder %v2502, 16.0
    %vm2827 = vcmp.le.f32.partialorder %v2503, 16.0
    %vm2828 = vcmp.le.f32.partialorder %v2504, 16.0
    %vm2829 = vcmp.le.f32.partialorder %v2505, 16.0
    %vm2830 = vmand %vm2668, %vm2749
    %vm2831 = vmand %vm2669, %vm2750
    %vm2832 = vmand %vm2670, %vm2751
    %vm2833 = vmand %vm2671, %vm2752
    %vm2834 = vmand %vm2672, %vm2753
    %vm2835 = vmand %vm2673, %vm2754
    %vm2836 = vmand %vm2674, %vm2755
    %vm2837 = vmand %vm2675, %vm2756
    %vm2838 = vmand %vm2676, %vm2757
    %vm2839 = vmand %vm2677, %vm2758
    %vm2840 = vmand %vm2678, %vm2759
    %vm2841 = vmand %vm2679, %vm2760
    %vm2842 = vmand %vm2680, %vm2761
    %vm2843 = vmand %vm2681, %vm2762
    %vm2844 = vmand %vm2682, %vm2763
    %vm2845 = vmand %vm2683, %vm2764
    %vm2846 = vmand %vm2684, %vm2765
    %vm2847 = vmand %vm2685, %vm2766
    %vm2848 = vmand %vm2686, %vm2767
    %vm2849 = vmand %vm2687, %vm2768
    %vm2850 = vmand %vm2688, %vm2769
    %vm2851 = vmand %vm2689, %vm2770
    %vm2852 = vmand %vm2690, %vm2771
    %vm2853 = vmand %vm2691, %vm2772
    %vm2854 = vmand %vm2692, %vm2773
    %vm2855 = vmand %vm2693, %vm2774
    %vm2856 = vmand %vm2694, %vm2775
    %vm2857 = vmand %vm2695, %vm2776
    %vm2858 = vmand %vm2696, %vm2777
    %vm2859 = vmand %vm2697, %vm2778
    %vm2860 = vmand %vm2698, %vm2779
    %vm2861 = vmand %vm2699, %vm2780
    %vm2862 = vmand %vm2700, %vm2781
    %vm2863 = vmand %vm2701, %vm2782
    %vm2864 = vmand %vm2702, %vm2783
    %vm2865 = vmand %vm2703, %vm2784
    %vm2866 = vmand %vm2704, %vm2785
    %vm2867 = vmand %vm2705, %vm2786
    %vm2868 = vmand %vm2706, %vm2787
    %vm2869 = vmand %vm2707, %vm2788
    %vm2870 = vmand %vm2708, %vm2789
    %vm2871 = vmand %vm2709, %vm2790
    %vm2872 = vmand %vm2710, %vm2791
    %vm2873 = vmand %vm2711, %vm2792
    %vm2874 = vmand %vm2712, %vm2793
    %vm2875 = vmand %vm2713, %vm2794
    %vm2876 = vmand %vm2714, %vm2795
    %vm2877 = vmand %vm2715, %vm2796
    %vm2878 = vmand %vm2716, %vm2797
    %vm2879 = vmand %vm2717, %vm2798
    %vm2880 = vmand %vm2718, %vm2799
    %vm2881 = vmand %vm2719, %vm2800
    %vm2882 = vmand %vm2720, %vm2801
    %vm2883 = vmand %vm2721, %vm2802
    %vm2884 = vmand %vm2722, %vm2803
    %vm2885 = vmand %vm2723, %vm2804
    %vm2886 = vmand %vm2724, %vm2805
    %vm2887 = vmand %vm2725, %vm2806
    %vm2888 = vmand %vm2726, %vm2807
    %vm2889 = vmand %vm2727, %vm2808
    %vm2890 = vmand %vm2728, %vm2809
    %vm2891 = vmand %vm2729, %vm2810
    %vm2892 = vmand %vm2730, %vm2811
    %vm2893 = vmand %vm2731, %vm2812
    %vm2894 = vmand %vm2732, %vm2813
    %vm2895 = vmand %vm2733, %vm2814
    %vm2896 = vmand %vm2734, %vm2815
    %vm2897 = vmand %vm2735, %vm2816
    %vm2898 = vmand %vm2736, %vm2817
    %vm2899 = vmand %vm2737, %vm2818
    %vm2900 = vmand %vm2738, %vm2819
    %vm2901 = vmand %vm2739, %vm2820
    %vm2902 = vmand %vm2740, %vm2821
    %vm2903 = vmand %vm2741, %vm2822
    %vm2904 = vmand %vm2742, %vm2823
    %vm2905 = vmand %vm2743, %vm2824
    %vm2906 = vmand %vm2744, %vm2825
    %vm2907 = vmand %vm2745, %vm2826
    %vm2908 = vmand %vm2746, %vm2827
    %vm2909 = vmand %vm2747, %vm2828
    %vm2910 = vmand %vm2748, %vm2829
    %vm2911 = vcmp.ge.f32.partialorder %v2587, 1.0
    %vm2912 = vcmp.ge.f32.partialorder %v2588, 1.0
    %vm2913 = vcmp.ge.f32.partialorder %v2589, 1.0
    %vm2914 = vcmp.ge.f32.partialorder %v2590, 1.0
    %vm2915 = vcmp.ge.f32.partialorder %v2591, 1.0
    %vm2916 = vcmp.ge.f32.partialorder %v2592, 1.0
    %vm2917 = vcmp.ge.f32.partialorder %v2593, 1.0
    %vm2918 = vcmp.ge.f32.partialorder %v2594, 1.0
    %vm2919 = vcmp.ge.f32.partialorder %v2595, 1.0
    %vm2920 = vcmp.ge.f32.partialorder %v2596, 1.0
    %vm2921 = vcmp.ge.f32.partialorder %v2597, 1.0
    %vm2922 = vcmp.ge.f32.partialorder %v2598, 1.0
    %vm2923 = vcmp.ge.f32.partialorder %v2599, 1.0
    %vm2924 = vcmp.ge.f32.partialorder %v2600, 1.0
    %vm2925 = vcmp.ge.f32.partialorder %v2601, 1.0
    %vm2926 = vcmp.ge.f32.partialorder %v2602, 1.0
    %vm2927 = vcmp.ge.f32.partialorder %v2603, 1.0
    %vm2928 = vcmp.ge.f32.partialorder %v2604, 1.0
    %vm2929 = vcmp.ge.f32.partialorder %v2605, 1.0
    %vm2930 = vcmp.ge.f32.partialorder %v2606, 1.0
    %vm2931 = vcmp.ge.f32.partialorder %v2607, 1.0
    %vm2932 = vcmp.ge.f32.partialorder %v2608, 1.0
    %vm2933 = vcmp.ge.f32.partialorder %v2609, 1.0
    %vm2934 = vcmp.ge.f32.partialorder %v2610, 1.0
    %vm2935 = vcmp.ge.f32.partialorder %v2611, 1.0
    %vm2936 = vcmp.ge.f32.partialorder %v2612, 1.0
    %vm2937 = vcmp.ge.f32.partialorder %v2613, 1.0
    %vm2938 = vcmp.ge.f32.partialorder %v2614, 1.0
    %vm2939 = vcmp.ge.f32.partialorder %v2615, 1.0
    %vm2940 = vcmp.ge.f32.partialorder %v2616, 1.0
    %vm2941 = vcmp.ge.f32.partialorder %v2617, 1.0
    %vm2942 = vcmp.ge.f32.partialorder %v2618, 1.0
    %vm2943 = vcmp.ge.f32.partialorder %v2619, 1.0
    %vm2944 = vcmp.ge.f32.partialorder %v2620, 1.0
    %vm2945 = vcmp.ge.f32.partialorder %v2621, 1.0
    %vm2946 = vcmp.ge.f32.partialorder %v2622, 1.0
    %vm2947 = vcmp.ge.f32.partialorder %v2623, 1.0
    %vm2948 = vcmp.ge.f32.partialorder %v2624, 1.0
    %vm2949 = vcmp.ge.f32.partialorder %v2625, 1.0
    %vm2950 = vcmp.ge.f32.partialorder %v2626, 1.0
    %vm2951 = vcmp.ge.f32.partialorder %v2627, 1.0
    %vm2952 = vcmp.ge.f32.partialorder %v2628, 1.0
    %vm2953 = vcmp.ge.f32.partialorder %v2629, 1.0
    %vm2954 = vcmp.ge.f32.partialorder %v2630, 1.0
    %vm2955 = vcmp.ge.f32.partialorder %v2631, 1.0
    %vm2956 = vcmp.ge.f32.partialorder %v2632, 1.0
    %vm2957 = vcmp.ge.f32.partialorder %v2633, 1.0
    %vm2958 = vcmp.ge.f32.partialorder %v2634, 1.0
    %vm2959 = vcmp.ge.f32.partialorder %v2635, 1.0
    %vm2960 = vcmp.ge.f32.partialorder %v2636, 1.0
    %vm2961 = vcmp.ge.f32.partialorder %v2637, 1.0
    %vm2962 = vcmp.ge.f32.partialorder %v2638, 1.0
    %vm2963 = vcmp.ge.f32.partialorder %v2639, 1.0
    %vm2964 = vcmp.ge.f32.partialorder %v2640, 1.0
    %vm2965 = vcmp.ge.f32.partialorder %v2641, 1.0
    %vm2966 = vcmp.ge.f32.partialorder %v2642, 1.0
    %vm2967 = vcmp.ge.f32.partialorder %v2643, 1.0
    %vm2968 = vcmp.ge.f32.partialorder %v2644, 1.0
    %vm2969 = vcmp.ge.f32.partialorder %v2645, 1.0
    %vm2970 = vcmp.ge.f32.partialorder %v2646, 1.0
    %vm2971 = vcmp.ge.f32.partialorder %v2647, 1.0
    %vm2972 = vcmp.ge.f32.partialorder %v2648, 1.0
    %vm2973 = vcmp.ge.f32.partialorder %v2649, 1.0
    %vm2974 = vcmp.ge.f32.partialorder %v2650, 1.0
    %vm2975 = vcmp.ge.f32.partialorder %v2651, 1.0
    %vm2976 = vcmp.ge.f32.partialorder %v2652, 1.0
    %vm2977 = vcmp.ge.f32.partialorder %v2653, 1.0
    %vm2978 = vcmp.ge.f32.partialorder %v2654, 1.0
    %vm2979 = vcmp.ge.f32.partialorder %v2655, 1.0
    %vm2980 = vcmp.ge.f32.partialorder %v2656, 1.0
    %vm2981 = vcmp.ge.f32.partialorder %v2657, 1.0
    %vm2982 = vcmp.ge.f32.partialorder %v2658, 1.0
    %vm2983 = vcmp.ge.f32.partialorder %v2659, 1.0
    %vm2984 = vcmp.ge.f32.partialorder %v2660, 1.0
    %vm2985 = vcmp.ge.f32.partialorder %v2661, 1.0
    %vm2986 = vcmp.ge.f32.partialorder %v2662, 1.0
    %vm2987 = vcmp.ge.f32.partialorder %v2663, 1.0
    %vm2988 = vcmp.ge.f32.partialorder %v2664, 1.0
    %vm2989 = vcmp.ge.f32.partialorder %v2665, 1.0
    %vm2990 = vcmp.ge.f32.partialorder %v2666, 1.0
    %vm2991 = vcmp.ge.f32.partialorder %v2667, 1.0
    %vm2992 = vmand %vm2830, %vm2911
    %vm2993 = vmand %vm2831, %vm2912
    %vm2994 = vmand %vm2832, %vm2913
    %vm2995 = vmand %vm2833, %vm2914
    %vm2996 = vmand %vm2834, %vm2915
    %vm2997 = vmand %vm2835, %vm2916
    %vm2998 = vmand %vm2836, %vm2917
    %vm2999 = vmand %vm2837, %vm2918
    %vm3000 = vmand %vm2838, %vm2919
    %vm3001 = vmand %vm2839, %vm2920
    %vm3002 = vmand %vm2840, %vm2921
    %vm3003 = vmand %vm2841, %vm2922
    %vm3004 = vmand %vm2842, %vm2923
    %vm3005 = vmand %vm2843, %vm2924
    %vm3006 = vmand %vm2844, %vm2925
    %vm3007 = vmand %vm2845, %vm2926
    %vm3008 = vmand %vm2846, %vm2927
    %vm3009 = vmand %vm2847, %vm2928
    %vm3010 = vmand %vm2848, %vm2929
    %vm3011 = vmand %vm2849, %vm2930
    %vm3012 = vmand %vm2850, %vm2931
    %vm3013 = vmand %vm2851, %vm2932
    %vm3014 = vmand %vm2852, %vm2933
    %vm3015 = vmand %vm2853, %vm2934
    %vm3016 = vmand %vm2854, %vm2935
    %vm3017 = vmand %vm2855, %vm2936
    %vm3018 = vmand %vm2856, %vm2937
    %vm3019 = vmand %vm2857, %vm2938
    %vm3020 = vmand %vm2858, %vm2939
    %vm3021 = vmand %vm2859, %vm2940
    %vm3022 = vmand %vm2860, %vm2941
    %vm3023 = vmand %vm2861, %vm2942
    %vm3024 = vmand %vm2862, %vm2943
    %vm3025 = vmand %vm2863, %vm2944
    %vm3026 = vmand %vm2864, %vm2945
    %vm3027 = vmand %vm2865, %vm2946
    %vm3028 = vmand %vm2866, %vm2947
    %vm3029 = vmand %vm2867, %vm2948
    %vm3030 = vmand %vm2868, %vm2949
    %vm3031 = vmand %vm2869, %vm2950
    %vm3032 = vmand %vm2870, %vm2951
    %vm3033 = vmand %vm2871, %vm2952
    %vm3034 = vmand %vm2872, %vm2953
    %vm3035 = vmand %vm2873, %vm2954
    %vm3036 = vmand %vm2874, %vm2955
    %vm3037 = vmand %vm2875, %vm2956
    %vm3038 = vmand %vm2876, %vm2957
    %vm3039 = vmand %vm2877, %vm2958
    %vm3040 = vmand %vm2878, %vm2959
    %vm3041 = vmand %vm2879, %vm2960
    %vm3042 = vmand %vm2880, %vm2961
    %vm3043 = vmand %vm2881, %vm2962
    %vm3044 = vmand %vm2882, %vm2963
    %vm3045 = vmand %vm2883, %vm2964
    %vm3046 = vmand %vm2884, %vm2965
    %vm3047 = vmand %vm2885, %vm2966
    %vm3048 = vmand %vm2886, %vm2967
    %vm3049 = vmand %vm2887, %vm2968
    %vm3050 = vmand %vm2888, %vm2969
    %vm3051 = vmand %vm2889, %vm2970
    %vm3052 = vmand %vm2890, %vm2971
    %vm3053 = vmand %vm2891, %vm2972
    %vm3054 = vmand %vm2892, %vm2973
    %vm3055 = vmand %vm2893, %vm2974
    %vm3056 = vmand %vm2894, %vm2975
    %vm3057 = vmand %vm2895, %vm2976
    %vm3058 = vmand %vm2896, %vm2977
    %vm3059 = vmand %vm2897, %vm2978
    %vm3060 = vmand %vm2898, %vm2979
    %vm3061 = vmand %vm2899, %vm2980
    %vm3062 = vmand %vm2900, %vm2981
    %vm3063 = vmand %vm2901, %vm2982
    %vm3064 = vmand %vm2902, %vm2983
    %vm3065 = vmand %vm2903, %vm2984
    %vm3066 = vmand %vm2904, %vm2985
    %vm3067 = vmand %vm2905, %vm2986
    %vm3068 = vmand %vm2906, %vm2987
    %vm3069 = vmand %vm2907, %vm2988
    %vm3070 = vmand %vm2908, %vm2989
    %vm3071 = vmand %vm2909, %vm2990
    %vm3072 = vmand %vm2910, %vm2991
    %vm3073 = vcmp.le.f32.partialorder %v2587, 16.0
    %vm3074 = vcmp.le.f32.partialorder %v2588, 16.0
    %vm3075 = vcmp.le.f32.partialorder %v2589, 16.0
    %vm3076 = vcmp.le.f32.partialorder %v2590, 16.0
    %vm3077 = vcmp.le.f32.partialorder %v2591, 16.0
    %vm3078 = vcmp.le.f32.partialorder %v2592, 16.0
    %vm3079 = vcmp.le.f32.partialorder %v2593, 16.0
    %vm3080 = vcmp.le.f32.partialorder %v2594, 16.0
    %vm3081 = vcmp.le.f32.partialorder %v2595, 16.0
    %vm3082 = vcmp.le.f32.partialorder %v2596, 16.0
    %vm3083 = vcmp.le.f32.partialorder %v2597, 16.0
    %vm3084 = vcmp.le.f32.partialorder %v2598, 16.0
    %vm3085 = vcmp.le.f32.partialorder %v2599, 16.0
    %vm3086 = vcmp.le.f32.partialorder %v2600, 16.0
    %vm3087 = vcmp.le.f32.partialorder %v2601, 16.0
    %vm3088 = vcmp.le.f32.partialorder %v2602, 16.0
    %vm3089 = vcmp.le.f32.partialorder %v2603, 16.0
    %vm3090 = vcmp.le.f32.partialorder %v2604, 16.0
    %vm3091 = vcmp.le.f32.partialorder %v2605, 16.0
    %vm3092 = vcmp.le.f32.partialorder %v2606, 16.0
    %vm3093 = vcmp.le.f32.partialorder %v2607, 16.0
    %vm3094 = vcmp.le.f32.partialorder %v2608, 16.0
    %vm3095 = vcmp.le.f32.partialorder %v2609, 16.0
    %vm3096 = vcmp.le.f32.partialorder %v2610, 16.0
    %vm3097 = vcmp.le.f32.partialorder %v2611, 16.0
    %vm3098 = vcmp.le.f32.partialorder %v2612, 16.0
    %vm3099 = vcmp.le.f32.partialorder %v2613, 16.0
    %vm3100 = vcmp.le.f32.partialorder %v2614, 16.0
    %vm3101 = vcmp.le.f32.partialorder %v2615, 16.0
    %vm3102 = vcmp.le.f32.partialorder %v2616, 16.0
    %vm3103 = vcmp.le.f32.partialorder %v2617, 16.0
    %vm3104 = vcmp.le.f32.partialorder %v2618, 16.0
    %vm3105 = vcmp.le.f32.partialorder %v2619, 16.0
    %vm3106 = vcmp.le.f32.partialorder %v2620, 16.0
    %vm3107 = vcmp.le.f32.partialorder %v2621, 16.0
    %vm3108 = vcmp.le.f32.partialorder %v2622, 16.0
    %vm3109 = vcmp.le.f32.partialorder %v2623, 16.0
    %vm3110 = vcmp.le.f32.partialorder %v2624, 16.0
    %vm3111 = vcmp.le.f32.partialorder %v2625, 16.0
    %vm3112 = vcmp.le.f32.partialorder %v2626, 16.0
    %vm3113 = vcmp.le.f32.partialorder %v2627, 16.0
    %vm3114 = vcmp.le.f32.partialorder %v2628, 16.0
    %vm3115 = vcmp.le.f32.partialorder %v2629, 16.0
    %vm3116 = vcmp.le.f32.partialorder %v2630, 16.0
    %vm3117 = vcmp.le.f32.partialorder %v2631, 16.0
    %vm3118 = vcmp.le.f32.partialorder %v2632, 16.0
    %vm3119 = vcmp.le.f32.partialorder %v2633, 16.0
    %vm3120 = vcmp.le.f32.partialorder %v2634, 16.0
    %vm3121 = vcmp.le.f32.partialorder %v2635, 16.0
    %vm3122 = vcmp.le.f32.partialorder %v2636, 16.0
    %vm3123 = vcmp.le.f32.partialorder %v2637, 16.0
    %vm3124 = vcmp.le.f32.partialorder %v2638, 16.0
    %vm3125 = vcmp.le.f32.partialorder %v2639, 16.0
    %vm3126 = vcmp.le.f32.partialorder %v2640, 16.0
    %vm3127 = vcmp.le.f32.partialorder %v2641, 16.0
    %vm3128 = vcmp.le.f32.partialorder %v2642, 16.0
    %vm3129 = vcmp.le.f32.partialorder %v2643, 16.0
    %vm3130 = vcmp.le.f32.partialorder %v2644, 16.0
    %vm3131 = vcmp.le.f32.partialorder %v2645, 16.0
    %vm3132 = vcmp.le.f32.partialorder %v2646, 16.0
    %vm3133 = vcmp.le.f32.partialorder %v2647, 16.0
    %vm3134 = vcmp.le.f32.partialorder %v2648, 16.0
    %vm3135 = vcmp.le.f32.partialorder %v2649, 16.0
    %vm3136 = vcmp.le.f32.partialorder %v2650, 16.0
    %vm3137 = vcmp.le.f32.partialorder %v2651, 16.0
    %vm3138 = vcmp.le.f32.partialorder %v2652, 16.0
    %vm3139 = vcmp.le.f32.partialorder %v2653, 16.0
    %vm3140 = vcmp.le.f32.partialorder %v2654, 16.0
    %vm3141 = vcmp.le.f32.partialorder %v2655, 16.0
    %vm3142 = vcmp.le.f32.partialorder %v2656, 16.0
    %vm3143 = vcmp.le.f32.partialorder %v2657, 16.0
    %vm3144 = vcmp.le.f32.partialorder %v2658, 16.0
    %vm3145 = vcmp.le.f32.partialorder %v2659, 16.0
    %vm3146 = vcmp.le.f32.partialorder %v2660, 16.0
    %vm3147 = vcmp.le.f32.partialorder %v2661, 16.0
    %vm3148 = vcmp.le.f32.partialorder %v2662, 16.0
    %vm3149 = vcmp.le.f32.partialorder %v2663, 16.0
    %vm3150 = vcmp.le.f32.partialorder %v2664, 16.0
    %vm3151 = vcmp.le.f32.partialorder %v2665, 16.0
    %vm3152 = vcmp.le.f32.partialorder %v2666, 16.0
    %vm3153 = vcmp.le.f32.partialorder %v2667, 16.0
    %vm3154 = vmand %vm2992, %vm3073
    %vm3155 = vmand %vm2993, %vm3074
    %vm3156 = vmand %vm2994, %vm3075
    %vm3157 = vmand %vm2995, %vm3076
    %vm3158 = vmand %vm2996, %vm3077
    %vm3159 = vmand %vm2997, %vm3078
    %vm3160 = vmand %vm2998, %vm3079
    %vm3161 = vmand %vm2999, %vm3080
    %vm3162 = vmand %vm3000, %vm3081
    %vm3163 = vmand %vm3001, %vm3082
    %vm3164 = vmand %vm3002, %vm3083
    %vm3165 = vmand %vm3003, %vm3084
    %vm3166 = vmand %vm3004, %vm3085
    %vm3167 = vmand %vm3005, %vm3086
    %vm3168 = vmand %vm3006, %vm3087
    %vm3169 = vmand %vm3007, %vm3088
    %vm3170 = vmand %vm3008, %vm3089
    %vm3171 = vmand %vm3009, %vm3090
    %vm3172 = vmand %vm3010, %vm3091
    %vm3173 = vmand %vm3011, %vm3092
    %vm3174 = vmand %vm3012, %vm3093
    %vm3175 = vmand %vm3013, %vm3094
    %vm3176 = vmand %vm3014, %vm3095
    %vm3177 = vmand %vm3015, %vm3096
    %vm3178 = vmand %vm3016, %vm3097
    %vm3179 = vmand %vm3017, %vm3098
    %vm3180 = vmand %vm3018, %vm3099
    %vm3181 = vmand %vm3019, %vm3100
    %vm3182 = vmand %vm3020, %vm3101
    %vm3183 = vmand %vm3021, %vm3102
    %vm3184 = vmand %vm3022, %vm3103
    %vm3185 = vmand %vm3023, %vm3104
    %vm3186 = vmand %vm3024, %vm3105
    %vm3187 = vmand %vm3025, %vm3106
    %vm3188 = vmand %vm3026, %vm3107
    %vm3189 = vmand %vm3027, %vm3108
    %vm3190 = vmand %vm3028, %vm3109
    %vm3191 = vmand %vm3029, %vm3110
    %vm3192 = vmand %vm3030, %vm3111
    %vm3193 = vmand %vm3031, %vm3112
    %vm3194 = vmand %vm3032, %vm3113
    %vm3195 = vmand %vm3033, %vm3114
    %vm3196 = vmand %vm3034, %vm3115
    %vm3197 = vmand %vm3035, %vm3116
    %vm3198 = vmand %vm3036, %vm3117
    %vm3199 = vmand %vm3037, %vm3118
    %vm3200 = vmand %vm3038, %vm3119
    %vm3201 = vmand %vm3039, %vm3120
    %vm3202 = vmand %vm3040, %vm3121
    %vm3203 = vmand %vm3041, %vm3122
    %vm3204 = vmand %vm3042, %vm3123
    %vm3205 = vmand %vm3043, %vm3124
    %vm3206 = vmand %vm3044, %vm3125
    %vm3207 = vmand %vm3045, %vm3126
    %vm3208 = vmand %vm3046, %vm3127
    %vm3209 = vmand %vm3047, %vm3128
    %vm3210 = vmand %vm3048, %vm3129
    %vm3211 = vmand %vm3049, %vm3130
    %vm3212 = vmand %vm3050, %vm3131
    %vm3213 = vmand %vm3051, %vm3132
    %vm3214 = vmand %vm3052, %vm3133
    %vm3215 = vmand %vm3053, %vm3134
    %vm3216 = vmand %vm3054, %vm3135
    %vm3217 = vmand %vm3055, %vm3136
    %vm3218 = vmand %vm3056, %vm3137
    %vm3219 = vmand %vm3057, %vm3138
    %vm3220 = vmand %vm3058, %vm3139
    %vm3221 = vmand %vm3059, %vm3140
    %vm3222 = vmand %vm3060, %vm3141
    %vm3223 = vmand %vm3061, %vm3142
    %vm3224 = vmand %vm3062, %vm3143
    %vm3225 = vmand %vm3063, %vm3144
    %vm3226 = vmand %vm3064, %vm3145
    %vm3227 = vmand %vm3065, %vm3146
    %vm3228 = vmand %vm3066, %vm3147
    %vm3229 = vmand %vm3067, %vm3148
    %vm3230 = vmand %vm3068, %vm3149
    %vm3231 = vmand %vm3069, %vm3150
    %vm3232 = vmand %vm3070, %vm3151
    %vm3233 = vmand %vm3071, %vm3152
    %vm3234 = vmand %vm3072, %vm3153
    %v3235 = vsel %vm3154, 1, 0
    %v3236 = vsel %vm3155, 1, 0
    %v3237 = vsel %vm3156, 1, 0
    %v3238 = vsel %vm3157, 1, 0
    %v3239 = vsel %vm3158, 1, 0
    %v3240 = vsel %vm3159, 1, 0
    %v3241 = vsel %vm3160, 1, 0
    %v3242 = vsel %vm3161, 1, 0
    %v3243 = vsel %vm3162, 1, 0
    %v3244 = vsel %vm3163, 1, 0
    %v3245 = vsel %vm3164, 1, 0
    %v3246 = vsel %vm3165, 1, 0
    %v3247 = vsel %vm3166, 1, 0
    %v3248 = vsel %vm3167, 1, 0
    %v3249 = vsel %vm3168, 1, 0
    %v3250 = vsel %vm3169, 1, 0
    %v3251 = vsel %vm3170, 1, 0
    %v3252 = vsel %vm3171, 1, 0
    %v3253 = vsel %vm3172, 1, 0
    %v3254 = vsel %vm3173, 1, 0
    %v3255 = vsel %vm3174, 1, 0
    %v3256 = vsel %vm3175, 1, 0
    %v3257 = vsel %vm3176, 1, 0
    %v3258 = vsel %vm3177, 1, 0
    %v3259 = vsel %vm3178, 1, 0
    %v3260 = vsel %vm3179, 1, 0
    %v3261 = vsel %vm3180, 1, 0
    %v3262 = vsel %vm3181, 1, 0
    %v3263 = vsel %vm3182, 1, 0
    %v3264 = vsel %vm3183, 1, 0
    %v3265 = vsel %vm3184, 1, 0
    %v3266 = vsel %vm3185, 1, 0
    %v3267 = vsel %vm3186, 1, 0
    %v3268 = vsel %vm3187, 1, 0
    %v3269 = vsel %vm3188, 1, 0
    %v3270 = vsel %vm3189, 1, 0
    %v3271 = vsel %vm3190, 1, 0
    %v3272 = vsel %vm3191, 1, 0
    %v3273 = vsel %vm3192, 1, 0
    %v3274 = vsel %vm3193, 1, 0
    %v3275 = vsel %vm3194, 1, 0
    %v3276 = vsel %vm3195, 1, 0
    %v3277 = vsel %vm3196, 1, 0
    %v3278 = vsel %vm3197, 1, 0
    %v3279 = vsel %vm3198, 1, 0
    %v3280 = vsel %vm3199, 1, 0
    %v3281 = vsel %vm3200, 1, 0
    %v3282 = vsel %vm3201, 1, 0
    %v3283 = vsel %vm3202, 1, 0
    %v3284 = vsel %vm3203, 1, 0
    %v3285 = vsel %vm3204, 1, 0
    %v3286 = vsel %vm3205, 1, 0
    %v3287 = vsel %vm3206, 1, 0
    %v3288 = vsel %vm3207, 1, 0
    %v3289 = vsel %vm3208, 1, 0
    %v3290 = vsel %vm3209, 1, 0
    %v3291 = vsel %vm3210, 1, 0
    %v3292 = vsel %vm3211, 1, 0
    %v3293 = vsel %vm3212, 1, 0
    %v3294 = vsel %vm3213, 1, 0
    %v3295 = vsel %vm3214, 1, 0
    %v3296 = vsel %vm3215, 1, 0
    %v3297 = vsel %vm3216, 1, 0
    %v3298 = vsel %vm3217, 1, 0
    %v3299 = vsel %vm3218, 1, 0
    %v3300 = vsel %vm3219, 1, 0
    %v3301 = vsel %vm3220, 1, 0
    %v3302 = vsel %vm3221, 1, 0
    %v3303 = vsel %vm3222, 1, 0
    %v3304 = vsel %vm3223, 1, 0
    %v3305 = vsel %vm3224, 1, 0
    %v3306 = vsel %vm3225, 1, 0
    %v3307 = vsel %vm3226, 1, 0
    %v3308 = vsel %vm3227, 1, 0
    %v3309 = vsel %vm3228, 1, 0
    %v3310 = vsel %vm3229, 1, 0
    %v3311 = vsel %vm3230, 1, 0
    %v3312 = vsel %vm3231, 1, 0
    %v3313 = vsel %vm3232, 1, 0
    %v3314 = vsel %vm3233, 1, 0
    %v3315 = vsel %vm3234, 1, 0
    %vm3316 = vcmp.eq.s32.totalorder %v3235, 1
    %vm3317 = vcmp.eq.s32.totalorder %v3236, 1
    %vm3318 = vcmp.eq.s32.totalorder %v3237, 1
    %vm3319 = vcmp.eq.s32.totalorder %v3238, 1
    %vm3320 = vcmp.eq.s32.totalorder %v3239, 1
    %vm3321 = vcmp.eq.s32.totalorder %v3240, 1
    %vm3322 = vcmp.eq.s32.totalorder %v3241, 1
    %vm3323 = vcmp.eq.s32.totalorder %v3242, 1
    %vm3324 = vcmp.eq.s32.totalorder %v3243, 1
    %vm3325 = vcmp.eq.s32.totalorder %v3244, 1
    %vm3326 = vcmp.eq.s32.totalorder %v3245, 1
    %vm3327 = vcmp.eq.s32.totalorder %v3246, 1
    %vm3328 = vcmp.eq.s32.totalorder %v3247, 1
    %vm3329 = vcmp.eq.s32.totalorder %v3248, 1
    %vm3330 = vcmp.eq.s32.totalorder %v3249, 1
    %vm3331 = vcmp.eq.s32.totalorder %v3250, 1
    %vm3332 = vcmp.eq.s32.totalorder %v3251, 1
    %vm3333 = vcmp.eq.s32.totalorder %v3252, 1
    %vm3334 = vcmp.eq.s32.totalorder %v3253, 1
    %vm3335 = vcmp.eq.s32.totalorder %v3254, 1
    %vm3336 = vcmp.eq.s32.totalorder %v3255, 1
    %vm3337 = vcmp.eq.s32.totalorder %v3256, 1
    %vm3338 = vcmp.eq.s32.totalorder %v3257, 1
    %vm3339 = vcmp.eq.s32.totalorder %v3258, 1
    %vm3340 = vcmp.eq.s32.totalorder %v3259, 1
    %vm3341 = vcmp.eq.s32.totalorder %v3260, 1
    %vm3342 = vcmp.eq.s32.totalorder %v3261, 1
    %vm3343 = vcmp.eq.s32.totalorder %v3262, 1
    %vm3344 = vcmp.eq.s32.totalorder %v3263, 1
    %vm3345 = vcmp.eq.s32.totalorder %v3264, 1
    %vm3346 = vcmp.eq.s32.totalorder %v3265, 1
    %vm3347 = vcmp.eq.s32.totalorder %v3266, 1
    %vm3348 = vcmp.eq.s32.totalorder %v3267, 1
    %vm3349 = vcmp.eq.s32.totalorder %v3268, 1
    %vm3350 = vcmp.eq.s32.totalorder %v3269, 1
    %vm3351 = vcmp.eq.s32.totalorder %v3270, 1
    %vm3352 = vcmp.eq.s32.totalorder %v3271, 1
    %vm3353 = vcmp.eq.s32.totalorder %v3272, 1
    %vm3354 = vcmp.eq.s32.totalorder %v3273, 1
    %vm3355 = vcmp.eq.s32.totalorder %v3274, 1
    %vm3356 = vcmp.eq.s32.totalorder %v3275, 1
    %vm3357 = vcmp.eq.s32.totalorder %v3276, 1
    %vm3358 = vcmp.eq.s32.totalorder %v3277, 1
    %vm3359 = vcmp.eq.s32.totalorder %v3278, 1
    %vm3360 = vcmp.eq.s32.totalorder %v3279, 1
    %vm3361 = vcmp.eq.s32.totalorder %v3280, 1
    %vm3362 = vcmp.eq.s32.totalorder %v3281, 1
    %vm3363 = vcmp.eq.s32.totalorder %v3282, 1
    %vm3364 = vcmp.eq.s32.totalorder %v3283, 1
    %vm3365 = vcmp.eq.s32.totalorder %v3284, 1
    %vm3366 = vcmp.eq.s32.totalorder %v3285, 1
    %vm3367 = vcmp.eq.s32.totalorder %v3286, 1
    %vm3368 = vcmp.eq.s32.totalorder %v3287, 1
    %vm3369 = vcmp.eq.s32.totalorder %v3288, 1
    %vm3370 = vcmp.eq.s32.totalorder %v3289, 1
    %vm3371 = vcmp.eq.s32.totalorder %v3290, 1
    %vm3372 = vcmp.eq.s32.totalorder %v3291, 1
    %vm3373 = vcmp.eq.s32.totalorder %v3292, 1
    %vm3374 = vcmp.eq.s32.totalorder %v3293, 1
    %vm3375 = vcmp.eq.s32.totalorder %v3294, 1
    %vm3376 = vcmp.eq.s32.totalorder %v3295, 1
    %vm3377 = vcmp.eq.s32.totalorder %v3296, 1
    %vm3378 = vcmp.eq.s32.totalorder %v3297, 1
    %vm3379 = vcmp.eq.s32.totalorder %v3298, 1
    %vm3380 = vcmp.eq.s32.totalorder %v3299, 1
    %vm3381 = vcmp.eq.s32.totalorder %v3300, 1
    %vm3382 = vcmp.eq.s32.totalorder %v3301, 1
    %vm3383 = vcmp.eq.s32.totalorder %v3302, 1
    %vm3384 = vcmp.eq.s32.totalorder %v3303, 1
    %vm3385 = vcmp.eq.s32.totalorder %v3304, 1
    %vm3386 = vcmp.eq.s32.totalorder %v3305, 1
    %vm3387 = vcmp.eq.s32.totalorder %v3306, 1
    %vm3388 = vcmp.eq.s32.totalorder %v3307, 1
    %vm3389 = vcmp.eq.s32.totalorder %v3308, 1
    %vm3390 = vcmp.eq.s32.totalorder %v3309, 1
    %vm3391 = vcmp.eq.s32.totalorder %v3310, 1
    %vm3392 = vcmp.eq.s32.totalorder %v3311, 1
    %vm3393 = vcmp.eq.s32.totalorder %v3312, 1
    %vm3394 = vcmp.eq.s32.totalorder %v3313, 1
    %vm3395 = vcmp.eq.s32.totalorder %v3314, 1
    %vm3396 = vcmp.eq.s32.totalorder %v3315, 1
    %v3397 = vsel %vm3316, %v1125, 0.0
    %v3398 = vsel %vm3317, %v1127, 0.0
    %v3399 = vsel %vm3318, %v1129, 0.0
    %v3400 = vsel %vm3319, %v1131, 0.0
    %v3401 = vsel %vm3320, %v1133, 0.0
    %v3402 = vsel %vm3321, %v1135, 0.0
    %v3403 = vsel %vm3322, %v1137, 0.0
    %v3404 = vsel %vm3323, %v1139, 0.0
    %v3405 = vsel %vm3324, %v1141, 0.0
    %v3406 = vsel %vm3325, %v1143, 0.0
    %v3407 = vsel %vm3326, %v1145, 0.0
    %v3408 = vsel %vm3327, %v1147, 0.0
    %v3409 = vsel %vm3328, %v1149, 0.0
    %v3410 = vsel %vm3329, %v1151, 0.0
    %v3411 = vsel %vm3330, %v1153, 0.0
    %v3412 = vsel %vm3331, %v1155, 0.0
    %v3413 = vsel %vm3332, %v1157, 0.0
    %v3414 = vsel %vm3333, %v1159, 0.0
    %v3415 = vsel %vm3334, %v1161, 0.0
    %v3416 = vsel %vm3335, %v1163, 0.0
    %v3417 = vsel %vm3336, %v1165, 0.0
    %v3418 = vsel %vm3337, %v1167, 0.0
    %v3419 = vsel %vm3338, %v1169, 0.0
    %v3420 = vsel %vm3339, %v1171, 0.0
    %v3421 = vsel %vm3340, %v1173, 0.0
    %v3422 = vsel %vm3341, %v1175, 0.0
    %v3423 = vsel %vm3342, %v1177, 0.0
    %v3424 = vsel %vm3343, %v1179, 0.0
    %v3425 = vsel %vm3344, %v1181, 0.0
    %v3426 = vsel %vm3345, %v1183, 0.0
    %v3427 = vsel %vm3346, %v1185, 0.0
    %v3428 = vsel %vm3347, %v1187, 0.0
    %v3429 = vsel %vm3348, %v1189, 0.0
    %v3430 = vsel %vm3349, %v1191, 0.0
    %v3431 = vsel %vm3350, %v1193, 0.0
    %v3432 = vsel %vm3351, %v1195, 0.0
    %v3433 = vsel %vm3352, %v1197, 0.0
    %v3434 = vsel %vm3353, %v1199, 0.0
    %v3435 = vsel %vm3354, %v1201, 0.0
    %v3436 = vsel %vm3355, %v1203, 0.0
    %v3437 = vsel %vm3356, %v1205, 0.0
    %v3438 = vsel %vm3357, %v1207, 0.0
    %v3439 = vsel %vm3358, %v1209, 0.0
    %v3440 = vsel %vm3359, %v1211, 0.0
    %v3441 = vsel %vm3360, %v1213, 0.0
    %v3442 = vsel %vm3361, %v1215, 0.0
    %v3443 = vsel %vm3362, %v1217, 0.0
    %v3444 = vsel %vm3363, %v1219, 0.0
    %v3445 = vsel %vm3364, %v1221, 0.0
    %v3446 = vsel %vm3365, %v1223, 0.0
    %v3447 = vsel %vm3366, %v1225, 0.0
    %v3448 = vsel %vm3367, %v1227, 0.0
    %v3449 = vsel %vm3368, %v1229, 0.0
    %v3450 = vsel %vm3369, %v1231, 0.0
    %v3451 = vsel %vm3370, %v1233, 0.0
    %v3452 = vsel %vm3371, %v1235, 0.0
    %v3453 = vsel %vm3372, %v1237, 0.0
    %v3454 = vsel %vm3373, %v1239, 0.0
    %v3455 = vsel %vm3374, %v1241, 0.0
    %v3456 = vsel %vm3375, %v1243, 0.0
    %v3457 = vsel %vm3376, %v1245, 0.0
    %v3458 = vsel %vm3377, %v1247, 0.0
    %v3459 = vsel %vm3378, %v1249, 0.0
    %v3460 = vsel %vm3379, %v1251, 0.0
    %v3461 = vsel %vm3380, %v1253, 0.0
    %v3462 = vsel %vm3381, %v1255, 0.0
    %v3463 = vsel %vm3382, %v1257, 0.0
    %v3464 = vsel %vm3383, %v1259, 0.0
    %v3465 = vsel %vm3384, %v1261, 0.0
    %v3466 = vsel %vm3385, %v1263, 0.0
    %v3467 = vsel %vm3386, %v1265, 0.0
    %v3468 = vsel %vm3387, %v1267, 0.0
    %v3469 = vsel %vm3388, %v1269, 0.0
    %v3470 = vsel %vm3389, %v1271, 0.0
    %v3471 = vsel %vm3390, %v1273, 0.0
    %v3472 = vsel %vm3391, %v1275, 0.0
    %v3473 = vsel %vm3392, %v1277, 0.0
    %v3474 = vsel %vm3393, %v1279, 0.0
    %v3475 = vsel %vm3394, %v1281, 0.0
    %v3476 = vsel %vm3395, %v1283, 0.0
    %v3477 = vsel %vm3396, %v1285, 0.0
    %v3478 = vpack.c.bf16 %v3398, %v3397
    %v3479 = vpack.c.bf16 %v3400, %v3399
    %v3480 = vpack.c.bf16 %v3402, %v3401
    %v3481 = vpack.c.bf16 %v3404, %v3403
    %v3482 = vpack.c.bf16 %v3406, %v3405
    %v3483 = vpack.c.bf16 %v3408, %v3407
    %v3484 = vpack.c.bf16 %v3410, %v3409
    %v3485 = vpack.c.bf16 %v3412, %v3411
    %v3486 = vpack.c.bf16 %v3414, %v3413
    %v3487 = vpack.c.bf16 %v3416, %v3415
    %v3488 = vpack.c.bf16 %v3418, %v3417
    %v3489 = vpack.c.bf16 %v3420, %v3419
    %v3490 = vpack.c.bf16 %v3422, %v3421
    %v3491 = vpack.c.bf16 %v3424, %v3423
    %v3492 = vpack.c.bf16 %v3426, %v3425
    %v3493 = vpack.c.bf16 %v3428, %v3427
    %v3494 = vpack.c.bf16 %v3430, %v3429
    %v3495 = vpack.c.bf16 %v3432, %v3431
    %v3496 = vpack.c.bf16 %v3434, %v3433
    %v3497 = vpack.c.bf16 %v3436, %v3435
    %v3498 = vpack.c.bf16 %v3438, %v3437
    %v3499 = vpack.c.bf16 %v3440, %v3439
    %v3500 = vpack.c.bf16 %v3442, %v3441
    %v3501 = vpack.c.bf16 %v3444, %v3443
    %v3502 = vpack.c.bf16 %v3446, %v3445
    %v3503 = vpack.c.bf16 %v3448, %v3447
    %v3504 = vpack.c.bf16 %v3450, %v3449
    %v3505 = vpack.c.bf16 %v3452, %v3451
    %v3506 = vpack.c.bf16 %v3454, %v3453
    %v3507 = vpack.c.bf16 %v3456, %v3455
    %v3508 = vpack.c.bf16 %v3458, %v3457
    %v3509 = vpack.c.bf16 %v3460, %v3459
    %v3510 = vpack.c.bf16 %v3462, %v3461
    %v3511 = vpack.c.bf16 %v3464, %v3463
    %v3512 = vpack.c.bf16 %v3466, %v3465
    %v3513 = vpack.c.bf16 %v3468, %v3467
    %v3514 = vpack.c.bf16 %v3470, %v3469
    %v3515 = vpack.c.bf16 %v3472, %v3471
    %v3516 = vpack.c.bf16 %v3474, %v3473
    %v3517 = vpack.c.bf16 %v3476, %v3475
    %v3518 = vpack.c.bf16 %v3477, %v3477
    %v3560 = vunpack.c.l.b16 %v3478
    %v3561 = vunpack.c.h.b16 %v3478
    %v3562 = vunpack.c.l.b16 %v3479
    %v3563 = vunpack.c.h.b16 %v3479
    %v3564 = vunpack.c.l.b16 %v3480
    %v3565 = vunpack.c.h.b16 %v3480
    %v3566 = vunpack.c.l.b16 %v3481
    %v3567 = vunpack.c.h.b16 %v3481
    %v3568 = vunpack.c.l.b16 %v3482
    %v3569 = vunpack.c.h.b16 %v3482
    %v3570 = vunpack.c.l.b16 %v3483
    %v3571 = vunpack.c.h.b16 %v3483
    %v3572 = vunpack.c.l.b16 %v3484
    %v3573 = vunpack.c.h.b16 %v3484
    %v3574 = vunpack.c.l.b16 %v3485
    %v3575 = vunpack.c.h.b16 %v3485
    %v3576 = vunpack.c.l.b16 %v3486
    %v3577 = vunpack.c.h.b16 %v3486
    %v3578 = vunpack.c.l.b16 %v3487
    %v3579 = vunpack.c.h.b16 %v3487
    %v3580 = vunpack.c.l.b16 %v3488
    %v3581 = vunpack.c.h.b16 %v3488
    %v3582 = vunpack.c.l.b16 %v3489
    %v3583 = vunpack.c.h.b16 %v3489
    %v3584 = vunpack.c.l.b16 %v3490
    %v3585 = vunpack.c.h.b16 %v3490
    %v3586 = vunpack.c.l.b16 %v3491
    %v3587 = vunpack.c.h.b16 %v3491
    %v3588 = vunpack.c.l.b16 %v3492
    %v3589 = vunpack.c.h.b16 %v3492
    %v3590 = vunpack.c.l.b16 %v3493
    %v3591 = vunpack.c.h.b16 %v3493
    %v3592 = vunpack.c.l.b16 %v3494
    %v3593 = vunpack.c.h.b16 %v3494
    %v3594 = vunpack.c.l.b16 %v3495
    %v3595 = vunpack.c.h.b16 %v3495
    %v3596 = vunpack.c.l.b16 %v3496
    %v3597 = vunpack.c.h.b16 %v3496
    %v3598 = vunpack.c.l.b16 %v3497
    %v3599 = vunpack.c.h.b16 %v3497
    %v3600 = vunpack.c.l.b16 %v3498
    %v3601 = vunpack.c.h.b16 %v3498
    %v3602 = vunpack.c.l.b16 %v3499
    %v3603 = vunpack.c.h.b16 %v3499
    %v3604 = vunpack.c.l.b16 %v3500
    %v3605 = vunpack.c.h.b16 %v3500
    %v3606 = vunpack.c.l.b16 %v3501
    %v3607 = vunpack.c.h.b16 %v3501
    %v3608 = vunpack.c.l.b16 %v3502
    %v3609 = vunpack.c.h.b16 %v3502
    %v3610 = vunpack.c.l.b16 %v3503
    %v3611 = vunpack.c.h.b16 %v3503
    %v3612 = vunpack.c.l.b16 %v3504
    %v3613 = vunpack.c.h.b16 %v3504
    %v3614 = vunpack.c.l.b16 %v3505
    %v3615 = vunpack.c.h.b16 %v3505
    %v3616 = vunpack.c.l.b16 %v3506
    %v3617 = vunpack.c.h.b16 %v3506
    %v3618 = vunpack.c.l.b16 %v3507
    %v3619 = vunpack.c.h.b16 %v3507
    %v3620 = vunpack.c.l.b16 %v3508
    %v3621 = vunpack.c.h.b16 %v3508
    %v3622 = vunpack.c.l.b16 %v3509
    %v3623 = vunpack.c.h.b16 %v3509
    %v3624 = vunpack.c.l.b16 %v3510
    %v3625 = vunpack.c.h.b16 %v3510
    %v3626 = vunpack.c.l.b16 %v3511
    %v3627 = vunpack.c.h.b16 %v3511
    %v3628 = vunpack.c.l.b16 %v3512
    %v3629 = vunpack.c.h.b16 %v3512
    %v3630 = vunpack.c.l.b16 %v3513
    %v3631 = vunpack.c.h.b16 %v3513
    %v3632 = vunpack.c.l.b16 %v3514
    %v3633 = vunpack.c.h.b16 %v3514
    %v3634 = vunpack.c.l.b16 %v3515
    %v3635 = vunpack.c.h.b16 %v3515
    %v3636 = vunpack.c.l.b16 %v3516
    %v3637 = vunpack.c.h.b16 %v3516
    %v3638 = vunpack.c.l.b16 %v3517
    %v3639 = vunpack.c.h.b16 %v3517
    %v3640 = vunpack.c.l.b16 %v3518
    %v3641 = vpack.c.b16 %v3560, %v3560
    %v3642 = vpack.c.b16 %v3561, %v3561
    %v3643 = vpack.c.b16 %v3562, %v3562
    %v3644 = vpack.c.b16 %v3563, %v3563
    %v3645 = vpack.c.b16 %v3564, %v3564
    %v3646 = vpack.c.b16 %v3565, %v3565
    %v3647 = vpack.c.b16 %v3566, %v3566
    %v3648 = vpack.c.b16 %v3567, %v3567
    %v3649 = vpack.c.b16 %v3568, %v3568
    %v3650 = vpack.c.b16 %v3569, %v3569
    %v3651 = vpack.c.b16 %v3570, %v3570
    %v3652 = vpack.c.b16 %v3571, %v3571
    %v3653 = vpack.c.b16 %v3572, %v3572
    %v3654 = vpack.c.b16 %v3573, %v3573
    %v3655 = vpack.c.b16 %v3574, %v3574
    %v3656 = vpack.c.b16 %v3575, %v3575
    %v3657 = vpack.c.b16 %v3576, %v3576
    %v3658 = vpack.c.b16 %v3577, %v3577
    %v3659 = vpack.c.b16 %v3578, %v3578
    %v3660 = vpack.c.b16 %v3579, %v3579
    %v3661 = vpack.c.b16 %v3580, %v3580
    %v3662 = vpack.c.b16 %v3581, %v3581
    %v3663 = vpack.c.b16 %v3582, %v3582
    %v3664 = vpack.c.b16 %v3583, %v3583
    %v3665 = vpack.c.b16 %v3584, %v3584
    %v3666 = vpack.c.b16 %v3585, %v3585
    %v3667 = vpack.c.b16 %v3586, %v3586
    %v3668 = vpack.c.b16 %v3587, %v3587
    %v3669 = vpack.c.b16 %v3588, %v3588
    %v3670 = vpack.c.b16 %v3589, %v3589
    %v3671 = vpack.c.b16 %v3590, %v3590
    %v3672 = vpack.c.b16 %v3591, %v3591
    %v3673 = vpack.c.b16 %v3592, %v3592
    %v3674 = vpack.c.b16 %v3593, %v3593
    %v3675 = vpack.c.b16 %v3594, %v3594
    %v3676 = vpack.c.b16 %v3595, %v3595
    %v3677 = vpack.c.b16 %v3596, %v3596
    %v3678 = vpack.c.b16 %v3597, %v3597
    %v3679 = vpack.c.b16 %v3598, %v3598
    %v3680 = vpack.c.b16 %v3599, %v3599
    %v3681 = vpack.c.b16 %v3600, %v3600
    %v3682 = vpack.c.b16 %v3601, %v3601
    %v3683 = vpack.c.b16 %v3602, %v3602
    %v3684 = vpack.c.b16 %v3603, %v3603
    %v3685 = vpack.c.b16 %v3604, %v3604
    %v3686 = vpack.c.b16 %v3605, %v3605
    %v3687 = vpack.c.b16 %v3606, %v3606
    %v3688 = vpack.c.b16 %v3607, %v3607
    %v3689 = vpack.c.b16 %v3608, %v3608
    %v3690 = vpack.c.b16 %v3609, %v3609
    %v3691 = vpack.c.b16 %v3610, %v3610
    %v3692 = vpack.c.b16 %v3611, %v3611
    %v3693 = vpack.c.b16 %v3612, %v3612
    %v3694 = vpack.c.b16 %v3613, %v3613
    %v3695 = vpack.c.b16 %v3614, %v3614
    %v3696 = vpack.c.b16 %v3615, %v3615
    %v3697 = vpack.c.b16 %v3616, %v3616
    %v3698 = vpack.c.b16 %v3617, %v3617
    %v3699 = vpack.c.b16 %v3618, %v3618
    %v3700 = vpack.c.b16 %v3619, %v3619
    %v3701 = vpack.c.b16 %v3620, %v3620
    %v3702 = vpack.c.b16 %v3621, %v3621
    %v3703 = vpack.c.b16 %v3622, %v3622
    %v3704 = vpack.c.b16 %v3623, %v3623
    %v3705 = vpack.c.b16 %v3624, %v3624
    %v3706 = vpack.c.b16 %v3625, %v3625
    %v3707 = vpack.c.b16 %v3626, %v3626
    %v3708 = vpack.c.b16 %v3627, %v3627
    %v3709 = vpack.c.b16 %v3628, %v3628
    %v3710 = vpack.c.b16 %v3629, %v3629
    %v3711 = vpack.c.b16 %v3630, %v3630
    %v3712 = vpack.c.b16 %v3631, %v3631
    %v3713 = vpack.c.b16 %v3632, %v3632
    %v3714 = vpack.c.b16 %v3633, %v3633
    %v3715 = vpack.c.b16 %v3634, %v3634
    %v3716 = vpack.c.b16 %v3635, %v3635
    %v3717 = vpack.c.b16 %v3636, %v3636
    %v3718 = vpack.c.b16 %v3637, %v3637
    %v3719 = vpack.c.b16 %v3638, %v3638
    %v3720 = vpack.c.b16 %v3639, %v3639
    %v3721 = vpack.c.b16 %v3640, %v3640
    %3803 = vst [vmem:[#allocation2 + $0xc] sm:$0xf] %v3641
    %3804 = vst [vmem:[#allocation2 + $0x10] sm:$0xf] %v3642
    %3805 = vst [vmem:[#allocation2 + $0x14] sm:$0xf] %v3643
    %3806 = vst [vmem:[#allocation2 + $0x18] sm:$0xf] %v3644
    %3807 = vst [vmem:[#allocation2 + $0x1c] sm:$0xf] %v3645
    %3808 = vst [vmem:[#allocation2 + $0x20] sm:$0xf] %v3646
    %3809 = vst [vmem:[#allocation2 + $0x24] sm:$0xf] %v3647
    %3810 = vst [vmem:[#allocation2 + $0x28] sm:$0xf] %v3648
    %3811 = vst [vmem:[#allocation2 + $0x2c] sm:$0xf] %v3649
    %3812 = vst [vmem:[#allocation2 + $0x30] sm:$0xf] %v3650
    %3813 = vst [vmem:[#allocation2 + $0x34] sm:$0xf] %v3651
    %3814 = vst [vmem:[#allocation2 + $0x38] sm:$0xf] %v3652
    %3815 = vst [vmem:[#allocation2 + $0x3c] sm:$0xf] %v3653
    %3816 = vst [vmem:[#allocation2 + $0x40] sm:$0xf] %v3654
    %3817 = vst [vmem:[#allocation2 + $0x44] sm:$0xf] %v3655
    %3818 = vst [vmem:[#allocation2 + $0x48] sm:$0xf] %v3656
    %3819 = vst [vmem:[#allocation2 + $0x4c] sm:$0xf] %v3657
    %3820 = vst [vmem:[#allocation2 + $0x50] sm:$0xf] %v3658
    %3821 = vst [vmem:[#allocation2 + $0x54] sm:$0xf] %v3659
    %3822 = vst [vmem:[#allocation2 + $0x58] sm:$0xf] %v3660
    %3823 = vst [vmem:[#allocation2 + $0x5c] sm:$0xf] %v3661
    %3824 = vst [vmem:[#allocation2 + $0x60] sm:$0xf] %v3662
    %3825 = vst [vmem:[#allocation2 + $0x64] sm:$0xf] %v3663
    %3826 = vst [vmem:[#allocation2 + $0x68] sm:$0xf] %v3664
    %3827 = vst [vmem:[#allocation2 + $0x6c] sm:$0xf] %v3665
    %3828 = vst [vmem:[#allocation2 + $0x70] sm:$0xf] %v3666
    %3829 = vst [vmem:[#allocation2 + $0x74] sm:$0xf] %v3667
    %3830 = vst [vmem:[#allocation2 + $0x78] sm:$0xf] %v3668
    %3831 = vst [vmem:[#allocation2 + $0x7c] sm:$0xf] %v3669
    %3832 = vst [vmem:[#allocation2 + $0x80] sm:$0xf] %v3670
    %3833 = vst [vmem:[#allocation2 + $0x84] sm:$0xf] %v3671
    %3834 = vst [vmem:[#allocation2 + $0x88] sm:$0xf] %v3672
    %3835 = vst [vmem:[#allocation2 + $0x8c] sm:$0xf] %v3673
    %3836 = vst [vmem:[#allocation2 + $0x90] sm:$0xf] %v3674
    %3837 = vst [vmem:[#allocation2 + $0x94] sm:$0xf] %v3675
    %3838 = vst [vmem:[#allocation2 + $0x98] sm:$0xf] %v3676
    %3839 = vst [vmem:[#allocation2 + $0x9c] sm:$0xf] %v3677
    %3840 = vst [vmem:[#allocation2 + $0xa0] sm:$0xf] %v3678
    %3841 = vst [vmem:[#allocation2 + $0xa4] sm:$0xf] %v3679
    %3842 = vst [vmem:[#allocation2 + $0xa8] sm:$0xf] %v3680
    %3843 = vst [vmem:[#allocation2 + $0xac] sm:$0xf] %v3681
    %3844 = vst [vmem:[#allocation2 + $0xb0] sm:$0xf] %v3682
    %3845 = vst [vmem:[#allocation2 + $0xb4] sm:$0xf] %v3683
    %3846 = vst [vmem:[#allocation2 + $0xb8] sm:$0xf] %v3684
    %3847 = vst [vmem:[#allocation2 + $0xbc] sm:$0xf] %v3685
    %3848 = vst [vmem:[#allocation2 + $0xc0] sm:$0xf] %v3686
    %3849 = vst [vmem:[#allocation2 + $0xc4] sm:$0xf] %v3687
    %3850 = vst [vmem:[#allocation2 + $0xc8] sm:$0xf] %v3688
    %3851 = vst [vmem:[#allocation2 + $0xcc] sm:$0xf] %v3689
    %3852 = vst [vmem:[#allocation2 + $0xd0] sm:$0xf] %v3690
    %3853 = vst [vmem:[#allocation2 + $0xd4] sm:$0xf] %v3691
    %3854 = vst [vmem:[#allocation2 + $0xd8] sm:$0xf] %v3692
    %3855 = vst [vmem:[#allocation2 + $0xdc] sm:$0xf] %v3693
    %3856 = vst [vmem:[#allocation2 + $0xe0] sm:$0xf] %v3694
    %3857 = vst [vmem:[#allocation2 + $0xe4] sm:$0xf] %v3695
    %3858 = vst [vmem:[#allocation2 + $0xe8] sm:$0xf] %v3696
    %3859 = vst [vmem:[#allocation2 + $0xec] sm:$0xf] %v3697
    %3860 = vst [vmem:[#allocation2 + $0xf0] sm:$0xf] %v3698
    %3861 = vst [vmem:[#allocation2 + $0xf4] sm:$0xf] %v3699
    %3862 = vst [vmem:[#allocation2 + $0xf8] sm:$0xf] %v3700
    %3863 = vst [vmem:[#allocation2 + $0xfc] sm:$0xf] %v3701
    %3864 = vst [vmem:[#allocation2 + $0x100] sm:$0xf] %v3702
    %3865 = vst [vmem:[#allocation2 + $0x104] sm:$0xf] %v3703
    %3866 = vst [vmem:[#allocation2 + $0x108] sm:$0xf] %v3704
    %3867 = vst [vmem:[#allocation2 + $0x10c] sm:$0xf] %v3705
    %3868 = vst [vmem:[#allocation2 + $0x110] sm:$0xf] %v3706
    %3869 = vst [vmem:[#allocation2 + $0x114] sm:$0xf] %v3707
    %3870 = vst [vmem:[#allocation2 + $0x118] sm:$0xf] %v3708
    %3871 = vst [vmem:[#allocation2 + $0x11c] sm:$0xf] %v3709
    %3872 = vst [vmem:[#allocation2 + $0x120] sm:$0xf] %v3710
    %3873 = vst [vmem:[#allocation2 + $0x124] sm:$0xf] %v3711
    %3874 = vst [vmem:[#allocation2 + $0x128] sm:$0xf] %v3712
    %3875 = vst [vmem:[#allocation2 + $0x12c] sm:$0xf] %v3713
    %3876 = vst [vmem:[#allocation2 + $0x130] sm:$0xf] %v3714
    %3877 = vst [vmem:[#allocation2 + $0x134] sm:$0xf] %v3715
    %3878 = vst [vmem:[#allocation2 + $0x138] sm:$0xf] %v3716
    %3879 = vst [vmem:[#allocation2 + $0x13c] sm:$0xf] %v3717
    %3880 = vst [vmem:[#allocation2 + $0x140] sm:$0xf] %v3718
    %3881 = vst [vmem:[#allocation2 + $0x144] sm:$0xf] %v3719
    %3882 = vst [vmem:[#allocation2 + $0x148] sm:$0xf] %v3720
    %3883 = vst [vmem:[#allocation2 + $0x14c] sm:$0xf] %v3721
    %v3884 = vld [vmem:[#allocation2] sm:$0xc]
    %v3885 = vld [vmem:[#allocation2 + $0x4] sm:$0xf]
    %v3886 = vld [vmem:[#allocation2 + $0x8] sm:$0xf]
    %v3887 = vld [vmem:[#allocation2 + $0xc] sm:$0xf]
    %v3888 = vld [vmem:[#allocation2 + $0x10] sm:$0xf]
    %v3889 = vld [vmem:[#allocation2 + $0x14] sm:$0xf]
    %v3890 = vld [vmem:[#allocation2 + $0x18] sm:$0xf]
    %v3891 = vld [vmem:[#allocation2 + $0x1c] sm:$0xf]
    %v3892 = vld [vmem:[#allocation2 + $0x20] sm:$0xf]
    %v3893 = vld [vmem:[#allocation2 + $0x24] sm:$0xf]
    %v3894 = vld [vmem:[#allocation2 + $0x28] sm:$0xf]
    %v3895 = vld [vmem:[#allocation2 + $0x2c] sm:$0xf]
    %v3896 = vld [vmem:[#allocation2 + $0x30] sm:$0xf]
    %v3897 = vld [vmem:[#allocation2 + $0x34] sm:$0xf]
    %v3898 = vld [vmem:[#allocation2 + $0x38] sm:$0xf]
    %v3899 = vld [vmem:[#allocation2 + $0x3c] sm:$0xf]
    %v3900 = vld [vmem:[#allocation2 + $0x40] sm:$0xf]
    %v3901 = vld [vmem:[#allocation2 + $0x44] sm:$0xf]
    %v3902 = vld [vmem:[#allocation2 + $0x48] sm:$0xf]
    %v3903 = vld [vmem:[#allocation2 + $0x4c] sm:$0xf]
    %v3904 = vld [vmem:[#allocation2 + $0x50] sm:$0xf]
    %v3905 = vld [vmem:[#allocation2 + $0x54] sm:$0xf]
    %v3906 = vld [vmem:[#allocation2 + $0x58] sm:$0xf]
    %v3907 = vld [vmem:[#allocation2 + $0x5c] sm:$0xf]
    %v3908 = vld [vmem:[#allocation2 + $0x60] sm:$0xf]
    %v3909 = vld [vmem:[#allocation2 + $0x64] sm:$0xf]
    %v3910 = vld [vmem:[#allocation2 + $0x68] sm:$0xf]
    %v3911 = vld [vmem:[#allocation2 + $0x6c] sm:$0xf]
    %v3912 = vld [vmem:[#allocation2 + $0x70] sm:$0xf]
    %v3913 = vld [vmem:[#allocation2 + $0x74] sm:$0xf]
    %v3914 = vld [vmem:[#allocation2 + $0x78] sm:$0xf]
    %v3915 = vld [vmem:[#allocation2 + $0x7c] sm:$0xf]
    %v3916 = vld [vmem:[#allocation2 + $0x80] sm:$0xf]
    %v3917 = vld [vmem:[#allocation2 + $0x84] sm:$0xf]
    %v3918 = vld [vmem:[#allocation2 + $0x88] sm:$0xf]
    %v3919 = vld [vmem:[#allocation2 + $0x8c] sm:$0xf]
    %v3920 = vld [vmem:[#allocation2 + $0x90] sm:$0xf]
    %v3921 = vld [vmem:[#allocation2 + $0x94] sm:$0xf]
    %v3922 = vld [vmem:[#allocation2 + $0x98] sm:$0xf]
    %v3923 = vld [vmem:[#allocation2 + $0x9c] sm:$0xf]
    %v3924 = vld [vmem:[#allocation2 + $0xa0] sm:$0xf]
    %v3925 = vld [vmem:[#allocation2 + $0xa4] sm:$0xf]
    %v3926 = vld [vmem:[#allocation2 + $0xa8] sm:$0xf]
    %v3927 = vld [vmem:[#allocation2 + $0xac] sm:$0xf]
    %v3928 = vld [vmem:[#allocation2 + $0xb0] sm:$0xf]
    %v3929 = vld [vmem:[#allocation2 + $0xb4] sm:$0xf]
    %v3930 = vld [vmem:[#allocation2 + $0xb8] sm:$0xf]
    %v3931 = vld [vmem:[#allocation2 + $0xbc] sm:$0xf]
    %v3932 = vld [vmem:[#allocation2 + $0xc0] sm:$0xf]
    %v3933 = vld [vmem:[#allocation2 + $0xc4] sm:$0xf]
    %v3934 = vld [vmem:[#allocation2 + $0xc8] sm:$0xf]
    %v3935 = vld [vmem:[#allocation2 + $0xcc] sm:$0xf]
    %v3936 = vld [vmem:[#allocation2 + $0xd0] sm:$0xf]
    %v3937 = vld [vmem:[#allocation2 + $0xd4] sm:$0xf]
    %v3938 = vld [vmem:[#allocation2 + $0xd8] sm:$0xf]
    %v3939 = vld [vmem:[#allocation2 + $0xdc] sm:$0xf]
    %v3940 = vld [vmem:[#allocation2 + $0xe0] sm:$0xf]
    %v3941 = vld [vmem:[#allocation2 + $0xe4] sm:$0xf]
    %v3942 = vld [vmem:[#allocation2 + $0xe8] sm:$0xf]
    %v3943 = vld [vmem:[#allocation2 + $0xec] sm:$0xf]
    %v3944 = vld [vmem:[#allocation2 + $0xf0] sm:$0xf]
    %v3945 = vld [vmem:[#allocation2 + $0xf4] sm:$0xf]
    %v3946 = vld [vmem:[#allocation2 + $0xf8] sm:$0xf]
    %v3947 = vld [vmem:[#allocation2 + $0xfc] sm:$0xf]
    %v3948 = vld [vmem:[#allocation2 + $0x100] sm:$0xf]
    %v3949 = vld [vmem:[#allocation2 + $0x104] sm:$0xf]
    %v3950 = vld [vmem:[#allocation2 + $0x108] sm:$0xf]
    %v3951 = vld [vmem:[#allocation2 + $0x10c] sm:$0xf]
    %v3952 = vld [vmem:[#allocation2 + $0x110] sm:$0xf]
    %v3953 = vld [vmem:[#allocation2 + $0x114] sm:$0xf]
    %v3954 = vld [vmem:[#allocation2 + $0x118] sm:$0xf]
    %v3955 = vld [vmem:[#allocation2 + $0x11c] sm:$0xf]
    %v3956 = vld [vmem:[#allocation2 + $0x120] sm:$0xf]
    %v3957 = vld [vmem:[#allocation2 + $0x124] sm:$0xf]
    %v3958 = vld [vmem:[#allocation2 + $0x128] sm:$0xf]
    %v3959 = vld [vmem:[#allocation2 + $0x12c] sm:$0xf]
    %v3960 = vld [vmem:[#allocation2 + $0x130] sm:$0xf]
    %v3961 = vld [vmem:[#allocation2 + $0x134] sm:$0xf]
    %v3962 = vld [vmem:[#allocation2 + $0x138] sm:$0xf]
    %v3963 = vld [vmem:[#allocation2 + $0x13c] sm:$0xf]
    %v3964 = vld [vmem:[#allocation2 + $0x140] sm:$0xf]
    %v3965 = vld [vmem:[#allocation2 + $0x144] sm:$0x7]
    %v3966 = vld [vmem:[#allocation8] sm:$0xf]
    %v3967 = vld [vmem:[#allocation8 + $0x4] sm:$0xf]
    %v3968 = vld [vmem:[#allocation8 + $0x8] sm:$0xf]
    %v3969 = vld [vmem:[#allocation8 + $0xc] sm:$0xf]
    %v3970 = vld [vmem:[#allocation8 + $0x10] sm:$0xf]
    %v3971 = vld [vmem:[#allocation8 + $0x14] sm:$0xf]
    %v3972 = vld [vmem:[#allocation8 + $0x18] sm:$0xf]
    %v3973 = vld [vmem:[#allocation8 + $0x1c] sm:$0xf]
    %v3974 = vld [vmem:[#allocation8 + $0x20] sm:$0xf]
    %v3975 = vld [vmem:[#allocation8 + $0x24] sm:$0xf]
    %v3976 = vld [vmem:[#allocation8 + $0x28] sm:$0xf]
    %v3977 = vld [vmem:[#allocation8 + $0x2c] sm:$0xf]
    %v3978 = vld [vmem:[#allocation8 + $0x30] sm:$0xf]
    %v3979 = vld [vmem:[#allocation8 + $0x34] sm:$0xf]
    %v3980 = vld [vmem:[#allocation8 + $0x38] sm:$0xf]
    %v3981 = vld [vmem:[#allocation8 + $0x3c] sm:$0xf]
    %v3982 = vld [vmem:[#allocation2] sm:$0x8]
    %s3983 = scalar_lea.vmem [#allocation8], 64
    %v3984 = vld [vmem:[%s3983] sm:$0xf]
    %v3985 = vld [vmem:[%s3983 + $0x4] sm:$0xf]
    %v3986 = vld [vmem:[%s3983 + $0x8] sm:$0xf]
    %v3987 = vld [vmem:[%s3983 + $0xc] sm:$0xf]
    %v3988 = vld [vmem:[%s3983 + $0x10] sm:$0xf]
    %v3989 = vld [vmem:[%s3983 + $0x14] sm:$0xf]
    %v3990 = vld [vmem:[%s3983 + $0x18] sm:$0xf]
    %v3991 = vld [vmem:[%s3983 + $0x1c] sm:$0xf]
    %v3992 = vld [vmem:[%s3983 + $0x20] sm:$0xf]
    %v3993 = vld [vmem:[%s3983 + $0x24] sm:$0xf]
    %v3994 = vld [vmem:[%s3983 + $0x28] sm:$0xf]
    %v3995 = vld [vmem:[%s3983 + $0x2c] sm:$0xf]
    %v3996 = vld [vmem:[%s3983 + $0x30] sm:$0xf]
    %v3997 = vld [vmem:[%s3983 + $0x34] sm:$0xf]
    %v3998 = vld [vmem:[%s3983 + $0x38] sm:$0xf]
    %v3999 = vld [vmem:[%s3983 + $0x3c] sm:$0xf]
    %v4082 = vunpack.c.l.b16 %v3982
    %v4083 = vunpack.c.l.b16 %v3885
    %v4084 = vunpack.c.l.b16 %v3886
    %v4085 = vunpack.c.l.b16 %v3887
    %v4086 = vunpack.c.l.b16 %v3888
    %v4087 = vunpack.c.l.b16 %v3889
    %v4088 = vunpack.c.l.b16 %v3890
    %v4089 = vunpack.c.l.b16 %v3891
    %v4090 = vunpack.c.l.b16 %v3892
    %v4091 = vunpack.c.l.b16 %v3893
    %v4092 = vunpack.c.l.b16 %v3894
    %v4093 = vunpack.c.l.b16 %v3895
    %v4094 = vunpack.c.l.b16 %v3896
    %v4095 = vunpack.c.l.b16 %v3897
    %v4096 = vunpack.c.l.b16 %v3898
    %v4097 = vunpack.c.l.b16 %v3899
    %v4098 = vunpack.c.l.b16 %v3900
    %v4099 = vunpack.c.l.b16 %v3901
    %v4100 = vunpack.c.l.b16 %v3902
    %v4101 = vunpack.c.l.b16 %v3903
    %v4102 = vunpack.c.l.b16 %v3904
    %v4103 = vunpack.c.l.b16 %v3905
    %v4104 = vunpack.c.l.b16 %v3906
    %v4105 = vunpack.c.l.b16 %v3907
    %v4106 = vunpack.c.l.b16 %v3908
    %v4107 = vunpack.c.l.b16 %v3909
    %v4108 = vunpack.c.l.b16 %v3910
    %v4109 = vunpack.c.l.b16 %v3911
    %v4110 = vunpack.c.l.b16 %v3912
    %v4111 = vunpack.c.l.b16 %v3913
    %v4112 = vunpack.c.l.b16 %v3914
    %v4113 = vunpack.c.l.b16 %v3915
    %v4114 = vunpack.c.l.b16 %v3916
    %v4115 = vunpack.c.l.b16 %v3917
    %v4116 = vunpack.c.l.b16 %v3918
    %v4117 = vunpack.c.l.b16 %v3919
    %v4118 = vunpack.c.l.b16 %v3920
    %v4119 = vunpack.c.l.b16 %v3921
    %v4120 = vunpack.c.l.b16 %v3922
    %v4121 = vunpack.c.l.b16 %v3923
    %v4122 = vunpack.c.l.b16 %v3924
    %v4123 = vunpack.c.l.b16 %v3925
    %v4124 = vunpack.c.l.b16 %v3926
    %v4125 = vunpack.c.l.b16 %v3927
    %v4126 = vunpack.c.l.b16 %v3928
    %v4127 = vunpack.c.l.b16 %v3929
    %v4128 = vunpack.c.l.b16 %v3930
    %v4129 = vunpack.c.l.b16 %v3931
    %v4130 = vunpack.c.l.b16 %v3932
    %v4131 = vunpack.c.l.b16 %v3933
    %v4132 = vunpack.c.l.b16 %v3934
    %v4133 = vunpack.c.l.b16 %v3935
    %v4134 = vunpack.c.l.b16 %v3936
    %v4135 = vunpack.c.l.b16 %v3937
    %v4136 = vunpack.c.l.b16 %v3938
    %v4137 = vunpack.c.l.b16 %v3939
    %v4138 = vunpack.c.l.b16 %v3940
    %v4139 = vunpack.c.l.b16 %v3941
    %v4140 = vunpack.c.l.b16 %v3942
    %v4141 = vunpack.c.l.b16 %v3943
    %v4142 = vunpack.c.l.b16 %v3944
    %v4143 = vunpack.c.l.b16 %v3945
    %v4144 = vunpack.c.l.b16 %v3946
    %v4145 = vunpack.c.l.b16 %v3947
    %v4146 = vunpack.c.l.b16 %v3948
    %v4147 = vunpack.c.l.b16 %v3949
    %v4148 = vunpack.c.l.b16 %v3950
    %v4149 = vunpack.c.l.b16 %v3951
    %v4150 = vunpack.c.l.b16 %v3952
    %v4151 = vunpack.c.l.b16 %v3953
    %v4152 = vunpack.c.l.b16 %v3954
    %v4153 = vunpack.c.l.b16 %v3955
    %v4154 = vunpack.c.l.b16 %v3956
    %v4155 = vunpack.c.l.b16 %v3957
    %v4156 = vunpack.c.l.b16 %v3958
    %v4157 = vunpack.c.l.b16 %v3959
    %v4158 = vunpack.c.l.b16 %v3960
    %v4159 = vunpack.c.l.b16 %v3961
    %v4160 = vunpack.c.l.b16 %v3962
    %v4161 = vunpack.c.l.b16 %v3963
    %v4162 = vunpack.c.l.b16 %v3964
    %v4163 = vunpack.c.l.b16 %v3965
    %v4164 = vpack.c.b16 %v4083, %v4082
    %v4165 = vpack.c.b16 %v4085, %v4084
    %v4166 = vpack.c.b16 %v4087, %v4086
    %v4167 = vpack.c.b16 %v4089, %v4088
    %v4168 = vpack.c.b16 %v4091, %v4090
    %v4169 = vpack.c.b16 %v4093, %v4092
    %v4170 = vpack.c.b16 %v4095, %v4094
    %v4171 = vpack.c.b16 %v4097, %v4096
    %v4172 = vpack.c.b16 %v4099, %v4098
    %v4173 = vpack.c.b16 %v4101, %v4100
    %v4174 = vpack.c.b16 %v4103, %v4102
    %v4175 = vpack.c.b16 %v4105, %v4104
    %v4176 = vpack.c.b16 %v4107, %v4106
    %v4177 = vpack.c.b16 %v4109, %v4108
    %v4178 = vpack.c.b16 %v4111, %v4110
    %v4179 = vpack.c.b16 %v4113, %v4112
    %v4180 = vpack.c.b16 %v4115, %v4114
    %v4181 = vpack.c.b16 %v4117, %v4116
    %v4182 = vpack.c.b16 %v4119, %v4118
    %v4183 = vpack.c.b16 %v4121, %v4120
    %v4184 = vpack.c.b16 %v4123, %v4122
    %v4185 = vpack.c.b16 %v4125, %v4124
    %v4186 = vpack.c.b16 %v4127, %v4126
    %v4187 = vpack.c.b16 %v4129, %v4128
    %v4188 = vpack.c.b16 %v4131, %v4130
    %v4189 = vpack.c.b16 %v4133, %v4132
    %v4190 = vpack.c.b16 %v4135, %v4134
    %v4191 = vpack.c.b16 %v4137, %v4136
    %v4192 = vpack.c.b16 %v4139, %v4138
    %v4193 = vpack.c.b16 %v4141, %v4140
    %v4194 = vpack.c.b16 %v4143, %v4142
    %v4195 = vpack.c.b16 %v4145, %v4144
    %v4196 = vpack.c.b16 %v4147, %v4146
    %v4197 = vpack.c.b16 %v4149, %v4148
    %v4198 = vpack.c.b16 %v4151, %v4150
    %v4199 = vpack.c.b16 %v4153, %v4152
    %v4200 = vpack.c.b16 %v4155, %v4154
    %v4201 = vpack.c.b16 %v4157, %v4156
    %v4202 = vpack.c.b16 %v4159, %v4158
    %v4203 = vpack.c.b16 %v4161, %v4160
    %v4204 = vpack.c.b16 %v4163, %v4162
    %vm4205 = vcmask 1044480
    %v4206 = vrot.slane %v4164, 3
    %v4207 = vrot.slane %v4165, 3
    %v4208 = vsel %vm4205, %v4206, %v4207
    %v4209 = vrot.slane %v4166, 3
    %v4210 = vsel %vm4205, %v4207, %v4209
    %v4211 = vrot.slane %v4167, 3
    %v4212 = vsel %vm4205, %v4209, %v4211
    %v4213 = vrot.slane %v4168, 3
    %v4214 = vsel %vm4205, %v4211, %v4213
    %v4215 = vrot.slane %v4169, 3
    %v4216 = vsel %vm4205, %v4213, %v4215
    %v4217 = vrot.slane %v4170, 3
    %v4218 = vsel %vm4205, %v4215, %v4217
    %v4219 = vrot.slane %v4171, 3
    %v4220 = vsel %vm4205, %v4217, %v4219
    %v4221 = vrot.slane %v4172, 3
    %v4222 = vsel %vm4205, %v4219, %v4221
    %v4223 = vrot.slane %v4173, 3
    %v4224 = vsel %vm4205, %v4221, %v4223
    %v4225 = vrot.slane %v4174, 3
    %v4226 = vsel %vm4205, %v4223, %v4225
    %v4227 = vrot.slane %v4175, 3
    %v4228 = vsel %vm4205, %v4225, %v4227
    %v4229 = vrot.slane %v4176, 3
    %v4230 = vsel %vm4205, %v4227, %v4229
    %v4231 = vrot.slane %v4177, 3
    %v4232 = vsel %vm4205, %v4229, %v4231
    %v4233 = vrot.slane %v4178, 3
    %v4234 = vsel %vm4205, %v4231, %v4233
    %v4235 = vrot.slane %v4179, 3
    %v4236 = vsel %vm4205, %v4233, %v4235
    %v4237 = vrot.slane %v4180, 3
    %v4238 = vsel %vm4205, %v4235, %v4237
    %v4239 = vrot.slane %v4181, 3
    %v4240 = vsel %vm4205, %v4237, %v4239
    %v4241 = vrot.slane %v4182, 3
    %v4242 = vsel %vm4205, %v4239, %v4241
    %v4243 = vrot.slane %v4183, 3
    %v4244 = vsel %vm4205, %v4241, %v4243
    %v4245 = vrot.slane %v4184, 3
    %v4246 = vsel %vm4205, %v4243, %v4245
    %v4247 = vrot.slane %v4185, 3
    %v4248 = vsel %vm4205, %v4245, %v4247
    %v4249 = vrot.slane %v4186, 3
    %v4250 = vsel %vm4205, %v4247, %v4249
    %v4251 = vrot.slane %v4187, 3
    %v4252 = vsel %vm4205, %v4249, %v4251
    %v4253 = vrot.slane %v4188, 3
    %v4254 = vsel %vm4205, %v4251, %v4253
    %v4255 = vrot.slane %v4189, 3
    %v4256 = vsel %vm4205, %v4253, %v4255
    %v4257 = vrot.slane %v4190, 3
    %v4258 = vsel %vm4205, %v4255, %v4257
    %v4259 = vrot.slane %v4191, 3
    %v4260 = vsel %vm4205, %v4257, %v4259
    %v4261 = vrot.slane %v4192, 3
    %v4262 = vsel %vm4205, %v4259, %v4261
    %v4263 = vrot.slane %v4193, 3
    %v4264 = vsel %vm4205, %v4261, %v4263
    %v4265 = vrot.slane %v4194, 3
    %v4266 = vsel %vm4205, %v4263, %v4265
    %v4267 = vrot.slane %v4195, 3
    %v4268 = vsel %vm4205, %v4265, %v4267
    %v4269 = vrot.slane %v4196, 3
    %v4270 = vsel %vm4205, %v4267, %v4269
    %v4271 = vrot.slane %v4197, 3
    %v4272 = vsel %vm4205, %v4269, %v4271
    %v4273 = vrot.slane %v4198, 3
    %v4274 = vsel %vm4205, %v4271, %v4273
    %v4275 = vrot.slane %v4199, 3
    %v4276 = vsel %vm4205, %v4273, %v4275
    %v4277 = vrot.slane %v4200, 3
    %v4278 = vsel %vm4205, %v4275, %v4277
    %v4279 = vrot.slane %v4201, 3
    %v4280 = vsel %vm4205, %v4277, %v4279
    %v4281 = vrot.slane %v4202, 3
    %v4282 = vsel %vm4205, %v4279, %v4281
    %v4283 = vrot.slane %v4203, 3
    %v4284 = vsel %vm4205, %v4281, %v4283
    %v4285 = vrot.slane %v4204, 3
    %v4286 = vsel %vm4205, %v4283, %v4285
    %v4344 = vunpack.c.l.b16 %v3984
    %v4345 = vunpack.c.l.b16 %v3985
    %v4346 = vunpack.c.l.b16 %v3986
    %v4347 = vunpack.c.l.b16 %v3987
    %v4348 = vunpack.c.l.b16 %v3988
    %v4349 = vunpack.c.l.b16 %v3989
    %v4350 = vunpack.c.l.b16 %v3990
    %v4351 = vunpack.c.l.b16 %v3991
    %v4352 = vunpack.c.l.b16 %v3992
    %v4353 = vunpack.c.l.b16 %v3993
    %v4354 = vunpack.c.l.b16 %v3994
    %v4355 = vunpack.c.l.b16 %v3995
    %v4356 = vunpack.c.l.b16 %v3996
    %v4357 = vunpack.c.l.b16 %v3997
    %v4358 = vunpack.c.l.b16 %v3998
    %v4359 = vunpack.c.l.b16 %v3999
    %v4360 = vpack.c.b16 %v4345, %v4344
    %v4361 = vpack.c.b16 %v4347, %v4346
    %v4362 = vpack.c.b16 %v4349, %v4348
    %v4363 = vpack.c.b16 %v4351, %v4350
    %v4364 = vpack.c.b16 %v4353, %v4352
    %v4365 = vpack.c.b16 %v4355, %v4354
    %v4366 = vpack.c.b16 %v4357, %v4356
    %v4367 = vpack.c.b16 %v4359, %v4358
    %4376 = vmatprep.subr.bf16.mxu0 0
    %4377 = vmatpush1.bf16.msra.mxu0 %v4360
    %4378 = vmatprep.subr.bf16.mxu0 0
    %4379 = vmatpush1.bf16.msra.mxu0 %v4361
    %4380 = vmatprep.subr.bf16.mxu0 0
    %4381 = vmatpush1.bf16.msra.mxu0 %v4362
    %4382 = vmatprep.subr.bf16.mxu0 0
    %4383 = vmatpush1.bf16.msra.mxu0 %v4363
    %4384 = vmatprep.subr.bf16.mxu0 0
    %4385 = vmatpush1.bf16.msra.mxu0 %v4364
    %4386 = vmatprep.subr.bf16.mxu0 0
    %4387 = vmatpush1.bf16.msra.mxu0 %v4365
    %4388 = vmatprep.subr.bf16.mxu0 0
    %4389 = vmatpush1.bf16.msra.mxu0 %v4366
    %4390 = vmatprep.subr.bf16.mxu0 0
    %4391 = vmatpush1.bf16.msra.mxu0 %v4367
    %4392 = vmatprep.subr.bf16.mxu0 0
    %4393 = vmatpush1.bf16.msra.mxu0 0
    %4394 = vmatprep.subr.bf16.mxu0 0
    %4395 = vmatpush1.bf16.msra.mxu0 0
    %4396 = vmatprep.subr.bf16.mxu0 0
    %4397 = vmatpush1.bf16.msra.mxu0 0
    %4398 = vmatprep.subr.bf16.mxu0 0
    %4399 = vmatpush1.bf16.msra.mxu0 0
    %4400 = vmatprep.subr.bf16.mxu0 0
    %4401 = vmatpush1.bf16.msra.mxu0 0
    %4402 = vmatprep.subr.bf16.mxu0 0
    %4403 = vmatpush1.bf16.msra.mxu0 0
    %4404 = vmatprep.subr.bf16.mxu0 0
    %4405 = vmatpush1.bf16.msra.mxu0 0
    %4406 = vmatprep.subr.bf16.mxu0 0
    %4407 = vmatpush1.bf16.msra.mxu0 0
    %4408 = vmatprep.mubr.bf16.mxu0 0
    %4409 = vmatmul.mubr.bf16.gmra.mrb[0].mxu0 %v4208
    %v4410 = vpop.f32.mrb[0].mxu0
    %v4411 = vadd.f32 0.0, %v4410
    %v4412 = vpop.f32.mrb[0].mxu0
    %v4413 = vpop.f32.mrb[0].mxu0
    %v4414 = vadd.f32 0.0, %v4413
    %v4415 = vpop.f32.mrb[0].mxu0
    %4416 = vmatprep.mubr.bf16.mxu0 0
    %4417 = vmatmul.mubr.bf16.gmra.mrb[0].mxu0 %v4210
    %v4418 = vpop.f32.mrb[0].mxu0
    %v4419 = vadd.f32 0.0, %v4418
    %v4420 = vpop.f32.mrb[0].mxu0
    %v4421 = vpop.f32.mrb[0].mxu0
    %v4422 = vadd.f32 0.0, %v4421
    %v4423 = vpop.f32.mrb[0].mxu0
    %4424 = vmatprep.mubr.bf16.mxu0 0
    %4425 = vmatmul.mubr.bf16.gmra.mrb[0].mxu0 %v4212
    %v4426 = vpop.f32.mrb[0].mxu0
    %v4427 = vadd.f32 0.0, %v4426
    %v4428 = vpop.f32.mrb[0].mxu0
    %v4429 = vpop.f32.mrb[0].mxu0
    %v4430 = vadd.f32 0.0, %v4429
    %v4431 = vpop.f32.mrb[0].mxu0
    %4432 = vmatprep.mubr.bf16.mxu0 0
    %4433 = vmatmul.mubr.bf16.gmra.mrb[0].mxu0 %v4214
    %v4434 = vpop.f32.mrb[0].mxu0
    %v4435 = vadd.f32 0.0, %v4434
    %v4436 = vpop.f32.mrb[0].mxu0
    %v4437 = vpop.f32.mrb[0].mxu0
    %v4438 = vadd.f32 0.0, %v4437
    %v4439 = vpop.f32.mrb[0].mxu0
    %4440 = vmatprep.mubr.bf16.mxu0 0
    %4441 = vmatmul.mubr.bf16.gmra.mrb[0].mxu0 %v4216
    %v4442 = vpop.f32.mrb[0].mxu0
    %v4443 = vadd.f32 0.0, %v4442
    %v4444 = vpop.f32.mrb[0].mxu0
    %v4445 = vpop.f32.mrb[0].mxu0
    %v4446 = vadd.f32 0.0, %v4445
    %v4447 = vpop.f32.mrb[0].mxu0
    %4448 = vmatprep.mubr.bf16.mxu0 0
    %4449 = vmatmul.mubr.bf16.gmra.mrb[0].mxu0 %v4218
    %v4450 = vpop.f32.mrb[0].mxu0
    %v4451 = vadd.f32 0.0, %v4450
    %v4452 = vpop.f32.mrb[0].mxu0
    %v4453 = vpop.f32.mrb[0].mxu0
    %v4454 = vadd.f32 0.0, %v4453
    %v4455 = vpop.f32.mrb[0].mxu0
    %4456 = vmatprep.mubr.bf16.mxu0 0
    %4457 = vmatmul.mubr.bf16.gmra.mrb[0].mxu0 %v4220
    %v4458 = vpop.f32.mrb[0].mxu0
    %v4459 = vadd.f32 0.0, %v4458
    %v4460 = vpop.f32.mrb[0].mxu0
    %v4461 = vpop.f32.mrb[0].mxu0
    %v4462 = vadd.f32 0.0, %v4461
    %v4463 = vpop.f32.mrb[0].mxu0
    %4464 = vmatprep.mubr.bf16.mxu0 0
    %4465 = vmatmul.mubr.bf16.gmra.mrb[0].mxu0 %v4222
    %v4466 = vpop.f32.mrb[0].mxu0
    %v4467 = vadd.f32 0.0, %v4466
    %v4468 = vpop.f32.mrb[0].mxu0
    %v4469 = vpop.f32.mrb[0].mxu0
    %v4470 = vadd.f32 0.0, %v4469
    %v4471 = vpop.f32.mrb[0].mxu0
    %4472 = vmatprep.mubr.bf16.mxu0 0
    %4473 = vmatmul.mubr.bf16.gmra.mrb[0].mxu0 %v4224
    %v4474 = vpop.f32.mrb[0].mxu0
    %v4475 = vadd.f32 0.0, %v4474
    %v4476 = vpop.f32.mrb[0].mxu0
    %v4477 = vpop.f32.mrb[0].mxu0
    %v4478 = vadd.f32 0.0, %v4477
    %v4479 = vpop.f32.mrb[0].mxu0
    %4480 = vmatprep.mubr.bf16.mxu0 0
    %4481 = vmatmul.mubr.bf16.gmra.mrb[0].mxu0 %v4226
    %v4482 = vpop.f32.mrb[0].mxu0
    %v4483 = vadd.f32 0.0, %v4482
    %v4484 = vpop.f32.mrb[0].mxu0
    %v4485 = vpop.f32.mrb[0].mxu0
    %v4486 = vadd.f32 0.0, %v4485
    %v4487 = vpop.f32.mrb[0].mxu0
    %4488 = vmatprep.mubr.bf16.mxu0 0
    %4489 = vmatmul.mubr.bf16.gmra.mrb[0].mxu0 %v4228
    %v4490 = vpop.f32.mrb[0].mxu0
    %v4491 = vadd.f32 0.0, %v4490
    %v4492 = vpop.f32.mrb[0].mxu0
    %v4493 = vpop.f32.mrb[0].mxu0
    %v4494 = vadd.f32 0.0, %v4493
    %v4495 = vpop.f32.mrb[0].mxu0
    %4496 = vmatprep.mubr.bf16.mxu0 0
    %4497 = vmatmul.mubr.bf16.gmra.mrb[0].mxu0 %v4230
    %v4498 = vpop.f32.mrb[0].mxu0
    %v4499 = vadd.f32 0.0, %v4498
    %v4500 = vpop.f32.mrb[0].mxu0
    %v4501 = vpop.f32.mrb[0].mxu0
    %v4502 = vadd.f32 0.0, %v4501
    %v4503 = vpop.f32.mrb[0].mxu0
    %4504 = vmatprep.mubr.bf16.mxu0 0
    %4505 = vmatmul.mubr.bf16.gmra.mrb[0].mxu0 %v4232
    %v4506 = vpop.f32.mrb[0].mxu0
    %v4507 = vadd.f32 0.0, %v4506
    %v4508 = vpop.f32.mrb[0].mxu0
    %v4509 = vpop.f32.mrb[0].mxu0
    %v4510 = vadd.f32 0.0, %v4509
    %v4511 = vpop.f32.mrb[0].mxu0
    %4512 = vmatprep.mubr.bf16.mxu0 0
    %4513 = vmatmul.mubr.bf16.gmra.mrb[0].mxu0 %v4234
    %v4514 = vpop.f32.mrb[0].mxu0
    %v4515 = vadd.f32 0.0, %v4514
    %v4516 = vpop.f32.mrb[0].mxu0
    %v4517 = vpop.f32.mrb[0].mxu0
    %v4518 = vadd.f32 0.0, %v4517
    %v4519 = vpop.f32.mrb[0].mxu0
    %4520 = vmatprep.mubr.bf16.mxu0 0
    %4521 = vmatmul.mubr.bf16.gmra.mrb[0].mxu0 %v4236
    %v4522 = vpop.f32.mrb[0].mxu0
    %v4523 = vadd.f32 0.0, %v4522
    %v4524 = vpop.f32.mrb[0].mxu0
    %v4525 = vpop.f32.mrb[0].mxu0
    %v4526 = vadd.f32 0.0, %v4525
    %v4527 = vpop.f32.mrb[0].mxu0
    %4528 = vmatprep.mubr.bf16.mxu0 0
    %4529 = vmatmul.mubr.bf16.gmra.mrb[0].mxu0 %v4238
    %v4530 = vpop.f32.mrb[0].mxu0
    %v4531 = vadd.f32 0.0, %v4530
    %v4532 = vpop.f32.mrb[0].mxu0
    %v4533 = vpop.f32.mrb[0].mxu0
    %v4534 = vadd.f32 0.0, %v4533
    %v4535 = vpop.f32.mrb[0].mxu0
    %4536 = vmatprep.mubr.bf16.mxu0 0
    %4537 = vmatmul.mubr.bf16.gmra.mrb[0].mxu0 %v4240
    %v4538 = vpop.f32.mrb[0].mxu0
    %v4539 = vadd.f32 0.0, %v4538
    %v4540 = vpop.f32.mrb[0].mxu0
    %v4541 = vpop.f32.mrb[0].mxu0
    %v4542 = vadd.f32 0.0, %v4541
    %v4543 = vpop.f32.mrb[0].mxu0
    %4544 = vmatprep.mubr.bf16.mxu0 0
    %4545 = vmatmul.mubr.bf16.gmra.mrb[0].mxu0 %v4242
    %v4546 = vpop.f32.mrb[0].mxu0
    %v4547 = vadd.f32 0.0, %v4546
    %v4548 = vpop.f32.mrb[0].mxu0
    %v4549 = vpop.f32.mrb[0].mxu0
    %v4550 = vadd.f32 0.0, %v4549
    %v4551 = vpop.f32.mrb[0].mxu0
    %4552 = vmatprep.mubr.bf16.mxu0 0
    %4553 = vmatmul.mubr.bf16.gmra.mrb[0].mxu0 %v4244
    %v4554 = vpop.f32.mrb[0].mxu0
    %v4555 = vadd.f32 0.0, %v4554
    %v4556 = vpop.f32.mrb[0].mxu0
    %v4557 = vpop.f32.mrb[0].mxu0
    %v4558 = vadd.f32 0.0, %v4557
    %v4559 = vpop.f32.mrb[0].mxu0
    %4560 = vmatprep.mubr.bf16.mxu0 0
    %4561 = vmatmul.mubr.bf16.gmra.mrb[0].mxu0 %v4246
    %v4562 = vpop.f32.mrb[0].mxu0
    %v4563 = vadd.f32 0.0, %v4562
    %v4564 = vpop.f32.mrb[0].mxu0
    %v4565 = vpop.f32.mrb[0].mxu0
    %v4566 = vadd.f32 0.0, %v4565
    %v4567 = vpop.f32.mrb[0].mxu0
    %4568 = vmatprep.mubr.bf16.mxu0 0
    %4569 = vmatmul.mubr.bf16.gmra.mrb[0].mxu0 %v4248
    %v4570 = vpop.f32.mrb[0].mxu0
    %v4571 = vadd.f32 0.0, %v4570
    %v4572 = vpop.f32.mrb[0].mxu0
    %v4573 = vpop.f32.mrb[0].mxu0
    %v4574 = vadd.f32 0.0, %v4573
    %v4575 = vpop.f32.mrb[0].mxu0
    %4576 = vmatprep.mubr.bf16.mxu0 0
    %4577 = vmatmul.mubr.bf16.gmra.mrb[0].mxu0 %v4250
    %v4578 = vpop.f32.mrb[0].mxu0
    %v4579 = vadd.f32 0.0, %v4578
    %v4580 = vpop.f32.mrb[0].mxu0
    %v4581 = vpop.f32.mrb[0].mxu0
    %v4582 = vadd.f32 0.0, %v4581
    %v4583 = vpop.f32.mrb[0].mxu0
    %4584 = vmatprep.mubr.bf16.mxu0 0
    %4585 = vmatmul.mubr.bf16.gmra.mrb[0].mxu0 %v4252
    %v4586 = vpop.f32.mrb[0].mxu0
    %v4587 = vadd.f32 0.0, %v4586
    %v4588 = vpop.f32.mrb[0].mxu0
    %v4589 = vpop.f32.mrb[0].mxu0
    %v4590 = vadd.f32 0.0, %v4589
    %v4591 = vpop.f32.mrb[0].mxu0
    %4592 = vmatprep.mubr.bf16.mxu0 0
    %4593 = vmatmul.mubr.bf16.gmra.mrb[0].mxu0 %v4254
    %v4594 = vpop.f32.mrb[0].mxu0
    %v4595 = vadd.f32 0.0, %v4594
    %v4596 = vpop.f32.mrb[0].mxu0
    %v4597 = vpop.f32.mrb[0].mxu0
    %v4598 = vadd.f32 0.0, %v4597
    %v4599 = vpop.f32.mrb[0].mxu0
    %4600 = vmatprep.mubr.bf16.mxu0 0
    %4601 = vmatmul.mubr.bf16.gmra.mrb[0].mxu0 %v4256
    %v4602 = vpop.f32.mrb[0].mxu0
    %v4603 = vadd.f32 0.0, %v4602
    %v4604 = vpop.f32.mrb[0].mxu0
    %v4605 = vpop.f32.mrb[0].mxu0
    %v4606 = vadd.f32 0.0, %v4605
    %v4607 = vpop.f32.mrb[0].mxu0
    %4608 = vmatprep.mubr.bf16.mxu0 0
    %4609 = vmatmul.mubr.bf16.gmra.mrb[0].mxu0 %v4258
    %v4610 = vpop.f32.mrb[0].mxu0
    %v4611 = vadd.f32 0.0, %v4610
    %v4612 = vpop.f32.mrb[0].mxu0
    %v4613 = vpop.f32.mrb[0].mxu0
    %v4614 = vadd.f32 0.0, %v4613
    %v4615 = vpop.f32.mrb[0].mxu0
    %4616 = vmatprep.mubr.bf16.mxu0 0
    %4617 = vmatmul.mubr.bf16.gmra.mrb[0].mxu0 %v4260
    %v4618 = vpop.f32.mrb[0].mxu0
    %v4619 = vadd.f32 0.0, %v4618
    %v4620 = vpop.f32.mrb[0].mxu0
    %v4621 = vpop.f32.mrb[0].mxu0
    %v4622 = vadd.f32 0.0, %v4621
    %v4623 = vpop.f32.mrb[0].mxu0
    %4624 = vmatprep.mubr.bf16.mxu0 0
    %4625 = vmatmul.mubr.bf16.gmra.mrb[0].mxu0 %v4262
    %v4626 = vpop.f32.mrb[0].mxu0
    %v4627 = vadd.f32 0.0, %v4626
    %v4628 = vpop.f32.mrb[0].mxu0
    %v4629 = vpop.f32.mrb[0].mxu0
    %v4630 = vadd.f32 0.0, %v4629
    %v4631 = vpop.f32.mrb[0].mxu0
    %4632 = vmatprep.mubr.bf16.mxu0 0
    %4633 = vmatmul.mubr.bf16.gmra.mrb[0].mxu0 %v4264
    %v4634 = vpop.f32.mrb[0].mxu0
    %v4635 = vadd.f32 0.0, %v4634
    %v4636 = vpop.f32.mrb[0].mxu0
    %v4637 = vpop.f32.mrb[0].mxu0
    %v4638 = vadd.f32 0.0, %v4637
    %v4639 = vpop.f32.mrb[0].mxu0
    %4640 = vmatprep.mubr.bf16.mxu0 0
    %4641 = vmatmul.mubr.bf16.gmra.mrb[0].mxu0 %v4266
    %v4642 = vpop.f32.mrb[0].mxu0
    %v4643 = vadd.f32 0.0, %v4642
    %v4644 = vpop.f32.mrb[0].mxu0
    %v4645 = vpop.f32.mrb[0].mxu0
    %v4646 = vadd.f32 0.0, %v4645
    %v4647 = vpop.f32.mrb[0].mxu0
    %4648 = vmatprep.mubr.bf16.mxu0 0
    %4649 = vmatmul.mubr.bf16.gmra.mrb[0].mxu0 %v4268
    %v4650 = vpop.f32.mrb[0].mxu0
    %v4651 = vadd.f32 0.0, %v4650
    %v4652 = vpop.f32.mrb[0].mxu0
    %v4653 = vpop.f32.mrb[0].mxu0
    %v4654 = vadd.f32 0.0, %v4653
    %v4655 = vpop.f32.mrb[0].mxu0
    %4656 = vmatprep.mubr.bf16.mxu0 0
    %4657 = vmatmul.mubr.bf16.gmra.mrb[0].mxu0 %v4270
    %v4658 = vpop.f32.mrb[0].mxu0
    %v4659 = vadd.f32 0.0, %v4658
    %v4660 = vpop.f32.mrb[0].mxu0
    %v4661 = vpop.f32.mrb[0].mxu0
    %v4662 = vadd.f32 0.0, %v4661
    %v4663 = vpop.f32.mrb[0].mxu0
    %4664 = vmatprep.mubr.bf16.mxu0 0
    %4665 = vmatmul.mubr.bf16.gmra.mrb[0].mxu0 %v4272
    %v4666 = vpop.f32.mrb[0].mxu0
    %v4667 = vadd.f32 0.0, %v4666
    %v4668 = vpop.f32.mrb[0].mxu0
    %v4669 = vpop.f32.mrb[0].mxu0
    %v4670 = vadd.f32 0.0, %v4669
    %v4671 = vpop.f32.mrb[0].mxu0
    %4672 = vmatprep.mubr.bf16.mxu0 0
    %4673 = vmatmul.mubr.bf16.gmra.mrb[0].mxu0 %v4274
    %v4674 = vpop.f32.mrb[0].mxu0
    %v4675 = vadd.f32 0.0, %v4674
    %v4676 = vpop.f32.mrb[0].mxu0
    %v4677 = vpop.f32.mrb[0].mxu0
    %v4678 = vadd.f32 0.0, %v4677
    %v4679 = vpop.f32.mrb[0].mxu0
    %4680 = vmatprep.mubr.bf16.mxu0 0
    %4681 = vmatmul.mubr.bf16.gmra.mrb[0].mxu0 %v4276
    %v4682 = vpop.f32.mrb[0].mxu0
    %v4683 = vadd.f32 0.0, %v4682
    %v4684 = vpop.f32.mrb[0].mxu0
    %v4685 = vpop.f32.mrb[0].mxu0
    %v4686 = vadd.f32 0.0, %v4685
    %v4687 = vpop.f32.mrb[0].mxu0
    %4688 = vmatprep.mubr.bf16.mxu0 0
    %4689 = vmatmul.mubr.bf16.gmra.mrb[0].mxu0 %v4278
    %v4690 = vpop.f32.mrb[0].mxu0
    %v4691 = vadd.f32 0.0, %v4690
    %v4692 = vpop.f32.mrb[0].mxu0
    %v4693 = vpop.f32.mrb[0].mxu0
    %v4694 = vadd.f32 0.0, %v4693
    %v4695 = vpop.f32.mrb[0].mxu0
    %4696 = vmatprep.mubr.bf16.mxu0 0
    %4697 = vmatmul.mubr.bf16.gmra.mrb[0].mxu0 %v4280
    %v4698 = vpop.f32.mrb[0].mxu0
    %v4699 = vadd.f32 0.0, %v4698
    %v4700 = vpop.f32.mrb[0].mxu0
    %v4701 = vpop.f32.mrb[0].mxu0
    %v4702 = vadd.f32 0.0, %v4701
    %v4703 = vpop.f32.mrb[0].mxu0
    %4704 = vmatprep.mubr.bf16.mxu0 0
    %4705 = vmatmul.mubr.bf16.gmra.mrb[0].mxu0 %v4282
    %v4706 = vpop.f32.mrb[0].mxu0
    %v4707 = vadd.f32 0.0, %v4706
    %v4708 = vpop.f32.mrb[0].mxu0
    %v4709 = vpop.f32.mrb[0].mxu0
    %v4710 = vadd.f32 0.0, %v4709
    %v4711 = vpop.f32.mrb[0].mxu0
    %4712 = vmatprep.mubr.bf16.mxu0 0
    %4713 = vmatmul.mubr.bf16.gmra.mrb[0].mxu0 %v4284
    %v4714 = vpop.f32.mrb[0].mxu0
    %v4715 = vadd.f32 0.0, %v4714
    %v4716 = vpop.f32.mrb[0].mxu0
    %v4717 = vpop.f32.mrb[0].mxu0
    %v4718 = vadd.f32 0.0, %v4717
    %v4719 = vpop.f32.mrb[0].mxu0
    %4720 = vmatprep.mubr.bf16.mxu0 0
    %4721 = vmatmul.mubr.bf16.gmra.mrb[0].mxu0 %v4286
    %v4722 = vpop.f32.mrb[0].mxu0
    %v4723 = vadd.f32 0.0, %v4722
    %v4724 = vpop.f32.mrb[0].mxu0
    %v4725 = vpop.f32.mrb[0].mxu0
    %v4726 = vadd.f32 0.0, %v4725
    %v4727 = vpop.f32.mrb[0].mxu0
    %4728 = vmatprep.mubr.bf16.mxu0 0
    %4729 = vmatmul.mubr.bf16.gmra.mrb[0].mxu0 %v4285
    %v4730 = vpop.f32.mrb[0].mxu0
    %v4731 = vadd.f32 0.0, %v4730
    %v4732 = vpop.f32.mrb[0].mxu0
    %v4733 = vpop.f32.mrb[0].mxu0
    %v4734 = vpop.f32.mrb[0].mxu0
    %4735 = vdwg.mxu0
    %v4737 = vunpack.c.l.b16 %v3884
    %v4738 = vpack.c.b16 %v4083, %v4737
    %vm4739 = vsmask.f32 5376
    %v4741 = vshrl.u32 %v4738, 16
    %v4743 = vrot.slane %v4741, 2
    %v4744 = vshll.u32 %v4738, 16
    %v4746 = vrot.slane %v4744, 3
    %v4747 = vor.u32 %v4743, %v4746
    %v4749 = vshrl.u32 %v4165, 16
    %v4751 = vrot.slane %v4749, 2
    %v4752 = vshll.u32 %v4165, 16
    %v4754 = vrot.slane %v4752, 3
    %v4755 = vor.u32 %v4751, %v4754
    %v4756 = vsel %vm4739, %v4747, %v4755
    %v4758 = vshrl.u32 %v4166, 16
    %v4760 = vrot.slane %v4758, 2
    %v4761 = vshll.u32 %v4166, 16
    %v4763 = vrot.slane %v4761, 3
    %v4764 = vor.u32 %v4760, %v4763
    %v4765 = vsel %vm4739, %v4755, %v4764
    %v4767 = vshrl.u32 %v4167, 16
    %v4769 = vrot.slane %v4767, 2
    %v4770 = vshll.u32 %v4167, 16
    %v4772 = vrot.slane %v4770, 3
    %v4773 = vor.u32 %v4769, %v4772
    %v4774 = vsel %vm4739, %v4764, %v4773
    %v4776 = vshrl.u32 %v4168, 16
    %v4778 = vrot.slane %v4776, 2
    %v4779 = vshll.u32 %v4168, 16
    %v4781 = vrot.slane %v4779, 3
    %v4782 = vor.u32 %v4778, %v4781
    %v4783 = vsel %vm4739, %v4773, %v4782
    %v4785 = vshrl.u32 %v4169, 16
    %v4787 = vrot.slane %v4785, 2
    %v4788 = vshll.u32 %v4169, 16
    %v4790 = vrot.slane %v4788, 3
    %v4791 = vor.u32 %v4787, %v4790
    %v4792 = vsel %vm4739, %v4782, %v4791
    %v4794 = vshrl.u32 %v4170, 16
    %v4796 = vrot.slane %v4794, 2
    %v4797 = vshll.u32 %v4170, 16
    %v4799 = vrot.slane %v4797, 3
    %v4800 = vor.u32 %v4796, %v4799
    %v4801 = vsel %vm4739, %v4791, %v4800
    %v4803 = vshrl.u32 %v4171, 16
    %v4805 = vrot.slane %v4803, 2
    %v4806 = vshll.u32 %v4171, 16
    %v4808 = vrot.slane %v4806, 3
    %v4809 = vor.u32 %v4805, %v4808
    %v4810 = vsel %vm4739, %v4800, %v4809
    %v4812 = vshrl.u32 %v4172, 16
    %v4814 = vrot.slane %v4812, 2
    %v4815 = vshll.u32 %v4172, 16
    %v4817 = vrot.slane %v4815, 3
    %v4818 = vor.u32 %v4814, %v4817
    %v4819 = vsel %vm4739, %v4809, %v4818
    %v4821 = vshrl.u32 %v4173, 16
    %v4823 = vrot.slane %v4821, 2
    %v4824 = vshll.u32 %v4173, 16
    %v4826 = vrot.slane %v4824, 3
    %v4827 = vor.u32 %v4823, %v4826
    %v4828 = vsel %vm4739, %v4818, %v4827
    %v4830 = vshrl.u32 %v4174, 16
    %v4832 = vrot.slane %v4830, 2
    %v4833 = vshll.u32 %v4174, 16
    %v4835 = vrot.slane %v4833, 3
    %v4836 = vor.u32 %v4832, %v4835
    %v4837 = vsel %vm4739, %v4827, %v4836
    %v4839 = vshrl.u32 %v4175, 16
    %v4841 = vrot.slane %v4839, 2
    %v4842 = vshll.u32 %v4175, 16
    %v4844 = vrot.slane %v4842, 3
    %v4845 = vor.u32 %v4841, %v4844
    %v4846 = vsel %vm4739, %v4836, %v4845
    %v4848 = vshrl.u32 %v4176, 16
    %v4850 = vrot.slane %v4848, 2
    %v4851 = vshll.u32 %v4176, 16
    %v4853 = vrot.slane %v4851, 3
    %v4854 = vor.u32 %v4850, %v4853
    %v4855 = vsel %vm4739, %v4845, %v4854
    %v4857 = vshrl.u32 %v4177, 16
    %v4859 = vrot.slane %v4857, 2
    %v4860 = vshll.u32 %v4177, 16
    %v4862 = vrot.slane %v4860, 3
    %v4863 = vor.u32 %v4859, %v4862
    %v4864 = vsel %vm4739, %v4854, %v4863
    %v4866 = vshrl.u32 %v4178, 16
    %v4868 = vrot.slane %v4866, 2
    %v4869 = vshll.u32 %v4178, 16
    %v4871 = vrot.slane %v4869, 3
    %v4872 = vor.u32 %v4868, %v4871
    %v4873 = vsel %vm4739, %v4863, %v4872
    %v4875 = vshrl.u32 %v4179, 16
    %v4877 = vrot.slane %v4875, 2
    %v4878 = vshll.u32 %v4179, 16
    %v4880 = vrot.slane %v4878, 3
    %v4881 = vor.u32 %v4877, %v4880
    %v4882 = vsel %vm4739, %v4872, %v4881
    %v4884 = vshrl.u32 %v4180, 16
    %v4886 = vrot.slane %v4884, 2
    %v4887 = vshll.u32 %v4180, 16
    %v4889 = vrot.slane %v4887, 3
    %v4890 = vor.u32 %v4886, %v4889
    %v4891 = vsel %vm4739, %v4881, %v4890
    %v4893 = vshrl.u32 %v4181, 16
    %v4895 = vrot.slane %v4893, 2
    %v4896 = vshll.u32 %v4181, 16
    %v4898 = vrot.slane %v4896, 3
    %v4899 = vor.u32 %v4895, %v4898
    %v4900 = vsel %vm4739, %v4890, %v4899
    %v4902 = vshrl.u32 %v4182, 16
    %v4904 = vrot.slane %v4902, 2
    %v4905 = vshll.u32 %v4182, 16
    %v4907 = vrot.slane %v4905, 3
    %v4908 = vor.u32 %v4904, %v4907
    %v4909 = vsel %vm4739, %v4899, %v4908
    %v4911 = vshrl.u32 %v4183, 16
    %v4913 = vrot.slane %v4911, 2
    %v4914 = vshll.u32 %v4183, 16
    %v4916 = vrot.slane %v4914, 3
    %v4917 = vor.u32 %v4913, %v4916
    %v4918 = vsel %vm4739, %v4908, %v4917
    %v4920 = vshrl.u32 %v4184, 16
    %v4922 = vrot.slane %v4920, 2
    %v4923 = vshll.u32 %v4184, 16
    %v4925 = vrot.slane %v4923, 3
    %v4926 = vor.u32 %v4922, %v4925
    %v4927 = vsel %vm4739, %v4917, %v4926
    %v4929 = vshrl.u32 %v4185, 16
    %v4931 = vrot.slane %v4929, 2
    %v4932 = vshll.u32 %v4185, 16
    %v4934 = vrot.slane %v4932, 3
    %v4935 = vor.u32 %v4931, %v4934
    %v4936 = vsel %vm4739, %v4926, %v4935
    %v4938 = vshrl.u32 %v4186, 16
    %v4940 = vrot.slane %v4938, 2
    %v4941 = vshll.u32 %v4186, 16
    %v4943 = vrot.slane %v4941, 3
    %v4944 = vor.u32 %v4940, %v4943
    %v4945 = vsel %vm4739, %v4935, %v4944
    %v4947 = vshrl.u32 %v4187, 16
    %v4949 = vrot.slane %v4947, 2
    %v4950 = vshll.u32 %v4187, 16
    %v4952 = vrot.slane %v4950, 3
    %v4953 = vor.u32 %v4949, %v4952
    %v4954 = vsel %vm4739, %v4944, %v4953
    %v4956 = vshrl.u32 %v4188, 16
    %v4958 = vrot.slane %v4956, 2
    %v4959 = vshll.u32 %v4188, 16
    %v4961 = vrot.slane %v4959, 3
    %v4962 = vor.u32 %v4958, %v4961
    %v4963 = vsel %vm4739, %v4953, %v4962
    %v4965 = vshrl.u32 %v4189, 16
    %v4967 = vrot.slane %v4965, 2
    %v4968 = vshll.u32 %v4189, 16
    %v4970 = vrot.slane %v4968, 3
    %v4971 = vor.u32 %v4967, %v4970
    %v4972 = vsel %vm4739, %v4962, %v4971
    %v4974 = vshrl.u32 %v4190, 16
    %v4976 = vrot.slane %v4974, 2
    %v4977 = vshll.u32 %v4190, 16
    %v4979 = vrot.slane %v4977, 3
    %v4980 = vor.u32 %v4976, %v4979
    %v4981 = vsel %vm4739, %v4971, %v4980
    %v4983 = vshrl.u32 %v4191, 16
    %v4985 = vrot.slane %v4983, 2
    %v4986 = vshll.u32 %v4191, 16
    %v4988 = vrot.slane %v4986, 3
    %v4989 = vor.u32 %v4985, %v4988
    %v4990 = vsel %vm4739, %v4980, %v4989
    %v4992 = vshrl.u32 %v4192, 16
    %v4994 = vrot.slane %v4992, 2
    %v4995 = vshll.u32 %v4192, 16
    %v4997 = vrot.slane %v4995, 3
    %v4998 = vor.u32 %v4994, %v4997
    %v4999 = vsel %vm4739, %v4989, %v4998
    %v5001 = vshrl.u32 %v4193, 16
    %v5003 = vrot.slane %v5001, 2
    %v5004 = vshll.u32 %v4193, 16
    %v5006 = vrot.slane %v5004, 3
    %v5007 = vor.u32 %v5003, %v5006
    %v5008 = vsel %vm4739, %v4998, %v5007
    %v5010 = vshrl.u32 %v4194, 16
    %v5012 = vrot.slane %v5010, 2
    %v5013 = vshll.u32 %v4194, 16
    %v5015 = vrot.slane %v5013, 3
    %v5016 = vor.u32 %v5012, %v5015
    %v5017 = vsel %vm4739, %v5007, %v5016
    %v5019 = vshrl.u32 %v4195, 16
    %v5021 = vrot.slane %v5019, 2
    %v5022 = vshll.u32 %v4195, 16
    %v5024 = vrot.slane %v5022, 3
    %v5025 = vor.u32 %v5021, %v5024
    %v5026 = vsel %vm4739, %v5016, %v5025
    %v5028 = vshrl.u32 %v4196, 16
    %v5030 = vrot.slane %v5028, 2
    %v5031 = vshll.u32 %v4196, 16
    %v5033 = vrot.slane %v5031, 3
    %v5034 = vor.u32 %v5030, %v5033
    %v5035 = vsel %vm4739, %v5025, %v5034
    %v5037 = vshrl.u32 %v4197, 16
    %v5039 = vrot.slane %v5037, 2
    %v5040 = vshll.u32 %v4197, 16
    %v5042 = vrot.slane %v5040, 3
    %v5043 = vor.u32 %v5039, %v5042
    %v5044 = vsel %vm4739, %v5034, %v5043
    %v5046 = vshrl.u32 %v4198, 16
    %v5048 = vrot.slane %v5046, 2
    %v5049 = vshll.u32 %v4198, 16
    %v5051 = vrot.slane %v5049, 3
    %v5052 = vor.u32 %v5048, %v5051
    %v5053 = vsel %vm4739, %v5043, %v5052
    %v5055 = vshrl.u32 %v4199, 16
    %v5057 = vrot.slane %v5055, 2
    %v5058 = vshll.u32 %v4199, 16
    %v5060 = vrot.slane %v5058, 3
    %v5061 = vor.u32 %v5057, %v5060
    %v5062 = vsel %vm4739, %v5052, %v5061
    %v5064 = vshrl.u32 %v4200, 16
    %v5066 = vrot.slane %v5064, 2
    %v5067 = vshll.u32 %v4200, 16
    %v5069 = vrot.slane %v5067, 3
    %v5070 = vor.u32 %v5066, %v5069
    %v5071 = vsel %vm4739, %v5061, %v5070
    %v5073 = vshrl.u32 %v4201, 16
    %v5075 = vrot.slane %v5073, 2
    %v5076 = vshll.u32 %v4201, 16
    %v5078 = vrot.slane %v5076, 3
    %v5079 = vor.u32 %v5075, %v5078
    %v5080 = vsel %vm4739, %v5070, %v5079
    %v5082 = vshrl.u32 %v4202, 16
    %v5084 = vrot.slane %v5082, 2
    %v5085 = vshll.u32 %v4202, 16
    %v5087 = vrot.slane %v5085, 3
    %v5088 = vor.u32 %v5084, %v5087
    %v5089 = vsel %vm4739, %v5079, %v5088
    %v5091 = vshrl.u32 %v4203, 16
    %v5093 = vrot.slane %v5091, 2
    %v5094 = vshll.u32 %v4203, 16
    %v5096 = vrot.slane %v5094, 3
    %v5097 = vor.u32 %v5093, %v5096
    %v5098 = vsel %vm4739, %v5088, %v5097
    %v5100 = vshrl.u32 %v4204, 16
    %v5102 = vrot.slane %v5100, 2
    %v5103 = vshll.u32 %v4204, 16
    %v5105 = vrot.slane %v5103, 3
    %v5106 = vor.u32 %v5102, %v5105
    %v5107 = vsel %vm4739, %v5097, %v5106
    %v5165 = vunpack.c.l.b16 %v3966
    %v5166 = vunpack.c.l.b16 %v3967
    %v5167 = vunpack.c.l.b16 %v3968
    %v5168 = vunpack.c.l.b16 %v3969
    %v5169 = vunpack.c.l.b16 %v3970
    %v5170 = vunpack.c.l.b16 %v3971
    %v5171 = vunpack.c.l.b16 %v3972
    %v5172 = vunpack.c.l.b16 %v3973
    %v5173 = vunpack.c.l.b16 %v3974
    %v5174 = vunpack.c.l.b16 %v3975
    %v5175 = vunpack.c.l.b16 %v3976
    %v5176 = vunpack.c.l.b16 %v3977
    %v5177 = vunpack.c.l.b16 %v3978
    %v5178 = vunpack.c.l.b16 %v3979
    %v5179 = vunpack.c.l.b16 %v3980
    %v5180 = vunpack.c.l.b16 %v3981
    %v5181 = vpack.c.b16 %v5166, %v5165
    %v5182 = vpack.c.b16 %v5168, %v5167
    %v5183 = vpack.c.b16 %v5170, %v5169
    %v5184 = vpack.c.b16 %v5172, %v5171
    %v5185 = vpack.c.b16 %v5174, %v5173
    %v5186 = vpack.c.b16 %v5176, %v5175
    %v5187 = vpack.c.b16 %v5178, %v5177
    %v5188 = vpack.c.b16 %v5180, %v5179
    %5197 = vmatprep.subr.bf16.mxu0 0
    %5198 = vmatpush1.bf16.msra.mxu0 %v5181
    %5199 = vmatprep.subr.bf16.mxu0 0
    %5200 = vmatpush1.bf16.msra.mxu0 %v5182
    %5201 = vmatprep.subr.bf16.mxu0 0
    %5202 = vmatpush1.bf16.msra.mxu0 %v5183
    %5203 = vmatprep.subr.bf16.mxu0 0
    %5204 = vmatpush1.bf16.msra.mxu0 %v5184
    %5205 = vmatprep.subr.bf16.mxu0 0
    %5206 = vmatpush1.bf16.msra.mxu0 %v5185
    %5207 = vmatprep.subr.bf16.mxu0 0
    %5208 = vmatpush1.bf16.msra.mxu0 %v5186
    %5209 = vmatprep.subr.bf16.mxu0 0
    %5210 = vmatpush1.bf16.msra.mxu0 %v5187
    %5211 = vmatprep.subr.bf16.mxu0 0
    %5212 = vmatpush1.bf16.msra.mxu0 %v5188
    %5213 = vmatprep.subr.bf16.mxu0 0
    %5214 = vmatpush1.bf16.msra.mxu0 0
    %5215 = vmatprep.subr.bf16.mxu0 0
    %5216 = vmatpush1.bf16.msra.mxu0 0
    %5217 = vmatprep.subr.bf16.mxu0 0
    %5218 = vmatpush1.bf16.msra.mxu0 0
    %5219 = vmatprep.subr.bf16.mxu0 0
    %5220 = vmatpush1.bf16.msra.mxu0 0
    %5221 = vmatprep.subr.bf16.mxu0 0
    %5222 = vmatpush1.bf16.msra.mxu0 0
    %5223 = vmatprep.subr.bf16.mxu0 0
    %5224 = vmatpush1.bf16.msra.mxu0 0
    %5225 = vmatprep.subr.bf16.mxu0 0
    %5226 = vmatpush1.bf16.msra.mxu0 0
    %5227 = vmatprep.subr.bf16.mxu0 0
    %5228 = vmatpush1.bf16.msra.mxu0 0
    %5229 = vmatprep.mubr.bf16.mxu0 0
    %5230 = vmatmul.mubr.bf16.gmra.mrb[0].mxu0 %v4756
    %v5231 = vpop.f32.mrb[0].mxu0
    %v5232 = vadd.f32 %v4411, %v5231
    %v5233 = vpop.f32.mrb[0].mxu0
    %v5234 = vpop.f32.mrb[0].mxu0
    %v5235 = vadd.f32 %v4414, %v5234
    %v5236 = vpop.f32.mrb[0].mxu0
    %5237 = vmatprep.mubr.bf16.mxu0 0
    %5238 = vmatmul.mubr.bf16.gmra.mrb[0].mxu0 %v4765
    %v5239 = vpop.f32.mrb[0].mxu0
    %v5240 = vadd.f32 %v4419, %v5239
    %v5241 = vpop.f32.mrb[0].mxu0
    %v5242 = vpop.f32.mrb[0].mxu0
    %v5243 = vadd.f32 %v4422, %v5242
    %v5244 = vpop.f32.mrb[0].mxu0
    %5245 = vmatprep.mubr.bf16.mxu0 0
    %5246 = vmatmul.mubr.bf16.gmra.mrb[0].mxu0 %v4774
    %v5247 = vpop.f32.mrb[0].mxu0
    %v5248 = vadd.f32 %v4427, %v5247
    %v5249 = vpop.f32.mrb[0].mxu0
    %v5250 = vpop.f32.mrb[0].mxu0
    %v5251 = vadd.f32 %v4430, %v5250
    %v5252 = vpop.f32.mrb[0].mxu0
    %5253 = vmatprep.mubr.bf16.mxu0 0
    %5254 = vmatmul.mubr.bf16.gmra.mrb[0].mxu0 %v4783
    %v5255 = vpop.f32.mrb[0].mxu0
    %v5256 = vadd.f32 %v4435, %v5255
    %v5257 = vpop.f32.mrb[0].mxu0
    %v5258 = vpop.f32.mrb[0].mxu0
    %v5259 = vadd.f32 %v4438, %v5258
    %v5260 = vpop.f32.mrb[0].mxu0
    %5261 = vmatprep.mubr.bf16.mxu0 0
    %5262 = vmatmul.mubr.bf16.gmra.mrb[0].mxu0 %v4792
    %v5263 = vpop.f32.mrb[0].mxu0
    %v5264 = vadd.f32 %v4443, %v5263
    %v5265 = vpop.f32.mrb[0].mxu0
    %v5266 = vpop.f32.mrb[0].mxu0
    %v5267 = vadd.f32 %v4446, %v5266
    %v5268 = vpop.f32.mrb[0].mxu0
    %5269 = vmatprep.mubr.bf16.mxu0 0
    %5270 = vmatmul.mubr.bf16.gmra.mrb[0].mxu0 %v4801
    %v5271 = vpop.f32.mrb[0].mxu0
    %v5272 = vadd.f32 %v4451, %v5271
    %v5273 = vpop.f32.mrb[0].mxu0
    %v5274 = vpop.f32.mrb[0].mxu0
    %v5275 = vadd.f32 %v4454, %v5274
    %v5276 = vpop.f32.mrb[0].mxu0
    %5277 = vmatprep.mubr.bf16.mxu0 0
    %5278 = vmatmul.mubr.bf16.gmra.mrb[0].mxu0 %v4810
    %v5279 = vpop.f32.mrb[0].mxu0
    %v5280 = vadd.f32 %v4459, %v5279
    %v5281 = vpop.f32.mrb[0].mxu0
    %v5282 = vpop.f32.mrb[0].mxu0
    %v5283 = vadd.f32 %v4462, %v5282
    %v5284 = vpop.f32.mrb[0].mxu0
    %5285 = vmatprep.mubr.bf16.mxu0 0
    %5286 = vmatmul.mubr.bf16.gmra.mrb[0].mxu0 %v4819
    %v5287 = vpop.f32.mrb[0].mxu0
    %v5288 = vadd.f32 %v4467, %v5287
    %v5289 = vpop.f32.mrb[0].mxu0
    %v5290 = vpop.f32.mrb[0].mxu0
    %v5291 = vadd.f32 %v4470, %v5290
    %v5292 = vpop.f32.mrb[0].mxu0
    %5293 = vmatprep.mubr.bf16.mxu0 0
    %5294 = vmatmul.mubr.bf16.gmra.mrb[0].mxu0 %v4828
    %v5295 = vpop.f32.mrb[0].mxu0
    %v5296 = vadd.f32 %v4475, %v5295
    %v5297 = vpop.f32.mrb[0].mxu0
    %v5298 = vpop.f32.mrb[0].mxu0
    %v5299 = vadd.f32 %v4478, %v5298
    %v5300 = vpop.f32.mrb[0].mxu0
    %5301 = vmatprep.mubr.bf16.mxu0 0
    %5302 = vmatmul.mubr.bf16.gmra.mrb[0].mxu0 %v4837
    %v5303 = vpop.f32.mrb[0].mxu0
    %v5304 = vadd.f32 %v4483, %v5303
    %v5305 = vpop.f32.mrb[0].mxu0
    %v5306 = vpop.f32.mrb[0].mxu0
    %v5307 = vadd.f32 %v4486, %v5306
    %v5308 = vpop.f32.mrb[0].mxu0
    %5309 = vmatprep.mubr.bf16.mxu0 0
    %5310 = vmatmul.mubr.bf16.gmra.mrb[0].mxu0 %v4846
    %v5311 = vpop.f32.mrb[0].mxu0
    %v5312 = vadd.f32 %v4491, %v5311
    %v5313 = vpop.f32.mrb[0].mxu0
    %v5314 = vpop.f32.mrb[0].mxu0
    %v5315 = vadd.f32 %v4494, %v5314
    %v5316 = vpop.f32.mrb[0].mxu0
    %5317 = vmatprep.mubr.bf16.mxu0 0
    %5318 = vmatmul.mubr.bf16.gmra.mrb[0].mxu0 %v4855
    %v5319 = vpop.f32.mrb[0].mxu0
    %v5320 = vadd.f32 %v4499, %v5319
    %v5321 = vpop.f32.mrb[0].mxu0
    %v5322 = vpop.f32.mrb[0].mxu0
    %v5323 = vadd.f32 %v4502, %v5322
    %v5324 = vpop.f32.mrb[0].mxu0
    %5325 = vmatprep.mubr.bf16.mxu0 0
    %5326 = vmatmul.mubr.bf16.gmra.mrb[0].mxu0 %v4864
    %v5327 = vpop.f32.mrb[0].mxu0
    %v5328 = vadd.f32 %v4507, %v5327
    %v5329 = vpop.f32.mrb[0].mxu0
    %v5330 = vpop.f32.mrb[0].mxu0
    %v5331 = vadd.f32 %v4510, %v5330
    %v5332 = vpop.f32.mrb[0].mxu0
    %5333 = vmatprep.mubr.bf16.mxu0 0
    %5334 = vmatmul.mubr.bf16.gmra.mrb[0].mxu0 %v4873
    %v5335 = vpop.f32.mrb[0].mxu0
    %v5336 = vadd.f32 %v4515, %v5335
    %v5337 = vpop.f32.mrb[0].mxu0
    %v5338 = vpop.f32.mrb[0].mxu0
    %v5339 = vadd.f32 %v4518, %v5338
    %v5340 = vpop.f32.mrb[0].mxu0
    %5341 = vmatprep.mubr.bf16.mxu0 0
    %5342 = vmatmul.mubr.bf16.gmra.mrb[0].mxu0 %v4882
    %v5343 = vpop.f32.mrb[0].mxu0
    %v5344 = vadd.f32 %v4523, %v5343
    %v5345 = vpop.f32.mrb[0].mxu0
    %v5346 = vpop.f32.mrb[0].mxu0
    %v5347 = vadd.f32 %v4526, %v5346
    %v5348 = vpop.f32.mrb[0].mxu0
    %5349 = vmatprep.mubr.bf16.mxu0 0
    %5350 = vmatmul.mubr.bf16.gmra.mrb[0].mxu0 %v4891
    %v5351 = vpop.f32.mrb[0].mxu0
    %v5352 = vadd.f32 %v4531, %v5351
    %v5353 = vpop.f32.mrb[0].mxu0
    %v5354 = vpop.f32.mrb[0].mxu0
    %v5355 = vadd.f32 %v4534, %v5354
    %v5356 = vpop.f32.mrb[0].mxu0
    %5357 = vmatprep.mubr.bf16.mxu0 0
    %5358 = vmatmul.mubr.bf16.gmra.mrb[0].mxu0 %v4900
    %v5359 = vpop.f32.mrb[0].mxu0
    %v5360 = vadd.f32 %v4539, %v5359
    %v5361 = vpop.f32.mrb[0].mxu0
    %v5362 = vpop.f32.mrb[0].mxu0
    %v5363 = vadd.f32 %v4542, %v5362
    %v5364 = vpop.f32.mrb[0].mxu0
    %5365 = vmatprep.mubr.bf16.mxu0 0
    %5366 = vmatmul.mubr.bf16.gmra.mrb[0].mxu0 %v4909
    %v5367 = vpop.f32.mrb[0].mxu0
    %v5368 = vadd.f32 %v4547, %v5367
    %v5369 = vpop.f32.mrb[0].mxu0
    %v5370 = vpop.f32.mrb[0].mxu0
    %v5371 = vadd.f32 %v4550, %v5370
    %v5372 = vpop.f32.mrb[0].mxu0
    %5373 = vmatprep.mubr.bf16.mxu0 0
    %5374 = vmatmul.mubr.bf16.gmra.mrb[0].mxu0 %v4918
    %v5375 = vpop.f32.mrb[0].mxu0
    %v5376 = vadd.f32 %v4555, %v5375
    %v5377 = vpop.f32.mrb[0].mxu0
    %v5378 = vpop.f32.mrb[0].mxu0
    %v5379 = vadd.f32 %v4558, %v5378
    %v5380 = vpop.f32.mrb[0].mxu0
    %5381 = vmatprep.mubr.bf16.mxu0 0
    %5382 = vmatmul.mubr.bf16.gmra.mrb[0].mxu0 %v4927
    %v5383 = vpop.f32.mrb[0].mxu0
    %v5384 = vadd.f32 %v4563, %v5383
    %v5385 = vpop.f32.mrb[0].mxu0
    %v5386 = vpop.f32.mrb[0].mxu0
    %v5387 = vadd.f32 %v4566, %v5386
    %v5388 = vpop.f32.mrb[0].mxu0
    %5389 = vmatprep.mubr.bf16.mxu0 0
    %5390 = vmatmul.mubr.bf16.gmra.mrb[0].mxu0 %v4936
    %v5391 = vpop.f32.mrb[0].mxu0
    %v5392 = vadd.f32 %v4571, %v5391
    %v5393 = vpop.f32.mrb[0].mxu0
    %v5394 = vpop.f32.mrb[0].mxu0
    %v5395 = vadd.f32 %v4574, %v5394
    %v5396 = vpop.f32.mrb[0].mxu0
    %5397 = vmatprep.mubr.bf16.mxu0 0
    %5398 = vmatmul.mubr.bf16.gmra.mrb[0].mxu0 %v4945
    %v5399 = vpop.f32.mrb[0].mxu0
    %v5400 = vadd.f32 %v4579, %v5399
    %v5401 = vpop.f32.mrb[0].mxu0
    %v5402 = vpop.f32.mrb[0].mxu0
    %v5403 = vadd.f32 %v4582, %v5402
    %v5404 = vpop.f32.mrb[0].mxu0
    %5405 = vmatprep.mubr.bf16.mxu0 0
    %5406 = vmatmul.mubr.bf16.gmra.mrb[0].mxu0 %v4954
    %v5407 = vpop.f32.mrb[0].mxu0
    %v5408 = vadd.f32 %v4587, %v5407
    %v5409 = vpop.f32.mrb[0].mxu0
    %v5410 = vpop.f32.mrb[0].mxu0
    %v5411 = vadd.f32 %v4590, %v5410
    %v5412 = vpop.f32.mrb[0].mxu0
    %5413 = vmatprep.mubr.bf16.mxu0 0
    %5414 = vmatmul.mubr.bf16.gmra.mrb[0].mxu0 %v4963
    %v5415 = vpop.f32.mrb[0].mxu0
    %v5416 = vadd.f32 %v4595, %v5415
    %v5417 = vpop.f32.mrb[0].mxu0
    %v5418 = vpop.f32.mrb[0].mxu0
    %v5419 = vadd.f32 %v4598, %v5418
    %v5420 = vpop.f32.mrb[0].mxu0
    %5421 = vmatprep.mubr.bf16.mxu0 0
    %5422 = vmatmul.mubr.bf16.gmra.mrb[0].mxu0 %v4972
    %v5423 = vpop.f32.mrb[0].mxu0
    %v5424 = vadd.f32 %v4603, %v5423
    %v5425 = vpop.f32.mrb[0].mxu0
    %v5426 = vpop.f32.mrb[0].mxu0
    %v5427 = vadd.f32 %v4606, %v5426
    %v5428 = vpop.f32.mrb[0].mxu0
    %5429 = vmatprep.mubr.bf16.mxu0 0
    %5430 = vmatmul.mubr.bf16.gmra.mrb[0].mxu0 %v4981
    %v5431 = vpop.f32.mrb[0].mxu0
    %v5432 = vadd.f32 %v4611, %v5431
    %v5433 = vpop.f32.mrb[0].mxu0
    %v5434 = vpop.f32.mrb[0].mxu0
    %v5435 = vadd.f32 %v4614, %v5434
    %v5436 = vpop.f32.mrb[0].mxu0
    %5437 = vmatprep.mubr.bf16.mxu0 0
    %5438 = vmatmul.mubr.bf16.gmra.mrb[0].mxu0 %v4990
    %v5439 = vpop.f32.mrb[0].mxu0
    %v5440 = vadd.f32 %v4619, %v5439
    %v5441 = vpop.f32.mrb[0].mxu0
    %v5442 = vpop.f32.mrb[0].mxu0
    %v5443 = vadd.f32 %v4622, %v5442
    %v5444 = vpop.f32.mrb[0].mxu0
    %5445 = vmatprep.mubr.bf16.mxu0 0
    %5446 = vmatmul.mubr.bf16.gmra.mrb[0].mxu0 %v4999
    %v5447 = vpop.f32.mrb[0].mxu0
    %v5448 = vadd.f32 %v4627, %v5447
    %v5449 = vpop.f32.mrb[0].mxu0
    %v5450 = vpop.f32.mrb[0].mxu0
    %v5451 = vadd.f32 %v4630, %v5450
    %v5452 = vpop.f32.mrb[0].mxu0
    %5453 = vmatprep.mubr.bf16.mxu0 0
    %5454 = vmatmul.mubr.bf16.gmra.mrb[0].mxu0 %v5008
    %v5455 = vpop.f32.mrb[0].mxu0
    %v5456 = vadd.f32 %v4635, %v5455
    %v5457 = vpop.f32.mrb[0].mxu0
    %v5458 = vpop.f32.mrb[0].mxu0
    %v5459 = vadd.f32 %v4638, %v5458
    %v5460 = vpop.f32.mrb[0].mxu0
    %5461 = vmatprep.mubr.bf16.mxu0 0
    %5462 = vmatmul.mubr.bf16.gmra.mrb[0].mxu0 %v5017
    %v5463 = vpop.f32.mrb[0].mxu0
    %v5464 = vadd.f32 %v4643, %v5463
    %v5465 = vpop.f32.mrb[0].mxu0
    %v5466 = vpop.f32.mrb[0].mxu0
    %v5467 = vadd.f32 %v4646, %v5466
    %v5468 = vpop.f32.mrb[0].mxu0
    %5469 = vmatprep.mubr.bf16.mxu0 0
    %5470 = vmatmul.mubr.bf16.gmra.mrb[0].mxu0 %v5026
    %v5471 = vpop.f32.mrb[0].mxu0
    %v5472 = vadd.f32 %v4651, %v5471
    %v5473 = vpop.f32.mrb[0].mxu0
    %v5474 = vpop.f32.mrb[0].mxu0
    %v5475 = vadd.f32 %v4654, %v5474
    %v5476 = vpop.f32.mrb[0].mxu0
    %5477 = vmatprep.mubr.bf16.mxu0 0
    %5478 = vmatmul.mubr.bf16.gmra.mrb[0].mxu0 %v5035
    %v5479 = vpop.f32.mrb[0].mxu0
    %v5480 = vadd.f32 %v4659, %v5479
    %v5481 = vpop.f32.mrb[0].mxu0
    %v5482 = vpop.f32.mrb[0].mxu0
    %v5483 = vadd.f32 %v4662, %v5482
    %v5484 = vpop.f32.mrb[0].mxu0
    %5485 = vmatprep.mubr.bf16.mxu0 0
    %5486 = vmatmul.mubr.bf16.gmra.mrb[0].mxu0 %v5044
    %v5487 = vpop.f32.mrb[0].mxu0
    %v5488 = vadd.f32 %v4667, %v5487
    %v5489 = vpop.f32.mrb[0].mxu0
    %v5490 = vpop.f32.mrb[0].mxu0
    %v5491 = vadd.f32 %v4670, %v5490
    %v5492 = vpop.f32.mrb[0].mxu0
    %5493 = vmatprep.mubr.bf16.mxu0 0
    %5494 = vmatmul.mubr.bf16.gmra.mrb[0].mxu0 %v5053
    %v5495 = vpop.f32.mrb[0].mxu0
    %v5496 = vadd.f32 %v4675, %v5495
    %v5497 = vpop.f32.mrb[0].mxu0
    %v5498 = vpop.f32.mrb[0].mxu0
    %v5499 = vadd.f32 %v4678, %v5498
    %v5500 = vpop.f32.mrb[0].mxu0
    %5501 = vmatprep.mubr.bf16.mxu0 0
    %5502 = vmatmul.mubr.bf16.gmra.mrb[0].mxu0 %v5062
    %v5503 = vpop.f32.mrb[0].mxu0
    %v5504 = vadd.f32 %v4683, %v5503
    %v5505 = vpop.f32.mrb[0].mxu0
    %v5506 = vpop.f32.mrb[0].mxu0
    %v5507 = vadd.f32 %v4686, %v5506
    %v5508 = vpop.f32.mrb[0].mxu0
    %5509 = vmatprep.mubr.bf16.mxu0 0
    %5510 = vmatmul.mubr.bf16.gmra.mrb[0].mxu0 %v5071
    %v5511 = vpop.f32.mrb[0].mxu0
    %v5512 = vadd.f32 %v4691, %v5511
    %v5513 = vpop.f32.mrb[0].mxu0
    %v5514 = vpop.f32.mrb[0].mxu0
    %v5515 = vadd.f32 %v4694, %v5514
    %v5516 = vpop.f32.mrb[0].mxu0
    %5517 = vmatprep.mubr.bf16.mxu0 0
    %5518 = vmatmul.mubr.bf16.gmra.mrb[0].mxu0 %v5080
    %v5519 = vpop.f32.mrb[0].mxu0
    %v5520 = vadd.f32 %v4699, %v5519
    %v5521 = vpop.f32.mrb[0].mxu0
    %v5522 = vpop.f32.mrb[0].mxu0
    %v5523 = vadd.f32 %v4702, %v5522
    %v5524 = vpop.f32.mrb[0].mxu0
    %5525 = vmatprep.mubr.bf16.mxu0 0
    %5526 = vmatmul.mubr.bf16.gmra.mrb[0].mxu0 %v5089
    %v5527 = vpop.f32.mrb[0].mxu0
    %v5528 = vadd.f32 %v4707, %v5527
    %v5529 = vpop.f32.mrb[0].mxu0
    %v5530 = vpop.f32.mrb[0].mxu0
    %v5531 = vadd.f32 %v4710, %v5530
    %v5532 = vpop.f32.mrb[0].mxu0
    %5533 = vmatprep.mubr.bf16.mxu0 0
    %5534 = vmatmul.mubr.bf16.gmra.mrb[0].mxu0 %v5098
    %v5535 = vpop.f32.mrb[0].mxu0
    %v5536 = vadd.f32 %v4715, %v5535
    %v5537 = vpop.f32.mrb[0].mxu0
    %v5538 = vpop.f32.mrb[0].mxu0
    %v5539 = vadd.f32 %v4718, %v5538
    %v5540 = vpop.f32.mrb[0].mxu0
    %5541 = vmatprep.mubr.bf16.mxu0 0
    %5542 = vmatmul.mubr.bf16.gmra.mrb[0].mxu0 %v5107
    %v5543 = vpop.f32.mrb[0].mxu0
    %v5544 = vadd.f32 %v4723, %v5543
    %v5545 = vpop.f32.mrb[0].mxu0
    %v5546 = vpop.f32.mrb[0].mxu0
    %v5547 = vadd.f32 %v4726, %v5546
    %v5548 = vpop.f32.mrb[0].mxu0
    %5549 = vmatprep.mubr.bf16.mxu0 0
    %5550 = vmatmul.mubr.bf16.gmra.mrb[0].mxu0 %v5106
    %v5551 = vpop.f32.mrb[0].mxu0
    %v5552 = vadd.f32 %v4731, %v5551
    %v5553 = vpop.f32.mrb[0].mxu0
    %v5554 = vpop.f32.mrb[0].mxu0
    %v5555 = vpop.f32.mrb[0].mxu0
    %5556 = vdwg.mxu0
    %v5557 = vld [vmem:[#allocation2 + $0x144] sm:$0xf]
    %s5558 = scalar_lea.vmem [#allocation8], 128
    %v5559 = vld [vmem:[%s5558] sm:$0xf]
    %v5560 = vld [vmem:[%s5558 + $0x4] sm:$0xf]
    %v5561 = vld [vmem:[%s5558 + $0x8] sm:$0xf]
    %v5562 = vld [vmem:[%s5558 + $0xc] sm:$0xf]
    %v5563 = vld [vmem:[%s5558 + $0x10] sm:$0xf]
    %v5564 = vld [vmem:[%s5558 + $0x14] sm:$0xf]
    %v5565 = vld [vmem:[%s5558 + $0x18] sm:$0xf]
    %v5566 = vld [vmem:[%s5558 + $0x1c] sm:$0xf]
    %v5567 = vld [vmem:[%s5558 + $0x20] sm:$0xf]
    %v5568 = vld [vmem:[%s5558 + $0x24] sm:$0xf]
    %v5569 = vld [vmem:[%s5558 + $0x28] sm:$0xf]
    %v5570 = vld [vmem:[%s5558 + $0x2c] sm:$0xf]
    %v5571 = vld [vmem:[%s5558 + $0x30] sm:$0xf]
    %v5572 = vld [vmem:[%s5558 + $0x34] sm:$0xf]
    %v5573 = vld [vmem:[%s5558 + $0x38] sm:$0xf]
    %v5574 = vld [vmem:[%s5558 + $0x3c] sm:$0xf]
    %v5576 = vunpack.c.l.b16 %v5557
    %v5577 = vpack.c.b16 %v5576, %v4162
    %vm5578 = vsmask.f32 4352
    %v5580 = vshrl.u32 %v4164, 16
    %v5582 = vrot.slane %v5580, 3
    %v5583 = vshll.u32 %v4164, 16
    %v5585 = vrot.slane %v5583, 4
    %v5586 = vor.u32 %v5582, %v5585
    %v5587 = vrot.slane %v4749, 3
    %v5588 = vrot.slane %v4752, 4
    %v5589 = vor.u32 %v5587, %v5588
    %v5590 = vsel %vm5578, %v5586, %v5589
    %v5591 = vrot.slane %v4758, 3
    %v5592 = vrot.slane %v4761, 4
    %v5593 = vor.u32 %v5591, %v5592
    %v5594 = vsel %vm5578, %v5589, %v5593
    %v5595 = vrot.slane %v4767, 3
    %v5596 = vrot.slane %v4770, 4
    %v5597 = vor.u32 %v5595, %v5596
    %v5598 = vsel %vm5578, %v5593, %v5597
    %v5599 = vrot.slane %v4776, 3
    %v5600 = vrot.slane %v4779, 4
    %v5601 = vor.u32 %v5599, %v5600
    %v5602 = vsel %vm5578, %v5597, %v5601
    %v5603 = vrot.slane %v4785, 3
    %v5604 = vrot.slane %v4788, 4
    %v5605 = vor.u32 %v5603, %v5604
    %v5606 = vsel %vm5578, %v5601, %v5605
    %v5607 = vrot.slane %v4794, 3
    %v5608 = vrot.slane %v4797, 4
    %v5609 = vor.u32 %v5607, %v5608
    %v5610 = vsel %vm5578, %v5605, %v5609
    %v5611 = vrot.slane %v4803, 3
    %v5612 = vrot.slane %v4806, 4
    %v5613 = vor.u32 %v5611, %v5612
    %v5614 = vsel %vm5578, %v5609, %v5613
    %v5615 = vrot.slane %v4812, 3
    %v5616 = vrot.slane %v4815, 4
    %v5617 = vor.u32 %v5615, %v5616
    %v5618 = vsel %vm5578, %v5613, %v5617
    %v5619 = vrot.slane %v4821, 3
    %v5620 = vrot.slane %v4824, 4
    %v5621 = vor.u32 %v5619, %v5620
    %v5622 = vsel %vm5578, %v5617, %v5621
    %v5623 = vrot.slane %v4830, 3
    %v5624 = vrot.slane %v4833, 4
    %v5625 = vor.u32 %v5623, %v5624
    %v5626 = vsel %vm5578, %v5621, %v5625
    %v5627 = vrot.slane %v4839, 3
    %v5628 = vrot.slane %v4842, 4
    %v5629 = vor.u32 %v5627, %v5628
    %v5630 = vsel %vm5578, %v5625, %v5629
    %v5631 = vrot.slane %v4848, 3
    %v5632 = vrot.slane %v4851, 4
    %v5633 = vor.u32 %v5631, %v5632
    %v5634 = vsel %vm5578, %v5629, %v5633
    %v5635 = vrot.slane %v4857, 3
    %v5636 = vrot.slane %v4860, 4
    %v5637 = vor.u32 %v5635, %v5636
    %v5638 = vsel %vm5578, %v5633, %v5637
    %v5639 = vrot.slane %v4866, 3
    %v5640 = vrot.slane %v4869, 4
    %v5641 = vor.u32 %v5639, %v5640
    %v5642 = vsel %vm5578, %v5637, %v5641
    %v5643 = vrot.slane %v4875, 3
    %v5644 = vrot.slane %v4878, 4
    %v5645 = vor.u32 %v5643, %v5644
    %v5646 = vsel %vm5578, %v5641, %v5645
    %v5647 = vrot.slane %v4884, 3
    %v5648 = vrot.slane %v4887, 4
    %v5649 = vor.u32 %v5647, %v5648
    %v5650 = vsel %vm5578, %v5645, %v5649
    %v5651 = vrot.slane %v4893, 3
    %v5652 = vrot.slane %v4896, 4
    %v5653 = vor.u32 %v5651, %v5652
    %v5654 = vsel %vm5578, %v5649, %v5653
    %v5655 = vrot.slane %v4902, 3
    %v5656 = vrot.slane %v4905, 4
    %v5657 = vor.u32 %v5655, %v5656
    %v5658 = vsel %vm5578, %v5653, %v5657
    %v5659 = vrot.slane %v4911, 3
    %v5660 = vrot.slane %v4914, 4
    %v5661 = vor.u32 %v5659, %v5660
    %v5662 = vsel %vm5578, %v5657, %v5661
    %v5663 = vrot.slane %v4920, 3
    %v5664 = vrot.slane %v4923, 4
    %v5665 = vor.u32 %v5663, %v5664
    %v5666 = vsel %vm5578, %v5661, %v5665
    %v5667 = vrot.slane %v4929, 3
    %v5668 = vrot.slane %v4932, 4
    %v5669 = vor.u32 %v5667, %v5668
    %v5670 = vsel %vm5578, %v5665, %v5669
    %v5671 = vrot.slane %v4938, 3
    %v5672 = vrot.slane %v4941, 4
    %v5673 = vor.u32 %v5671, %v5672
    %v5674 = vsel %vm5578, %v5669, %v5673
    %v5675 = vrot.slane %v4947, 3
    %v5676 = vrot.slane %v4950, 4
    %v5677 = vor.u32 %v5675, %v5676
    %v5678 = vsel %vm5578, %v5673, %v5677
    %v5679 = vrot.slane %v4956, 3
    %v5680 = vrot.slane %v4959, 4
    %v5681 = vor.u32 %v5679, %v5680
    %v5682 = vsel %vm5578, %v5677, %v5681
    %v5683 = vrot.slane %v4965, 3
    %v5684 = vrot.slane %v4968, 4
    %v5685 = vor.u32 %v5683, %v5684
    %v5686 = vsel %vm5578, %v5681, %v5685
    %v5687 = vrot.slane %v4974, 3
    %v5688 = vrot.slane %v4977, 4
    %v5689 = vor.u32 %v5687, %v5688
    %v5690 = vsel %vm5578, %v5685, %v5689
    %v5691 = vrot.slane %v4983, 3
    %v5692 = vrot.slane %v4986, 4
    %v5693 = vor.u32 %v5691, %v5692
    %v5694 = vsel %vm5578, %v5689, %v5693
    %v5695 = vrot.slane %v4992, 3
    %v5696 = vrot.slane %v4995, 4
    %v5697 = vor.u32 %v5695, %v5696
    %v5698 = vsel %vm5578, %v5693, %v5697
    %v5699 = vrot.slane %v5001, 3
    %v5700 = vrot.slane %v5004, 4
    %v5701 = vor.u32 %v5699, %v5700
    %v5702 = vsel %vm5578, %v5697, %v5701
    %v5703 = vrot.slane %v5010, 3
    %v5704 = vrot.slane %v5013, 4
    %v5705 = vor.u32 %v5703, %v5704
    %v5706 = vsel %vm5578, %v5701, %v5705
    %v5707 = vrot.slane %v5019, 3
    %v5708 = vrot.slane %v5022, 4
    %v5709 = vor.u32 %v5707, %v5708
    %v5710 = vsel %vm5578, %v5705, %v5709
    %v5711 = vrot.slane %v5028, 3
    %v5712 = vrot.slane %v5031, 4
    %v5713 = vor.u32 %v5711, %v5712
    %v5714 = vsel %vm5578, %v5709, %v5713
    %v5715 = vrot.slane %v5037, 3
    %v5716 = vrot.slane %v5040, 4
    %v5717 = vor.u32 %v5715, %v5716
    %v5718 = vsel %vm5578, %v5713, %v5717
    %v5719 = vrot.slane %v5046, 3
    %v5720 = vrot.slane %v5049, 4
    %v5721 = vor.u32 %v5719, %v5720
    %v5722 = vsel %vm5578, %v5717, %v5721
    %v5723 = vrot.slane %v5055, 3
    %v5724 = vrot.slane %v5058, 4
    %v5725 = vor.u32 %v5723, %v5724
    %v5726 = vsel %vm5578, %v5721, %v5725
    %v5727 = vrot.slane %v5064, 3
    %v5728 = vrot.slane %v5067, 4
    %v5729 = vor.u32 %v5727, %v5728
    %v5730 = vsel %vm5578, %v5725, %v5729
    %v5731 = vrot.slane %v5073, 3
    %v5732 = vrot.slane %v5076, 4
    %v5733 = vor.u32 %v5731, %v5732
    %v5734 = vsel %vm5578, %v5729, %v5733
    %v5735 = vrot.slane %v5082, 3
    %v5736 = vrot.slane %v5085, 4
    %v5737 = vor.u32 %v5735, %v5736
    %v5738 = vsel %vm5578, %v5733, %v5737
    %v5739 = vrot.slane %v5091, 3
    %v5740 = vrot.slane %v5094, 4
    %v5741 = vor.u32 %v5739, %v5740
    %v5742 = vsel %vm5578, %v5737, %v5741
    %v5744 = vshrl.u32 %v5577, 16
    %v5746 = vrot.slane %v5744, 3
    %v5747 = vshll.u32 %v5577, 16
    %v5749 = vrot.slane %v5747, 4
    %v5750 = vor.u32 %v5746, %v5749
    %v5751 = vsel %vm5578, %v5741, %v5750
    %v5809 = vunpack.c.l.b16 %v5559
    %v5810 = vunpack.c.l.b16 %v5560
    %v5811 = vunpack.c.l.b16 %v5561
    %v5812 = vunpack.c.l.b16 %v5562
    %v5813 = vunpack.c.l.b16 %v5563
    %v5814 = vunpack.c.l.b16 %v5564
    %v5815 = vunpack.c.l.b16 %v5565
    %v5816 = vunpack.c.l.b16 %v5566
    %v5817 = vunpack.c.l.b16 %v5567
    %v5818 = vunpack.c.l.b16 %v5568
    %v5819 = vunpack.c.l.b16 %v5569
    %v5820 = vunpack.c.l.b16 %v5570
    %v5821 = vunpack.c.l.b16 %v5571
    %v5822 = vunpack.c.l.b16 %v5572
    %v5823 = vunpack.c.l.b16 %v5573
    %v5824 = vunpack.c.l.b16 %v5574
    %v5825 = vpack.c.b16 %v5810, %v5809
    %v5826 = vpack.c.b16 %v5812, %v5811
    %v5827 = vpack.c.b16 %v5814, %v5813
    %v5828 = vpack.c.b16 %v5816, %v5815
    %v5829 = vpack.c.b16 %v5818, %v5817
    %v5830 = vpack.c.b16 %v5820, %v5819
    %v5831 = vpack.c.b16 %v5822, %v5821
    %v5832 = vpack.c.b16 %v5824, %v5823
    %5841 = vmatprep.subr.bf16.mxu0 0
    %5842 = vmatpush1.bf16.msra.mxu0 %v5825
    %5843 = vmatprep.subr.bf16.mxu0 0
    %5844 = vmatpush1.bf16.msra.mxu0 %v5826
    %5845 = vmatprep.subr.bf16.mxu0 0
    %5846 = vmatpush1.bf16.msra.mxu0 %v5827
    %5847 = vmatprep.subr.bf16.mxu0 0
    %5848 = vmatpush1.bf16.msra.mxu0 %v5828
    %5849 = vmatprep.subr.bf16.mxu0 0
    %5850 = vmatpush1.bf16.msra.mxu0 %v5829
    %5851 = vmatprep.subr.bf16.mxu0 0
    %5852 = vmatpush1.bf16.msra.mxu0 %v5830
    %5853 = vmatprep.subr.bf16.mxu0 0
    %5854 = vmatpush1.bf16.msra.mxu0 %v5831
    %5855 = vmatprep.subr.bf16.mxu0 0
    %5856 = vmatpush1.bf16.msra.mxu0 %v5832
    %5857 = vmatprep.subr.bf16.mxu0 0
    %5858 = vmatpush1.bf16.msra.mxu0 0
    %5859 = vmatprep.subr.bf16.mxu0 0
    %5860 = vmatpush1.bf16.msra.mxu0 0
    %5861 = vmatprep.subr.bf16.mxu0 0
    %5862 = vmatpush1.bf16.msra.mxu0 0
    %5863 = vmatprep.subr.bf16.mxu0 0
    %5864 = vmatpush1.bf16.msra.mxu0 0
    %5865 = vmatprep.subr.bf16.mxu0 0
    %5866 = vmatpush1.bf16.msra.mxu0 0
    %5867 = vmatprep.subr.bf16.mxu0 0
    %5868 = vmatpush1.bf16.msra.mxu0 0
    %5869 = vmatprep.subr.bf16.mxu0 0
    %5870 = vmatpush1.bf16.msra.mxu0 0
    %5871 = vmatprep.subr.bf16.mxu0 0
    %5872 = vmatpush1.bf16.msra.mxu0 0
    %5873 = vmatprep.mubr.bf16.mxu0 0
    %5874 = vmatmul.mubr.bf16.gmra.mrb[0].mxu0 %v5590
    %v5875 = vpop.f32.mrb[0].mxu0
    %v5876 = vadd.f32 0.0, %v5875
    %v5877 = vpop.f32.mrb[0].mxu0
    %v5878 = vpop.f32.mrb[0].mxu0
    %v5879 = vadd.f32 0.0, %v5878
    %v5880 = vpop.f32.mrb[0].mxu0
    %5881 = vmatprep.mubr.bf16.mxu0 0
    %5882 = vmatmul.mubr.bf16.gmra.mrb[0].mxu0 %v5594
    %v5883 = vpop.f32.mrb[0].mxu0
    %v5884 = vadd.f32 0.0, %v5883
    %v5885 = vpop.f32.mrb[0].mxu0
    %v5886 = vpop.f32.mrb[0].mxu0
    %v5887 = vadd.f32 0.0, %v5886
    %v5888 = vpop.f32.mrb[0].mxu0
    %5889 = vmatprep.mubr.bf16.mxu0 0
    %5890 = vmatmul.mubr.bf16.gmra.mrb[0].mxu0 %v5598
    %v5891 = vpop.f32.mrb[0].mxu0
    %v5892 = vadd.f32 0.0, %v5891
    %v5893 = vpop.f32.mrb[0].mxu0
    %v5894 = vpop.f32.mrb[0].mxu0
    %v5895 = vadd.f32 0.0, %v5894
    %v5896 = vpop.f32.mrb[0].mxu0
    %5897 = vmatprep.mubr.bf16.mxu0 0
    %5898 = vmatmul.mubr.bf16.gmra.mrb[0].mxu0 %v5602
    %v5899 = vpop.f32.mrb[0].mxu0
    %v5900 = vadd.f32 0.0, %v5899
    %v5901 = vpop.f32.mrb[0].mxu0
    %v5902 = vpop.f32.mrb[0].mxu0
    %v5903 = vadd.f32 0.0, %v5902
    %v5904 = vpop.f32.mrb[0].mxu0
    %5905 = vmatprep.mubr.bf16.mxu0 0
    %5906 = vmatmul.mubr.bf16.gmra.mrb[0].mxu0 %v5606
    %v5907 = vpop.f32.mrb[0].mxu0
    %v5908 = vadd.f32 0.0, %v5907
    %v5909 = vpop.f32.mrb[0].mxu0
    %v5910 = vpop.f32.mrb[0].mxu0
    %v5911 = vadd.f32 0.0, %v5910
    %v5912 = vpop.f32.mrb[0].mxu0
    %5913 = vmatprep.mubr.bf16.mxu0 0
    %5914 = vmatmul.mubr.bf16.gmra.mrb[0].mxu0 %v5610
    %v5915 = vpop.f32.mrb[0].mxu0
    %v5916 = vadd.f32 0.0, %v5915
    %v5917 = vpop.f32.mrb[0].mxu0
    %v5918 = vpop.f32.mrb[0].mxu0
    %v5919 = vadd.f32 0.0, %v5918
    %v5920 = vpop.f32.mrb[0].mxu0
    %5921 = vmatprep.mubr.bf16.mxu0 0
    %5922 = vmatmul.mubr.bf16.gmra.mrb[0].mxu0 %v5614
    %v5923 = vpop.f32.mrb[0].mxu0
    %v5924 = vadd.f32 0.0, %v5923
    %v5925 = vpop.f32.mrb[0].mxu0
    %v5926 = vpop.f32.mrb[0].mxu0
    %v5927 = vadd.f32 0.0, %v5926
    %v5928 = vpop.f32.mrb[0].mxu0
    %5929 = vmatprep.mubr.bf16.mxu0 0
    %5930 = vmatmul.mubr.bf16.gmra.mrb[0].mxu0 %v5618
    %v5931 = vpop.f32.mrb[0].mxu0
    %v5932 = vadd.f32 0.0, %v5931
    %v5933 = vpop.f32.mrb[0].mxu0
    %v5934 = vpop.f32.mrb[0].mxu0
    %v5935 = vadd.f32 0.0, %v5934
    %v5936 = vpop.f32.mrb[0].mxu0
    %5937 = vmatprep.mubr.bf16.mxu0 0
    %5938 = vmatmul.mubr.bf16.gmra.mrb[0].mxu0 %v5622
    %v5939 = vpop.f32.mrb[0].mxu0
    %v5940 = vadd.f32 0.0, %v5939
    %v5941 = vpop.f32.mrb[0].mxu0
    %v5942 = vpop.f32.mrb[0].mxu0
    %v5943 = vadd.f32 0.0, %v5942
    %v5944 = vpop.f32.mrb[0].mxu0
    %5945 = vmatprep.mubr.bf16.mxu0 0
    %5946 = vmatmul.mubr.bf16.gmra.mrb[0].mxu0 %v5626
    %v5947 = vpop.f32.mrb[0].mxu0
    %v5948 = vadd.f32 0.0, %v5947
    %v5949 = vpop.f32.mrb[0].mxu0
    %v5950 = vpop.f32.mrb[0].mxu0
    %v5951 = vadd.f32 0.0, %v5950
    %v5952 = vpop.f32.mrb[0].mxu0
    %5953 = vmatprep.mubr.bf16.mxu0 0
    %5954 = vmatmul.mubr.bf16.gmra.mrb[0].mxu0 %v5630
    %v5955 = vpop.f32.mrb[0].mxu0
    %v5956 = vadd.f32 0.0, %v5955
    %v5957 = vpop.f32.mrb[0].mxu0
    %v5958 = vpop.f32.mrb[0].mxu0
    %v5959 = vadd.f32 0.0, %v5958
    %v5960 = vpop.f32.mrb[0].mxu0
    %5961 = vmatprep.mubr.bf16.mxu0 0
    %5962 = vmatmul.mubr.bf16.gmra.mrb[0].mxu0 %v5634
    %v5963 = vpop.f32.mrb[0].mxu0
    %v5964 = vadd.f32 0.0, %v5963
    %v5965 = vpop.f32.mrb[0].mxu0
    %v5966 = vpop.f32.mrb[0].mxu0
    %v5967 = vadd.f32 0.0, %v5966
    %v5968 = vpop.f32.mrb[0].mxu0
    %5969 = vmatprep.mubr.bf16.mxu0 0
    %5970 = vmatmul.mubr.bf16.gmra.mrb[0].mxu0 %v5638
    %v5971 = vpop.f32.mrb[0].mxu0
    %v5972 = vadd.f32 0.0, %v5971
    %v5973 = vpop.f32.mrb[0].mxu0
    %v5974 = vpop.f32.mrb[0].mxu0
    %v5975 = vadd.f32 0.0, %v5974
    %v5976 = vpop.f32.mrb[0].mxu0
    %5977 = vmatprep.mubr.bf16.mxu0 0
    %5978 = vmatmul.mubr.bf16.gmra.mrb[0].mxu0 %v5642
    %v5979 = vpop.f32.mrb[0].mxu0
    %v5980 = vadd.f32 0.0, %v5979
    %v5981 = vpop.f32.mrb[0].mxu0
    %v5982 = vpop.f32.mrb[0].mxu0
    %v5983 = vadd.f32 0.0, %v5982
    %v5984 = vpop.f32.mrb[0].mxu0
    %5985 = vmatprep.mubr.bf16.mxu0 0
    %5986 = vmatmul.mubr.bf16.gmra.mrb[0].mxu0 %v5646
    %v5987 = vpop.f32.mrb[0].mxu0
    %v5988 = vadd.f32 0.0, %v5987
    %v5989 = vpop.f32.mrb[0].mxu0
    %v5990 = vpop.f32.mrb[0].mxu0
    %v5991 = vadd.f32 0.0, %v5990
    %v5992 = vpop.f32.mrb[0].mxu0
    %5993 = vmatprep.mubr.bf16.mxu0 0
    %5994 = vmatmul.mubr.bf16.gmra.mrb[0].mxu0 %v5650
    %v5995 = vpop.f32.mrb[0].mxu0
    %v5996 = vadd.f32 0.0, %v5995
    %v5997 = vpop.f32.mrb[0].mxu0
    %v5998 = vpop.f32.mrb[0].mxu0
    %v5999 = vadd.f32 0.0, %v5998
    %v6000 = vpop.f32.mrb[0].mxu0
    %6001 = vmatprep.mubr.bf16.mxu0 0
    %6002 = vmatmul.mubr.bf16.gmra.mrb[0].mxu0 %v5654
    %v6003 = vpop.f32.mrb[0].mxu0
    %v6004 = vadd.f32 0.0, %v6003
    %v6005 = vpop.f32.mrb[0].mxu0
    %v6006 = vpop.f32.mrb[0].mxu0
    %v6007 = vadd.f32 0.0, %v6006
    %v6008 = vpop.f32.mrb[0].mxu0
    %6009 = vmatprep.mubr.bf16.mxu0 0
    %6010 = vmatmul.mubr.bf16.gmra.mrb[0].mxu0 %v5658
    %v6011 = vpop.f32.mrb[0].mxu0
    %v6012 = vadd.f32 0.0, %v6011
    %v6013 = vpop.f32.mrb[0].mxu0
    %v6014 = vpop.f32.mrb[0].mxu0
    %v6015 = vadd.f32 0.0, %v6014
    %v6016 = vpop.f32.mrb[0].mxu0
    %6017 = vmatprep.mubr.bf16.mxu0 0
    %6018 = vmatmul.mubr.bf16.gmra.mrb[0].mxu0 %v5662
    %v6019 = vpop.f32.mrb[0].mxu0
    %v6020 = vadd.f32 0.0, %v6019
    %v6021 = vpop.f32.mrb[0].mxu0
    %v6022 = vpop.f32.mrb[0].mxu0
    %v6023 = vadd.f32 0.0, %v6022
    %v6024 = vpop.f32.mrb[0].mxu0
    %6025 = vmatprep.mubr.bf16.mxu0 0
    %6026 = vmatmul.mubr.bf16.gmra.mrb[0].mxu0 %v5666
    %v6027 = vpop.f32.mrb[0].mxu0
    %v6028 = vadd.f32 0.0, %v6027
    %v6029 = vpop.f32.mrb[0].mxu0
    %v6030 = vpop.f32.mrb[0].mxu0
    %v6031 = vadd.f32 0.0, %v6030
    %v6032 = vpop.f32.mrb[0].mxu0
    %6033 = vmatprep.mubr.bf16.mxu0 0
    %6034 = vmatmul.mubr.bf16.gmra.mrb[0].mxu0 %v5670
    %v6035 = vpop.f32.mrb[0].mxu0
    %v6036 = vadd.f32 0.0, %v6035
    %v6037 = vpop.f32.mrb[0].mxu0
    %v6038 = vpop.f32.mrb[0].mxu0
    %v6039 = vadd.f32 0.0, %v6038
    %v6040 = vpop.f32.mrb[0].mxu0
    %6041 = vmatprep.mubr.bf16.mxu0 0
    %6042 = vmatmul.mubr.bf16.gmra.mrb[0].mxu0 %v5674
    %v6043 = vpop.f32.mrb[0].mxu0
    %v6044 = vadd.f32 0.0, %v6043
    %v6045 = vpop.f32.mrb[0].mxu0
    %v6046 = vpop.f32.mrb[0].mxu0
    %v6047 = vadd.f32 0.0, %v6046
    %v6048 = vpop.f32.mrb[0].mxu0
    %6049 = vmatprep.mubr.bf16.mxu0 0
    %6050 = vmatmul.mubr.bf16.gmra.mrb[0].mxu0 %v5678
    %v6051 = vpop.f32.mrb[0].mxu0
    %v6052 = vadd.f32 0.0, %v6051
    %v6053 = vpop.f32.mrb[0].mxu0
    %v6054 = vpop.f32.mrb[0].mxu0
    %v6055 = vadd.f32 0.0, %v6054
    %v6056 = vpop.f32.mrb[0].mxu0
    %6057 = vmatprep.mubr.bf16.mxu0 0
    %6058 = vmatmul.mubr.bf16.gmra.mrb[0].mxu0 %v5682
    %v6059 = vpop.f32.mrb[0].mxu0
    %v6060 = vadd.f32 0.0, %v6059
    %v6061 = vpop.f32.mrb[0].mxu0
    %v6062 = vpop.f32.mrb[0].mxu0
    %v6063 = vadd.f32 0.0, %v6062
    %v6064 = vpop.f32.mrb[0].mxu0
    %6065 = vmatprep.mubr.bf16.mxu0 0
    %6066 = vmatmul.mubr.bf16.gmra.mrb[0].mxu0 %v5686
    %v6067 = vpop.f32.mrb[0].mxu0
    %v6068 = vadd.f32 0.0, %v6067
    %v6069 = vpop.f32.mrb[0].mxu0
    %v6070 = vpop.f32.mrb[0].mxu0
    %v6071 = vadd.f32 0.0, %v6070
    %v6072 = vpop.f32.mrb[0].mxu0
    %6073 = vmatprep.mubr.bf16.mxu0 0
    %6074 = vmatmul.mubr.bf16.gmra.mrb[0].mxu0 %v5690
    %v6075 = vpop.f32.mrb[0].mxu0
    %v6076 = vadd.f32 0.0, %v6075
    %v6077 = vpop.f32.mrb[0].mxu0
    %v6078 = vpop.f32.mrb[0].mxu0
    %v6079 = vadd.f32 0.0, %v6078
    %v6080 = vpop.f32.mrb[0].mxu0
    %6081 = vmatprep.mubr.bf16.mxu0 0
    %6082 = vmatmul.mubr.bf16.gmra.mrb[0].mxu0 %v5694
    %v6083 = vpop.f32.mrb[0].mxu0
    %v6084 = vadd.f32 0.0, %v6083
    %v6085 = vpop.f32.mrb[0].mxu0
    %v6086 = vpop.f32.mrb[0].mxu0
    %v6087 = vadd.f32 0.0, %v6086
    %v6088 = vpop.f32.mrb[0].mxu0
    %6089 = vmatprep.mubr.bf16.mxu0 0
    %6090 = vmatmul.mubr.bf16.gmra.mrb[0].mxu0 %v5698
    %v6091 = vpop.f32.mrb[0].mxu0
    %v6092 = vadd.f32 0.0, %v6091
    %v6093 = vpop.f32.mrb[0].mxu0
    %v6094 = vpop.f32.mrb[0].mxu0
    %v6095 = vadd.f32 0.0, %v6094
    %v6096 = vpop.f32.mrb[0].mxu0
    %6097 = vmatprep.mubr.bf16.mxu0 0
    %6098 = vmatmul.mubr.bf16.gmra.mrb[0].mxu0 %v5702
    %v6099 = vpop.f32.mrb[0].mxu0
    %v6100 = vadd.f32 0.0, %v6099
    %v6101 = vpop.f32.mrb[0].mxu0
    %v6102 = vpop.f32.mrb[0].mxu0
    %v6103 = vadd.f32 0.0, %v6102
    %v6104 = vpop.f32.mrb[0].mxu0
    %6105 = vmatprep.mubr.bf16.mxu0 0
    %6106 = vmatmul.mubr.bf16.gmra.mrb[0].mxu0 %v5706
    %v6107 = vpop.f32.mrb[0].mxu0
    %v6108 = vadd.f32 0.0, %v6107
    %v6109 = vpop.f32.mrb[0].mxu0
    %v6110 = vpop.f32.mrb[0].mxu0
    %v6111 = vadd.f32 0.0, %v6110
    %v6112 = vpop.f32.mrb[0].mxu0
    %6113 = vmatprep.mubr.bf16.mxu0 0
    %6114 = vmatmul.mubr.bf16.gmra.mrb[0].mxu0 %v5710
    %v6115 = vpop.f32.mrb[0].mxu0
    %v6116 = vadd.f32 0.0, %v6115
    %v6117 = vpop.f32.mrb[0].mxu0
    %v6118 = vpop.f32.mrb[0].mxu0
    %v6119 = vadd.f32 0.0, %v6118
    %v6120 = vpop.f32.mrb[0].mxu0
    %6121 = vmatprep.mubr.bf16.mxu0 0
    %6122 = vmatmul.mubr.bf16.gmra.mrb[0].mxu0 %v5714
    %v6123 = vpop.f32.mrb[0].mxu0
    %v6124 = vadd.f32 0.0, %v6123
    %v6125 = vpop.f32.mrb[0].mxu0
    %v6126 = vpop.f32.mrb[0].mxu0
    %v6127 = vadd.f32 0.0, %v6126
    %v6128 = vpop.f32.mrb[0].mxu0
    %6129 = vmatprep.mubr.bf16.mxu0 0
    %6130 = vmatmul.mubr.bf16.gmra.mrb[0].mxu0 %v5718
    %v6131 = vpop.f32.mrb[0].mxu0
    %v6132 = vadd.f32 0.0, %v6131
    %v6133 = vpop.f32.mrb[0].mxu0
    %v6134 = vpop.f32.mrb[0].mxu0
    %v6135 = vadd.f32 0.0, %v6134
    %v6136 = vpop.f32.mrb[0].mxu0
    %6137 = vmatprep.mubr.bf16.mxu0 0
    %6138 = vmatmul.mubr.bf16.gmra.mrb[0].mxu0 %v5722
    %v6139 = vpop.f32.mrb[0].mxu0
    %v6140 = vadd.f32 0.0, %v6139
    %v6141 = vpop.f32.mrb[0].mxu0
    %v6142 = vpop.f32.mrb[0].mxu0
    %v6143 = vadd.f32 0.0, %v6142
    %v6144 = vpop.f32.mrb[0].mxu0
    %6145 = vmatprep.mubr.bf16.mxu0 0
    %6146 = vmatmul.mubr.bf16.gmra.mrb[0].mxu0 %v5726
    %v6147 = vpop.f32.mrb[0].mxu0
    %v6148 = vadd.f32 0.0, %v6147
    %v6149 = vpop.f32.mrb[0].mxu0
    %v6150 = vpop.f32.mrb[0].mxu0
    %v6151 = vadd.f32 0.0, %v6150
    %v6152 = vpop.f32.mrb[0].mxu0
    %6153 = vmatprep.mubr.bf16.mxu0 0
    %6154 = vmatmul.mubr.bf16.gmra.mrb[0].mxu0 %v5730
    %v6155 = vpop.f32.mrb[0].mxu0
    %v6156 = vadd.f32 0.0, %v6155
    %v6157 = vpop.f32.mrb[0].mxu0
    %v6158 = vpop.f32.mrb[0].mxu0
    %v6159 = vadd.f32 0.0, %v6158
    %v6160 = vpop.f32.mrb[0].mxu0
    %6161 = vmatprep.mubr.bf16.mxu0 0
    %6162 = vmatmul.mubr.bf16.gmra.mrb[0].mxu0 %v5734
    %v6163 = vpop.f32.mrb[0].mxu0
    %v6164 = vadd.f32 0.0, %v6163
    %v6165 = vpop.f32.mrb[0].mxu0
    %v6166 = vpop.f32.mrb[0].mxu0
    %v6167 = vadd.f32 0.0, %v6166
    %v6168 = vpop.f32.mrb[0].mxu0
    %6169 = vmatprep.mubr.bf16.mxu0 0
    %6170 = vmatmul.mubr.bf16.gmra.mrb[0].mxu0 %v5738
    %v6171 = vpop.f32.mrb[0].mxu0
    %v6172 = vadd.f32 0.0, %v6171
    %v6173 = vpop.f32.mrb[0].mxu0
    %v6174 = vpop.f32.mrb[0].mxu0
    %v6175 = vadd.f32 0.0, %v6174
    %v6176 = vpop.f32.mrb[0].mxu0
    %6177 = vmatprep.mubr.bf16.mxu0 0
    %6178 = vmatmul.mubr.bf16.gmra.mrb[0].mxu0 %v5742
    %v6179 = vpop.f32.mrb[0].mxu0
    %v6180 = vadd.f32 0.0, %v6179
    %v6181 = vpop.f32.mrb[0].mxu0
    %v6182 = vpop.f32.mrb[0].mxu0
    %v6183 = vadd.f32 0.0, %v6182
    %v6184 = vpop.f32.mrb[0].mxu0
    %6185 = vmatprep.mubr.bf16.mxu0 0
    %6186 = vmatmul.mubr.bf16.gmra.mrb[0].mxu0 %v5751
    %v6187 = vpop.f32.mrb[0].mxu0
    %v6188 = vadd.f32 0.0, %v6187
    %v6189 = vpop.f32.mrb[0].mxu0
    %v6190 = vpop.f32.mrb[0].mxu0
    %v6191 = vadd.f32 0.0, %v6190
    %v6192 = vpop.f32.mrb[0].mxu0
    %6193 = vmatprep.mubr.bf16.mxu0 0
    %6194 = vmatmul.mubr.bf16.gmra.mrb[0].mxu0 %v5750
    %v6195 = vpop.f32.mrb[0].mxu0
    %v6196 = vadd.f32 0.0, %v6195
    %v6197 = vpop.f32.mrb[0].mxu0
    %v6198 = vpop.f32.mrb[0].mxu0
    %v6199 = vpop.f32.mrb[0].mxu0
    %6200 = vdwg.mxu0
    %v6201 = vadd.f32 %v5232, %v5876
    %v6202 = vadd.f32 %v5235, %v5879
    %v6203 = vadd.f32 %v5240, %v5884
    %v6204 = vadd.f32 %v5243, %v5887
    %v6205 = vadd.f32 %v5248, %v5892
    %v6206 = vadd.f32 %v5251, %v5895
    %v6207 = vadd.f32 %v5256, %v5900
    %v6208 = vadd.f32 %v5259, %v5903
    %v6209 = vadd.f32 %v5264, %v5908
    %v6210 = vadd.f32 %v5267, %v5911
    %v6211 = vadd.f32 %v5272, %v5916
    %v6212 = vadd.f32 %v5275, %v5919
    %v6213 = vadd.f32 %v5280, %v5924
    %v6214 = vadd.f32 %v5283, %v5927
    %v6215 = vadd.f32 %v5288, %v5932
    %v6216 = vadd.f32 %v5291, %v5935
    %v6217 = vadd.f32 %v5296, %v5940
    %v6218 = vadd.f32 %v5299, %v5943
    %v6219 = vadd.f32 %v5304, %v5948
    %v6220 = vadd.f32 %v5307, %v5951
    %v6221 = vadd.f32 %v5312, %v5956
    %v6222 = vadd.f32 %v5315, %v5959
    %v6223 = vadd.f32 %v5320, %v5964
    %v6224 = vadd.f32 %v5323, %v5967
    %v6225 = vadd.f32 %v5328, %v5972
    %v6226 = vadd.f32 %v5331, %v5975
    %v6227 = vadd.f32 %v5336, %v5980
    %v6228 = vadd.f32 %v5339, %v5983
    %v6229 = vadd.f32 %v5344, %v5988
    %v6230 = vadd.f32 %v5347, %v5991
    %v6231 = vadd.f32 %v5352, %v5996
    %v6232 = vadd.f32 %v5355, %v5999
    %v6233 = vadd.f32 %v5360, %v6004
    %v6234 = vadd.f32 %v5363, %v6007
    %v6235 = vadd.f32 %v5368, %v6012
    %v6236 = vadd.f32 %v5371, %v6015
    %v6237 = vadd.f32 %v5376, %v6020
    %v6238 = vadd.f32 %v5379, %v6023
    %v6239 = vadd.f32 %v5384, %v6028
    %v6240 = vadd.f32 %v5387, %v6031
    %v6241 = vadd.f32 %v5392, %v6036
    %v6242 = vadd.f32 %v5395, %v6039
    %v6243 = vadd.f32 %v5400, %v6044
    %v6244 = vadd.f32 %v5403, %v6047
    %v6245 = vadd.f32 %v5408, %v6052
    %v6246 = vadd.f32 %v5411, %v6055
    %v6247 = vadd.f32 %v5416, %v6060
    %v6248 = vadd.f32 %v5419, %v6063
    %v6249 = vadd.f32 %v5424, %v6068
    %v6250 = vadd.f32 %v5427, %v6071
    %v6251 = vadd.f32 %v5432, %v6076
    %v6252 = vadd.f32 %v5435, %v6079
    %v6253 = vadd.f32 %v5440, %v6084
    %v6254 = vadd.f32 %v5443, %v6087
    %v6255 = vadd.f32 %v5448, %v6092
    %v6256 = vadd.f32 %v5451, %v6095
    %v6257 = vadd.f32 %v5456, %v6100
    %v6258 = vadd.f32 %v5459, %v6103
    %v6259 = vadd.f32 %v5464, %v6108
    %v6260 = vadd.f32 %v5467, %v6111
    %v6261 = vadd.f32 %v5472, %v6116
    %v6262 = vadd.f32 %v5475, %v6119
    %v6263 = vadd.f32 %v5480, %v6124
    %v6264 = vadd.f32 %v5483, %v6127
    %v6265 = vadd.f32 %v5488, %v6132
    %v6266 = vadd.f32 %v5491, %v6135
    %v6267 = vadd.f32 %v5496, %v6140
    %v6268 = vadd.f32 %v5499, %v6143
    %v6269 = vadd.f32 %v5504, %v6148
    %v6270 = vadd.f32 %v5507, %v6151
    %v6271 = vadd.f32 %v5512, %v6156
    %v6272 = vadd.f32 %v5515, %v6159
    %v6273 = vadd.f32 %v5520, %v6164
    %v6274 = vadd.f32 %v5523, %v6167
    %v6275 = vadd.f32 %v5528, %v6172
    %v6276 = vadd.f32 %v5531, %v6175
    %v6277 = vadd.f32 %v5536, %v6180
    %v6278 = vadd.f32 %v5539, %v6183
    %v6279 = vadd.f32 %v5544, %v6188
    %v6280 = vadd.f32 %v5547, %v6191
    %v6281 = vadd.f32 %v5552, %v6196
    %v6282 = vld [vmem:[#allocation2 + $0x8] sm:$0x8]
    %v6283 = vld [vmem:[#allocation2 + $0xc] sm:$0xf]
    %v6284 = vld [vmem:[#allocation2 + $0x10] sm:$0xf]
    %v6285 = vld [vmem:[#allocation2 + $0x14] sm:$0xf]
    %v6286 = vld [vmem:[#allocation2 + $0x18] sm:$0xf]
    %v6287 = vld [vmem:[#allocation2 + $0x1c] sm:$0xf]
    %v6288 = vld [vmem:[#allocation2 + $0x20] sm:$0xf]
    %v6289 = vld [vmem:[#allocation2 + $0x24] sm:$0xf]
    %v6290 = vld [vmem:[#allocation2 + $0x28] sm:$0xf]
    %v6291 = vld [vmem:[#allocation2 + $0x2c] sm:$0xf]
    %v6292 = vld [vmem:[#allocation2 + $0x30] sm:$0xf]
    %v6293 = vld [vmem:[#allocation2 + $0x34] sm:$0xf]
    %v6294 = vld [vmem:[#allocation2 + $0x38] sm:$0xf]
    %v6295 = vld [vmem:[#allocation2 + $0x3c] sm:$0xf]
    %v6296 = vld [vmem:[#allocation2 + $0x40] sm:$0xf]
    %v6297 = vld [vmem:[#allocation2 + $0x44] sm:$0xf]
    %v6298 = vld [vmem:[#allocation2 + $0x48] sm:$0xf]
    %v6299 = vld [vmem:[#allocation2 + $0x4c] sm:$0xf]
    %v6300 = vld [vmem:[#allocation2 + $0x50] sm:$0xf]
    %v6301 = vld [vmem:[#allocation2 + $0x54] sm:$0xf]
    %v6302 = vld [vmem:[#allocation2 + $0x58] sm:$0xf]
    %v6303 = vld [vmem:[#allocation2 + $0x5c] sm:$0xf]
    %v6304 = vld [vmem:[#allocation2 + $0x60] sm:$0xf]
    %v6305 = vld [vmem:[#allocation2 + $0x64] sm:$0xf]
    %v6306 = vld [vmem:[#allocation2 + $0x68] sm:$0xf]
    %v6307 = vld [vmem:[#allocation2 + $0x6c] sm:$0xf]
    %v6308 = vld [vmem:[#allocation2 + $0x70] sm:$0xf]
    %v6309 = vld [vmem:[#allocation2 + $0x74] sm:$0xf]
    %v6310 = vld [vmem:[#allocation2 + $0x78] sm:$0xf]
    %v6311 = vld [vmem:[#allocation2 + $0x7c] sm:$0xf]
    %v6312 = vld [vmem:[#allocation2 + $0x80] sm:$0xf]
    %v6313 = vld [vmem:[#allocation2 + $0x84] sm:$0xf]
    %v6314 = vld [vmem:[#allocation2 + $0x88] sm:$0xf]
    %v6315 = vld [vmem:[#allocation2 + $0x8c] sm:$0xf]
    %v6316 = vld [vmem:[#allocation2 + $0x90] sm:$0xf]
    %v6317 = vld [vmem:[#allocation2 + $0x94] sm:$0xf]
    %v6318 = vld [vmem:[#allocation2 + $0x98] sm:$0xf]
    %v6319 = vld [vmem:[#allocation2 + $0x9c] sm:$0xf]
    %v6320 = vld [vmem:[#allocation2 + $0xa0] sm:$0xf]
    %v6321 = vld [vmem:[#allocation2 + $0xa4] sm:$0xf]
    %v6322 = vld [vmem:[#allocation2 + $0xa8] sm:$0xf]
    %v6323 = vld [vmem:[#allocation2 + $0xac] sm:$0xf]
    %v6324 = vld [vmem:[#allocation2 + $0xb0] sm:$0xf]
    %v6325 = vld [vmem:[#allocation2 + $0xb4] sm:$0xf]
    %v6326 = vld [vmem:[#allocation2 + $0xb8] sm:$0xf]
    %v6327 = vld [vmem:[#allocation2 + $0xbc] sm:$0xf]
    %v6328 = vld [vmem:[#allocation2 + $0xc0] sm:$0xf]
    %v6329 = vld [vmem:[#allocation2 + $0xc4] sm:$0xf]
    %v6330 = vld [vmem:[#allocation2 + $0xc8] sm:$0xf]
    %v6331 = vld [vmem:[#allocation2 + $0xcc] sm:$0xf]
    %v6332 = vld [vmem:[#allocation2 + $0xd0] sm:$0xf]
    %v6333 = vld [vmem:[#allocation2 + $0xd4] sm:$0xf]
    %v6334 = vld [vmem:[#allocation2 + $0xd8] sm:$0xf]
    %v6335 = vld [vmem:[#allocation2 + $0xdc] sm:$0xf]
    %v6336 = vld [vmem:[#allocation2 + $0xe0] sm:$0xf]
    %v6337 = vld [vmem:[#allocation2 + $0xe4] sm:$0xf]
    %v6338 = vld [vmem:[#allocation2 + $0xe8] sm:$0xf]
    %v6339 = vld [vmem:[#allocation2 + $0xec] sm:$0xf]
    %v6340 = vld [vmem:[#allocation2 + $0xf0] sm:$0xf]
    %v6341 = vld [vmem:[#allocation2 + $0xf4] sm:$0xf]
    %v6342 = vld [vmem:[#allocation2 + $0xf8] sm:$0xf]
    %v6343 = vld [vmem:[#allocation2 + $0xfc] sm:$0xf]
    %v6344 = vld [vmem:[#allocation2 + $0x100] sm:$0xf]
    %v6345 = vld [vmem:[#allocation2 + $0x104] sm:$0xf]
    %v6346 = vld [vmem:[#allocation2 + $0x108] sm:$0xf]
    %v6347 = vld [vmem:[#allocation2 + $0x10c] sm:$0xf]
    %v6348 = vld [vmem:[#allocation2 + $0x110] sm:$0xf]
    %v6349 = vld [vmem:[#allocation2 + $0x114] sm:$0xf]
    %v6350 = vld [vmem:[#allocation2 + $0x118] sm:$0xf]
    %v6351 = vld [vmem:[#allocation2 + $0x11c] sm:$0xf]
    %v6352 = vld [vmem:[#allocation2 + $0x120] sm:$0xf]
    %v6353 = vld [vmem:[#allocation2 + $0x124] sm:$0xf]
    %v6354 = vld [vmem:[#allocation2 + $0x128] sm:$0xf]
    %v6355 = vld [vmem:[#allocation2 + $0x12c] sm:$0xf]
    %v6356 = vld [vmem:[#allocation2 + $0x130] sm:$0xf]
    %v6357 = vld [vmem:[#allocation2 + $0x134] sm:$0xf]
    %v6358 = vld [vmem:[#allocation2 + $0x138] sm:$0xf]
    %v6359 = vld [vmem:[#allocation2 + $0x13c] sm:$0xf]
    %v6360 = vld [vmem:[#allocation2 + $0x140] sm:$0xf]
    %v6361 = vld [vmem:[#allocation2 + $0x144] sm:$0xf]
    %v6362 = vld [vmem:[#allocation2 + $0x148] sm:$0xf]
    %v6363 = vld [vmem:[#allocation2 + $0x14c] sm:$0xf]
    %s6364 = scalar_lea.vmem [#allocation8], 192
    %v6365 = vld [vmem:[%s6364] sm:$0xf]
    %v6366 = vld [vmem:[%s6364 + $0x4] sm:$0xf]
    %v6367 = vld [vmem:[%s6364 + $0x8] sm:$0xf]
    %v6368 = vld [vmem:[%s6364 + $0xc] sm:$0xf]
    %v6369 = vld [vmem:[%s6364 + $0x10] sm:$0xf]
    %v6370 = vld [vmem:[%s6364 + $0x14] sm:$0xf]
    %v6371 = vld [vmem:[%s6364 + $0x18] sm:$0xf]
    %v6372 = vld [vmem:[%s6364 + $0x1c] sm:$0xf]
    %v6373 = vld [vmem:[%s6364 + $0x20] sm:$0xf]
    %v6374 = vld [vmem:[%s6364 + $0x24] sm:$0xf]
    %v6375 = vld [vmem:[%s6364 + $0x28] sm:$0xf]
    %v6376 = vld [vmem:[%s6364 + $0x2c] sm:$0xf]
    %v6377 = vld [vmem:[%s6364 + $0x30] sm:$0xf]
    %v6378 = vld [vmem:[%s6364 + $0x34] sm:$0xf]
    %v6379 = vld [vmem:[%s6364 + $0x38] sm:$0xf]
    %v6380 = vld [vmem:[%s6364 + $0x3c] sm:$0xf]
    %v6463 = vunpack.c.l.b16 %v6282
    %v6464 = vunpack.c.l.b16 %v6283
    %v6465 = vunpack.c.l.b16 %v6284
    %v6466 = vunpack.c.l.b16 %v6285
    %v6467 = vunpack.c.l.b16 %v6286
    %v6468 = vunpack.c.l.b16 %v6287
    %v6469 = vunpack.c.l.b16 %v6288
    %v6470 = vunpack.c.l.b16 %v6289
    %v6471 = vunpack.c.l.b16 %v6290
    %v6472 = vunpack.c.l.b16 %v6291
    %v6473 = vunpack.c.l.b16 %v6292
    %v6474 = vunpack.c.l.b16 %v6293
    %v6475 = vunpack.c.l.b16 %v6294
    %v6476 = vunpack.c.l.b16 %v6295
    %v6477 = vunpack.c.l.b16 %v6296
    %v6478 = vunpack.c.l.b16 %v6297
    %v6479 = vunpack.c.l.b16 %v6298
    %v6480 = vunpack.c.l.b16 %v6299
    %v6481 = vunpack.c.l.b16 %v6300
    %v6482 = vunpack.c.l.b16 %v6301
    %v6483 = vunpack.c.l.b16 %v6302
    %v6484 = vunpack.c.l.b16 %v6303
    %v6485 = vunpack.c.l.b16 %v6304
    %v6486 = vunpack.c.l.b16 %v6305
    %v6487 = vunpack.c.l.b16 %v6306
    %v6488 = vunpack.c.l.b16 %v6307
    %v6489 = vunpack.c.l.b16 %v6308
    %v6490 = vunpack.c.l.b16 %v6309
    %v6491 = vunpack.c.l.b16 %v6310
    %v6492 = vunpack.c.l.b16 %v6311
    %v6493 = vunpack.c.l.b16 %v6312
    %v6494 = vunpack.c.l.b16 %v6313
    %v6495 = vunpack.c.l.b16 %v6314
    %v6496 = vunpack.c.l.b16 %v6315
    %v6497 = vunpack.c.l.b16 %v6316
    %v6498 = vunpack.c.l.b16 %v6317
    %v6499 = vunpack.c.l.b16 %v6318
    %v6500 = vunpack.c.l.b16 %v6319
    %v6501 = vunpack.c.l.b16 %v6320
    %v6502 = vunpack.c.l.b16 %v6321
    %v6503 = vunpack.c.l.b16 %v6322
    %v6504 = vunpack.c.l.b16 %v6323
    %v6505 = vunpack.c.l.b16 %v6324
    %v6506 = vunpack.c.l.b16 %v6325
    %v6507 = vunpack.c.l.b16 %v6326
    %v6508 = vunpack.c.l.b16 %v6327
    %v6509 = vunpack.c.l.b16 %v6328
    %v6510 = vunpack.c.l.b16 %v6329
    %v6511 = vunpack.c.l.b16 %v6330
    %v6512 = vunpack.c.l.b16 %v6331
    %v6513 = vunpack.c.l.b16 %v6332
    %v6514 = vunpack.c.l.b16 %v6333
    %v6515 = vunpack.c.l.b16 %v6334
    %v6516 = vunpack.c.l.b16 %v6335
    %v6517 = vunpack.c.l.b16 %v6336
    %v6518 = vunpack.c.l.b16 %v6337
    %v6519 = vunpack.c.l.b16 %v6338
    %v6520 = vunpack.c.l.b16 %v6339
    %v6521 = vunpack.c.l.b16 %v6340
    %v6522 = vunpack.c.l.b16 %v6341
    %v6523 = vunpack.c.l.b16 %v6342
    %v6524 = vunpack.c.l.b16 %v6343
    %v6525 = vunpack.c.l.b16 %v6344
    %v6526 = vunpack.c.l.b16 %v6345
    %v6527 = vunpack.c.l.b16 %v6346
    %v6528 = vunpack.c.l.b16 %v6347
    %v6529 = vunpack.c.l.b16 %v6348
    %v6530 = vunpack.c.l.b16 %v6349
    %v6531 = vunpack.c.l.b16 %v6350
    %v6532 = vunpack.c.l.b16 %v6351
    %v6533 = vunpack.c.l.b16 %v6352
    %v6534 = vunpack.c.l.b16 %v6353
    %v6535 = vunpack.c.l.b16 %v6354
    %v6536 = vunpack.c.l.b16 %v6355
    %v6537 = vunpack.c.l.b16 %v6356
    %v6538 = vunpack.c.l.b16 %v6357
    %v6539 = vunpack.c.l.b16 %v6358
    %v6540 = vunpack.c.l.b16 %v6359
    %v6541 = vunpack.c.l.b16 %v6360
    %v6542 = vunpack.c.l.b16 %v6361
    %v6543 = vunpack.c.l.b16 %v6362
    %v6544 = vunpack.c.l.b16 %v6363
    %v6545 = vpack.c.b16 %v6464, %v6463
    %v6546 = vpack.c.b16 %v6466, %v6465
    %v6547 = vpack.c.b16 %v6468, %v6467
    %v6548 = vpack.c.b16 %v6470, %v6469
    %v6549 = vpack.c.b16 %v6472, %v6471
    %v6550 = vpack.c.b16 %v6474, %v6473
    %v6551 = vpack.c.b16 %v6476, %v6475
    %v6552 = vpack.c.b16 %v6478, %v6477
    %v6553 = vpack.c.b16 %v6480, %v6479
    %v6554 = vpack.c.b16 %v6482, %v6481
    %v6555 = vpack.c.b16 %v6484, %v6483
    %v6556 = vpack.c.b16 %v6486, %v6485
    %v6557 = vpack.c.b16 %v6488, %v6487
    %v6558 = vpack.c.b16 %v6490, %v6489
    %v6559 = vpack.c.b16 %v6492, %v6491
    %v6560 = vpack.c.b16 %v6494, %v6493
    %v6561 = vpack.c.b16 %v6496, %v6495
    %v6562 = vpack.c.b16 %v6498, %v6497
    %v6563 = vpack.c.b16 %v6500, %v6499
    %v6564 = vpack.c.b16 %v6502, %v6501
    %v6565 = vpack.c.b16 %v6504, %v6503
    %v6566 = vpack.c.b16 %v6506, %v6505
    %v6567 = vpack.c.b16 %v6508, %v6507
    %v6568 = vpack.c.b16 %v6510, %v6509
    %v6569 = vpack.c.b16 %v6512, %v6511
    %v6570 = vpack.c.b16 %v6514, %v6513
    %v6571 = vpack.c.b16 %v6516, %v6515
    %v6572 = vpack.c.b16 %v6518, %v6517
    %v6573 = vpack.c.b16 %v6520, %v6519
    %v6574 = vpack.c.b16 %v6522, %v6521
    %v6575 = vpack.c.b16 %v6524, %v6523
    %v6576 = vpack.c.b16 %v6526, %v6525
    %v6577 = vpack.c.b16 %v6528, %v6527
    %v6578 = vpack.c.b16 %v6530, %v6529
    %v6579 = vpack.c.b16 %v6532, %v6531
    %v6580 = vpack.c.b16 %v6534, %v6533
    %v6581 = vpack.c.b16 %v6536, %v6535
    %v6582 = vpack.c.b16 %v6538, %v6537
    %v6583 = vpack.c.b16 %v6540, %v6539
    %v6584 = vpack.c.b16 %v6542, %v6541
    %v6585 = vpack.c.b16 %v6544, %v6543
    %v6587 = vshrl.u32 %v6545, 16
    %v6589 = vrot.slane %v6587, 3
    %v6590 = vshll.u32 %v6545, 16
    %v6592 = vrot.slane %v6590, 4
    %v6593 = vor.u32 %v6589, %v6592
    %v6595 = vshrl.u32 %v6546, 16
    %v6597 = vrot.slane %v6595, 3
    %v6598 = vshll.u32 %v6546, 16
    %v6600 = vrot.slane %v6598, 4
    %v6601 = vor.u32 %v6597, %v6600
    %v6602 = vsel %vm5578, %v6593, %v6601
    %v6604 = vshrl.u32 %v6547, 16
    %v6606 = vrot.slane %v6604, 3
    %v6607 = vshll.u32 %v6547, 16
    %v6609 = vrot.slane %v6607, 4
    %v6610 = vor.u32 %v6606, %v6609
    %v6611 = vsel %vm5578, %v6601, %v6610
    %v6613 = vshrl.u32 %v6548, 16
    %v6615 = vrot.slane %v6613, 3
    %v6616 = vshll.u32 %v6548, 16
    %v6618 = vrot.slane %v6616, 4
    %v6619 = vor.u32 %v6615, %v6618
    %v6620 = vsel %vm5578, %v6610, %v6619
    %v6622 = vshrl.u32 %v6549, 16
    %v6624 = vrot.slane %v6622, 3
    %v6625 = vshll.u32 %v6549, 16
    %v6627 = vrot.slane %v6625, 4
    %v6628 = vor.u32 %v6624, %v6627
    %v6629 = vsel %vm5578, %v6619, %v6628
    %v6631 = vshrl.u32 %v6550, 16
    %v6633 = vrot.slane %v6631, 3
    %v6634 = vshll.u32 %v6550, 16
    %v6636 = vrot.slane %v6634, 4
    %v6637 = vor.u32 %v6633, %v6636
    %v6638 = vsel %vm5578, %v6628, %v6637
    %v6640 = vshrl.u32 %v6551, 16
    %v6642 = vrot.slane %v6640, 3
    %v6643 = vshll.u32 %v6551, 16
    %v6645 = vrot.slane %v6643, 4
    %v6646 = vor.u32 %v6642, %v6645
    %v6647 = vsel %vm5578, %v6637, %v6646
    %v6649 = vshrl.u32 %v6552, 16
    %v6651 = vrot.slane %v6649, 3
    %v6652 = vshll.u32 %v6552, 16
    %v6654 = vrot.slane %v6652, 4
    %v6655 = vor.u32 %v6651, %v6654
    %v6656 = vsel %vm5578, %v6646, %v6655
    %v6658 = vshrl.u32 %v6553, 16
    %v6660 = vrot.slane %v6658, 3
    %v6661 = vshll.u32 %v6553, 16
    %v6663 = vrot.slane %v6661, 4
    %v6664 = vor.u32 %v6660, %v6663
    %v6665 = vsel %vm5578, %v6655, %v6664
    %v6667 = vshrl.u32 %v6554, 16
    %v6669 = vrot.slane %v6667, 3
    %v6670 = vshll.u32 %v6554, 16
    %v6672 = vrot.slane %v6670, 4
    %v6673 = vor.u32 %v6669, %v6672
    %v6674 = vsel %vm5578, %v6664, %v6673
    %v6676 = vshrl.u32 %v6555, 16
    %v6678 = vrot.slane %v6676, 3
    %v6679 = vshll.u32 %v6555, 16
    %v6681 = vrot.slane %v6679, 4
    %v6682 = vor.u32 %v6678, %v6681
    %v6683 = vsel %vm5578, %v6673, %v6682
    %v6685 = vshrl.u32 %v6556, 16
    %v6687 = vrot.slane %v6685, 3
    %v6688 = vshll.u32 %v6556, 16
    %v6690 = vrot.slane %v6688, 4
    %v6691 = vor.u32 %v6687, %v6690
    %v6692 = vsel %vm5578, %v6682, %v6691
    %v6694 = vshrl.u32 %v6557, 16
    %v6696 = vrot.slane %v6694, 3
    %v6697 = vshll.u32 %v6557, 16
    %v6699 = vrot.slane %v6697, 4
    %v6700 = vor.u32 %v6696, %v6699
    %v6701 = vsel %vm5578, %v6691, %v6700
    %v6703 = vshrl.u32 %v6558, 16
    %v6705 = vrot.slane %v6703, 3
    %v6706 = vshll.u32 %v6558, 16
    %v6708 = vrot.slane %v6706, 4
    %v6709 = vor.u32 %v6705, %v6708
    %v6710 = vsel %vm5578, %v6700, %v6709
    %v6712 = vshrl.u32 %v6559, 16
    %v6714 = vrot.slane %v6712, 3
    %v6715 = vshll.u32 %v6559, 16
    %v6717 = vrot.slane %v6715, 4
    %v6718 = vor.u32 %v6714, %v6717
    %v6719 = vsel %vm5578, %v6709, %v6718
    %v6721 = vshrl.u32 %v6560, 16
    %v6723 = vrot.slane %v6721, 3
    %v6724 = vshll.u32 %v6560, 16
    %v6726 = vrot.slane %v6724, 4
    %v6727 = vor.u32 %v6723, %v6726
    %v6728 = vsel %vm5578, %v6718, %v6727
    %v6730 = vshrl.u32 %v6561, 16
    %v6732 = vrot.slane %v6730, 3
    %v6733 = vshll.u32 %v6561, 16
    %v6735 = vrot.slane %v6733, 4
    %v6736 = vor.u32 %v6732, %v6735
    %v6737 = vsel %vm5578, %v6727, %v6736
    %v6739 = vshrl.u32 %v6562, 16
    %v6741 = vrot.slane %v6739, 3
    %v6742 = vshll.u32 %v6562, 16
    %v6744 = vrot.slane %v6742, 4
    %v6745 = vor.u32 %v6741, %v6744
    %v6746 = vsel %vm5578, %v6736, %v6745
    %v6748 = vshrl.u32 %v6563, 16
    %v6750 = vrot.slane %v6748, 3
    %v6751 = vshll.u32 %v6563, 16
    %v6753 = vrot.slane %v6751, 4
    %v6754 = vor.u32 %v6750, %v6753
    %v6755 = vsel %vm5578, %v6745, %v6754
    %v6757 = vshrl.u32 %v6564, 16
    %v6759 = vrot.slane %v6757, 3
    %v6760 = vshll.u32 %v6564, 16
    %v6762 = vrot.slane %v6760, 4
    %v6763 = vor.u32 %v6759, %v6762
    %v6764 = vsel %vm5578, %v6754, %v6763
    %v6766 = vshrl.u32 %v6565, 16
    %v6768 = vrot.slane %v6766, 3
    %v6769 = vshll.u32 %v6565, 16
    %v6771 = vrot.slane %v6769, 4
    %v6772 = vor.u32 %v6768, %v6771
    %v6773 = vsel %vm5578, %v6763, %v6772
    %v6775 = vshrl.u32 %v6566, 16
    %v6777 = vrot.slane %v6775, 3
    %v6778 = vshll.u32 %v6566, 16
    %v6780 = vrot.slane %v6778, 4
    %v6781 = vor.u32 %v6777, %v6780
    %v6782 = vsel %vm5578, %v6772, %v6781
    %v6784 = vshrl.u32 %v6567, 16
    %v6786 = vrot.slane %v6784, 3
    %v6787 = vshll.u32 %v6567, 16
    %v6789 = vrot.slane %v6787, 4
    %v6790 = vor.u32 %v6786, %v6789
    %v6791 = vsel %vm5578, %v6781, %v6790
    %v6793 = vshrl.u32 %v6568, 16
    %v6795 = vrot.slane %v6793, 3
    %v6796 = vshll.u32 %v6568, 16
    %v6798 = vrot.slane %v6796, 4
    %v6799 = vor.u32 %v6795, %v6798
    %v6800 = vsel %vm5578, %v6790, %v6799
    %v6802 = vshrl.u32 %v6569, 16
    %v6804 = vrot.slane %v6802, 3
    %v6805 = vshll.u32 %v6569, 16
    %v6807 = vrot.slane %v6805, 4
    %v6808 = vor.u32 %v6804, %v6807
    %v6809 = vsel %vm5578, %v6799, %v6808
    %v6811 = vshrl.u32 %v6570, 16
    %v6813 = vrot.slane %v6811, 3
    %v6814 = vshll.u32 %v6570, 16
    %v6816 = vrot.slane %v6814, 4
    %v6817 = vor.u32 %v6813, %v6816
    %v6818 = vsel %vm5578, %v6808, %v6817
    %v6820 = vshrl.u32 %v6571, 16
    %v6822 = vrot.slane %v6820, 3
    %v6823 = vshll.u32 %v6571, 16
    %v6825 = vrot.slane %v6823, 4
    %v6826 = vor.u32 %v6822, %v6825
    %v6827 = vsel %vm5578, %v6817, %v6826
    %v6829 = vshrl.u32 %v6572, 16
    %v6831 = vrot.slane %v6829, 3
    %v6832 = vshll.u32 %v6572, 16
    %v6834 = vrot.slane %v6832, 4
    %v6835 = vor.u32 %v6831, %v6834
    %v6836 = vsel %vm5578, %v6826, %v6835
    %v6838 = vshrl.u32 %v6573, 16
    %v6840 = vrot.slane %v6838, 3
    %v6841 = vshll.u32 %v6573, 16
    %v6843 = vrot.slane %v6841, 4
    %v6844 = vor.u32 %v6840, %v6843
    %v6845 = vsel %vm5578, %v6835, %v6844
    %v6847 = vshrl.u32 %v6574, 16
    %v6849 = vrot.slane %v6847, 3
    %v6850 = vshll.u32 %v6574, 16
    %v6852 = vrot.slane %v6850, 4
    %v6853 = vor.u32 %v6849, %v6852
    %v6854 = vsel %vm5578, %v6844, %v6853
    %v6856 = vshrl.u32 %v6575, 16
    %v6858 = vrot.slane %v6856, 3
    %v6859 = vshll.u32 %v6575, 16
    %v6861 = vrot.slane %v6859, 4
    %v6862 = vor.u32 %v6858, %v6861
    %v6863 = vsel %vm5578, %v6853, %v6862
    %v6865 = vshrl.u32 %v6576, 16
    %v6867 = vrot.slane %v6865, 3
    %v6868 = vshll.u32 %v6576, 16
    %v6870 = vrot.slane %v6868, 4
    %v6871 = vor.u32 %v6867, %v6870
    %v6872 = vsel %vm5578, %v6862, %v6871
    %v6874 = vshrl.u32 %v6577, 16
    %v6876 = vrot.slane %v6874, 3
    %v6877 = vshll.u32 %v6577, 16
    %v6879 = vrot.slane %v6877, 4
    %v6880 = vor.u32 %v6876, %v6879
    %v6881 = vsel %vm5578, %v6871, %v6880
    %v6883 = vshrl.u32 %v6578, 16
    %v6885 = vrot.slane %v6883, 3
    %v6886 = vshll.u32 %v6578, 16
    %v6888 = vrot.slane %v6886, 4
    %v6889 = vor.u32 %v6885, %v6888
    %v6890 = vsel %vm5578, %v6880, %v6889
    %v6892 = vshrl.u32 %v6579, 16
    %v6894 = vrot.slane %v6892, 3
    %v6895 = vshll.u32 %v6579, 16
    %v6897 = vrot.slane %v6895, 4
    %v6898 = vor.u32 %v6894, %v6897
    %v6899 = vsel %vm5578, %v6889, %v6898
    %v6901 = vshrl.u32 %v6580, 16
    %v6903 = vrot.slane %v6901, 3
    %v6904 = vshll.u32 %v6580, 16
    %v6906 = vrot.slane %v6904, 4
    %v6907 = vor.u32 %v6903, %v6906
    %v6908 = vsel %vm5578, %v6898, %v6907
    %v6910 = vshrl.u32 %v6581, 16
    %v6912 = vrot.slane %v6910, 3
    %v6913 = vshll.u32 %v6581, 16
    %v6915 = vrot.slane %v6913, 4
    %v6916 = vor.u32 %v6912, %v6915
    %v6917 = vsel %vm5578, %v6907, %v6916
    %v6919 = vshrl.u32 %v6582, 16
    %v6921 = vrot.slane %v6919, 3
    %v6922 = vshll.u32 %v6582, 16
    %v6924 = vrot.slane %v6922, 4
    %v6925 = vor.u32 %v6921, %v6924
    %v6926 = vsel %vm5578, %v6916, %v6925
    %v6928 = vshrl.u32 %v6583, 16
    %v6930 = vrot.slane %v6928, 3
    %v6931 = vshll.u32 %v6583, 16
    %v6933 = vrot.slane %v6931, 4
    %v6934 = vor.u32 %v6930, %v6933
    %v6935 = vsel %vm5578, %v6925, %v6934
    %v6937 = vshrl.u32 %v6584, 16
    %v6939 = vrot.slane %v6937, 3
    %v6940 = vshll.u32 %v6584, 16
    %v6942 = vrot.slane %v6940, 4
    %v6943 = vor.u32 %v6939, %v6942
    %v6944 = vsel %vm5578, %v6934, %v6943
    %v6946 = vshrl.u32 %v6585, 16
    %v6948 = vrot.slane %v6946, 3
    %v6949 = vshll.u32 %v6585, 16
    %v6951 = vrot.slane %v6949, 4
    %v6952 = vor.u32 %v6948, %v6951
    %v6953 = vsel %vm5578, %v6943, %v6952
    %v7011 = vunpack.c.l.b16 %v6365
    %v7012 = vunpack.c.l.b16 %v6366
    %v7013 = vunpack.c.l.b16 %v6367
    %v7014 = vunpack.c.l.b16 %v6368
    %v7015 = vunpack.c.l.b16 %v6369
    %v7016 = vunpack.c.l.b16 %v6370
    %v7017 = vunpack.c.l.b16 %v6371
    %v7018 = vunpack.c.l.b16 %v6372
    %v7019 = vunpack.c.l.b16 %v6373
    %v7020 = vunpack.c.l.b16 %v6374
    %v7021 = vunpack.c.l.b16 %v6375
    %v7022 = vunpack.c.l.b16 %v6376
    %v7023 = vunpack.c.l.b16 %v6377
    %v7024 = vunpack.c.l.b16 %v6378
    %v7025 = vunpack.c.l.b16 %v6379
    %v7026 = vunpack.c.l.b16 %v6380
    %v7027 = vpack.c.b16 %v7012, %v7011
    %v7028 = vpack.c.b16 %v7014, %v7013
    %v7029 = vpack.c.b16 %v7016, %v7015
    %v7030 = vpack.c.b16 %v7018, %v7017
    %v7031 = vpack.c.b16 %v7020, %v7019
    %v7032 = vpack.c.b16 %v7022, %v7021
    %v7033 = vpack.c.b16 %v7024, %v7023
    %v7034 = vpack.c.b16 %v7026, %v7025
    %7043 = vmatprep.subr.bf16.mxu0 0
    %7044 = vmatpush1.bf16.msra.mxu0 %v7027
    %7045 = vmatprep.subr.bf16.mxu0 0
    %7046 = vmatpush1.bf16.msra.mxu0 %v7028
    %7047 = vmatprep.subr.bf16.mxu0 0
    %7048 = vmatpush1.bf16.msra.mxu0 %v7029
    %7049 = vmatprep.subr.bf16.mxu0 0
    %7050 = vmatpush1.bf16.msra.mxu0 %v7030
    %7051 = vmatprep.subr.bf16.mxu0 0
    %7052 = vmatpush1.bf16.msra.mxu0 %v7031
    %7053 = vmatprep.subr.bf16.mxu0 0
    %7054 = vmatpush1.bf16.msra.mxu0 %v7032
    %7055 = vmatprep.subr.bf16.mxu0 0
    %7056 = vmatpush1.bf16.msra.mxu0 %v7033
    %7057 = vmatprep.subr.bf16.mxu0 0
    %7058 = vmatpush1.bf16.msra.mxu0 %v7034
    %7059 = vmatprep.subr.bf16.mxu0 0
    %7060 = vmatpush1.bf16.msra.mxu0 0
    %7061 = vmatprep.subr.bf16.mxu0 0
    %7062 = vmatpush1.bf16.msra.mxu0 0
    %7063 = vmatprep.subr.bf16.mxu0 0
    %7064 = vmatpush1.bf16.msra.mxu0 0
    %7065 = vmatprep.subr.bf16.mxu0 0
    %7066 = vmatpush1.bf16.msra.mxu0 0
    %7067 = vmatprep.subr.bf16.mxu0 0
    %7068 = vmatpush1.bf16.msra.mxu0 0
    %7069 = vmatprep.subr.bf16.mxu0 0
    %7070 = vmatpush1.bf16.msra.mxu0 0
    %7071 = vmatprep.subr.bf16.mxu0 0
    %7072 = vmatpush1.bf16.msra.mxu0 0
    %7073 = vmatprep.subr.bf16.mxu0 0
    %7074 = vmatpush1.bf16.msra.mxu0 0
    %7075 = vmatprep.mubr.bf16.mxu0 0
    %7076 = vmatmul.mubr.bf16.gmra.mrb[0].mxu0 %v6602
    %v7077 = vpop.f32.mrb[0].mxu0
    %v7078 = vadd.f32 0.0, %v7077
    %v7079 = vpop.f32.mrb[0].mxu0
    %v7080 = vpop.f32.mrb[0].mxu0
    %v7081 = vadd.f32 0.0, %v7080
    %v7082 = vpop.f32.mrb[0].mxu0
    %7083 = vmatprep.mubr.bf16.mxu0 0
    %7084 = vmatmul.mubr.bf16.gmra.mrb[0].mxu0 %v6611
    %v7085 = vpop.f32.mrb[0].mxu0
    %v7086 = vadd.f32 0.0, %v7085
    %v7087 = vpop.f32.mrb[0].mxu0
    %v7088 = vpop.f32.mrb[0].mxu0
    %v7089 = vadd.f32 0.0, %v7088
    %v7090 = vpop.f32.mrb[0].mxu0
    %7091 = vmatprep.mubr.bf16.mxu0 0
    %7092 = vmatmul.mubr.bf16.gmra.mrb[0].mxu0 %v6620
    %v7093 = vpop.f32.mrb[0].mxu0
    %v7094 = vadd.f32 0.0, %v7093
    %v7095 = vpop.f32.mrb[0].mxu0
    %v7096 = vpop.f32.mrb[0].mxu0
    %v7097 = vadd.f32 0.0, %v7096
    %v7098 = vpop.f32.mrb[0].mxu0
    %7099 = vmatprep.mubr.bf16.mxu0 0
    %7100 = vmatmul.mubr.bf16.gmra.mrb[0].mxu0 %v6629
    %v7101 = vpop.f32.mrb[0].mxu0
    %v7102 = vadd.f32 0.0, %v7101
    %v7103 = vpop.f32.mrb[0].mxu0
    %v7104 = vpop.f32.mrb[0].mxu0
    %v7105 = vadd.f32 0.0, %v7104
    %v7106 = vpop.f32.mrb[0].mxu0
    %7107 = vmatprep.mubr.bf16.mxu0 0
    %7108 = vmatmul.mubr.bf16.gmra.mrb[0].mxu0 %v6638
    %v7109 = vpop.f32.mrb[0].mxu0
    %v7110 = vadd.f32 0.0, %v7109
    %v7111 = vpop.f32.mrb[0].mxu0
    %v7112 = vpop.f32.mrb[0].mxu0
    %v7113 = vadd.f32 0.0, %v7112
    %v7114 = vpop.f32.mrb[0].mxu0
    %7115 = vmatprep.mubr.bf16.mxu0 0
    %7116 = vmatmul.mubr.bf16.gmra.mrb[0].mxu0 %v6647
    %v7117 = vpop.f32.mrb[0].mxu0
    %v7118 = vadd.f32 0.0, %v7117
    %v7119 = vpop.f32.mrb[0].mxu0
    %v7120 = vpop.f32.mrb[0].mxu0
    %v7121 = vadd.f32 0.0, %v7120
    %v7122 = vpop.f32.mrb[0].mxu0
    %7123 = vmatprep.mubr.bf16.mxu0 0
    %7124 = vmatmul.mubr.bf16.gmra.mrb[0].mxu0 %v6656
    %v7125 = vpop.f32.mrb[0].mxu0
    %v7126 = vadd.f32 0.0, %v7125
    %v7127 = vpop.f32.mrb[0].mxu0
    %v7128 = vpop.f32.mrb[0].mxu0
    %v7129 = vadd.f32 0.0, %v7128
    %v7130 = vpop.f32.mrb[0].mxu0
    %7131 = vmatprep.mubr.bf16.mxu0 0
    %7132 = vmatmul.mubr.bf16.gmra.mrb[0].mxu0 %v6665
    %v7133 = vpop.f32.mrb[0].mxu0
    %v7134 = vadd.f32 0.0, %v7133
    %v7135 = vpop.f32.mrb[0].mxu0
    %v7136 = vpop.f32.mrb[0].mxu0
    %v7137 = vadd.f32 0.0, %v7136
    %v7138 = vpop.f32.mrb[0].mxu0
    %7139 = vmatprep.mubr.bf16.mxu0 0
    %7140 = vmatmul.mubr.bf16.gmra.mrb[0].mxu0 %v6674
    %v7141 = vpop.f32.mrb[0].mxu0
    %v7142 = vadd.f32 0.0, %v7141
    %v7143 = vpop.f32.mrb[0].mxu0
    %v7144 = vpop.f32.mrb[0].mxu0
    %v7145 = vadd.f32 0.0, %v7144
    %v7146 = vpop.f32.mrb[0].mxu0
    %7147 = vmatprep.mubr.bf16.mxu0 0
    %7148 = vmatmul.mubr.bf16.gmra.mrb[0].mxu0 %v6683
    %v7149 = vpop.f32.mrb[0].mxu0
    %v7150 = vadd.f32 0.0, %v7149
    %v7151 = vpop.f32.mrb[0].mxu0
    %v7152 = vpop.f32.mrb[0].mxu0
    %v7153 = vadd.f32 0.0, %v7152
    %v7154 = vpop.f32.mrb[0].mxu0
    %7155 = vmatprep.mubr.bf16.mxu0 0
    %7156 = vmatmul.mubr.bf16.gmra.mrb[0].mxu0 %v6692
    %v7157 = vpop.f32.mrb[0].mxu0
    %v7158 = vadd.f32 0.0, %v7157
    %v7159 = vpop.f32.mrb[0].mxu0
    %v7160 = vpop.f32.mrb[0].mxu0
    %v7161 = vadd.f32 0.0, %v7160
    %v7162 = vpop.f32.mrb[0].mxu0
    %7163 = vmatprep.mubr.bf16.mxu0 0
    %7164 = vmatmul.mubr.bf16.gmra.mrb[0].mxu0 %v6701
    %v7165 = vpop.f32.mrb[0].mxu0
    %v7166 = vadd.f32 0.0, %v7165
    %v7167 = vpop.f32.mrb[0].mxu0
    %v7168 = vpop.f32.mrb[0].mxu0
    %v7169 = vadd.f32 0.0, %v7168
    %v7170 = vpop.f32.mrb[0].mxu0
    %7171 = vmatprep.mubr.bf16.mxu0 0
    %7172 = vmatmul.mubr.bf16.gmra.mrb[0].mxu0 %v6710
    %v7173 = vpop.f32.mrb[0].mxu0
    %v7174 = vadd.f32 0.0, %v7173
    %v7175 = vpop.f32.mrb[0].mxu0
    %v7176 = vpop.f32.mrb[0].mxu0
    %v7177 = vadd.f32 0.0, %v7176
    %v7178 = vpop.f32.mrb[0].mxu0
    %7179 = vmatprep.mubr.bf16.mxu0 0
    %7180 = vmatmul.mubr.bf16.gmra.mrb[0].mxu0 %v6719
    %v7181 = vpop.f32.mrb[0].mxu0
    %v7182 = vadd.f32 0.0, %v7181
    %v7183 = vpop.f32.mrb[0].mxu0
    %v7184 = vpop.f32.mrb[0].mxu0
    %v7185 = vadd.f32 0.0, %v7184
    %v7186 = vpop.f32.mrb[0].mxu0
    %7187 = vmatprep.mubr.bf16.mxu0 0
    %7188 = vmatmul.mubr.bf16.gmra.mrb[0].mxu0 %v6728
    %v7189 = vpop.f32.mrb[0].mxu0
    %v7190 = vadd.f32 0.0, %v7189
    %v7191 = vpop.f32.mrb[0].mxu0
    %v7192 = vpop.f32.mrb[0].mxu0
    %v7193 = vadd.f32 0.0, %v7192
    %v7194 = vpop.f32.mrb[0].mxu0
    %7195 = vmatprep.mubr.bf16.mxu0 0
    %7196 = vmatmul.mubr.bf16.gmra.mrb[0].mxu0 %v6737
    %v7197 = vpop.f32.mrb[0].mxu0
    %v7198 = vadd.f32 0.0, %v7197
    %v7199 = vpop.f32.mrb[0].mxu0
    %v7200 = vpop.f32.mrb[0].mxu0
    %v7201 = vadd.f32 0.0, %v7200
    %v7202 = vpop.f32.mrb[0].mxu0
    %7203 = vmatprep.mubr.bf16.mxu0 0
    %7204 = vmatmul.mubr.bf16.gmra.mrb[0].mxu0 %v6746
    %v7205 = vpop.f32.mrb[0].mxu0
    %v7206 = vadd.f32 0.0, %v7205
    %v7207 = vpop.f32.mrb[0].mxu0
    %v7208 = vpop.f32.mrb[0].mxu0
    %v7209 = vadd.f32 0.0, %v7208
    %v7210 = vpop.f32.mrb[0].mxu0
    %7211 = vmatprep.mubr.bf16.mxu0 0
    %7212 = vmatmul.mubr.bf16.gmra.mrb[0].mxu0 %v6755
    %v7213 = vpop.f32.mrb[0].mxu0
    %v7214 = vadd.f32 0.0, %v7213
    %v7215 = vpop.f32.mrb[0].mxu0
    %v7216 = vpop.f32.mrb[0].mxu0
    %v7217 = vadd.f32 0.0, %v7216
    %v7218 = vpop.f32.mrb[0].mxu0
    %7219 = vmatprep.mubr.bf16.mxu0 0
    %7220 = vmatmul.mubr.bf16.gmra.mrb[0].mxu0 %v6764
    %v7221 = vpop.f32.mrb[0].mxu0
    %v7222 = vadd.f32 0.0, %v7221
    %v7223 = vpop.f32.mrb[0].mxu0
    %v7224 = vpop.f32.mrb[0].mxu0
    %v7225 = vadd.f32 0.0, %v7224
    %v7226 = vpop.f32.mrb[0].mxu0
    %7227 = vmatprep.mubr.bf16.mxu0 0
    %7228 = vmatmul.mubr.bf16.gmra.mrb[0].mxu0 %v6773
    %v7229 = vpop.f32.mrb[0].mxu0
    %v7230 = vadd.f32 0.0, %v7229
    %v7231 = vpop.f32.mrb[0].mxu0
    %v7232 = vpop.f32.mrb[0].mxu0
    %v7233 = vadd.f32 0.0, %v7232
    %v7234 = vpop.f32.mrb[0].mxu0
    %7235 = vmatprep.mubr.bf16.mxu0 0
    %7236 = vmatmul.mubr.bf16.gmra.mrb[0].mxu0 %v6782
    %v7237 = vpop.f32.mrb[0].mxu0
    %v7238 = vadd.f32 0.0, %v7237
    %v7239 = vpop.f32.mrb[0].mxu0
    %v7240 = vpop.f32.mrb[0].mxu0
    %v7241 = vadd.f32 0.0, %v7240
    %v7242 = vpop.f32.mrb[0].mxu0
    %7243 = vmatprep.mubr.bf16.mxu0 0
    %7244 = vmatmul.mubr.bf16.gmra.mrb[0].mxu0 %v6791
    %v7245 = vpop.f32.mrb[0].mxu0
    %v7246 = vadd.f32 0.0, %v7245
    %v7247 = vpop.f32.mrb[0].mxu0
    %v7248 = vpop.f32.mrb[0].mxu0
    %v7249 = vadd.f32 0.0, %v7248
    %v7250 = vpop.f32.mrb[0].mxu0
    %7251 = vmatprep.mubr.bf16.mxu0 0
    %7252 = vmatmul.mubr.bf16.gmra.mrb[0].mxu0 %v6800
    %v7253 = vpop.f32.mrb[0].mxu0
    %v7254 = vadd.f32 0.0, %v7253
    %v7255 = vpop.f32.mrb[0].mxu0
    %v7256 = vpop.f32.mrb[0].mxu0
    %v7257 = vadd.f32 0.0, %v7256
    %v7258 = vpop.f32.mrb[0].mxu0
    %7259 = vmatprep.mubr.bf16.mxu0 0
    %7260 = vmatmul.mubr.bf16.gmra.mrb[0].mxu0 %v6809
    %v7261 = vpop.f32.mrb[0].mxu0
    %v7262 = vadd.f32 0.0, %v7261
    %v7263 = vpop.f32.mrb[0].mxu0
    %v7264 = vpop.f32.mrb[0].mxu0
    %v7265 = vadd.f32 0.0, %v7264
    %v7266 = vpop.f32.mrb[0].mxu0
    %7267 = vmatprep.mubr.bf16.mxu0 0
    %7268 = vmatmul.mubr.bf16.gmra.mrb[0].mxu0 %v6818
    %v7269 = vpop.f32.mrb[0].mxu0
    %v7270 = vadd.f32 0.0, %v7269
    %v7271 = vpop.f32.mrb[0].mxu0
    %v7272 = vpop.f32.mrb[0].mxu0
    %v7273 = vadd.f32 0.0, %v7272
    %v7274 = vpop.f32.mrb[0].mxu0
    %7275 = vmatprep.mubr.bf16.mxu0 0
    %7276 = vmatmul.mubr.bf16.gmra.mrb[0].mxu0 %v6827
    %v7277 = vpop.f32.mrb[0].mxu0
    %v7278 = vadd.f32 0.0, %v7277
    %v7279 = vpop.f32.mrb[0].mxu0
    %v7280 = vpop.f32.mrb[0].mxu0
    %v7281 = vadd.f32 0.0, %v7280
    %v7282 = vpop.f32.mrb[0].mxu0
    %7283 = vmatprep.mubr.bf16.mxu0 0
    %7284 = vmatmul.mubr.bf16.gmra.mrb[0].mxu0 %v6836
    %v7285 = vpop.f32.mrb[0].mxu0
    %v7286 = vadd.f32 0.0, %v7285
    %v7287 = vpop.f32.mrb[0].mxu0
    %v7288 = vpop.f32.mrb[0].mxu0
    %v7289 = vadd.f32 0.0, %v7288
    %v7290 = vpop.f32.mrb[0].mxu0
    %7291 = vmatprep.mubr.bf16.mxu0 0
    %7292 = vmatmul.mubr.bf16.gmra.mrb[0].mxu0 %v6845
    %v7293 = vpop.f32.mrb[0].mxu0
    %v7294 = vadd.f32 0.0, %v7293
    %v7295 = vpop.f32.mrb[0].mxu0
    %v7296 = vpop.f32.mrb[0].mxu0
    %v7297 = vadd.f32 0.0, %v7296
    %v7298 = vpop.f32.mrb[0].mxu0
    %7299 = vmatprep.mubr.bf16.mxu0 0
    %7300 = vmatmul.mubr.bf16.gmra.mrb[0].mxu0 %v6854
    %v7301 = vpop.f32.mrb[0].mxu0
    %v7302 = vadd.f32 0.0, %v7301
    %v7303 = vpop.f32.mrb[0].mxu0
    %v7304 = vpop.f32.mrb[0].mxu0
    %v7305 = vadd.f32 0.0, %v7304
    %v7306 = vpop.f32.mrb[0].mxu0
    %7307 = vmatprep.mubr.bf16.mxu0 0
    %7308 = vmatmul.mubr.bf16.gmra.mrb[0].mxu0 %v6863
    %v7309 = vpop.f32.mrb[0].mxu0
    %v7310 = vadd.f32 0.0, %v7309
    %v7311 = vpop.f32.mrb[0].mxu0
    %v7312 = vpop.f32.mrb[0].mxu0
    %v7313 = vadd.f32 0.0, %v7312
    %v7314 = vpop.f32.mrb[0].mxu0
    %7315 = vmatprep.mubr.bf16.mxu0 0
    %7316 = vmatmul.mubr.bf16.gmra.mrb[0].mxu0 %v6872
    %v7317 = vpop.f32.mrb[0].mxu0
    %v7318 = vadd.f32 0.0, %v7317
    %v7319 = vpop.f32.mrb[0].mxu0
    %v7320 = vpop.f32.mrb[0].mxu0
    %v7321 = vadd.f32 0.0, %v7320
    %v7322 = vpop.f32.mrb[0].mxu0
    %7323 = vmatprep.mubr.bf16.mxu0 0
    %7324 = vmatmul.mubr.bf16.gmra.mrb[0].mxu0 %v6881
    %v7325 = vpop.f32.mrb[0].mxu0
    %v7326 = vadd.f32 0.0, %v7325
    %v7327 = vpop.f32.mrb[0].mxu0
    %v7328 = vpop.f32.mrb[0].mxu0
    %v7329 = vadd.f32 0.0, %v7328
    %v7330 = vpop.f32.mrb[0].mxu0
    %7331 = vmatprep.mubr.bf16.mxu0 0
    %7332 = vmatmul.mubr.bf16.gmra.mrb[0].mxu0 %v6890
    %v7333 = vpop.f32.mrb[0].mxu0
    %v7334 = vadd.f32 0.0, %v7333
    %v7335 = vpop.f32.mrb[0].mxu0
    %v7336 = vpop.f32.mrb[0].mxu0
    %v7337 = vadd.f32 0.0, %v7336
    %v7338 = vpop.f32.mrb[0].mxu0
    %7339 = vmatprep.mubr.bf16.mxu0 0
    %7340 = vmatmul.mubr.bf16.gmra.mrb[0].mxu0 %v6899
    %v7341 = vpop.f32.mrb[0].mxu0
    %v7342 = vadd.f32 0.0, %v7341
    %v7343 = vpop.f32.mrb[0].mxu0
    %v7344 = vpop.f32.mrb[0].mxu0
    %v7345 = vadd.f32 0.0, %v7344
    %v7346 = vpop.f32.mrb[0].mxu0
    %7347 = vmatprep.mubr.bf16.mxu0 0
    %7348 = vmatmul.mubr.bf16.gmra.mrb[0].mxu0 %v6908
    %v7349 = vpop.f32.mrb[0].mxu0
    %v7350 = vadd.f32 0.0, %v7349
    %v7351 = vpop.f32.mrb[0].mxu0
    %v7352 = vpop.f32.mrb[0].mxu0
    %v7353 = vadd.f32 0.0, %v7352
    %v7354 = vpop.f32.mrb[0].mxu0
    %7355 = vmatprep.mubr.bf16.mxu0 0
    %7356 = vmatmul.mubr.bf16.gmra.mrb[0].mxu0 %v6917
    %v7357 = vpop.f32.mrb[0].mxu0
    %v7358 = vadd.f32 0.0, %v7357
    %v7359 = vpop.f32.mrb[0].mxu0
    %v7360 = vpop.f32.mrb[0].mxu0
    %v7361 = vadd.f32 0.0, %v7360
    %v7362 = vpop.f32.mrb[0].mxu0
    %7363 = vmatprep.mubr.bf16.mxu0 0
    %7364 = vmatmul.mubr.bf16.gmra.mrb[0].mxu0 %v6926
    %v7365 = vpop.f32.mrb[0].mxu0
    %v7366 = vadd.f32 0.0, %v7365
    %v7367 = vpop.f32.mrb[0].mxu0
    %v7368 = vpop.f32.mrb[0].mxu0
    %v7369 = vadd.f32 0.0, %v7368
    %v7370 = vpop.f32.mrb[0].mxu0
    %7371 = vmatprep.mubr.bf16.mxu0 0
    %7372 = vmatmul.mubr.bf16.gmra.mrb[0].mxu0 %v6935
    %v7373 = vpop.f32.mrb[0].mxu0
    %v7374 = vadd.f32 0.0, %v7373
    %v7375 = vpop.f32.mrb[0].mxu0
    %v7376 = vpop.f32.mrb[0].mxu0
    %v7377 = vadd.f32 0.0, %v7376
    %v7378 = vpop.f32.mrb[0].mxu0
    %7379 = vmatprep.mubr.bf16.mxu0 0
    %7380 = vmatmul.mubr.bf16.gmra.mrb[0].mxu0 %v6944
    %v7381 = vpop.f32.mrb[0].mxu0
    %v7382 = vadd.f32 0.0, %v7381
    %v7383 = vpop.f32.mrb[0].mxu0
    %v7384 = vpop.f32.mrb[0].mxu0
    %v7385 = vadd.f32 0.0, %v7384
    %v7386 = vpop.f32.mrb[0].mxu0
    %7387 = vmatprep.mubr.bf16.mxu0 0
    %7388 = vmatmul.mubr.bf16.gmra.mrb[0].mxu0 %v6953
    %v7389 = vpop.f32.mrb[0].mxu0
    %v7390 = vadd.f32 0.0, %v7389
    %v7391 = vpop.f32.mrb[0].mxu0
    %v7392 = vpop.f32.mrb[0].mxu0
    %v7393 = vadd.f32 0.0, %v7392
    %v7394 = vpop.f32.mrb[0].mxu0
    %7395 = vmatprep.mubr.bf16.mxu0 0
    %7396 = vmatmul.mubr.bf16.gmra.mrb[0].mxu0 %v6952
    %v7397 = vpop.f32.mrb[0].mxu0
    %v7398 = vadd.f32 0.0, %v7397
    %v7399 = vpop.f32.mrb[0].mxu0
    %v7400 = vpop.f32.mrb[0].mxu0
    %v7401 = vpop.f32.mrb[0].mxu0
    %7402 = vdwg.mxu0
    %v7403 = vadd.f32 %v6201, %v7078
    %v7404 = vadd.f32 %v6202, %v7081
    %v7405 = vadd.f32 %v6203, %v7086
    %v7406 = vadd.f32 %v6204, %v7089
    %v7407 = vadd.f32 %v6205, %v7094
    %v7408 = vadd.f32 %v6206, %v7097
    %v7409 = vadd.f32 %v6207, %v7102
    %v7410 = vadd.f32 %v6208, %v7105
    %v7411 = vadd.f32 %v6209, %v7110
    %v7412 = vadd.f32 %v6210, %v7113
    %v7413 = vadd.f32 %v6211, %v7118
    %v7414 = vadd.f32 %v6212, %v7121
    %v7415 = vadd.f32 %v6213, %v7126
    %v7416 = vadd.f32 %v6214, %v7129
    %v7417 = vadd.f32 %v6215, %v7134
    %v7418 = vadd.f32 %v6216, %v7137
    %v7419 = vadd.f32 %v6217, %v7142
    %v7420 = vadd.f32 %v6218, %v7145
    %v7421 = vadd.f32 %v6219, %v7150
    %v7422 = vadd.f32 %v6220, %v7153
    %v7423 = vadd.f32 %v6221, %v7158
    %v7424 = vadd.f32 %v6222, %v7161
    %v7425 = vadd.f32 %v6223, %v7166
    %v7426 = vadd.f32 %v6224, %v7169
    %v7427 = vadd.f32 %v6225, %v7174
    %v7428 = vadd.f32 %v6226, %v7177
    %v7429 = vadd.f32 %v6227, %v7182
    %v7430 = vadd.f32 %v6228, %v7185
    %v7431 = vadd.f32 %v6229, %v7190
    %v7432 = vadd.f32 %v6230, %v7193
    %v7433 = vadd.f32 %v6231, %v7198
    %v7434 = vadd.f32 %v6232, %v7201
    %v7435 = vadd.f32 %v6233, %v7206
    %v7436 = vadd.f32 %v6234, %v7209
    %v7437 = vadd.f32 %v6235, %v7214
    %v7438 = vadd.f32 %v6236, %v7217
    %v7439 = vadd.f32 %v6237, %v7222
    %v7440 = vadd.f32 %v6238, %v7225
    %v7441 = vadd.f32 %v6239, %v7230
    %v7442 = vadd.f32 %v6240, %v7233
    %v7443 = vadd.f32 %v6241, %v7238
    %v7444 = vadd.f32 %v6242, %v7241
    %v7445 = vadd.f32 %v6243, %v7246
    %v7446 = vadd.f32 %v6244, %v7249
    %v7447 = vadd.f32 %v6245, %v7254
    %v7448 = vadd.f32 %v6246, %v7257
    %v7449 = vadd.f32 %v6247, %v7262
    %v7450 = vadd.f32 %v6248, %v7265
    %v7451 = vadd.f32 %v6249, %v7270
    %v7452 = vadd.f32 %v6250, %v7273
    %v7453 = vadd.f32 %v6251, %v7278
    %v7454 = vadd.f32 %v6252, %v7281
    %v7455 = vadd.f32 %v6253, %v7286
    %v7456 = vadd.f32 %v6254, %v7289
    %v7457 = vadd.f32 %v6255, %v7294
    %v7458 = vadd.f32 %v6256, %v7297
    %v7459 = vadd.f32 %v6257, %v7302
    %v7460 = vadd.f32 %v6258, %v7305
    %v7461 = vadd.f32 %v6259, %v7310
    %v7462 = vadd.f32 %v6260, %v7313
    %v7463 = vadd.f32 %v6261, %v7318
    %v7464 = vadd.f32 %v6262, %v7321
    %v7465 = vadd.f32 %v6263, %v7326
    %v7466 = vadd.f32 %v6264, %v7329
    %v7467 = vadd.f32 %v6265, %v7334
    %v7468 = vadd.f32 %v6266, %v7337
    %v7469 = vadd.f32 %v6267, %v7342
    %v7470 = vadd.f32 %v6268, %v7345
    %v7471 = vadd.f32 %v6269, %v7350
    %v7472 = vadd.f32 %v6270, %v7353
    %v7473 = vadd.f32 %v6271, %v7358
    %v7474 = vadd.f32 %v6272, %v7361
    %v7475 = vadd.f32 %v6273, %v7366
    %v7476 = vadd.f32 %v6274, %v7369
    %v7477 = vadd.f32 %v6275, %v7374
    %v7478 = vadd.f32 %v6276, %v7377
    %v7479 = vadd.f32 %v6277, %v7382
    %v7480 = vadd.f32 %v6278, %v7385
    %v7481 = vadd.f32 %v6279, %v7390
    %v7482 = vadd.f32 %v6280, %v7393
    %v7483 = vadd.f32 %v6281, %v7398
    %s7484 = scalar_lea.vmem [#allocation8], 256
    %v7485 = vld [vmem:[%s7484] sm:$0xf]
    %v7486 = vld [vmem:[%s7484 + $0x4] sm:$0xf]
    %v7487 = vld [vmem:[%s7484 + $0x8] sm:$0xf]
    %v7488 = vld [vmem:[%s7484 + $0xc] sm:$0xf]
    %v7489 = vld [vmem:[%s7484 + $0x10] sm:$0xf]
    %v7490 = vld [vmem:[%s7484 + $0x14] sm:$0xf]
    %v7491 = vld [vmem:[%s7484 + $0x18] sm:$0xf]
    %v7492 = vld [vmem:[%s7484 + $0x1c] sm:$0xf]
    %v7493 = vld [vmem:[%s7484 + $0x20] sm:$0xf]
    %v7494 = vld [vmem:[%s7484 + $0x24] sm:$0xf]
    %v7495 = vld [vmem:[%s7484 + $0x28] sm:$0xf]
    %v7496 = vld [vmem:[%s7484 + $0x2c] sm:$0xf]
    %v7497 = vld [vmem:[%s7484 + $0x30] sm:$0xf]
    %v7498 = vld [vmem:[%s7484 + $0x34] sm:$0xf]
    %v7499 = vld [vmem:[%s7484 + $0x38] sm:$0xf]
    %v7500 = vld [vmem:[%s7484 + $0x3c] sm:$0xf]
    %v7501 = vpack.c.b16 %v6465, %v6464
    %v7502 = vpack.c.b16 %v6467, %v6466
    %v7503 = vpack.c.b16 %v6469, %v6468
    %v7504 = vpack.c.b16 %v6471, %v6470
    %v7505 = vpack.c.b16 %v6473, %v6472
    %v7506 = vpack.c.b16 %v6475, %v6474
    %v7507 = vpack.c.b16 %v6477, %v6476
    %v7508 = vpack.c.b16 %v6479, %v6478
    %v7509 = vpack.c.b16 %v6481, %v6480
    %v7510 = vpack.c.b16 %v6483, %v6482
    %v7511 = vpack.c.b16 %v6485, %v6484
    %v7512 = vpack.c.b16 %v6487, %v6486
    %v7513 = vpack.c.b16 %v6489, %v6488
    %v7514 = vpack.c.b16 %v6491, %v6490
    %v7515 = vpack.c.b16 %v6493, %v6492
    %v7516 = vpack.c.b16 %v6495, %v6494
    %v7517 = vpack.c.b16 %v6497, %v6496
    %v7518 = vpack.c.b16 %v6499, %v6498
    %v7519 = vpack.c.b16 %v6501, %v6500
    %v7520 = vpack.c.b16 %v6503, %v6502
    %v7521 = vpack.c.b16 %v6505, %v6504
    %v7522 = vpack.c.b16 %v6507, %v6506
    %v7523 = vpack.c.b16 %v6509, %v6508
    %v7524 = vpack.c.b16 %v6511, %v6510
    %v7525 = vpack.c.b16 %v6513, %v6512
    %v7526 = vpack.c.b16 %v6515, %v6514
    %v7527 = vpack.c.b16 %v6517, %v6516
    %v7528 = vpack.c.b16 %v6519, %v6518
    %v7529 = vpack.c.b16 %v6521, %v6520
    %v7530 = vpack.c.b16 %v6523, %v6522
    %v7531 = vpack.c.b16 %v6525, %v6524
    %v7532 = vpack.c.b16 %v6527, %v6526
    %v7533 = vpack.c.b16 %v6529, %v6528
    %v7534 = vpack.c.b16 %v6531, %v6530
    %v7535 = vpack.c.b16 %v6533, %v6532
    %v7536 = vpack.c.b16 %v6535, %v6534
    %v7537 = vpack.c.b16 %v6537, %v6536
    %v7538 = vpack.c.b16 %v6539, %v6538
    %v7539 = vpack.c.b16 %v6541, %v6540
    %v7540 = vpack.c.b16 %v6543, %v6542
    %v7541 = vpack.c.b16 %v6544, %v6544
    %v7599 = vunpack.c.l.b16 %v7485
    %v7600 = vunpack.c.l.b16 %v7486
    %v7601 = vunpack.c.l.b16 %v7487
    %v7602 = vunpack.c.l.b16 %v7488
    %v7603 = vunpack.c.l.b16 %v7489
    %v7604 = vunpack.c.l.b16 %v7490
    %v7605 = vunpack.c.l.b16 %v7491
    %v7606 = vunpack.c.l.b16 %v7492
    %v7607 = vunpack.c.l.b16 %v7493
    %v7608 = vunpack.c.l.b16 %v7494
    %v7609 = vunpack.c.l.b16 %v7495
    %v7610 = vunpack.c.l.b16 %v7496
    %v7611 = vunpack.c.l.b16 %v7497
    %v7612 = vunpack.c.l.b16 %v7498
    %v7613 = vunpack.c.l.b16 %v7499
    %v7614 = vunpack.c.l.b16 %v7500
    %v7615 = vpack.c.b16 %v7600, %v7599
    %v7616 = vpack.c.b16 %v7602, %v7601
    %v7617 = vpack.c.b16 %v7604, %v7603
    %v7618 = vpack.c.b16 %v7606, %v7605
    %v7619 = vpack.c.b16 %v7608, %v7607
    %v7620 = vpack.c.b16 %v7610, %v7609
    %v7621 = vpack.c.b16 %v7612, %v7611
    %v7622 = vpack.c.b16 %v7614, %v7613
    %7631 = vmatprep.subr.bf16.mxu0 0
    %7632 = vmatpush1.bf16.msra.mxu0 %v7615
    %7633 = vmatprep.subr.bf16.mxu0 0
    %7634 = vmatpush1.bf16.msra.mxu0 %v7616
    %7635 = vmatprep.subr.bf16.mxu0 0
    %7636 = vmatpush1.bf16.msra.mxu0 %v7617
    %7637 = vmatprep.subr.bf16.mxu0 0
    %7638 = vmatpush1.bf16.msra.mxu0 %v7618
    %7639 = vmatprep.subr.bf16.mxu0 0
    %7640 = vmatpush1.bf16.msra.mxu0 %v7619
    %7641 = vmatprep.subr.bf16.mxu0 0
    %7642 = vmatpush1.bf16.msra.mxu0 %v7620
    %7643 = vmatprep.subr.bf16.mxu0 0
    %7644 = vmatpush1.bf16.msra.mxu0 %v7621
    %7645 = vmatprep.subr.bf16.mxu0 0
    %7646 = vmatpush1.bf16.msra.mxu0 %v7622
    %7647 = vmatprep.subr.bf16.mxu0 0
    %7648 = vmatpush1.bf16.msra.mxu0 0
    %7649 = vmatprep.subr.bf16.mxu0 0
    %7650 = vmatpush1.bf16.msra.mxu0 0
    %7651 = vmatprep.subr.bf16.mxu0 0
    %7652 = vmatpush1.bf16.msra.mxu0 0
    %7653 = vmatprep.subr.bf16.mxu0 0
    %7654 = vmatpush1.bf16.msra.mxu0 0
    %7655 = vmatprep.subr.bf16.mxu0 0
    %7656 = vmatpush1.bf16.msra.mxu0 0
    %7657 = vmatprep.subr.bf16.mxu0 0
    %7658 = vmatpush1.bf16.msra.mxu0 0
    %7659 = vmatprep.subr.bf16.mxu0 0
    %7660 = vmatpush1.bf16.msra.mxu0 0
    %7661 = vmatprep.subr.bf16.mxu0 0
    %7662 = vmatpush1.bf16.msra.mxu0 0
    %7663 = vmatprep.mubr.bf16.mxu0 0
    %7664 = vmatmul.mubr.bf16.gmra.mrb[0].mxu0 %v7501
    %v7665 = vpop.f32.mrb[0].mxu0
    %v7666 = vadd.f32 0.0, %v7665
    %v7667 = vpop.f32.mrb[0].mxu0
    %v7668 = vpop.f32.mrb[0].mxu0
    %v7669 = vadd.f32 0.0, %v7668
    %v7670 = vpop.f32.mrb[0].mxu0
    %7671 = vmatprep.mubr.bf16.mxu0 0
    %7672 = vmatmul.mubr.bf16.gmra.mrb[0].mxu0 %v7502
    %v7673 = vpop.f32.mrb[0].mxu0
    %v7674 = vadd.f32 0.0, %v7673
    %v7675 = vpop.f32.mrb[0].mxu0
    %v7676 = vpop.f32.mrb[0].mxu0
    %v7677 = vadd.f32 0.0, %v7676
    %v7678 = vpop.f32.mrb[0].mxu0
    %7679 = vmatprep.mubr.bf16.mxu0 0
    %7680 = vmatmul.mubr.bf16.gmra.mrb[0].mxu0 %v7503
    %v7681 = vpop.f32.mrb[0].mxu0
    %v7682 = vadd.f32 0.0, %v7681
    %v7683 = vpop.f32.mrb[0].mxu0
    %v7684 = vpop.f32.mrb[0].mxu0
    %v7685 = vadd.f32 0.0, %v7684
    %v7686 = vpop.f32.mrb[0].mxu0
    %7687 = vmatprep.mubr.bf16.mxu0 0
    %7688 = vmatmul.mubr.bf16.gmra.mrb[0].mxu0 %v7504
    %v7689 = vpop.f32.mrb[0].mxu0
    %v7690 = vadd.f32 0.0, %v7689
    %v7691 = vpop.f32.mrb[0].mxu0
    %v7692 = vpop.f32.mrb[0].mxu0
    %v7693 = vadd.f32 0.0, %v7692
    %v7694 = vpop.f32.mrb[0].mxu0
    %7695 = vmatprep.mubr.bf16.mxu0 0
    %7696 = vmatmul.mubr.bf16.gmra.mrb[0].mxu0 %v7505
    %v7697 = vpop.f32.mrb[0].mxu0
    %v7698 = vadd.f32 0.0, %v7697
    %v7699 = vpop.f32.mrb[0].mxu0
    %v7700 = vpop.f32.mrb[0].mxu0
    %v7701 = vadd.f32 0.0, %v7700
    %v7702 = vpop.f32.mrb[0].mxu0
    %7703 = vmatprep.mubr.bf16.mxu0 0
    %7704 = vmatmul.mubr.bf16.gmra.mrb[0].mxu0 %v7506
    %v7705 = vpop.f32.mrb[0].mxu0
    %v7706 = vadd.f32 0.0, %v7705
    %v7707 = vpop.f32.mrb[0].mxu0
    %v7708 = vpop.f32.mrb[0].mxu0
    %v7709 = vadd.f32 0.0, %v7708
    %v7710 = vpop.f32.mrb[0].mxu0
    %7711 = vmatprep.mubr.bf16.mxu0 0
    %7712 = vmatmul.mubr.bf16.gmra.mrb[0].mxu0 %v7507
    %v7713 = vpop.f32.mrb[0].mxu0
    %v7714 = vadd.f32 0.0, %v7713
    %v7715 = vpop.f32.mrb[0].mxu0
    %v7716 = vpop.f32.mrb[0].mxu0
    %v7717 = vadd.f32 0.0, %v7716
    %v7718 = vpop.f32.mrb[0].mxu0
    %7719 = vmatprep.mubr.bf16.mxu0 0
    %7720 = vmatmul.mubr.bf16.gmra.mrb[0].mxu0 %v7508
    %v7721 = vpop.f32.mrb[0].mxu0
    %v7722 = vadd.f32 0.0, %v7721
    %v7723 = vpop.f32.mrb[0].mxu0
    %v7724 = vpop.f32.mrb[0].mxu0
    %v7725 = vadd.f32 0.0, %v7724
    %v7726 = vpop.f32.mrb[0].mxu0
    %7727 = vmatprep.mubr.bf16.mxu0 0
    %7728 = vmatmul.mubr.bf16.gmra.mrb[0].mxu0 %v7509
    %v7729 = vpop.f32.mrb[0].mxu0
    %v7730 = vadd.f32 0.0, %v7729
    %v7731 = vpop.f32.mrb[0].mxu0
    %v7732 = vpop.f32.mrb[0].mxu0
    %v7733 = vadd.f32 0.0, %v7732
    %v7734 = vpop.f32.mrb[0].mxu0
    %7735 = vmatprep.mubr.bf16.mxu0 0
    %7736 = vmatmul.mubr.bf16.gmra.mrb[0].mxu0 %v7510
    %v7737 = vpop.f32.mrb[0].mxu0
    %v7738 = vadd.f32 0.0, %v7737
    %v7739 = vpop.f32.mrb[0].mxu0
    %v7740 = vpop.f32.mrb[0].mxu0
    %v7741 = vadd.f32 0.0, %v7740
    %v7742 = vpop.f32.mrb[0].mxu0
    %7743 = vmatprep.mubr.bf16.mxu0 0
    %7744 = vmatmul.mubr.bf16.gmra.mrb[0].mxu0 %v7511
    %v7745 = vpop.f32.mrb[0].mxu0
    %v7746 = vadd.f32 0.0, %v7745
    %v7747 = vpop.f32.mrb[0].mxu0
    %v7748 = vpop.f32.mrb[0].mxu0
    %v7749 = vadd.f32 0.0, %v7748
    %v7750 = vpop.f32.mrb[0].mxu0
    %7751 = vmatprep.mubr.bf16.mxu0 0
    %7752 = vmatmul.mubr.bf16.gmra.mrb[0].mxu0 %v7512
    %v7753 = vpop.f32.mrb[0].mxu0
    %v7754 = vadd.f32 0.0, %v7753
    %v7755 = vpop.f32.mrb[0].mxu0
    %v7756 = vpop.f32.mrb[0].mxu0
    %v7757 = vadd.f32 0.0, %v7756
    %v7758 = vpop.f32.mrb[0].mxu0
    %7759 = vmatprep.mubr.bf16.mxu0 0
    %7760 = vmatmul.mubr.bf16.gmra.mrb[0].mxu0 %v7513
    %v7761 = vpop.f32.mrb[0].mxu0
    %v7762 = vadd.f32 0.0, %v7761
    %v7763 = vpop.f32.mrb[0].mxu0
    %v7764 = vpop.f32.mrb[0].mxu0
    %v7765 = vadd.f32 0.0, %v7764
    %v7766 = vpop.f32.mrb[0].mxu0
    %7767 = vmatprep.mubr.bf16.mxu0 0
    %7768 = vmatmul.mubr.bf16.gmra.mrb[0].mxu0 %v7514
    %v7769 = vpop.f32.mrb[0].mxu0
    %v7770 = vadd.f32 0.0, %v7769
    %v7771 = vpop.f32.mrb[0].mxu0
    %v7772 = vpop.f32.mrb[0].mxu0
    %v7773 = vadd.f32 0.0, %v7772
    %v7774 = vpop.f32.mrb[0].mxu0
    %7775 = vmatprep.mubr.bf16.mxu0 0
    %7776 = vmatmul.mubr.bf16.gmra.mrb[0].mxu0 %v7515
    %v7777 = vpop.f32.mrb[0].mxu0
    %v7778 = vadd.f32 0.0, %v7777
    %v7779 = vpop.f32.mrb[0].mxu0
    %v7780 = vpop.f32.mrb[0].mxu0
    %v7781 = vadd.f32 0.0, %v7780
    %v7782 = vpop.f32.mrb[0].mxu0
    %7783 = vmatprep.mubr.bf16.mxu0 0
    %7784 = vmatmul.mubr.bf16.gmra.mrb[0].mxu0 %v7516
    %v7785 = vpop.f32.mrb[0].mxu0
    %v7786 = vadd.f32 0.0, %v7785
    %v7787 = vpop.f32.mrb[0].mxu0
    %v7788 = vpop.f32.mrb[0].mxu0
    %v7789 = vadd.f32 0.0, %v7788
    %v7790 = vpop.f32.mrb[0].mxu0
    %7791 = vmatprep.mubr.bf16.mxu0 0
    %7792 = vmatmul.mubr.bf16.gmra.mrb[0].mxu0 %v7517
    %v7793 = vpop.f32.mrb[0].mxu0
    %v7794 = vadd.f32 0.0, %v7793
    %v7795 = vpop.f32.mrb[0].mxu0
    %v7796 = vpop.f32.mrb[0].mxu0
    %v7797 = vadd.f32 0.0, %v7796
    %v7798 = vpop.f32.mrb[0].mxu0
    %7799 = vmatprep.mubr.bf16.mxu0 0
    %7800 = vmatmul.mubr.bf16.gmra.mrb[0].mxu0 %v7518
    %v7801 = vpop.f32.mrb[0].mxu0
    %v7802 = vadd.f32 0.0, %v7801
    %v7803 = vpop.f32.mrb[0].mxu0
    %v7804 = vpop.f32.mrb[0].mxu0
    %v7805 = vadd.f32 0.0, %v7804
    %v7806 = vpop.f32.mrb[0].mxu0
    %7807 = vmatprep.mubr.bf16.mxu0 0
    %7808 = vmatmul.mubr.bf16.gmra.mrb[0].mxu0 %v7519
    %v7809 = vpop.f32.mrb[0].mxu0
    %v7810 = vadd.f32 0.0, %v7809
    %v7811 = vpop.f32.mrb[0].mxu0
    %v7812 = vpop.f32.mrb[0].mxu0
    %v7813 = vadd.f32 0.0, %v7812
    %v7814 = vpop.f32.mrb[0].mxu0
    %7815 = vmatprep.mubr.bf16.mxu0 0
    %7816 = vmatmul.mubr.bf16.gmra.mrb[0].mxu0 %v7520
    %v7817 = vpop.f32.mrb[0].mxu0
    %v7818 = vadd.f32 0.0, %v7817
    %v7819 = vpop.f32.mrb[0].mxu0
    %v7820 = vpop.f32.mrb[0].mxu0
    %v7821 = vadd.f32 0.0, %v7820
    %v7822 = vpop.f32.mrb[0].mxu0
    %7823 = vmatprep.mubr.bf16.mxu0 0
    %7824 = vmatmul.mubr.bf16.gmra.mrb[0].mxu0 %v7521
    %v7825 = vpop.f32.mrb[0].mxu0
    %v7826 = vadd.f32 0.0, %v7825
    %v7827 = vpop.f32.mrb[0].mxu0
    %v7828 = vpop.f32.mrb[0].mxu0
    %v7829 = vadd.f32 0.0, %v7828
    %v7830 = vpop.f32.mrb[0].mxu0
    %7831 = vmatprep.mubr.bf16.mxu0 0
    %7832 = vmatmul.mubr.bf16.gmra.mrb[0].mxu0 %v7522
    %v7833 = vpop.f32.mrb[0].mxu0
    %v7834 = vadd.f32 0.0, %v7833
    %v7835 = vpop.f32.mrb[0].mxu0
    %v7836 = vpop.f32.mrb[0].mxu0
    %v7837 = vadd.f32 0.0, %v7836
    %v7838 = vpop.f32.mrb[0].mxu0
    %7839 = vmatprep.mubr.bf16.mxu0 0
    %7840 = vmatmul.mubr.bf16.gmra.mrb[0].mxu0 %v7523
    %v7841 = vpop.f32.mrb[0].mxu0
    %v7842 = vadd.f32 0.0, %v7841
    %v7843 = vpop.f32.mrb[0].mxu0
    %v7844 = vpop.f32.mrb[0].mxu0
    %v7845 = vadd.f32 0.0, %v7844
    %v7846 = vpop.f32.mrb[0].mxu0
    %7847 = vmatprep.mubr.bf16.mxu0 0
    %7848 = vmatmul.mubr.bf16.gmra.mrb[0].mxu0 %v7524
    %v7849 = vpop.f32.mrb[0].mxu0
    %v7850 = vadd.f32 0.0, %v7849
    %v7851 = vpop.f32.mrb[0].mxu0
    %v7852 = vpop.f32.mrb[0].mxu0
    %v7853 = vadd.f32 0.0, %v7852
    %v7854 = vpop.f32.mrb[0].mxu0
    %7855 = vmatprep.mubr.bf16.mxu0 0
    %7856 = vmatmul.mubr.bf16.gmra.mrb[0].mxu0 %v7525
    %v7857 = vpop.f32.mrb[0].mxu0
    %v7858 = vadd.f32 0.0, %v7857
    %v7859 = vpop.f32.mrb[0].mxu0
    %v7860 = vpop.f32.mrb[0].mxu0
    %v7861 = vadd.f32 0.0, %v7860
    %v7862 = vpop.f32.mrb[0].mxu0
    %7863 = vmatprep.mubr.bf16.mxu0 0
    %7864 = vmatmul.mubr.bf16.gmra.mrb[0].mxu0 %v7526
    %v7865 = vpop.f32.mrb[0].mxu0
    %v7866 = vadd.f32 0.0, %v7865
    %v7867 = vpop.f32.mrb[0].mxu0
    %v7868 = vpop.f32.mrb[0].mxu0
    %v7869 = vadd.f32 0.0, %v7868
    %v7870 = vpop.f32.mrb[0].mxu0
    %7871 = vmatprep.mubr.bf16.mxu0 0
    %7872 = vmatmul.mubr.bf16.gmra.mrb[0].mxu0 %v7527
    %v7873 = vpop.f32.mrb[0].mxu0
    %v7874 = vadd.f32 0.0, %v7873
    %v7875 = vpop.f32.mrb[0].mxu0
    %v7876 = vpop.f32.mrb[0].mxu0
    %v7877 = vadd.f32 0.0, %v7876
    %v7878 = vpop.f32.mrb[0].mxu0
    %7879 = vmatprep.mubr.bf16.mxu0 0
    %7880 = vmatmul.mubr.bf16.gmra.mrb[0].mxu0 %v7528
    %v7881 = vpop.f32.mrb[0].mxu0
    %v7882 = vadd.f32 0.0, %v7881
    %v7883 = vpop.f32.mrb[0].mxu0
    %v7884 = vpop.f32.mrb[0].mxu0
    %v7885 = vadd.f32 0.0, %v7884
    %v7886 = vpop.f32.mrb[0].mxu0
    %7887 = vmatprep.mubr.bf16.mxu0 0
    %7888 = vmatmul.mubr.bf16.gmra.mrb[0].mxu0 %v7529
    %v7889 = vpop.f32.mrb[0].mxu0
    %v7890 = vadd.f32 0.0, %v7889
    %v7891 = vpop.f32.mrb[0].mxu0
    %v7892 = vpop.f32.mrb[0].mxu0
    %v7893 = vadd.f32 0.0, %v7892
    %v7894 = vpop.f32.mrb[0].mxu0
    %7895 = vmatprep.mubr.bf16.mxu0 0
    %7896 = vmatmul.mubr.bf16.gmra.mrb[0].mxu0 %v7530
    %v7897 = vpop.f32.mrb[0].mxu0
    %v7898 = vadd.f32 0.0, %v7897
    %v7899 = vpop.f32.mrb[0].mxu0
    %v7900 = vpop.f32.mrb[0].mxu0
    %v7901 = vadd.f32 0.0, %v7900
    %v7902 = vpop.f32.mrb[0].mxu0
    %7903 = vmatprep.mubr.bf16.mxu0 0
    %7904 = vmatmul.mubr.bf16.gmra.mrb[0].mxu0 %v7531
    %v7905 = vpop.f32.mrb[0].mxu0
    %v7906 = vadd.f32 0.0, %v7905
    %v7907 = vpop.f32.mrb[0].mxu0
    %v7908 = vpop.f32.mrb[0].mxu0
    %v7909 = vadd.f32 0.0, %v7908
    %v7910 = vpop.f32.mrb[0].mxu0
    %7911 = vmatprep.mubr.bf16.mxu0 0
    %7912 = vmatmul.mubr.bf16.gmra.mrb[0].mxu0 %v7532
    %v7913 = vpop.f32.mrb[0].mxu0
    %v7914 = vadd.f32 0.0, %v7913
    %v7915 = vpop.f32.mrb[0].mxu0
    %v7916 = vpop.f32.mrb[0].mxu0
    %v7917 = vadd.f32 0.0, %v7916
    %v7918 = vpop.f32.mrb[0].mxu0
    %7919 = vmatprep.mubr.bf16.mxu0 0
    %7920 = vmatmul.mubr.bf16.gmra.mrb[0].mxu0 %v7533
    %v7921 = vpop.f32.mrb[0].mxu0
    %v7922 = vadd.f32 0.0, %v7921
    %v7923 = vpop.f32.mrb[0].mxu0
    %v7924 = vpop.f32.mrb[0].mxu0
    %v7925 = vadd.f32 0.0, %v7924
    %v7926 = vpop.f32.mrb[0].mxu0
    %7927 = vmatprep.mubr.bf16.mxu0 0
    %7928 = vmatmul.mubr.bf16.gmra.mrb[0].mxu0 %v7534
    %v7929 = vpop.f32.mrb[0].mxu0
    %v7930 = vadd.f32 0.0, %v7929
    %v7931 = vpop.f32.mrb[0].mxu0
    %v7932 = vpop.f32.mrb[0].mxu0
    %v7933 = vadd.f32 0.0, %v7932
    %v7934 = vpop.f32.mrb[0].mxu0
    %7935 = vmatprep.mubr.bf16.mxu0 0
    %7936 = vmatmul.mubr.bf16.gmra.mrb[0].mxu0 %v7535
    %v7937 = vpop.f32.mrb[0].mxu0
    %v7938 = vadd.f32 0.0, %v7937
    %v7939 = vpop.f32.mrb[0].mxu0
    %v7940 = vpop.f32.mrb[0].mxu0
    %v7941 = vadd.f32 0.0, %v7940
    %v7942 = vpop.f32.mrb[0].mxu0
    %7943 = vmatprep.mubr.bf16.mxu0 0
    %7944 = vmatmul.mubr.bf16.gmra.mrb[0].mxu0 %v7536
    %v7945 = vpop.f32.mrb[0].mxu0
    %v7946 = vadd.f32 0.0, %v7945
    %v7947 = vpop.f32.mrb[0].mxu0
    %v7948 = vpop.f32.mrb[0].mxu0
    %v7949 = vadd.f32 0.0, %v7948
    %v7950 = vpop.f32.mrb[0].mxu0
    %7951 = vmatprep.mubr.bf16.mxu0 0
    %7952 = vmatmul.mubr.bf16.gmra.mrb[0].mxu0 %v7537
    %v7953 = vpop.f32.mrb[0].mxu0
    %v7954 = vadd.f32 0.0, %v7953
    %v7955 = vpop.f32.mrb[0].mxu0
    %v7956 = vpop.f32.mrb[0].mxu0
    %v7957 = vadd.f32 0.0, %v7956
    %v7958 = vpop.f32.mrb[0].mxu0
    %7959 = vmatprep.mubr.bf16.mxu0 0
    %7960 = vmatmul.mubr.bf16.gmra.mrb[0].mxu0 %v7538
    %v7961 = vpop.f32.mrb[0].mxu0
    %v7962 = vadd.f32 0.0, %v7961
    %v7963 = vpop.f32.mrb[0].mxu0
    %v7964 = vpop.f32.mrb[0].mxu0
    %v7965 = vadd.f32 0.0, %v7964
    %v7966 = vpop.f32.mrb[0].mxu0
    %7967 = vmatprep.mubr.bf16.mxu0 0
    %7968 = vmatmul.mubr.bf16.gmra.mrb[0].mxu0 %v7539
    %v7969 = vpop.f32.mrb[0].mxu0
    %v7970 = vadd.f32 0.0, %v7969
    %v7971 = vpop.f32.mrb[0].mxu0
    %v7972 = vpop.f32.mrb[0].mxu0
    %v7973 = vadd.f32 0.0, %v7972
    %v7974 = vpop.f32.mrb[0].mxu0
    %7975 = vmatprep.mubr.bf16.mxu0 0
    %7976 = vmatmul.mubr.bf16.gmra.mrb[0].mxu0 %v7540
    %v7977 = vpop.f32.mrb[0].mxu0
    %v7978 = vadd.f32 0.0, %v7977
    %v7979 = vpop.f32.mrb[0].mxu0
    %v7980 = vpop.f32.mrb[0].mxu0
    %v7981 = vadd.f32 0.0, %v7980
    %v7982 = vpop.f32.mrb[0].mxu0
    %7983 = vmatprep.mubr.bf16.mxu0 0
    %7984 = vmatmul.mubr.bf16.gmra.mrb[0].mxu0 %v7541
    %v7985 = vpop.f32.mrb[0].mxu0
    %v7986 = vadd.f32 0.0, %v7985
    %v7987 = vpop.f32.mrb[0].mxu0
    %v7988 = vpop.f32.mrb[0].mxu0
    %v7989 = vpop.f32.mrb[0].mxu0
    %7990 = vdwg.mxu0
    %v7991 = vadd.f32 %v7403, %v7666
    %v7992 = vadd.f32 %v7404, %v7669
    %v7993 = vadd.f32 %v7405, %v7674
    %v7994 = vadd.f32 %v7406, %v7677
    %v7995 = vadd.f32 %v7407, %v7682
    %v7996 = vadd.f32 %v7408, %v7685
    %v7997 = vadd.f32 %v7409, %v7690
    %v7998 = vadd.f32 %v7410, %v7693
    %v7999 = vadd.f32 %v7411, %v7698
    %v8000 = vadd.f32 %v7412, %v7701
    %v8001 = vadd.f32 %v7413, %v7706
    %v8002 = vadd.f32 %v7414, %v7709
    %v8003 = vadd.f32 %v7415, %v7714
    %v8004 = vadd.f32 %v7416, %v7717
    %v8005 = vadd.f32 %v7417, %v7722
    %v8006 = vadd.f32 %v7418, %v7725
    %v8007 = vadd.f32 %v7419, %v7730
    %v8008 = vadd.f32 %v7420, %v7733
    %v8009 = vadd.f32 %v7421, %v7738
    %v8010 = vadd.f32 %v7422, %v7741
    %v8011 = vadd.f32 %v7423, %v7746
    %v8012 = vadd.f32 %v7424, %v7749
    %v8013 = vadd.f32 %v7425, %v7754
    %v8014 = vadd.f32 %v7426, %v7757
    %v8015 = vadd.f32 %v7427, %v7762
    %v8016 = vadd.f32 %v7428, %v7765
    %v8017 = vadd.f32 %v7429, %v7770
    %v8018 = vadd.f32 %v7430, %v7773
    %v8019 = vadd.f32 %v7431, %v7778
    %v8020 = vadd.f32 %v7432, %v7781
    %v8021 = vadd.f32 %v7433, %v7786
    %v8022 = vadd.f32 %v7434, %v7789
    %v8023 = vadd.f32 %v7435, %v7794
    %v8024 = vadd.f32 %v7436, %v7797
    %v8025 = vadd.f32 %v7437, %v7802
    %v8026 = vadd.f32 %v7438, %v7805
    %v8027 = vadd.f32 %v7439, %v7810
    %v8028 = vadd.f32 %v7440, %v7813
    %v8029 = vadd.f32 %v7441, %v7818
    %v8030 = vadd.f32 %v7442, %v7821
    %v8031 = vadd.f32 %v7443, %v7826
    %v8032 = vadd.f32 %v7444, %v7829
    %v8033 = vadd.f32 %v7445, %v7834
    %v8034 = vadd.f32 %v7446, %v7837
    %v8035 = vadd.f32 %v7447, %v7842
    %v8036 = vadd.f32 %v7448, %v7845
    %v8037 = vadd.f32 %v7449, %v7850
    %v8038 = vadd.f32 %v7450, %v7853
    %v8039 = vadd.f32 %v7451, %v7858
    %v8040 = vadd.f32 %v7452, %v7861
    %v8041 = vadd.f32 %v7453, %v7866
    %v8042 = vadd.f32 %v7454, %v7869
    %v8043 = vadd.f32 %v7455, %v7874
    %v8044 = vadd.f32 %v7456, %v7877
    %v8045 = vadd.f32 %v7457, %v7882
    %v8046 = vadd.f32 %v7458, %v7885
    %v8047 = vadd.f32 %v7459, %v7890
    %v8048 = vadd.f32 %v7460, %v7893
    %v8049 = vadd.f32 %v7461, %v7898
    %v8050 = vadd.f32 %v7462, %v7901
    %v8051 = vadd.f32 %v7463, %v7906
    %v8052 = vadd.f32 %v7464, %v7909
    %v8053 = vadd.f32 %v7465, %v7914
    %v8054 = vadd.f32 %v7466, %v7917
    %v8055 = vadd.f32 %v7467, %v7922
    %v8056 = vadd.f32 %v7468, %v7925
    %v8057 = vadd.f32 %v7469, %v7930
    %v8058 = vadd.f32 %v7470, %v7933
    %v8059 = vadd.f32 %v7471, %v7938
    %v8060 = vadd.f32 %v7472, %v7941
    %v8061 = vadd.f32 %v7473, %v7946
    %v8062 = vadd.f32 %v7474, %v7949
    %v8063 = vadd.f32 %v7475, %v7954
    %v8064 = vadd.f32 %v7476, %v7957
    %v8065 = vadd.f32 %v7477, %v7962
    %v8066 = vadd.f32 %v7478, %v7965
    %v8067 = vadd.f32 %v7479, %v7970
    %v8068 = vadd.f32 %v7480, %v7973
    %v8069 = vadd.f32 %v7481, %v7978
    %v8070 = vadd.f32 %v7482, %v7981
    %v8071 = vadd.f32 %v7483, %v7986
    %v8072 = vld [vmem:[#allocation2 + $0xc] sm:$0xf]
    %v8073 = vld [vmem:[#allocation2 + $0x10] sm:$0xf]
    %v8074 = vld [vmem:[#allocation2 + $0x14] sm:$0xf]
    %v8075 = vld [vmem:[#allocation2 + $0x18] sm:$0xf]
    %v8076 = vld [vmem:[#allocation2 + $0x1c] sm:$0xf]
    %v8077 = vld [vmem:[#allocation2 + $0x20] sm:$0xf]
    %v8078 = vld [vmem:[#allocation2 + $0x24] sm:$0xf]
    %v8079 = vld [vmem:[#allocation2 + $0x28] sm:$0xf]
    %v8080 = vld [vmem:[#allocation2 + $0x2c] sm:$0xf]
    %v8081 = vld [vmem:[#allocation2 + $0x30] sm:$0xf]
    %v8082 = vld [vmem:[#allocation2 + $0x34] sm:$0xf]
    %v8083 = vld [vmem:[#allocation2 + $0x38] sm:$0xf]
    %v8084 = vld [vmem:[#allocation2 + $0x3c] sm:$0xf]
    %v8085 = vld [vmem:[#allocation2 + $0x40] sm:$0xf]
    %v8086 = vld [vmem:[#allocation2 + $0x44] sm:$0xf]
    %v8087 = vld [vmem:[#allocation2 + $0x48] sm:$0xf]
    %v8088 = vld [vmem:[#allocation2 + $0x4c] sm:$0xf]
    %v8089 = vld [vmem:[#allocation2 + $0x50] sm:$0xf]
    %v8090 = vld [vmem:[#allocation2 + $0x54] sm:$0xf]
    %v8091 = vld [vmem:[#allocation2 + $0x58] sm:$0xf]
    %v8092 = vld [vmem:[#allocation2 + $0x5c] sm:$0xf]
    %v8093 = vld [vmem:[#allocation2 + $0x60] sm:$0xf]
    %v8094 = vld [vmem:[#allocation2 + $0x64] sm:$0xf]
    %v8095 = vld [vmem:[#allocation2 + $0x68] sm:$0xf]
    %v8096 = vld [vmem:[#allocation2 + $0x6c] sm:$0xf]
    %v8097 = vld [vmem:[#allocation2 + $0x70] sm:$0xf]
    %v8098 = vld [vmem:[#allocation2 + $0x74] sm:$0xf]
    %v8099 = vld [vmem:[#allocation2 + $0x78] sm:$0xf]
    %v8100 = vld [vmem:[#allocation2 + $0x7c] sm:$0xf]
    %v8101 = vld [vmem:[#allocation2 + $0x80] sm:$0xf]
    %v8102 = vld [vmem:[#allocation2 + $0x84] sm:$0xf]
    %v8103 = vld [vmem:[#allocation2 + $0x88] sm:$0xf]
    %v8104 = vld [vmem:[#allocation2 + $0x8c] sm:$0xf]
    %v8105 = vld [vmem:[#allocation2 + $0x90] sm:$0xf]
    %v8106 = vld [vmem:[#allocation2 + $0x94] sm:$0xf]
    %v8107 = vld [vmem:[#allocation2 + $0x98] sm:$0xf]
    %v8108 = vld [vmem:[#allocation2 + $0x9c] sm:$0xf]
    %v8109 = vld [vmem:[#allocation2 + $0xa0] sm:$0xf]
    %v8110 = vld [vmem:[#allocation2 + $0xa4] sm:$0xf]
    %v8111 = vld [vmem:[#allocation2 + $0xa8] sm:$0xf]
    %v8112 = vld [vmem:[#allocation2 + $0xac] sm:$0xf]
    %v8113 = vld [vmem:[#allocation2 + $0xb0] sm:$0xf]
    %v8114 = vld [vmem:[#allocation2 + $0xb4] sm:$0xf]
    %v8115 = vld [vmem:[#allocation2 + $0xb8] sm:$0xf]
    %v8116 = vld [vmem:[#allocation2 + $0xbc] sm:$0xf]
    %v8117 = vld [vmem:[#allocation2 + $0xc0] sm:$0xf]
    %v8118 = vld [vmem:[#allocation2 + $0xc4] sm:$0xf]
    %v8119 = vld [vmem:[#allocation2 + $0xc8] sm:$0xf]
    %v8120 = vld [vmem:[#allocation2 + $0xcc] sm:$0xf]
    %v8121 = vld [vmem:[#allocation2 + $0xd0] sm:$0xf]
    %v8122 = vld [vmem:[#allocation2 + $0xd4] sm:$0xf]
    %v8123 = vld [vmem:[#allocation2 + $0xd8] sm:$0xf]
    %v8124 = vld [vmem:[#allocation2 + $0xdc] sm:$0xf]
    %v8125 = vld [vmem:[#allocation2 + $0xe0] sm:$0xf]
    %v8126 = vld [vmem:[#allocation2 + $0xe4] sm:$0xf]
    %v8127 = vld [vmem:[#allocation2 + $0xe8] sm:$0xf]
    %v8128 = vld [vmem:[#allocation2 + $0xec] sm:$0xf]
    %v8129 = vld [vmem:[#allocation2 + $0xf0] sm:$0xf]
    %v8130 = vld [vmem:[#allocation2 + $0xf4] sm:$0xf]
    %v8131 = vld [vmem:[#allocation2 + $0xf8] sm:$0xf]
    %v8132 = vld [vmem:[#allocation2 + $0xfc] sm:$0xf]
    %v8133 = vld [vmem:[#allocation2 + $0x100] sm:$0xf]
    %v8134 = vld [vmem:[#allocation2 + $0x104] sm:$0xf]
    %v8135 = vld [vmem:[#allocation2 + $0x108] sm:$0xf]
    %v8136 = vld [vmem:[#allocation2 + $0x10c] sm:$0xf]
    %v8137 = vld [vmem:[#allocation2 + $0x110] sm:$0xf]
    %v8138 = vld [vmem:[#allocation2 + $0x114] sm:$0xf]
    %v8139 = vld [vmem:[#allocation2 + $0x118] sm:$0xf]
    %v8140 = vld [vmem:[#allocation2 + $0x11c] sm:$0xf]
    %v8141 = vld [vmem:[#allocation2 + $0x120] sm:$0xf]
    %v8142 = vld [vmem:[#allocation2 + $0x124] sm:$0xf]
    %v8143 = vld [vmem:[#allocation2 + $0x128] sm:$0xf]
    %v8144 = vld [vmem:[#allocation2 + $0x12c] sm:$0xf]
    %v8145 = vld [vmem:[#allocation2 + $0x130] sm:$0xf]
    %v8146 = vld [vmem:[#allocation2 + $0x134] sm:$0xf]
    %v8147 = vld [vmem:[#allocation2 + $0x138] sm:$0xf]
    %v8148 = vld [vmem:[#allocation2 + $0x13c] sm:$0xf]
    %v8149 = vld [vmem:[#allocation2 + $0x140] sm:$0xf]
    %v8150 = vld [vmem:[#allocation2 + $0x144] sm:$0xf]
    %v8151 = vld [vmem:[#allocation2 + $0x148] sm:$0xf]
    %v8152 = vld [vmem:[#allocation2 + $0x14c] sm:$0xf]
    %v8153 = vld [vmem:[#allocation2 + $0x150] sm:$0x1]
    %s8154 = scalar_lea.vmem [#allocation8], 320
    %v8155 = vld [vmem:[%s8154] sm:$0xf]
    %v8156 = vld [vmem:[%s8154 + $0x4] sm:$0xf]
    %v8157 = vld [vmem:[%s8154 + $0x8] sm:$0xf]
    %v8158 = vld [vmem:[%s8154 + $0xc] sm:$0xf]
    %v8159 = vld [vmem:[%s8154 + $0x10] sm:$0xf]
    %v8160 = vld [vmem:[%s8154 + $0x14] sm:$0xf]
    %v8161 = vld [vmem:[%s8154 + $0x18] sm:$0xf]
    %v8162 = vld [vmem:[%s8154 + $0x1c] sm:$0xf]
    %v8163 = vld [vmem:[%s8154 + $0x20] sm:$0xf]
    %v8164 = vld [vmem:[%s8154 + $0x24] sm:$0xf]
    %v8165 = vld [vmem:[%s8154 + $0x28] sm:$0xf]
    %v8166 = vld [vmem:[%s8154 + $0x2c] sm:$0xf]
    %v8167 = vld [vmem:[%s8154 + $0x30] sm:$0xf]
    %v8168 = vld [vmem:[%s8154 + $0x34] sm:$0xf]
    %v8169 = vld [vmem:[%s8154 + $0x38] sm:$0xf]
    %v8170 = vld [vmem:[%s8154 + $0x3c] sm:$0xf]
    %v8253 = vunpack.c.l.b16 %v8072
    %v8254 = vunpack.c.l.b16 %v8073
    %v8255 = vunpack.c.l.b16 %v8074
    %v8256 = vunpack.c.l.b16 %v8075
    %v8257 = vunpack.c.l.b16 %v8076
    %v8258 = vunpack.c.l.b16 %v8077
    %v8259 = vunpack.c.l.b16 %v8078
    %v8260 = vunpack.c.l.b16 %v8079
    %v8261 = vunpack.c.l.b16 %v8080
    %v8262 = vunpack.c.l.b16 %v8081
    %v8263 = vunpack.c.l.b16 %v8082
    %v8264 = vunpack.c.l.b16 %v8083
    %v8265 = vunpack.c.l.b16 %v8084
    %v8266 = vunpack.c.l.b16 %v8085
    %v8267 = vunpack.c.l.b16 %v8086
    %v8268 = vunpack.c.l.b16 %v8087
    %v8269 = vunpack.c.l.b16 %v8088
    %v8270 = vunpack.c.l.b16 %v8089
    %v8271 = vunpack.c.l.b16 %v8090
    %v8272 = vunpack.c.l.b16 %v8091
    %v8273 = vunpack.c.l.b16 %v8092
    %v8274 = vunpack.c.l.b16 %v8093
    %v8275 = vunpack.c.l.b16 %v8094
    %v8276 = vunpack.c.l.b16 %v8095
    %v8277 = vunpack.c.l.b16 %v8096
    %v8278 = vunpack.c.l.b16 %v8097
    %v8279 = vunpack.c.l.b16 %v8098
    %v8280 = vunpack.c.l.b16 %v8099
    %v8281 = vunpack.c.l.b16 %v8100
    %v8282 = vunpack.c.l.b16 %v8101
    %v8283 = vunpack.c.l.b16 %v8102
    %v8284 = vunpack.c.l.b16 %v8103
    %v8285 = vunpack.c.l.b16 %v8104
    %v8286 = vunpack.c.l.b16 %v8105
    %v8287 = vunpack.c.l.b16 %v8106
    %v8288 = vunpack.c.l.b16 %v8107
    %v8289 = vunpack.c.l.b16 %v8108
    %v8290 = vunpack.c.l.b16 %v8109
    %v8291 = vunpack.c.l.b16 %v8110
    %v8292 = vunpack.c.l.b16 %v8111
    %v8293 = vunpack.c.l.b16 %v8112
    %v8294 = vunpack.c.l.b16 %v8113
    %v8295 = vunpack.c.l.b16 %v8114
    %v8296 = vunpack.c.l.b16 %v8115
    %v8297 = vunpack.c.l.b16 %v8116
    %v8298 = vunpack.c.l.b16 %v8117
    %v8299 = vunpack.c.l.b16 %v8118
    %v8300 = vunpack.c.l.b16 %v8119
    %v8301 = vunpack.c.l.b16 %v8120
    %v8302 = vunpack.c.l.b16 %v8121
    %v8303 = vunpack.c.l.b16 %v8122
    %v8304 = vunpack.c.l.b16 %v8123
    %v8305 = vunpack.c.l.b16 %v8124
    %v8306 = vunpack.c.l.b16 %v8125
    %v8307 = vunpack.c.l.b16 %v8126
    %v8308 = vunpack.c.l.b16 %v8127
    %v8309 = vunpack.c.l.b16 %v8128
    %v8310 = vunpack.c.l.b16 %v8129
    %v8311 = vunpack.c.l.b16 %v8130
    %v8312 = vunpack.c.l.b16 %v8131
    %v8313 = vunpack.c.l.b16 %v8132
    %v8314 = vunpack.c.l.b16 %v8133
    %v8315 = vunpack.c.l.b16 %v8134
    %v8316 = vunpack.c.l.b16 %v8135
    %v8317 = vunpack.c.l.b16 %v8136
    %v8318 = vunpack.c.l.b16 %v8137
    %v8319 = vunpack.c.l.b16 %v8138
    %v8320 = vunpack.c.l.b16 %v8139
    %v8321 = vunpack.c.l.b16 %v8140
    %v8322 = vunpack.c.l.b16 %v8141
    %v8323 = vunpack.c.l.b16 %v8142
    %v8324 = vunpack.c.l.b16 %v8143
    %v8325 = vunpack.c.l.b16 %v8144
    %v8326 = vunpack.c.l.b16 %v8145
    %v8327 = vunpack.c.l.b16 %v8146
    %v8328 = vunpack.c.l.b16 %v8147
    %v8329 = vunpack.c.l.b16 %v8148
    %v8330 = vunpack.c.l.b16 %v8149
    %v8331 = vunpack.c.l.b16 %v8150
    %v8332 = vunpack.c.l.b16 %v8151
    %v8333 = vunpack.c.l.b16 %v8152
    %v8334 = vunpack.c.l.b16 %v8153
    %v8335 = vpack.c.b16 %v8254, %v8253
    %v8336 = vpack.c.b16 %v8256, %v8255
    %v8337 = vpack.c.b16 %v8258, %v8257
    %v8338 = vpack.c.b16 %v8260, %v8259
    %v8339 = vpack.c.b16 %v8262, %v8261
    %v8340 = vpack.c.b16 %v8264, %v8263
    %v8341 = vpack.c.b16 %v8266, %v8265
    %v8342 = vpack.c.b16 %v8268, %v8267
    %v8343 = vpack.c.b16 %v8270, %v8269
    %v8344 = vpack.c.b16 %v8272, %v8271
    %v8345 = vpack.c.b16 %v8274, %v8273
    %v8346 = vpack.c.b16 %v8276, %v8275
    %v8347 = vpack.c.b16 %v8278, %v8277
    %v8348 = vpack.c.b16 %v8280, %v8279
    %v8349 = vpack.c.b16 %v8282, %v8281
    %v8350 = vpack.c.b16 %v8284, %v8283
    %v8351 = vpack.c.b16 %v8286, %v8285
    %v8352 = vpack.c.b16 %v8288, %v8287
    %v8353 = vpack.c.b16 %v8290, %v8289
    %v8354 = vpack.c.b16 %v8292, %v8291
    %v8355 = vpack.c.b16 %v8294, %v8293
    %v8356 = vpack.c.b16 %v8296, %v8295
    %v8357 = vpack.c.b16 %v8298, %v8297
    %v8358 = vpack.c.b16 %v8300, %v8299
    %v8359 = vpack.c.b16 %v8302, %v8301
    %v8360 = vpack.c.b16 %v8304, %v8303
    %v8361 = vpack.c.b16 %v8306, %v8305
    %v8362 = vpack.c.b16 %v8308, %v8307
    %v8363 = vpack.c.b16 %v8310, %v8309
    %v8364 = vpack.c.b16 %v8312, %v8311
    %v8365 = vpack.c.b16 %v8314, %v8313
    %v8366 = vpack.c.b16 %v8316, %v8315
    %v8367 = vpack.c.b16 %v8318, %v8317
    %v8368 = vpack.c.b16 %v8320, %v8319
    %v8369 = vpack.c.b16 %v8322, %v8321
    %v8370 = vpack.c.b16 %v8324, %v8323
    %v8371 = vpack.c.b16 %v8326, %v8325
    %v8372 = vpack.c.b16 %v8328, %v8327
    %v8373 = vpack.c.b16 %v8330, %v8329
    %v8374 = vpack.c.b16 %v8332, %v8331
    %v8375 = vpack.c.b16 %v8334, %v8333
    %vm8376 = vsmask.f32 7424
    %v8378 = vshrl.u32 %v8335, 16
    %v8380 = vshll.u32 %v8335, 16
    %v8382 = vrot.slane %v8380, 1
    %v8383 = vor.u32 %v8378, %v8382
    %v8385 = vshll.u32 %v8336, 16
    %v8387 = vrot.slane %v8385, 1
    %v8388 = vsel %vm8376, %v8383, %v8387
    %v8389 = vshrl.u32 %v8336, 16
    %v8391 = vor.u32 %v8389, %v8387
    %v8393 = vshll.u32 %v8337, 16
    %v8395 = vrot.slane %v8393, 1
    %v8396 = vsel %vm8376, %v8391, %v8395
    %v8397 = vshrl.u32 %v8337, 16
    %v8399 = vor.u32 %v8397, %v8395
    %v8401 = vshll.u32 %v8338, 16
    %v8403 = vrot.slane %v8401, 1
    %v8404 = vsel %vm8376, %v8399, %v8403
    %v8405 = vshrl.u32 %v8338, 16
    %v8407 = vor.u32 %v8405, %v8403
    %v8409 = vshll.u32 %v8339, 16
    %v8411 = vrot.slane %v8409, 1
    %v8412 = vsel %vm8376, %v8407, %v8411
    %v8413 = vshrl.u32 %v8339, 16
    %v8415 = vor.u32 %v8413, %v8411
    %v8417 = vshll.u32 %v8340, 16
    %v8419 = vrot.slane %v8417, 1
    %v8420 = vsel %vm8376, %v8415, %v8419
    %v8421 = vshrl.u32 %v8340, 16
    %v8423 = vor.u32 %v8421, %v8419
    %v8425 = vshll.u32 %v8341, 16
    %v8427 = vrot.slane %v8425, 1
    %v8428 = vsel %vm8376, %v8423, %v8427
    %v8429 = vshrl.u32 %v8341, 16
    %v8431 = vor.u32 %v8429, %v8427
    %v8433 = vshll.u32 %v8342, 16
    %v8435 = vrot.slane %v8433, 1
    %v8436 = vsel %vm8376, %v8431, %v8435
    %v8437 = vshrl.u32 %v8342, 16
    %v8439 = vor.u32 %v8437, %v8435
    %v8441 = vshll.u32 %v8343, 16
    %v8443 = vrot.slane %v8441, 1
    %v8444 = vsel %vm8376, %v8439, %v8443
    %v8445 = vshrl.u32 %v8343, 16
    %v8447 = vor.u32 %v8445, %v8443
    %v8449 = vshll.u32 %v8344, 16
    %v8451 = vrot.slane %v8449, 1
    %v8452 = vsel %vm8376, %v8447, %v8451
    %v8453 = vshrl.u32 %v8344, 16
    %v8455 = vor.u32 %v8453, %v8451
    %v8457 = vshll.u32 %v8345, 16
    %v8459 = vrot.slane %v8457, 1
    %v8460 = vsel %vm8376, %v8455, %v8459
    %v8461 = vshrl.u32 %v8345, 16
    %v8463 = vor.u32 %v8461, %v8459
    %v8465 = vshll.u32 %v8346, 16
    %v8467 = vrot.slane %v8465, 1
    %v8468 = vsel %vm8376, %v8463, %v8467
    %v8469 = vshrl.u32 %v8346, 16
    %v8471 = vor.u32 %v8469, %v8467
    %v8473 = vshll.u32 %v8347, 16
    %v8475 = vrot.slane %v8473, 1
    %v8476 = vsel %vm8376, %v8471, %v8475
    %v8477 = vshrl.u32 %v8347, 16
    %v8479 = vor.u32 %v8477, %v8475
    %v8481 = vshll.u32 %v8348, 16
    %v8483 = vrot.slane %v8481, 1
    %v8484 = vsel %vm8376, %v8479, %v8483
    %v8485 = vshrl.u32 %v8348, 16
    %v8487 = vor.u32 %v8485, %v8483
    %v8489 = vshll.u32 %v8349, 16
    %v8491 = vrot.slane %v8489, 1
    %v8492 = vsel %vm8376, %v8487, %v8491
    %v8493 = vshrl.u32 %v8349, 16
    %v8495 = vor.u32 %v8493, %v8491
    %v8497 = vshll.u32 %v8350, 16
    %v8499 = vrot.slane %v8497, 1
    %v8500 = vsel %vm8376, %v8495, %v8499
    %v8501 = vshrl.u32 %v8350, 16
    %v8503 = vor.u32 %v8501, %v8499
    %v8505 = vshll.u32 %v8351, 16
    %v8507 = vrot.slane %v8505, 1
    %v8508 = vsel %vm8376, %v8503, %v8507
    %v8509 = vshrl.u32 %v8351, 16
    %v8511 = vor.u32 %v8509, %v8507
    %v8513 = vshll.u32 %v8352, 16
    %v8515 = vrot.slane %v8513, 1
    %v8516 = vsel %vm8376, %v8511, %v8515
    %v8517 = vshrl.u32 %v8352, 16
    %v8519 = vor.u32 %v8517, %v8515
    %v8521 = vshll.u32 %v8353, 16
    %v8523 = vrot.slane %v8521, 1
    %v8524 = vsel %vm8376, %v8519, %v8523
    %v8525 = vshrl.u32 %v8353, 16
    %v8527 = vor.u32 %v8525, %v8523
    %v8529 = vshll.u32 %v8354, 16
    %v8531 = vrot.slane %v8529, 1
    %v8532 = vsel %vm8376, %v8527, %v8531
    %v8533 = vshrl.u32 %v8354, 16
    %v8535 = vor.u32 %v8533, %v8531
    %v8537 = vshll.u32 %v8355, 16
    %v8539 = vrot.slane %v8537, 1
    %v8540 = vsel %vm8376, %v8535, %v8539
    %v8541 = vshrl.u32 %v8355, 16
    %v8543 = vor.u32 %v8541, %v8539
    %v8545 = vshll.u32 %v8356, 16
    %v8547 = vrot.slane %v8545, 1
    %v8548 = vsel %vm8376, %v8543, %v8547
    %v8549 = vshrl.u32 %v8356, 16
    %v8551 = vor.u32 %v8549, %v8547
    %v8553 = vshll.u32 %v8357, 16
    %v8555 = vrot.slane %v8553, 1
    %v8556 = vsel %vm8376, %v8551, %v8555
    %v8557 = vshrl.u32 %v8357, 16
    %v8559 = vor.u32 %v8557, %v8555
    %v8561 = vshll.u32 %v8358, 16
    %v8563 = vrot.slane %v8561, 1
    %v8564 = vsel %vm8376, %v8559, %v8563
    %v8565 = vshrl.u32 %v8358, 16
    %v8567 = vor.u32 %v8565, %v8563
    %v8569 = vshll.u32 %v8359, 16
    %v8571 = vrot.slane %v8569, 1
    %v8572 = vsel %vm8376, %v8567, %v8571
    %v8573 = vshrl.u32 %v8359, 16
    %v8575 = vor.u32 %v8573, %v8571
    %v8577 = vshll.u32 %v8360, 16
    %v8579 = vrot.slane %v8577, 1
    %v8580 = vsel %vm8376, %v8575, %v8579
    %v8581 = vshrl.u32 %v8360, 16
    %v8583 = vor.u32 %v8581, %v8579
    %v8585 = vshll.u32 %v8361, 16
    %v8587 = vrot.slane %v8585, 1
    %v8588 = vsel %vm8376, %v8583, %v8587
    %v8589 = vshrl.u32 %v8361, 16
    %v8591 = vor.u32 %v8589, %v8587
    %v8593 = vshll.u32 %v8362, 16
    %v8595 = vrot.slane %v8593, 1
    %v8596 = vsel %vm8376, %v8591, %v8595
    %v8597 = vshrl.u32 %v8362, 16
    %v8599 = vor.u32 %v8597, %v8595
    %v8601 = vshll.u32 %v8363, 16
    %v8603 = vrot.slane %v8601, 1
    %v8604 = vsel %vm8376, %v8599, %v8603
    %v8605 = vshrl.u32 %v8363, 16
    %v8607 = vor.u32 %v8605, %v8603
    %v8609 = vshll.u32 %v8364, 16
    %v8611 = vrot.slane %v8609, 1
    %v8612 = vsel %vm8376, %v8607, %v8611
    %v8613 = vshrl.u32 %v8364, 16
    %v8615 = vor.u32 %v8613, %v8611
    %v8617 = vshll.u32 %v8365, 16
    %v8619 = vrot.slane %v8617, 1
    %v8620 = vsel %vm8376, %v8615, %v8619
    %v8621 = vshrl.u32 %v8365, 16
    %v8623 = vor.u32 %v8621, %v8619
    %v8625 = vshll.u32 %v8366, 16
    %v8627 = vrot.slane %v8625, 1
    %v8628 = vsel %vm8376, %v8623, %v8627
    %v8629 = vshrl.u32 %v8366, 16
    %v8631 = vor.u32 %v8629, %v8627
    %v8633 = vshll.u32 %v8367, 16
    %v8635 = vrot.slane %v8633, 1
    %v8636 = vsel %vm8376, %v8631, %v8635
    %v8637 = vshrl.u32 %v8367, 16
    %v8639 = vor.u32 %v8637, %v8635
    %v8641 = vshll.u32 %v8368, 16
    %v8643 = vrot.slane %v8641, 1
    %v8644 = vsel %vm8376, %v8639, %v8643
    %v8645 = vshrl.u32 %v8368, 16
    %v8647 = vor.u32 %v8645, %v8643
    %v8649 = vshll.u32 %v8369, 16
    %v8651 = vrot.slane %v8649, 1
    %v8652 = vsel %vm8376, %v8647, %v8651
    %v8653 = vshrl.u32 %v8369, 16
    %v8655 = vor.u32 %v8653, %v8651
    %v8657 = vshll.u32 %v8370, 16
    %v8659 = vrot.slane %v8657, 1
    %v8660 = vsel %vm8376, %v8655, %v8659
    %v8661 = vshrl.u32 %v8370, 16
    %v8663 = vor.u32 %v8661, %v8659
    %v8665 = vshll.u32 %v8371, 16
    %v8667 = vrot.slane %v8665, 1
    %v8668 = vsel %vm8376, %v8663, %v8667
    %v8669 = vshrl.u32 %v8371, 16
    %v8671 = vor.u32 %v8669, %v8667
    %v8673 = vshll.u32 %v8372, 16
    %v8675 = vrot.slane %v8673, 1
    %v8676 = vsel %vm8376, %v8671, %v8675
    %v8677 = vshrl.u32 %v8372, 16
    %v8679 = vor.u32 %v8677, %v8675
    %v8681 = vshll.u32 %v8373, 16
    %v8683 = vrot.slane %v8681, 1
    %v8684 = vsel %vm8376, %v8679, %v8683
    %v8685 = vshrl.u32 %v8373, 16
    %v8687 = vor.u32 %v8685, %v8683
    %v8689 = vshll.u32 %v8374, 16
    %v8691 = vrot.slane %v8689, 1
    %v8692 = vsel %vm8376, %v8687, %v8691
    %v8693 = vshrl.u32 %v8374, 16
    %v8695 = vor.u32 %v8693, %v8691
    %v8697 = vshll.u32 %v8375, 16
    %v8699 = vrot.slane %v8697, 1
    %v8700 = vsel %vm8376, %v8695, %v8699
    %v8701 = vshrl.u32 %v8375, 16
    %v8703 = vor.u32 %v8701, %v8699
    %v8761 = vunpack.c.l.b16 %v8155
    %v8762 = vunpack.c.l.b16 %v8156
    %v8763 = vunpack.c.l.b16 %v8157
    %v8764 = vunpack.c.l.b16 %v8158
    %v8765 = vunpack.c.l.b16 %v8159
    %v8766 = vunpack.c.l.b16 %v8160
    %v8767 = vunpack.c.l.b16 %v8161
    %v8768 = vunpack.c.l.b16 %v8162
    %v8769 = vunpack.c.l.b16 %v8163
    %v8770 = vunpack.c.l.b16 %v8164
    %v8771 = vunpack.c.l.b16 %v8165
    %v8772 = vunpack.c.l.b16 %v8166
    %v8773 = vunpack.c.l.b16 %v8167
    %v8774 = vunpack.c.l.b16 %v8168
    %v8775 = vunpack.c.l.b16 %v8169
    %v8776 = vunpack.c.l.b16 %v8170
    %v8777 = vpack.c.b16 %v8762, %v8761
    %v8778 = vpack.c.b16 %v8764, %v8763
    %v8779 = vpack.c.b16 %v8766, %v8765
    %v8780 = vpack.c.b16 %v8768, %v8767
    %v8781 = vpack.c.b16 %v8770, %v8769
    %v8782 = vpack.c.b16 %v8772, %v8771
    %v8783 = vpack.c.b16 %v8774, %v8773
    %v8784 = vpack.c.b16 %v8776, %v8775
    %8793 = vmatprep.subr.bf16.mxu0 0
    %8794 = vmatpush1.bf16.msra.mxu0 %v8777
    %8795 = vmatprep.subr.bf16.mxu0 0
    %8796 = vmatpush1.bf16.msra.mxu0 %v8778
    %8797 = vmatprep.subr.bf16.mxu0 0
    %8798 = vmatpush1.bf16.msra.mxu0 %v8779
    %8799 = vmatprep.subr.bf16.mxu0 0
    %8800 = vmatpush1.bf16.msra.mxu0 %v8780
    %8801 = vmatprep.subr.bf16.mxu0 0
    %8802 = vmatpush1.bf16.msra.mxu0 %v8781
    %8803 = vmatprep.subr.bf16.mxu0 0
    %8804 = vmatpush1.bf16.msra.mxu0 %v8782
    %8805 = vmatprep.subr.bf16.mxu0 0
    %8806 = vmatpush1.bf16.msra.mxu0 %v8783
    %8807 = vmatprep.subr.bf16.mxu0 0
    %8808 = vmatpush1.bf16.msra.mxu0 %v8784
    %8809 = vmatprep.subr.bf16.mxu0 0
    %8810 = vmatpush1.bf16.msra.mxu0 0
    %8811 = vmatprep.subr.bf16.mxu0 0
    %8812 = vmatpush1.bf16.msra.mxu0 0
    %8813 = vmatprep.subr.bf16.mxu0 0
    %8814 = vmatpush1.bf16.msra.mxu0 0
    %8815 = vmatprep.subr.bf16.mxu0 0
    %8816 = vmatpush1.bf16.msra.mxu0 0
    %8817 = vmatprep.subr.bf16.mxu0 0
    %8818 = vmatpush1.bf16.msra.mxu0 0
    %8819 = vmatprep.subr.bf16.mxu0 0
    %8820 = vmatpush1.bf16.msra.mxu0 0
    %8821 = vmatprep.subr.bf16.mxu0 0
    %8822 = vmatpush1.bf16.msra.mxu0 0
    %8823 = vmatprep.subr.bf16.mxu0 0
    %8824 = vmatpush1.bf16.msra.mxu0 0
    %8825 = vmatprep.mubr.bf16.mxu0 0
    %8826 = vmatmul.mubr.bf16.gmra.mrb[0].mxu0 %v8388
    %v8827 = vpop.f32.mrb[0].mxu0
    %v8828 = vadd.f32 0.0, %v8827
    %v8829 = vpop.f32.mrb[0].mxu0
    %v8830 = vpop.f32.mrb[0].mxu0
    %v8831 = vadd.f32 0.0, %v8830
    %v8832 = vpop.f32.mrb[0].mxu0
    %8833 = vmatprep.mubr.bf16.mxu0 0
    %8834 = vmatmul.mubr.bf16.gmra.mrb[0].mxu0 %v8396
    %v8835 = vpop.f32.mrb[0].mxu0
    %v8836 = vadd.f32 0.0, %v8835
    %v8837 = vpop.f32.mrb[0].mxu0
    %v8838 = vpop.f32.mrb[0].mxu0
    %v8839 = vadd.f32 0.0, %v8838
    %v8840 = vpop.f32.mrb[0].mxu0
    %8841 = vmatprep.mubr.bf16.mxu0 0
    %8842 = vmatmul.mubr.bf16.gmra.mrb[0].mxu0 %v8404
    %v8843 = vpop.f32.mrb[0].mxu0
    %v8844 = vadd.f32 0.0, %v8843
    %v8845 = vpop.f32.mrb[0].mxu0
    %v8846 = vpop.f32.mrb[0].mxu0
    %v8847 = vadd.f32 0.0, %v8846
    %v8848 = vpop.f32.mrb[0].mxu0
    %8849 = vmatprep.mubr.bf16.mxu0 0
    %8850 = vmatmul.mubr.bf16.gmra.mrb[0].mxu0 %v8412
    %v8851 = vpop.f32.mrb[0].mxu0
    %v8852 = vadd.f32 0.0, %v8851
    %v8853 = vpop.f32.mrb[0].mxu0
    %v8854 = vpop.f32.mrb[0].mxu0
    %v8855 = vadd.f32 0.0, %v8854
    %v8856 = vpop.f32.mrb[0].mxu0
    %8857 = vmatprep.mubr.bf16.mxu0 0
    %8858 = vmatmul.mubr.bf16.gmra.mrb[0].mxu0 %v8420
    %v8859 = vpop.f32.mrb[0].mxu0
    %v8860 = vadd.f32 0.0, %v8859
    %v8861 = vpop.f32.mrb[0].mxu0
    %v8862 = vpop.f32.mrb[0].mxu0
    %v8863 = vadd.f32 0.0, %v8862
    %v8864 = vpop.f32.mrb[0].mxu0
    %8865 = vmatprep.mubr.bf16.mxu0 0
    %8866 = vmatmul.mubr.bf16.gmra.mrb[0].mxu0 %v8428
    %v8867 = vpop.f32.mrb[0].mxu0
    %v8868 = vadd.f32 0.0, %v8867
    %v8869 = vpop.f32.mrb[0].mxu0
    %v8870 = vpop.f32.mrb[0].mxu0
    %v8871 = vadd.f32 0.0, %v8870
    %v8872 = vpop.f32.mrb[0].mxu0
    %8873 = vmatprep.mubr.bf16.mxu0 0
    %8874 = vmatmul.mubr.bf16.gmra.mrb[0].mxu0 %v8436
    %v8875 = vpop.f32.mrb[0].mxu0
    %v8876 = vadd.f32 0.0, %v8875
    %v8877 = vpop.f32.mrb[0].mxu0
    %v8878 = vpop.f32.mrb[0].mxu0
    %v8879 = vadd.f32 0.0, %v8878
    %v8880 = vpop.f32.mrb[0].mxu0
    %8881 = vmatprep.mubr.bf16.mxu0 0
    %8882 = vmatmul.mubr.bf16.gmra.mrb[0].mxu0 %v8444
    %v8883 = vpop.f32.mrb[0].mxu0
    %v8884 = vadd.f32 0.0, %v8883
    %v8885 = vpop.f32.mrb[0].mxu0
    %v8886 = vpop.f32.mrb[0].mxu0
    %v8887 = vadd.f32 0.0, %v8886
    %v8888 = vpop.f32.mrb[0].mxu0
    %8889 = vmatprep.mubr.bf16.mxu0 0
    %8890 = vmatmul.mubr.bf16.gmra.mrb[0].mxu0 %v8452
    %v8891 = vpop.f32.mrb[0].mxu0
    %v8892 = vadd.f32 0.0, %v8891
    %v8893 = vpop.f32.mrb[0].mxu0
    %v8894 = vpop.f32.mrb[0].mxu0
    %v8895 = vadd.f32 0.0, %v8894
    %v8896 = vpop.f32.mrb[0].mxu0
    %8897 = vmatprep.mubr.bf16.mxu0 0
    %8898 = vmatmul.mubr.bf16.gmra.mrb[0].mxu0 %v8460
    %v8899 = vpop.f32.mrb[0].mxu0
    %v8900 = vadd.f32 0.0, %v8899
    %v8901 = vpop.f32.mrb[0].mxu0
    %v8902 = vpop.f32.mrb[0].mxu0
    %v8903 = vadd.f32 0.0, %v8902
    %v8904 = vpop.f32.mrb[0].mxu0
    %8905 = vmatprep.mubr.bf16.mxu0 0
    %8906 = vmatmul.mubr.bf16.gmra.mrb[0].mxu0 %v8468
    %v8907 = vpop.f32.mrb[0].mxu0
    %v8908 = vadd.f32 0.0, %v8907
    %v8909 = vpop.f32.mrb[0].mxu0
    %v8910 = vpop.f32.mrb[0].mxu0
    %v8911 = vadd.f32 0.0, %v8910
    %v8912 = vpop.f32.mrb[0].mxu0
    %8913 = vmatprep.mubr.bf16.mxu0 0
    %8914 = vmatmul.mubr.bf16.gmra.mrb[0].mxu0 %v8476
    %v8915 = vpop.f32.mrb[0].mxu0
    %v8916 = vadd.f32 0.0, %v8915
    %v8917 = vpop.f32.mrb[0].mxu0
    %v8918 = vpop.f32.mrb[0].mxu0
    %v8919 = vadd.f32 0.0, %v8918
    %v8920 = vpop.f32.mrb[0].mxu0
    %8921 = vmatprep.mubr.bf16.mxu0 0
    %8922 = vmatmul.mubr.bf16.gmra.mrb[0].mxu0 %v8484
    %v8923 = vpop.f32.mrb[0].mxu0
    %v8924 = vadd.f32 0.0, %v8923
    %v8925 = vpop.f32.mrb[0].mxu0
    %v8926 = vpop.f32.mrb[0].mxu0
    %v8927 = vadd.f32 0.0, %v8926
    %v8928 = vpop.f32.mrb[0].mxu0
    %8929 = vmatprep.mubr.bf16.mxu0 0
    %8930 = vmatmul.mubr.bf16.gmra.mrb[0].mxu0 %v8492
    %v8931 = vpop.f32.mrb[0].mxu0
    %v8932 = vadd.f32 0.0, %v8931
    %v8933 = vpop.f32.mrb[0].mxu0
    %v8934 = vpop.f32.mrb[0].mxu0
    %v8935 = vadd.f32 0.0, %v8934
    %v8936 = vpop.f32.mrb[0].mxu0
    %8937 = vmatprep.mubr.bf16.mxu0 0
    %8938 = vmatmul.mubr.bf16.gmra.mrb[0].mxu0 %v8500
    %v8939 = vpop.f32.mrb[0].mxu0
    %v8940 = vadd.f32 0.0, %v8939
    %v8941 = vpop.f32.mrb[0].mxu0
    %v8942 = vpop.f32.mrb[0].mxu0
    %v8943 = vadd.f32 0.0, %v8942
    %v8944 = vpop.f32.mrb[0].mxu0
    %8945 = vmatprep.mubr.bf16.mxu0 0
    %8946 = vmatmul.mubr.bf16.gmra.mrb[0].mxu0 %v8508
    %v8947 = vpop.f32.mrb[0].mxu0
    %v8948 = vadd.f32 0.0, %v8947
    %v8949 = vpop.f32.mrb[0].mxu0
    %v8950 = vpop.f32.mrb[0].mxu0
    %v8951 = vadd.f32 0.0, %v8950
    %v8952 = vpop.f32.mrb[0].mxu0
    %8953 = vmatprep.mubr.bf16.mxu0 0
    %8954 = vmatmul.mubr.bf16.gmra.mrb[0].mxu0 %v8516
    %v8955 = vpop.f32.mrb[0].mxu0
    %v8956 = vadd.f32 0.0, %v8955
    %v8957 = vpop.f32.mrb[0].mxu0
    %v8958 = vpop.f32.mrb[0].mxu0
    %v8959 = vadd.f32 0.0, %v8958
    %v8960 = vpop.f32.mrb[0].mxu0
    %8961 = vmatprep.mubr.bf16.mxu0 0
    %8962 = vmatmul.mubr.bf16.gmra.mrb[0].mxu0 %v8524
    %v8963 = vpop.f32.mrb[0].mxu0
    %v8964 = vadd.f32 0.0, %v8963
    %v8965 = vpop.f32.mrb[0].mxu0
    %v8966 = vpop.f32.mrb[0].mxu0
    %v8967 = vadd.f32 0.0, %v8966
    %v8968 = vpop.f32.mrb[0].mxu0
    %8969 = vmatprep.mubr.bf16.mxu0 0
    %8970 = vmatmul.mubr.bf16.gmra.mrb[0].mxu0 %v8532
    %v8971 = vpop.f32.mrb[0].mxu0
    %v8972 = vadd.f32 0.0, %v8971
    %v8973 = vpop.f32.mrb[0].mxu0
    %v8974 = vpop.f32.mrb[0].mxu0
    %v8975 = vadd.f32 0.0, %v8974
    %v8976 = vpop.f32.mrb[0].mxu0
    %8977 = vmatprep.mubr.bf16.mxu0 0
    %8978 = vmatmul.mubr.bf16.gmra.mrb[0].mxu0 %v8540
    %v8979 = vpop.f32.mrb[0].mxu0
    %v8980 = vadd.f32 0.0, %v8979
    %v8981 = vpop.f32.mrb[0].mxu0
    %v8982 = vpop.f32.mrb[0].mxu0
    %v8983 = vadd.f32 0.0, %v8982
    %v8984 = vpop.f32.mrb[0].mxu0
    %8985 = vmatprep.mubr.bf16.mxu0 0
    %8986 = vmatmul.mubr.bf16.gmra.mrb[0].mxu0 %v8548
    %v8987 = vpop.f32.mrb[0].mxu0
    %v8988 = vadd.f32 0.0, %v8987
    %v8989 = vpop.f32.mrb[0].mxu0
    %v8990 = vpop.f32.mrb[0].mxu0
    %v8991 = vadd.f32 0.0, %v8990
    %v8992 = vpop.f32.mrb[0].mxu0
    %8993 = vmatprep.mubr.bf16.mxu0 0
    %8994 = vmatmul.mubr.bf16.gmra.mrb[0].mxu0 %v8556
    %v8995 = vpop.f32.mrb[0].mxu0
    %v8996 = vadd.f32 0.0, %v8995
    %v8997 = vpop.f32.mrb[0].mxu0
    %v8998 = vpop.f32.mrb[0].mxu0
    %v8999 = vadd.f32 0.0, %v8998
    %v9000 = vpop.f32.mrb[0].mxu0
    %9001 = vmatprep.mubr.bf16.mxu0 0
    %9002 = vmatmul.mubr.bf16.gmra.mrb[0].mxu0 %v8564
    %v9003 = vpop.f32.mrb[0].mxu0
    %v9004 = vadd.f32 0.0, %v9003
    %v9005 = vpop.f32.mrb[0].mxu0
    %v9006 = vpop.f32.mrb[0].mxu0
    %v9007 = vadd.f32 0.0, %v9006
    %v9008 = vpop.f32.mrb[0].mxu0
    %9009 = vmatprep.mubr.bf16.mxu0 0
    %9010 = vmatmul.mubr.bf16.gmra.mrb[0].mxu0 %v8572
    %v9011 = vpop.f32.mrb[0].mxu0
    %v9012 = vadd.f32 0.0, %v9011
    %v9013 = vpop.f32.mrb[0].mxu0
    %v9014 = vpop.f32.mrb[0].mxu0
    %v9015 = vadd.f32 0.0, %v9014
    %v9016 = vpop.f32.mrb[0].mxu0
    %9017 = vmatprep.mubr.bf16.mxu0 0
    %9018 = vmatmul.mubr.bf16.gmra.mrb[0].mxu0 %v8580
    %v9019 = vpop.f32.mrb[0].mxu0
    %v9020 = vadd.f32 0.0, %v9019
    %v9021 = vpop.f32.mrb[0].mxu0
    %v9022 = vpop.f32.mrb[0].mxu0
    %v9023 = vadd.f32 0.0, %v9022
    %v9024 = vpop.f32.mrb[0].mxu0
    %9025 = vmatprep.mubr.bf16.mxu0 0
    %9026 = vmatmul.mubr.bf16.gmra.mrb[0].mxu0 %v8588
    %v9027 = vpop.f32.mrb[0].mxu0
    %v9028 = vadd.f32 0.0, %v9027
    %v9029 = vpop.f32.mrb[0].mxu0
    %v9030 = vpop.f32.mrb[0].mxu0
    %v9031 = vadd.f32 0.0, %v9030
    %v9032 = vpop.f32.mrb[0].mxu0
    %9033 = vmatprep.mubr.bf16.mxu0 0
    %9034 = vmatmul.mubr.bf16.gmra.mrb[0].mxu0 %v8596
    %v9035 = vpop.f32.mrb[0].mxu0
    %v9036 = vadd.f32 0.0, %v9035
    %v9037 = vpop.f32.mrb[0].mxu0
    %v9038 = vpop.f32.mrb[0].mxu0
    %v9039 = vadd.f32 0.0, %v9038
    %v9040 = vpop.f32.mrb[0].mxu0
    %9041 = vmatprep.mubr.bf16.mxu0 0
    %9042 = vmatmul.mubr.bf16.gmra.mrb[0].mxu0 %v8604
    %v9043 = vpop.f32.mrb[0].mxu0
    %v9044 = vadd.f32 0.0, %v9043
    %v9045 = vpop.f32.mrb[0].mxu0
    %v9046 = vpop.f32.mrb[0].mxu0
    %v9047 = vadd.f32 0.0, %v9046
    %v9048 = vpop.f32.mrb[0].mxu0
    %9049 = vmatprep.mubr.bf16.mxu0 0
    %9050 = vmatmul.mubr.bf16.gmra.mrb[0].mxu0 %v8612
    %v9051 = vpop.f32.mrb[0].mxu0
    %v9052 = vadd.f32 0.0, %v9051
    %v9053 = vpop.f32.mrb[0].mxu0
    %v9054 = vpop.f32.mrb[0].mxu0
    %v9055 = vadd.f32 0.0, %v9054
    %v9056 = vpop.f32.mrb[0].mxu0
    %9057 = vmatprep.mubr.bf16.mxu0 0
    %9058 = vmatmul.mubr.bf16.gmra.mrb[0].mxu0 %v8620
    %v9059 = vpop.f32.mrb[0].mxu0
    %v9060 = vadd.f32 0.0, %v9059
    %v9061 = vpop.f32.mrb[0].mxu0
    %v9062 = vpop.f32.mrb[0].mxu0
    %v9063 = vadd.f32 0.0, %v9062
    %v9064 = vpop.f32.mrb[0].mxu0
    %9065 = vmatprep.mubr.bf16.mxu0 0
    %9066 = vmatmul.mubr.bf16.gmra.mrb[0].mxu0 %v8628
    %v9067 = vpop.f32.mrb[0].mxu0
    %v9068 = vadd.f32 0.0, %v9067
    %v9069 = vpop.f32.mrb[0].mxu0
    %v9070 = vpop.f32.mrb[0].mxu0
    %v9071 = vadd.f32 0.0, %v9070
    %v9072 = vpop.f32.mrb[0].mxu0
    %9073 = vmatprep.mubr.bf16.mxu0 0
    %9074 = vmatmul.mubr.bf16.gmra.mrb[0].mxu0 %v8636
    %v9075 = vpop.f32.mrb[0].mxu0
    %v9076 = vadd.f32 0.0, %v9075
    %v9077 = vpop.f32.mrb[0].mxu0
    %v9078 = vpop.f32.mrb[0].mxu0
    %v9079 = vadd.f32 0.0, %v9078
    %v9080 = vpop.f32.mrb[0].mxu0
    %9081 = vmatprep.mubr.bf16.mxu0 0
    %9082 = vmatmul.mubr.bf16.gmra.mrb[0].mxu0 %v8644
    %v9083 = vpop.f32.mrb[0].mxu0
    %v9084 = vadd.f32 0.0, %v9083
    %v9085 = vpop.f32.mrb[0].mxu0
    %v9086 = vpop.f32.mrb[0].mxu0
    %v9087 = vadd.f32 0.0, %v9086
    %v9088 = vpop.f32.mrb[0].mxu0
    %9089 = vmatprep.mubr.bf16.mxu0 0
    %9090 = vmatmul.mubr.bf16.gmra.mrb[0].mxu0 %v8652
    %v9091 = vpop.f32.mrb[0].mxu0
    %v9092 = vadd.f32 0.0, %v9091
    %v9093 = vpop.f32.mrb[0].mxu0
    %v9094 = vpop.f32.mrb[0].mxu0
    %v9095 = vadd.f32 0.0, %v9094
    %v9096 = vpop.f32.mrb[0].mxu0
    %9097 = vmatprep.mubr.bf16.mxu0 0
    %9098 = vmatmul.mubr.bf16.gmra.mrb[0].mxu0 %v8660
    %v9099 = vpop.f32.mrb[0].mxu0
    %v9100 = vadd.f32 0.0, %v9099
    %v9101 = vpop.f32.mrb[0].mxu0
    %v9102 = vpop.f32.mrb[0].mxu0
    %v9103 = vadd.f32 0.0, %v9102
    %v9104 = vpop.f32.mrb[0].mxu0
    %9105 = vmatprep.mubr.bf16.mxu0 0
    %9106 = vmatmul.mubr.bf16.gmra.mrb[0].mxu0 %v8668
    %v9107 = vpop.f32.mrb[0].mxu0
    %v9108 = vadd.f32 0.0, %v9107
    %v9109 = vpop.f32.mrb[0].mxu0
    %v9110 = vpop.f32.mrb[0].mxu0
    %v9111 = vadd.f32 0.0, %v9110
    %v9112 = vpop.f32.mrb[0].mxu0
    %9113 = vmatprep.mubr.bf16.mxu0 0
    %9114 = vmatmul.mubr.bf16.gmra.mrb[0].mxu0 %v8676
    %v9115 = vpop.f32.mrb[0].mxu0
    %v9116 = vadd.f32 0.0, %v9115
    %v9117 = vpop.f32.mrb[0].mxu0
    %v9118 = vpop.f32.mrb[0].mxu0
    %v9119 = vadd.f32 0.0, %v9118
    %v9120 = vpop.f32.mrb[0].mxu0
    %9121 = vmatprep.mubr.bf16.mxu0 0
    %9122 = vmatmul.mubr.bf16.gmra.mrb[0].mxu0 %v8684
    %v9123 = vpop.f32.mrb[0].mxu0
    %v9124 = vadd.f32 0.0, %v9123
    %v9125 = vpop.f32.mrb[0].mxu0
    %v9126 = vpop.f32.mrb[0].mxu0
    %v9127 = vadd.f32 0.0, %v9126
    %v9128 = vpop.f32.mrb[0].mxu0
    %9129 = vmatprep.mubr.bf16.mxu0 0
    %9130 = vmatmul.mubr.bf16.gmra.mrb[0].mxu0 %v8692
    %v9131 = vpop.f32.mrb[0].mxu0
    %v9132 = vadd.f32 0.0, %v9131
    %v9133 = vpop.f32.mrb[0].mxu0
    %v9134 = vpop.f32.mrb[0].mxu0
    %v9135 = vadd.f32 0.0, %v9134
    %v9136 = vpop.f32.mrb[0].mxu0
    %9137 = vmatprep.mubr.bf16.mxu0 0
    %9138 = vmatmul.mubr.bf16.gmra.mrb[0].mxu0 %v8700
    %v9139 = vpop.f32.mrb[0].mxu0
    %v9140 = vadd.f32 0.0, %v9139
    %v9141 = vpop.f32.mrb[0].mxu0
    %v9142 = vpop.f32.mrb[0].mxu0
    %v9143 = vadd.f32 0.0, %v9142
    %v9144 = vpop.f32.mrb[0].mxu0
    %9145 = vmatprep.mubr.bf16.mxu0 0
    %9146 = vmatmul.mubr.bf16.gmra.mrb[0].mxu0 %v8703
    %v9147 = vpop.f32.mrb[0].mxu0
    %v9148 = vadd.f32 0.0, %v9147
    %v9149 = vpop.f32.mrb[0].mxu0
    %v9150 = vpop.f32.mrb[0].mxu0
    %v9151 = vpop.f32.mrb[0].mxu0
    %9152 = vdwg.mxu0
    %v9153 = vadd.f32 %v7991, %v8828
    %v9154 = vadd.f32 %v7992, %v8831
    %v9155 = vadd.f32 %v7993, %v8836
    %v9156 = vadd.f32 %v7994, %v8839
    %v9157 = vadd.f32 %v7995, %v8844
    %v9158 = vadd.f32 %v7996, %v8847
    %v9159 = vadd.f32 %v7997, %v8852
    %v9160 = vadd.f32 %v7998, %v8855
    %v9161 = vadd.f32 %v7999, %v8860
    %v9162 = vadd.f32 %v8000, %v8863
    %v9163 = vadd.f32 %v8001, %v8868
    %v9164 = vadd.f32 %v8002, %v8871
    %v9165 = vadd.f32 %v8003, %v8876
    %v9166 = vadd.f32 %v8004, %v8879
    %v9167 = vadd.f32 %v8005, %v8884
    %v9168 = vadd.f32 %v8006, %v8887
    %v9169 = vadd.f32 %v8007, %v8892
    %v9170 = vadd.f32 %v8008, %v8895
    %v9171 = vadd.f32 %v8009, %v8900
    %v9172 = vadd.f32 %v8010, %v8903
    %v9173 = vadd.f32 %v8011, %v8908
    %v9174 = vadd.f32 %v8012, %v8911
    %v9175 = vadd.f32 %v8013, %v8916
    %v9176 = vadd.f32 %v8014, %v8919
    %v9177 = vadd.f32 %v8015, %v8924
    %v9178 = vadd.f32 %v8016, %v8927
    %v9179 = vadd.f32 %v8017, %v8932
    %v9180 = vadd.f32 %v8018, %v8935
    %v9181 = vadd.f32 %v8019, %v8940
    %v9182 = vadd.f32 %v8020, %v8943
    %v9183 = vadd.f32 %v8021, %v8948
    %v9184 = vadd.f32 %v8022, %v8951
    %v9185 = vadd.f32 %v8023, %v8956
    %v9186 = vadd.f32 %v8024, %v8959
    %v9187 = vadd.f32 %v8025, %v8964
    %v9188 = vadd.f32 %v8026, %v8967
    %v9189 = vadd.f32 %v8027, %v8972
    %v9190 = vadd.f32 %v8028, %v8975
    %v9191 = vadd.f32 %v8029, %v8980
    %v9192 = vadd.f32 %v8030, %v8983
    %v9193 = vadd.f32 %v8031, %v8988
    %v9194 = vadd.f32 %v8032, %v8991
    %v9195 = vadd.f32 %v8033, %v8996
    %v9196 = vadd.f32 %v8034, %v8999
    %v9197 = vadd.f32 %v8035, %v9004
    %v9198 = vadd.f32 %v8036, %v9007
    %v9199 = vadd.f32 %v8037, %v9012
    %v9200 = vadd.f32 %v8038, %v9015
    %v9201 = vadd.f32 %v8039, %v9020
    %v9202 = vadd.f32 %v8040, %v9023
    %v9203 = vadd.f32 %v8041, %v9028
    %v9204 = vadd.f32 %v8042, %v9031
    %v9205 = vadd.f32 %v8043, %v9036
    %v9206 = vadd.f32 %v8044, %v9039
    %v9207 = vadd.f32 %v8045, %v9044
    %v9208 = vadd.f32 %v8046, %v9047
    %v9209 = vadd.f32 %v8047, %v9052
    %v9210 = vadd.f32 %v8048, %v9055
    %v9211 = vadd.f32 %v8049, %v9060
    %v9212 = vadd.f32 %v8050, %v9063
    %v9213 = vadd.f32 %v8051, %v9068
    %v9214 = vadd.f32 %v8052, %v9071
    %v9215 = vadd.f32 %v8053, %v9076
    %v9216 = vadd.f32 %v8054, %v9079
    %v9217 = vadd.f32 %v8055, %v9084
    %v9218 = vadd.f32 %v8056, %v9087
    %v9219 = vadd.f32 %v8057, %v9092
    %v9220 = vadd.f32 %v8058, %v9095
    %v9221 = vadd.f32 %v8059, %v9100
    %v9222 = vadd.f32 %v8060, %v9103
    %v9223 = vadd.f32 %v8061, %v9108
    %v9224 = vadd.f32 %v8062, %v9111
    %v9225 = vadd.f32 %v8063, %v9116
    %v9226 = vadd.f32 %v8064, %v9119
    %v9227 = vadd.f32 %v8065, %v9124
    %v9228 = vadd.f32 %v8066, %v9127
    %v9229 = vadd.f32 %v8067, %v9132
    %v9230 = vadd.f32 %v8068, %v9135
    %v9231 = vadd.f32 %v8069, %v9140
    %v9232 = vadd.f32 %v8070, %v9143
    %v9233 = vadd.f32 %v8071, %v9148
    %v9234 = vld [vmem:[#allocation2 + $0x14] sm:$0xf]
    %v9235 = vld [vmem:[#allocation2 + $0x18] sm:$0xf]
    %v9236 = vld [vmem:[#allocation2 + $0x1c] sm:$0xf]
    %v9237 = vld [vmem:[#allocation2 + $0x20] sm:$0xf]
    %v9238 = vld [vmem:[#allocation2 + $0x24] sm:$0xf]
    %v9239 = vld [vmem:[#allocation2 + $0x28] sm:$0xf]
    %v9240 = vld [vmem:[#allocation2 + $0x2c] sm:$0xf]
    %v9241 = vld [vmem:[#allocation2 + $0x30] sm:$0xf]
    %v9242 = vld [vmem:[#allocation2 + $0x34] sm:$0xf]
    %v9243 = vld [vmem:[#allocation2 + $0x38] sm:$0xf]
    %v9244 = vld [vmem:[#allocation2 + $0x3c] sm:$0xf]
    %v9245 = vld [vmem:[#allocation2 + $0x40] sm:$0xf]
    %v9246 = vld [vmem:[#allocation2 + $0x44] sm:$0xf]
    %v9247 = vld [vmem:[#allocation2 + $0x48] sm:$0xf]
    %v9248 = vld [vmem:[#allocation2 + $0x4c] sm:$0xf]
    %v9249 = vld [vmem:[#allocation2 + $0x50] sm:$0xf]
    %v9250 = vld [vmem:[#allocation2 + $0x54] sm:$0xf]
    %v9251 = vld [vmem:[#allocation2 + $0x58] sm:$0xf]
    %v9252 = vld [vmem:[#allocation2 + $0x5c] sm:$0xf]
    %v9253 = vld [vmem:[#allocation2 + $0x60] sm:$0xf]
    %v9254 = vld [vmem:[#allocation2 + $0x64] sm:$0xf]
    %v9255 = vld [vmem:[#allocation2 + $0x68] sm:$0xf]
    %v9256 = vld [vmem:[#allocation2 + $0x6c] sm:$0xf]
    %v9257 = vld [vmem:[#allocation2 + $0x70] sm:$0xf]
    %v9258 = vld [vmem:[#allocation2 + $0x74] sm:$0xf]
    %v9259 = vld [vmem:[#allocation2 + $0x78] sm:$0xf]
    %v9260 = vld [vmem:[#allocation2 + $0x7c] sm:$0xf]
    %v9261 = vld [vmem:[#allocation2 + $0x80] sm:$0xf]
    %v9262 = vld [vmem:[#allocation2 + $0x84] sm:$0xf]
    %v9263 = vld [vmem:[#allocation2 + $0x88] sm:$0xf]
    %v9264 = vld [vmem:[#allocation2 + $0x8c] sm:$0xf]
    %v9265 = vld [vmem:[#allocation2 + $0x90] sm:$0xf]
    %v9266 = vld [vmem:[#allocation2 + $0x94] sm:$0xf]
    %v9267 = vld [vmem:[#allocation2 + $0x98] sm:$0xf]
    %v9268 = vld [vmem:[#allocation2 + $0x9c] sm:$0xf]
    %v9269 = vld [vmem:[#allocation2 + $0xa0] sm:$0xf]
    %v9270 = vld [vmem:[#allocation2 + $0xa4] sm:$0xf]
    %v9271 = vld [vmem:[#allocation2 + $0xa8] sm:$0xf]
    %v9272 = vld [vmem:[#allocation2 + $0xac] sm:$0xf]
    %v9273 = vld [vmem:[#allocation2 + $0xb0] sm:$0xf]
    %v9274 = vld [vmem:[#allocation2 + $0xb4] sm:$0xf]
    %v9275 = vld [vmem:[#allocation2 + $0xb8] sm:$0xf]
    %v9276 = vld [vmem:[#allocation2 + $0xbc] sm:$0xf]
    %v9277 = vld [vmem:[#allocation2 + $0xc0] sm:$0xf]
    %v9278 = vld [vmem:[#allocation2 + $0xc4] sm:$0xf]
    %v9279 = vld [vmem:[#allocation2 + $0xc8] sm:$0xf]
    %v9280 = vld [vmem:[#allocation2 + $0xcc] sm:$0xf]
    %v9281 = vld [vmem:[#allocation2 + $0xd0] sm:$0xf]
    %v9282 = vld [vmem:[#allocation2 + $0xd4] sm:$0xf]
    %v9283 = vld [vmem:[#allocation2 + $0xd8] sm:$0xf]
    %v9284 = vld [vmem:[#allocation2 + $0xdc] sm:$0xf]
    %v9285 = vld [vmem:[#allocation2 + $0xe0] sm:$0xf]
    %v9286 = vld [vmem:[#allocation2 + $0xe4] sm:$0xf]
    %v9287 = vld [vmem:[#allocation2 + $0xe8] sm:$0xf]
    %v9288 = vld [vmem:[#allocation2 + $0xec] sm:$0xf]
    %v9289 = vld [vmem:[#allocation2 + $0xf0] sm:$0xf]
    %v9290 = vld [vmem:[#allocation2 + $0xf4] sm:$0xf]
    %v9291 = vld [vmem:[#allocation2 + $0xf8] sm:$0xf]
    %v9292 = vld [vmem:[#allocation2 + $0xfc] sm:$0xf]
    %v9293 = vld [vmem:[#allocation2 + $0x100] sm:$0xf]
    %v9294 = vld [vmem:[#allocation2 + $0x104] sm:$0xf]
    %v9295 = vld [vmem:[#allocation2 + $0x108] sm:$0xf]
    %v9296 = vld [vmem:[#allocation2 + $0x10c] sm:$0xf]
    %v9297 = vld [vmem:[#allocation2 + $0x110] sm:$0xf]
    %v9298 = vld [vmem:[#allocation2 + $0x114] sm:$0xf]
    %v9299 = vld [vmem:[#allocation2 + $0x118] sm:$0xf]
    %v9300 = vld [vmem:[#allocation2 + $0x11c] sm:$0xf]
    %v9301 = vld [vmem:[#allocation2 + $0x120] sm:$0xf]
    %v9302 = vld [vmem:[#allocation2 + $0x124] sm:$0xf]
    %v9303 = vld [vmem:[#allocation2 + $0x128] sm:$0xf]
    %v9304 = vld [vmem:[#allocation2 + $0x12c] sm:$0xf]
    %v9305 = vld [vmem:[#allocation2 + $0x130] sm:$0xf]
    %v9306 = vld [vmem:[#allocation2 + $0x134] sm:$0xf]
    %v9307 = vld [vmem:[#allocation2 + $0x138] sm:$0xf]
    %v9308 = vld [vmem:[#allocation2 + $0x13c] sm:$0xf]
    %v9309 = vld [vmem:[#allocation2 + $0x140] sm:$0xf]
    %v9310 = vld [vmem:[#allocation2 + $0x144] sm:$0xf]
    %v9311 = vld [vmem:[#allocation2 + $0x148] sm:$0xf]
    %v9312 = vld [vmem:[#allocation2 + $0x14c] sm:$0xf]
    %v9313 = vld [vmem:[#allocation2 + $0x150] sm:$0xf]
    %v9314 = vld [vmem:[#allocation2 + $0x154] sm:$0xf]
    %v9315 = vld [vmem:[#allocation2 + $0x158] sm:$0x1]
    %s9316 = scalar_lea.vmem [#allocation8], 384
    %v9317 = vld [vmem:[%s9316] sm:$0xf]
    %v9318 = vld [vmem:[%s9316 + $0x4] sm:$0xf]
    %v9319 = vld [vmem:[%s9316 + $0x8] sm:$0xf]
    %v9320 = vld [vmem:[%s9316 + $0xc] sm:$0xf]
    %v9321 = vld [vmem:[%s9316 + $0x10] sm:$0xf]
    %v9322 = vld [vmem:[%s9316 + $0x14] sm:$0xf]
    %v9323 = vld [vmem:[%s9316 + $0x18] sm:$0xf]
    %v9324 = vld [vmem:[%s9316 + $0x1c] sm:$0xf]
    %v9325 = vld [vmem:[%s9316 + $0x20] sm:$0xf]
    %v9326 = vld [vmem:[%s9316 + $0x24] sm:$0xf]
    %v9327 = vld [vmem:[%s9316 + $0x28] sm:$0xf]
    %v9328 = vld [vmem:[%s9316 + $0x2c] sm:$0xf]
    %v9329 = vld [vmem:[%s9316 + $0x30] sm:$0xf]
    %v9330 = vld [vmem:[%s9316 + $0x34] sm:$0xf]
    %v9331 = vld [vmem:[%s9316 + $0x38] sm:$0xf]
    %v9332 = vld [vmem:[%s9316 + $0x3c] sm:$0xf]
    %v9415 = vunpack.c.l.b16 %v9234
    %v9416 = vunpack.c.l.b16 %v9235
    %v9417 = vunpack.c.l.b16 %v9236
    %v9418 = vunpack.c.l.b16 %v9237
    %v9419 = vunpack.c.l.b16 %v9238
    %v9420 = vunpack.c.l.b16 %v9239
    %v9421 = vunpack.c.l.b16 %v9240
    %v9422 = vunpack.c.l.b16 %v9241
    %v9423 = vunpack.c.l.b16 %v9242
    %v9424 = vunpack.c.l.b16 %v9243
    %v9425 = vunpack.c.l.b16 %v9244
    %v9426 = vunpack.c.l.b16 %v9245
    %v9427 = vunpack.c.l.b16 %v9246
    %v9428 = vunpack.c.l.b16 %v9247
    %v9429 = vunpack.c.l.b16 %v9248
    %v9430 = vunpack.c.l.b16 %v9249
    %v9431 = vunpack.c.l.b16 %v9250
    %v9432 = vunpack.c.l.b16 %v9251
    %v9433 = vunpack.c.l.b16 %v9252
    %v9434 = vunpack.c.l.b16 %v9253
    %v9435 = vunpack.c.l.b16 %v9254
    %v9436 = vunpack.c.l.b16 %v9255
    %v9437 = vunpack.c.l.b16 %v9256
    %v9438 = vunpack.c.l.b16 %v9257
    %v9439 = vunpack.c.l.b16 %v9258
    %v9440 = vunpack.c.l.b16 %v9259
    %v9441 = vunpack.c.l.b16 %v9260
    %v9442 = vunpack.c.l.b16 %v9261
    %v9443 = vunpack.c.l.b16 %v9262
    %v9444 = vunpack.c.l.b16 %v9263
    %v9445 = vunpack.c.l.b16 %v9264
    %v9446 = vunpack.c.l.b16 %v9265
    %v9447 = vunpack.c.l.b16 %v9266
    %v9448 = vunpack.c.l.b16 %v9267
    %v9449 = vunpack.c.l.b16 %v9268
    %v9450 = vunpack.c.l.b16 %v9269
    %v9451 = vunpack.c.l.b16 %v9270
    %v9452 = vunpack.c.l.b16 %v9271
    %v9453 = vunpack.c.l.b16 %v9272
    %v9454 = vunpack.c.l.b16 %v9273
    %v9455 = vunpack.c.l.b16 %v9274
    %v9456 = vunpack.c.l.b16 %v9275
    %v9457 = vunpack.c.l.b16 %v9276
    %v9458 = vunpack.c.l.b16 %v9277
    %v9459 = vunpack.c.l.b16 %v9278
    %v9460 = vunpack.c.l.b16 %v9279
    %v9461 = vunpack.c.l.b16 %v9280
    %v9462 = vunpack.c.l.b16 %v9281
    %v9463 = vunpack.c.l.b16 %v9282
    %v9464 = vunpack.c.l.b16 %v9283
    %v9465 = vunpack.c.l.b16 %v9284
    %v9466 = vunpack.c.l.b16 %v9285
    %v9467 = vunpack.c.l.b16 %v9286
    %v9468 = vunpack.c.l.b16 %v9287
    %v9469 = vunpack.c.l.b16 %v9288
    %v9470 = vunpack.c.l.b16 %v9289
    %v9471 = vunpack.c.l.b16 %v9290
    %v9472 = vunpack.c.l.b16 %v9291
    %v9473 = vunpack.c.l.b16 %v9292
    %v9474 = vunpack.c.l.b16 %v9293
    %v9475 = vunpack.c.l.b16 %v9294
    %v9476 = vunpack.c.l.b16 %v9295
    %v9477 = vunpack.c.l.b16 %v9296
    %v9478 = vunpack.c.l.b16 %v9297
    %v9479 = vunpack.c.l.b16 %v9298
    %v9480 = vunpack.c.l.b16 %v9299
    %v9481 = vunpack.c.l.b16 %v9300
    %v9482 = vunpack.c.l.b16 %v9301
    %v9483 = vunpack.c.l.b16 %v9302
    %v9484 = vunpack.c.l.b16 %v9303
    %v9485 = vunpack.c.l.b16 %v9304
    %v9486 = vunpack.c.l.b16 %v9305
    %v9487 = vunpack.c.l.b16 %v9306
    %v9488 = vunpack.c.l.b16 %v9307
    %v9489 = vunpack.c.l.b16 %v9308
    %v9490 = vunpack.c.l.b16 %v9309
    %v9491 = vunpack.c.l.b16 %v9310
    %v9492 = vunpack.c.l.b16 %v9311
    %v9493 = vunpack.c.l.b16 %v9312
    %v9494 = vunpack.c.l.b16 %v9313
    %v9495 = vunpack.c.l.b16 %v9314
    %v9496 = vunpack.c.l.b16 %v9315
    %v9497 = vpack.c.b16 %v9416, %v9415
    %v9498 = vpack.c.b16 %v9418, %v9417
    %v9499 = vpack.c.b16 %v9420, %v9419
    %v9500 = vpack.c.b16 %v9422, %v9421
    %v9501 = vpack.c.b16 %v9424, %v9423
    %v9502 = vpack.c.b16 %v9426, %v9425
    %v9503 = vpack.c.b16 %v9428, %v9427
    %v9504 = vpack.c.b16 %v9430, %v9429
    %v9505 = vpack.c.b16 %v9432, %v9431
    %v9506 = vpack.c.b16 %v9434, %v9433
    %v9507 = vpack.c.b16 %v9436, %v9435
    %v9508 = vpack.c.b16 %v9438, %v9437
    %v9509 = vpack.c.b16 %v9440, %v9439
    %v9510 = vpack.c.b16 %v9442, %v9441
    %v9511 = vpack.c.b16 %v9444, %v9443
    %v9512 = vpack.c.b16 %v9446, %v9445
    %v9513 = vpack.c.b16 %v9448, %v9447
    %v9514 = vpack.c.b16 %v9450, %v9449
    %v9515 = vpack.c.b16 %v9452, %v9451
    %v9516 = vpack.c.b16 %v9454, %v9453
    %v9517 = vpack.c.b16 %v9456, %v9455
    %v9518 = vpack.c.b16 %v9458, %v9457
    %v9519 = vpack.c.b16 %v9460, %v9459
    %v9520 = vpack.c.b16 %v9462, %v9461
    %v9521 = vpack.c.b16 %v9464, %v9463
    %v9522 = vpack.c.b16 %v9466, %v9465
    %v9523 = vpack.c.b16 %v9468, %v9467
    %v9524 = vpack.c.b16 %v9470, %v9469
    %v9525 = vpack.c.b16 %v9472, %v9471
    %v9526 = vpack.c.b16 %v9474, %v9473
    %v9527 = vpack.c.b16 %v9476, %v9475
    %v9528 = vpack.c.b16 %v9478, %v9477
    %v9529 = vpack.c.b16 %v9480, %v9479
    %v9530 = vpack.c.b16 %v9482, %v9481
    %v9531 = vpack.c.b16 %v9484, %v9483
    %v9532 = vpack.c.b16 %v9486, %v9485
    %v9533 = vpack.c.b16 %v9488, %v9487
    %v9534 = vpack.c.b16 %v9490, %v9489
    %v9535 = vpack.c.b16 %v9492, %v9491
    %v9536 = vpack.c.b16 %v9494, %v9493
    %v9537 = vpack.c.b16 %v9496, %v9495
    %v9539 = vshrl.u32 %v9497, 16
    %v9541 = vshll.u32 %v9497, 16
    %v9543 = vrot.slane %v9541, 1
    %v9544 = vor.u32 %v9539, %v9543
    %v9546 = vshll.u32 %v9498, 16
    %v9548 = vrot.slane %v9546, 1
    %v9549 = vsel %vm8376, %v9544, %v9548
    %v9550 = vshrl.u32 %v9498, 16
    %v9552 = vor.u32 %v9550, %v9548
    %v9554 = vshll.u32 %v9499, 16
    %v9556 = vrot.slane %v9554, 1
    %v9557 = vsel %vm8376, %v9552, %v9556
    %v9558 = vshrl.u32 %v9499, 16
    %v9560 = vor.u32 %v9558, %v9556
    %v9562 = vshll.u32 %v9500, 16
    %v9564 = vrot.slane %v9562, 1
    %v9565 = vsel %vm8376, %v9560, %v9564
    %v9566 = vshrl.u32 %v9500, 16
    %v9568 = vor.u32 %v9566, %v9564
    %v9570 = vshll.u32 %v9501, 16
    %v9572 = vrot.slane %v9570, 1
    %v9573 = vsel %vm8376, %v9568, %v9572
    %v9574 = vshrl.u32 %v9501, 16
    %v9576 = vor.u32 %v9574, %v9572
    %v9578 = vshll.u32 %v9502, 16
    %v9580 = vrot.slane %v9578, 1
    %v9581 = vsel %vm8376, %v9576, %v9580
    %v9582 = vshrl.u32 %v9502, 16
    %v9584 = vor.u32 %v9582, %v9580
    %v9586 = vshll.u32 %v9503, 16
    %v9588 = vrot.slane %v9586, 1
    %v9589 = vsel %vm8376, %v9584, %v9588
    %v9590 = vshrl.u32 %v9503, 16
    %v9592 = vor.u32 %v9590, %v9588
    %v9594 = vshll.u32 %v9504, 16
    %v9596 = vrot.slane %v9594, 1
    %v9597 = vsel %vm8376, %v9592, %v9596
    %v9598 = vshrl.u32 %v9504, 16
    %v9600 = vor.u32 %v9598, %v9596
    %v9602 = vshll.u32 %v9505, 16
    %v9604 = vrot.slane %v9602, 1
    %v9605 = vsel %vm8376, %v9600, %v9604
    %v9606 = vshrl.u32 %v9505, 16
    %v9608 = vor.u32 %v9606, %v9604
    %v9610 = vshll.u32 %v9506, 16
    %v9612 = vrot.slane %v9610, 1
    %v9613 = vsel %vm8376, %v9608, %v9612
    %v9614 = vshrl.u32 %v9506, 16
    %v9616 = vor.u32 %v9614, %v9612
    %v9618 = vshll.u32 %v9507, 16
    %v9620 = vrot.slane %v9618, 1
    %v9621 = vsel %vm8376, %v9616, %v9620
    %v9622 = vshrl.u32 %v9507, 16
    %v9624 = vor.u32 %v9622, %v9620
    %v9626 = vshll.u32 %v9508, 16
    %v9628 = vrot.slane %v9626, 1
    %v9629 = vsel %vm8376, %v9624, %v9628
    %v9630 = vshrl.u32 %v9508, 16
    %v9632 = vor.u32 %v9630, %v9628
    %v9634 = vshll.u32 %v9509, 16
    %v9636 = vrot.slane %v9634, 1
    %v9637 = vsel %vm8376, %v9632, %v9636
    %v9638 = vshrl.u32 %v9509, 16
    %v9640 = vor.u32 %v9638, %v9636
    %v9642 = vshll.u32 %v9510, 16
    %v9644 = vrot.slane %v9642, 1
    %v9645 = vsel %vm8376, %v9640, %v9644
    %v9646 = vshrl.u32 %v9510, 16
    %v9648 = vor.u32 %v9646, %v9644
    %v9650 = vshll.u32 %v9511, 16
    %v9652 = vrot.slane %v9650, 1
    %v9653 = vsel %vm8376, %v9648, %v9652
    %v9654 = vshrl.u32 %v9511, 16
    %v9656 = vor.u32 %v9654, %v9652
    %v9658 = vshll.u32 %v9512, 16
    %v9660 = vrot.slane %v9658, 1
    %v9661 = vsel %vm8376, %v9656, %v9660
    %v9662 = vshrl.u32 %v9512, 16
    %v9664 = vor.u32 %v9662, %v9660
    %v9666 = vshll.u32 %v9513, 16
    %v9668 = vrot.slane %v9666, 1
    %v9669 = vsel %vm8376, %v9664, %v9668
    %v9670 = vshrl.u32 %v9513, 16
    %v9672 = vor.u32 %v9670, %v9668
    %v9674 = vshll.u32 %v9514, 16
    %v9676 = vrot.slane %v9674, 1
    %v9677 = vsel %vm8376, %v9672, %v9676
    %v9678 = vshrl.u32 %v9514, 16
    %v9680 = vor.u32 %v9678, %v9676
    %v9682 = vshll.u32 %v9515, 16
    %v9684 = vrot.slane %v9682, 1
    %v9685 = vsel %vm8376, %v9680, %v9684
    %v9686 = vshrl.u32 %v9515, 16
    %v9688 = vor.u32 %v9686, %v9684
    %v9690 = vshll.u32 %v9516, 16
    %v9692 = vrot.slane %v9690, 1
    %v9693 = vsel %vm8376, %v9688, %v9692
    %v9694 = vshrl.u32 %v9516, 16
    %v9696 = vor.u32 %v9694, %v9692
    %v9698 = vshll.u32 %v9517, 16
    %v9700 = vrot.slane %v9698, 1
    %v9701 = vsel %vm8376, %v9696, %v9700
    %v9702 = vshrl.u32 %v9517, 16
    %v9704 = vor.u32 %v9702, %v9700
    %v9706 = vshll.u32 %v9518, 16
    %v9708 = vrot.slane %v9706, 1
    %v9709 = vsel %vm8376, %v9704, %v9708
    %v9710 = vshrl.u32 %v9518, 16
    %v9712 = vor.u32 %v9710, %v9708
    %v9714 = vshll.u32 %v9519, 16
    %v9716 = vrot.slane %v9714, 1
    %v9717 = vsel %vm8376, %v9712, %v9716
    %v9718 = vshrl.u32 %v9519, 16
    %v9720 = vor.u32 %v9718, %v9716
    %v9722 = vshll.u32 %v9520, 16
    %v9724 = vrot.slane %v9722, 1
    %v9725 = vsel %vm8376, %v9720, %v9724
    %v9726 = vshrl.u32 %v9520, 16
    %v9728 = vor.u32 %v9726, %v9724
    %v9730 = vshll.u32 %v9521, 16
    %v9732 = vrot.slane %v9730, 1
    %v9733 = vsel %vm8376, %v9728, %v9732
    %v9734 = vshrl.u32 %v9521, 16
    %v9736 = vor.u32 %v9734, %v9732
    %v9738 = vshll.u32 %v9522, 16
    %v9740 = vrot.slane %v9738, 1
    %v9741 = vsel %vm8376, %v9736, %v9740
    %v9742 = vshrl.u32 %v9522, 16
    %v9744 = vor.u32 %v9742, %v9740
    %v9746 = vshll.u32 %v9523, 16
    %v9748 = vrot.slane %v9746, 1
    %v9749 = vsel %vm8376, %v9744, %v9748
    %v9750 = vshrl.u32 %v9523, 16
    %v9752 = vor.u32 %v9750, %v9748
    %v9754 = vshll.u32 %v9524, 16
    %v9756 = vrot.slane %v9754, 1
    %v9757 = vsel %vm8376, %v9752, %v9756
    %v9758 = vshrl.u32 %v9524, 16
    %v9760 = vor.u32 %v9758, %v9756
    %v9762 = vshll.u32 %v9525, 16
    %v9764 = vrot.slane %v9762, 1
    %v9765 = vsel %vm8376, %v9760, %v9764
    %v9766 = vshrl.u32 %v9525, 16
    %v9768 = vor.u32 %v9766, %v9764
    %v9770 = vshll.u32 %v9526, 16
    %v9772 = vrot.slane %v9770, 1
    %v9773 = vsel %vm8376, %v9768, %v9772
    %v9774 = vshrl.u32 %v9526, 16
    %v9776 = vor.u32 %v9774, %v9772
    %v9778 = vshll.u32 %v9527, 16
    %v9780 = vrot.slane %v9778, 1
    %v9781 = vsel %vm8376, %v9776, %v9780
    %v9782 = vshrl.u32 %v9527, 16
    %v9784 = vor.u32 %v9782, %v9780
    %v9786 = vshll.u32 %v9528, 16
    %v9788 = vrot.slane %v9786, 1
    %v9789 = vsel %vm8376, %v9784, %v9788
    %v9790 = vshrl.u32 %v9528, 16
    %v9792 = vor.u32 %v9790, %v9788
    %v9794 = vshll.u32 %v9529, 16
    %v9796 = vrot.slane %v9794, 1
    %v9797 = vsel %vm8376, %v9792, %v9796
    %v9798 = vshrl.u32 %v9529, 16
    %v9800 = vor.u32 %v9798, %v9796
    %v9802 = vshll.u32 %v9530, 16
    %v9804 = vrot.slane %v9802, 1
    %v9805 = vsel %vm8376, %v9800, %v9804
    %v9806 = vshrl.u32 %v9530, 16
    %v9808 = vor.u32 %v9806, %v9804
    %v9810 = vshll.u32 %v9531, 16
    %v9812 = vrot.slane %v9810, 1
    %v9813 = vsel %vm8376, %v9808, %v9812
    %v9814 = vshrl.u32 %v9531, 16
    %v9816 = vor.u32 %v9814, %v9812
    %v9818 = vshll.u32 %v9532, 16
    %v9820 = vrot.slane %v9818, 1
    %v9821 = vsel %vm8376, %v9816, %v9820
    %v9822 = vshrl.u32 %v9532, 16
    %v9824 = vor.u32 %v9822, %v9820
    %v9826 = vshll.u32 %v9533, 16
    %v9828 = vrot.slane %v9826, 1
    %v9829 = vsel %vm8376, %v9824, %v9828
    %v9830 = vshrl.u32 %v9533, 16
    %v9832 = vor.u32 %v9830, %v9828
    %v9834 = vshll.u32 %v9534, 16
    %v9836 = vrot.slane %v9834, 1
    %v9837 = vsel %vm8376, %v9832, %v9836
    %v9838 = vshrl.u32 %v9534, 16
    %v9840 = vor.u32 %v9838, %v9836
    %v9842 = vshll.u32 %v9535, 16
    %v9844 = vrot.slane %v9842, 1
    %v9845 = vsel %vm8376, %v9840, %v9844
    %v9846 = vshrl.u32 %v9535, 16
    %v9848 = vor.u32 %v9846, %v9844
    %v9850 = vshll.u32 %v9536, 16
    %v9852 = vrot.slane %v9850, 1
    %v9853 = vsel %vm8376, %v9848, %v9852
    %v9854 = vshrl.u32 %v9536, 16
    %v9856 = vor.u32 %v9854, %v9852
    %v9858 = vshll.u32 %v9537, 16
    %v9860 = vrot.slane %v9858, 1
    %v9861 = vsel %vm8376, %v9856, %v9860
    %v9862 = vshrl.u32 %v9537, 16
    %v9864 = vor.u32 %v9862, %v9860
    %v9922 = vunpack.c.l.b16 %v9317
    %v9923 = vunpack.c.l.b16 %v9318
    %v9924 = vunpack.c.l.b16 %v9319
    %v9925 = vunpack.c.l.b16 %v9320
    %v9926 = vunpack.c.l.b16 %v9321
    %v9927 = vunpack.c.l.b16 %v9322
    %v9928 = vunpack.c.l.b16 %v9323
    %v9929 = vunpack.c.l.b16 %v9324
    %v9930 = vunpack.c.l.b16 %v9325
    %v9931 = vunpack.c.l.b16 %v9326
    %v9932 = vunpack.c.l.b16 %v9327
    %v9933 = vunpack.c.l.b16 %v9328
    %v9934 = vunpack.c.l.b16 %v9329
    %v9935 = vunpack.c.l.b16 %v9330
    %v9936 = vunpack.c.l.b16 %v9331
    %v9937 = vunpack.c.l.b16 %v9332
    %v9938 = vpack.c.b16 %v9923, %v9922
    %v9939 = vpack.c.b16 %v9925, %v9924
    %v9940 = vpack.c.b16 %v9927, %v9926
    %v9941 = vpack.c.b16 %v9929, %v9928
    %v9942 = vpack.c.b16 %v9931, %v9930
    %v9943 = vpack.c.b16 %v9933, %v9932
    %v9944 = vpack.c.b16 %v9935, %v9934
    %v9945 = vpack.c.b16 %v9937, %v9936
    %9954 = vmatprep.subr.bf16.mxu0 0
    %9955 = vmatpush1.bf16.msra.mxu0 %v9938
    %9956 = vmatprep.subr.bf16.mxu0 0
    %9957 = vmatpush1.bf16.msra.mxu0 %v9939
    %9958 = vmatprep.subr.bf16.mxu0 0
    %9959 = vmatpush1.bf16.msra.mxu0 %v9940
    %9960 = vmatprep.subr.bf16.mxu0 0
    %9961 = vmatpush1.bf16.msra.mxu0 %v9941
    %9962 = vmatprep.subr.bf16.mxu0 0
    %9963 = vmatpush1.bf16.msra.mxu0 %v9942
    %9964 = vmatprep.subr.bf16.mxu0 0
    %9965 = vmatpush1.bf16.msra.mxu0 %v9943
    %9966 = vmatprep.subr.bf16.mxu0 0
    %9967 = vmatpush1.bf16.msra.mxu0 %v9944
    %9968 = vmatprep.subr.bf16.mxu0 0
    %9969 = vmatpush1.bf16.msra.mxu0 %v9945
    %9970 = vmatprep.subr.bf16.mxu0 0
    %9971 = vmatpush1.bf16.msra.mxu0 0
    %9972 = vmatprep.subr.bf16.mxu0 0
    %9973 = vmatpush1.bf16.msra.mxu0 0
    %9974 = vmatprep.subr.bf16.mxu0 0
    %9975 = vmatpush1.bf16.msra.mxu0 0
    %9976 = vmatprep.subr.bf16.mxu0 0
    %9977 = vmatpush1.bf16.msra.mxu0 0
    %9978 = vmatprep.subr.bf16.mxu0 0
    %9979 = vmatpush1.bf16.msra.mxu0 0
    %9980 = vmatprep.subr.bf16.mxu0 0
    %9981 = vmatpush1.bf16.msra.mxu0 0
    %9982 = vmatprep.subr.bf16.mxu0 0
    %9983 = vmatpush1.bf16.msra.mxu0 0
    %9984 = vmatprep.subr.bf16.mxu0 0
    %9985 = vmatpush1.bf16.msra.mxu0 0
    %9986 = vmatprep.mubr.bf16.mxu0 0
    %9987 = vmatmul.mubr.bf16.gmra.mrb[0].mxu0 %v9549
    %v9988 = vpop.f32.mrb[0].mxu0
    %v9989 = vadd.f32 0.0, %v9988
    %v9990 = vpop.f32.mrb[0].mxu0
    %v9991 = vpop.f32.mrb[0].mxu0
    %v9992 = vadd.f32 0.0, %v9991
    %v9993 = vpop.f32.mrb[0].mxu0
    %9994 = vmatprep.mubr.bf16.mxu0 0
    %9995 = vmatmul.mubr.bf16.gmra.mrb[0].mxu0 %v9557
    %v9996 = vpop.f32.mrb[0].mxu0
    %v9997 = vadd.f32 0.0, %v9996
    %v9998 = vpop.f32.mrb[0].mxu0
    %v9999 = vpop.f32.mrb[0].mxu0
    %v10000 = vadd.f32 0.0, %v9999
    %v10001 = vpop.f32.mrb[0].mxu0
    %10002 = vmatprep.mubr.bf16.mxu0 0
    %10003 = vmatmul.mubr.bf16.gmra.mrb[0].mxu0 %v9565
    %v10004 = vpop.f32.mrb[0].mxu0
    %v10005 = vadd.f32 0.0, %v10004
    %v10006 = vpop.f32.mrb[0].mxu0
    %v10007 = vpop.f32.mrb[0].mxu0
    %v10008 = vadd.f32 0.0, %v10007
    %v10009 = vpop.f32.mrb[0].mxu0
    %10010 = vmatprep.mubr.bf16.mxu0 0
    %10011 = vmatmul.mubr.bf16.gmra.mrb[0].mxu0 %v9573
    %v10012 = vpop.f32.mrb[0].mxu0
    %v10013 = vadd.f32 0.0, %v10012
    %v10014 = vpop.f32.mrb[0].mxu0
    %v10015 = vpop.f32.mrb[0].mxu0
    %v10016 = vadd.f32 0.0, %v10015
    %v10017 = vpop.f32.mrb[0].mxu0
    %10018 = vmatprep.mubr.bf16.mxu0 0
    %10019 = vmatmul.mubr.bf16.gmra.mrb[0].mxu0 %v9581
    %v10020 = vpop.f32.mrb[0].mxu0
    %v10021 = vadd.f32 0.0, %v10020
    %v10022 = vpop.f32.mrb[0].mxu0
    %v10023 = vpop.f32.mrb[0].mxu0
    %v10024 = vadd.f32 0.0, %v10023
    %v10025 = vpop.f32.mrb[0].mxu0
    %10026 = vmatprep.mubr.bf16.mxu0 0
    %10027 = vmatmul.mubr.bf16.gmra.mrb[0].mxu0 %v9589
    %v10028 = vpop.f32.mrb[0].mxu0
    %v10029 = vadd.f32 0.0, %v10028
    %v10030 = vpop.f32.mrb[0].mxu0
    %v10031 = vpop.f32.mrb[0].mxu0
    %v10032 = vadd.f32 0.0, %v10031
    %v10033 = vpop.f32.mrb[0].mxu0
    %10034 = vmatprep.mubr.bf16.mxu0 0
    %10035 = vmatmul.mubr.bf16.gmra.mrb[0].mxu0 %v9597
    %v10036 = vpop.f32.mrb[0].mxu0
    %v10037 = vadd.f32 0.0, %v10036
    %v10038 = vpop.f32.mrb[0].mxu0
    %v10039 = vpop.f32.mrb[0].mxu0
    %v10040 = vadd.f32 0.0, %v10039
    %v10041 = vpop.f32.mrb[0].mxu0
    %10042 = vmatprep.mubr.bf16.mxu0 0
    %10043 = vmatmul.mubr.bf16.gmra.mrb[0].mxu0 %v9605
    %v10044 = vpop.f32.mrb[0].mxu0
    %v10045 = vadd.f32 0.0, %v10044
    %v10046 = vpop.f32.mrb[0].mxu0
    %v10047 = vpop.f32.mrb[0].mxu0
    %v10048 = vadd.f32 0.0, %v10047
    %v10049 = vpop.f32.mrb[0].mxu0
    %10050 = vmatprep.mubr.bf16.mxu0 0
    %10051 = vmatmul.mubr.bf16.gmra.mrb[0].mxu0 %v9613
    %v10052 = vpop.f32.mrb[0].mxu0
    %v10053 = vadd.f32 0.0, %v10052
    %v10054 = vpop.f32.mrb[0].mxu0
    %v10055 = vpop.f32.mrb[0].mxu0
    %v10056 = vadd.f32 0.0, %v10055
    %v10057 = vpop.f32.mrb[0].mxu0
    %10058 = vmatprep.mubr.bf16.mxu0 0
    %10059 = vmatmul.mubr.bf16.gmra.mrb[0].mxu0 %v9621
    %v10060 = vpop.f32.mrb[0].mxu0
    %v10061 = vadd.f32 0.0, %v10060
    %v10062 = vpop.f32.mrb[0].mxu0
    %v10063 = vpop.f32.mrb[0].mxu0
    %v10064 = vadd.f32 0.0, %v10063
    %v10065 = vpop.f32.mrb[0].mxu0
    %10066 = vmatprep.mubr.bf16.mxu0 0
    %10067 = vmatmul.mubr.bf16.gmra.mrb[0].mxu0 %v9629
    %v10068 = vpop.f32.mrb[0].mxu0
    %v10069 = vadd.f32 0.0, %v10068
    %v10070 = vpop.f32.mrb[0].mxu0
    %v10071 = vpop.f32.mrb[0].mxu0
    %v10072 = vadd.f32 0.0, %v10071
    %v10073 = vpop.f32.mrb[0].mxu0
    %10074 = vmatprep.mubr.bf16.mxu0 0
    %10075 = vmatmul.mubr.bf16.gmra.mrb[0].mxu0 %v9637
    %v10076 = vpop.f32.mrb[0].mxu0
    %v10077 = vadd.f32 0.0, %v10076
    %v10078 = vpop.f32.mrb[0].mxu0
    %v10079 = vpop.f32.mrb[0].mxu0
    %v10080 = vadd.f32 0.0, %v10079
    %v10081 = vpop.f32.mrb[0].mxu0
    %10082 = vmatprep.mubr.bf16.mxu0 0
    %10083 = vmatmul.mubr.bf16.gmra.mrb[0].mxu0 %v9645
    %v10084 = vpop.f32.mrb[0].mxu0
    %v10085 = vadd.f32 0.0, %v10084
    %v10086 = vpop.f32.mrb[0].mxu0
    %v10087 = vpop.f32.mrb[0].mxu0
    %v10088 = vadd.f32 0.0, %v10087
    %v10089 = vpop.f32.mrb[0].mxu0
    %10090 = vmatprep.mubr.bf16.mxu0 0
    %10091 = vmatmul.mubr.bf16.gmra.mrb[0].mxu0 %v9653
    %v10092 = vpop.f32.mrb[0].mxu0
    %v10093 = vadd.f32 0.0, %v10092
    %v10094 = vpop.f32.mrb[0].mxu0
    %v10095 = vpop.f32.mrb[0].mxu0
    %v10096 = vadd.f32 0.0, %v10095
    %v10097 = vpop.f32.mrb[0].mxu0
    %10098 = vmatprep.mubr.bf16.mxu0 0
    %10099 = vmatmul.mubr.bf16.gmra.mrb[0].mxu0 %v9661
    %v10100 = vpop.f32.mrb[0].mxu0
    %v10101 = vadd.f32 0.0, %v10100
    %v10102 = vpop.f32.mrb[0].mxu0
    %v10103 = vpop.f32.mrb[0].mxu0
    %v10104 = vadd.f32 0.0, %v10103
    %v10105 = vpop.f32.mrb[0].mxu0
    %10106 = vmatprep.mubr.bf16.mxu0 0
    %10107 = vmatmul.mubr.bf16.gmra.mrb[0].mxu0 %v9669
    %v10108 = vpop.f32.mrb[0].mxu0
    %v10109 = vadd.f32 0.0, %v10108
    %v10110 = vpop.f32.mrb[0].mxu0
    %v10111 = vpop.f32.mrb[0].mxu0
    %v10112 = vadd.f32 0.0, %v10111
    %v10113 = vpop.f32.mrb[0].mxu0
    %10114 = vmatprep.mubr.bf16.mxu0 0
    %10115 = vmatmul.mubr.bf16.gmra.mrb[0].mxu0 %v9677
    %v10116 = vpop.f32.mrb[0].mxu0
    %v10117 = vadd.f32 0.0, %v10116
    %v10118 = vpop.f32.mrb[0].mxu0
    %v10119 = vpop.f32.mrb[0].mxu0
    %v10120 = vadd.f32 0.0, %v10119
    %v10121 = vpop.f32.mrb[0].mxu0
    %10122 = vmatprep.mubr.bf16.mxu0 0
    %10123 = vmatmul.mubr.bf16.gmra.mrb[0].mxu0 %v9685
    %v10124 = vpop.f32.mrb[0].mxu0
    %v10125 = vadd.f32 0.0, %v10124
    %v10126 = vpop.f32.mrb[0].mxu0
    %v10127 = vpop.f32.mrb[0].mxu0
    %v10128 = vadd.f32 0.0, %v10127
    %v10129 = vpop.f32.mrb[0].mxu0
    %10130 = vmatprep.mubr.bf16.mxu0 0
    %10131 = vmatmul.mubr.bf16.gmra.mrb[0].mxu0 %v9693
    %v10132 = vpop.f32.mrb[0].mxu0
    %v10133 = vadd.f32 0.0, %v10132
    %v10134 = vpop.f32.mrb[0].mxu0
    %v10135 = vpop.f32.mrb[0].mxu0
    %v10136 = vadd.f32 0.0, %v10135
    %v10137 = vpop.f32.mrb[0].mxu0
    %10138 = vmatprep.mubr.bf16.mxu0 0
    %10139 = vmatmul.mubr.bf16.gmra.mrb[0].mxu0 %v9701
    %v10140 = vpop.f32.mrb[0].mxu0
    %v10141 = vadd.f32 0.0, %v10140
    %v10142 = vpop.f32.mrb[0].mxu0
    %v10143 = vpop.f32.mrb[0].mxu0
    %v10144 = vadd.f32 0.0, %v10143
    %v10145 = vpop.f32.mrb[0].mxu0
    %10146 = vmatprep.mubr.bf16.mxu0 0
    %10147 = vmatmul.mubr.bf16.gmra.mrb[0].mxu0 %v9709
    %v10148 = vpop.f32.mrb[0].mxu0
    %v10149 = vadd.f32 0.0, %v10148
    %v10150 = vpop.f32.mrb[0].mxu0
    %v10151 = vpop.f32.mrb[0].mxu0
    %v10152 = vadd.f32 0.0, %v10151
    %v10153 = vpop.f32.mrb[0].mxu0
    %10154 = vmatprep.mubr.bf16.mxu0 0
    %10155 = vmatmul.mubr.bf16.gmra.mrb[0].mxu0 %v9717
    %v10156 = vpop.f32.mrb[0].mxu0
    %v10157 = vadd.f32 0.0, %v10156
    %v10158 = vpop.f32.mrb[0].mxu0
    %v10159 = vpop.f32.mrb[0].mxu0
    %v10160 = vadd.f32 0.0, %v10159
    %v10161 = vpop.f32.mrb[0].mxu0
    %10162 = vmatprep.mubr.bf16.mxu0 0
    %10163 = vmatmul.mubr.bf16.gmra.mrb[0].mxu0 %v9725
    %v10164 = vpop.f32.mrb[0].mxu0
    %v10165 = vadd.f32 0.0, %v10164
    %v10166 = vpop.f32.mrb[0].mxu0
    %v10167 = vpop.f32.mrb[0].mxu0
    %v10168 = vadd.f32 0.0, %v10167
    %v10169 = vpop.f32.mrb[0].mxu0
    %10170 = vmatprep.mubr.bf16.mxu0 0
    %10171 = vmatmul.mubr.bf16.gmra.mrb[0].mxu0 %v9733
    %v10172 = vpop.f32.mrb[0].mxu0
    %v10173 = vadd.f32 0.0, %v10172
    %v10174 = vpop.f32.mrb[0].mxu0
    %v10175 = vpop.f32.mrb[0].mxu0
    %v10176 = vadd.f32 0.0, %v10175
    %v10177 = vpop.f32.mrb[0].mxu0
    %10178 = vmatprep.mubr.bf16.mxu0 0
    %10179 = vmatmul.mubr.bf16.gmra.mrb[0].mxu0 %v9741
    %v10180 = vpop.f32.mrb[0].mxu0
    %v10181 = vadd.f32 0.0, %v10180
    %v10182 = vpop.f32.mrb[0].mxu0
    %v10183 = vpop.f32.mrb[0].mxu0
    %v10184 = vadd.f32 0.0, %v10183
    %v10185 = vpop.f32.mrb[0].mxu0
    %10186 = vmatprep.mubr.bf16.mxu0 0
    %10187 = vmatmul.mubr.bf16.gmra.mrb[0].mxu0 %v9749
    %v10188 = vpop.f32.mrb[0].mxu0
    %v10189 = vadd.f32 0.0, %v10188
    %v10190 = vpop.f32.mrb[0].mxu0
    %v10191 = vpop.f32.mrb[0].mxu0
    %v10192 = vadd.f32 0.0, %v10191
    %v10193 = vpop.f32.mrb[0].mxu0
    %10194 = vmatprep.mubr.bf16.mxu0 0
    %10195 = vmatmul.mubr.bf16.gmra.mrb[0].mxu0 %v9757
    %v10196 = vpop.f32.mrb[0].mxu0
    %v10197 = vadd.f32 0.0, %v10196
    %v10198 = vpop.f32.mrb[0].mxu0
    %v10199 = vpop.f32.mrb[0].mxu0
    %v10200 = vadd.f32 0.0, %v10199
    %v10201 = vpop.f32.mrb[0].mxu0
    %10202 = vmatprep.mubr.bf16.mxu0 0
    %10203 = vmatmul.mubr.bf16.gmra.mrb[0].mxu0 %v9765
    %v10204 = vpop.f32.mrb[0].mxu0
    %v10205 = vadd.f32 0.0, %v10204
    %v10206 = vpop.f32.mrb[0].mxu0
    %v10207 = vpop.f32.mrb[0].mxu0
    %v10208 = vadd.f32 0.0, %v10207
    %v10209 = vpop.f32.mrb[0].mxu0
    %10210 = vmatprep.mubr.bf16.mxu0 0
    %10211 = vmatmul.mubr.bf16.gmra.mrb[0].mxu0 %v9773
    %v10212 = vpop.f32.mrb[0].mxu0
    %v10213 = vadd.f32 0.0, %v10212
    %v10214 = vpop.f32.mrb[0].mxu0
    %v10215 = vpop.f32.mrb[0].mxu0
    %v10216 = vadd.f32 0.0, %v10215
    %v10217 = vpop.f32.mrb[0].mxu0
    %10218 = vmatprep.mubr.bf16.mxu0 0
    %10219 = vmatmul.mubr.bf16.gmra.mrb[0].mxu0 %v9781
    %v10220 = vpop.f32.mrb[0].mxu0
    %v10221 = vadd.f32 0.0, %v10220
    %v10222 = vpop.f32.mrb[0].mxu0
    %v10223 = vpop.f32.mrb[0].mxu0
    %v10224 = vadd.f32 0.0, %v10223
    %v10225 = vpop.f32.mrb[0].mxu0
    %10226 = vmatprep.mubr.bf16.mxu0 0
    %10227 = vmatmul.mubr.bf16.gmra.mrb[0].mxu0 %v9789
    %v10228 = vpop.f32.mrb[0].mxu0
    %v10229 = vadd.f32 0.0, %v10228
    %v10230 = vpop.f32.mrb[0].mxu0
    %v10231 = vpop.f32.mrb[0].mxu0
    %v10232 = vadd.f32 0.0, %v10231
    %v10233 = vpop.f32.mrb[0].mxu0
    %10234 = vmatprep.mubr.bf16.mxu0 0
    %10235 = vmatmul.mubr.bf16.gmra.mrb[0].mxu0 %v9797
    %v10236 = vpop.f32.mrb[0].mxu0
    %v10237 = vadd.f32 0.0, %v10236
    %v10238 = vpop.f32.mrb[0].mxu0
    %v10239 = vpop.f32.mrb[0].mxu0
    %v10240 = vadd.f32 0.0, %v10239
    %v10241 = vpop.f32.mrb[0].mxu0
    %10242 = vmatprep.mubr.bf16.mxu0 0
    %10243 = vmatmul.mubr.bf16.gmra.mrb[0].mxu0 %v9805
    %v10244 = vpop.f32.mrb[0].mxu0
    %v10245 = vadd.f32 0.0, %v10244
    %v10246 = vpop.f32.mrb[0].mxu0
    %v10247 = vpop.f32.mrb[0].mxu0
    %v10248 = vadd.f32 0.0, %v10247
    %v10249 = vpop.f32.mrb[0].mxu0
    %10250 = vmatprep.mubr.bf16.mxu0 0
    %10251 = vmatmul.mubr.bf16.gmra.mrb[0].mxu0 %v9813
    %v10252 = vpop.f32.mrb[0].mxu0
    %v10253 = vadd.f32 0.0, %v10252
    %v10254 = vpop.f32.mrb[0].mxu0
    %v10255 = vpop.f32.mrb[0].mxu0
    %v10256 = vadd.f32 0.0, %v10255
    %v10257 = vpop.f32.mrb[0].mxu0
    %10258 = vmatprep.mubr.bf16.mxu0 0
    %10259 = vmatmul.mubr.bf16.gmra.mrb[0].mxu0 %v9821
    %v10260 = vpop.f32.mrb[0].mxu0
    %v10261 = vadd.f32 0.0, %v10260
    %v10262 = vpop.f32.mrb[0].mxu0
    %v10263 = vpop.f32.mrb[0].mxu0
    %v10264 = vadd.f32 0.0, %v10263
    %v10265 = vpop.f32.mrb[0].mxu0
    %10266 = vmatprep.mubr.bf16.mxu0 0
    %10267 = vmatmul.mubr.bf16.gmra.mrb[0].mxu0 %v9829
    %v10268 = vpop.f32.mrb[0].mxu0
    %v10269 = vadd.f32 0.0, %v10268
    %v10270 = vpop.f32.mrb[0].mxu0
    %v10271 = vpop.f32.mrb[0].mxu0
    %v10272 = vadd.f32 0.0, %v10271
    %v10273 = vpop.f32.mrb[0].mxu0
    %10274 = vmatprep.mubr.bf16.mxu0 0
    %10275 = vmatmul.mubr.bf16.gmra.mrb[0].mxu0 %v9837
    %v10276 = vpop.f32.mrb[0].mxu0
    %v10277 = vadd.f32 0.0, %v10276
    %v10278 = vpop.f32.mrb[0].mxu0
    %v10279 = vpop.f32.mrb[0].mxu0
    %v10280 = vadd.f32 0.0, %v10279
    %v10281 = vpop.f32.mrb[0].mxu0
    %10282 = vmatprep.mubr.bf16.mxu0 0
    %10283 = vmatmul.mubr.bf16.gmra.mrb[0].mxu0 %v9845
    %v10284 = vpop.f32.mrb[0].mxu0
    %v10285 = vadd.f32 0.0, %v10284
    %v10286 = vpop.f32.mrb[0].mxu0
    %v10287 = vpop.f32.mrb[0].mxu0
    %v10288 = vadd.f32 0.0, %v10287
    %v10289 = vpop.f32.mrb[0].mxu0
    %10290 = vmatprep.mubr.bf16.mxu0 0
    %10291 = vmatmul.mubr.bf16.gmra.mrb[0].mxu0 %v9853
    %v10292 = vpop.f32.mrb[0].mxu0
    %v10293 = vadd.f32 0.0, %v10292
    %v10294 = vpop.f32.mrb[0].mxu0
    %v10295 = vpop.f32.mrb[0].mxu0
    %v10296 = vadd.f32 0.0, %v10295
    %v10297 = vpop.f32.mrb[0].mxu0
    %10298 = vmatprep.mubr.bf16.mxu0 0
    %10299 = vmatmul.mubr.bf16.gmra.mrb[0].mxu0 %v9861
    %v10300 = vpop.f32.mrb[0].mxu0
    %v10301 = vadd.f32 0.0, %v10300
    %v10302 = vpop.f32.mrb[0].mxu0
    %v10303 = vpop.f32.mrb[0].mxu0
    %v10304 = vadd.f32 0.0, %v10303
    %v10305 = vpop.f32.mrb[0].mxu0
    %10306 = vmatprep.mubr.bf16.mxu0 0
    %10307 = vmatmul.mubr.bf16.gmra.mrb[0].mxu0 %v9864
    %v10308 = vpop.f32.mrb[0].mxu0
    %v10309 = vadd.f32 0.0, %v10308
    %v10310 = vpop.f32.mrb[0].mxu0
    %v10311 = vpop.f32.mrb[0].mxu0
    %v10312 = vpop.f32.mrb[0].mxu0
    %10313 = vdwg.mxu0
    %v10314 = vadd.f32 %v9153, %v9989
    %v10315 = vadd.f32 %v9154, %v9992
    %v10316 = vadd.f32 %v9155, %v9997
    %v10317 = vadd.f32 %v9156, %v10000
    %v10318 = vadd.f32 %v9157, %v10005
    %v10319 = vadd.f32 %v9158, %v10008
    %v10320 = vadd.f32 %v9159, %v10013
    %v10321 = vadd.f32 %v9160, %v10016
    %v10322 = vadd.f32 %v9161, %v10021
    %v10323 = vadd.f32 %v9162, %v10024
    %v10324 = vadd.f32 %v9163, %v10029
    %v10325 = vadd.f32 %v9164, %v10032
    %v10326 = vadd.f32 %v9165, %v10037
    %v10327 = vadd.f32 %v9166, %v10040
    %v10328 = vadd.f32 %v9167, %v10045
    %v10329 = vadd.f32 %v9168, %v10048
    %v10330 = vadd.f32 %v9169, %v10053
    %v10331 = vadd.f32 %v9170, %v10056
    %v10332 = vadd.f32 %v9171, %v10061
    %v10333 = vadd.f32 %v9172, %v10064
    %v10334 = vadd.f32 %v9173, %v10069
    %v10335 = vadd.f32 %v9174, %v10072
    %v10336 = vadd.f32 %v9175, %v10077
    %v10337 = vadd.f32 %v9176, %v10080
    %v10338 = vadd.f32 %v9177, %v10085
    %v10339 = vadd.f32 %v9178, %v10088
    %v10340 = vadd.f32 %v9179, %v10093
    %v10341 = vadd.f32 %v9180, %v10096
    %v10342 = vadd.f32 %v9181, %v10101
    %v10343 = vadd.f32 %v9182, %v10104
    %v10344 = vadd.f32 %v9183, %v10109
    %v10345 = vadd.f32 %v9184, %v10112
    %v10346 = vadd.f32 %v9185, %v10117
    %v10347 = vadd.f32 %v9186, %v10120
    %v10348 = vadd.f32 %v9187, %v10125
    %v10349 = vadd.f32 %v9188, %v10128
    %v10350 = vadd.f32 %v9189, %v10133
    %v10351 = vadd.f32 %v9190, %v10136
    %v10352 = vadd.f32 %v9191, %v10141
    %v10353 = vadd.f32 %v9192, %v10144
    %v10354 = vadd.f32 %v9193, %v10149
    %v10355 = vadd.f32 %v9194, %v10152
    %v10356 = vadd.f32 %v9195, %v10157
    %v10357 = vadd.f32 %v9196, %v10160
    %v10358 = vadd.f32 %v9197, %v10165
    %v10359 = vadd.f32 %v9198, %v10168
    %v10360 = vadd.f32 %v9199, %v10173
    %v10361 = vadd.f32 %v9200, %v10176
    %v10362 = vadd.f32 %v9201, %v10181
    %v10363 = vadd.f32 %v9202, %v10184
    %v10364 = vadd.f32 %v9203, %v10189
    %v10365 = vadd.f32 %v9204, %v10192
    %v10366 = vadd.f32 %v9205, %v10197
    %v10367 = vadd.f32 %v9206, %v10200
    %v10368 = vadd.f32 %v9207, %v10205
    %v10369 = vadd.f32 %v9208, %v10208
    %v10370 = vadd.f32 %v9209, %v10213
    %v10371 = vadd.f32 %v9210, %v10216
    %v10372 = vadd.f32 %v9211, %v10221
    %v10373 = vadd.f32 %v9212, %v10224
    %v10374 = vadd.f32 %v9213, %v10229
    %v10375 = vadd.f32 %v9214, %v10232
    %v10376 = vadd.f32 %v9215, %v10237
    %v10377 = vadd.f32 %v9216, %v10240
    %v10378 = vadd.f32 %v9217, %v10245
    %v10379 = vadd.f32 %v9218, %v10248
    %v10380 = vadd.f32 %v9219, %v10253
    %v10381 = vadd.f32 %v9220, %v10256
    %v10382 = vadd.f32 %v9221, %v10261
    %v10383 = vadd.f32 %v9222, %v10264
    %v10384 = vadd.f32 %v9223, %v10269
    %v10385 = vadd.f32 %v9224, %v10272
    %v10386 = vadd.f32 %v9225, %v10277
    %v10387 = vadd.f32 %v9226, %v10280
    %v10388 = vadd.f32 %v9227, %v10285
    %v10389 = vadd.f32 %v9228, %v10288
    %v10390 = vadd.f32 %v9229, %v10293
    %v10391 = vadd.f32 %v9230, %v10296
    %v10392 = vadd.f32 %v9231, %v10301
    %v10393 = vadd.f32 %v9232, %v10304
    %v10394 = vadd.f32 %v9233, %v10309
    %v10395 = vld [vmem:[#allocation2 + $0x14] sm:$0xe]
    %s10396 = scalar_lea.vmem [#allocation8], 448
    %v10397 = vld [vmem:[%s10396] sm:$0xf]
    %v10398 = vld [vmem:[%s10396 + $0x4] sm:$0xf]
    %v10399 = vld [vmem:[%s10396 + $0x8] sm:$0xf]
    %v10400 = vld [vmem:[%s10396 + $0xc] sm:$0xf]
    %v10401 = vld [vmem:[%s10396 + $0x10] sm:$0xf]
    %v10402 = vld [vmem:[%s10396 + $0x14] sm:$0xf]
    %v10403 = vld [vmem:[%s10396 + $0x18] sm:$0xf]
    %v10404 = vld [vmem:[%s10396 + $0x1c] sm:$0xf]
    %v10405 = vld [vmem:[%s10396 + $0x20] sm:$0xf]
    %v10406 = vld [vmem:[%s10396 + $0x24] sm:$0xf]
    %v10407 = vld [vmem:[%s10396 + $0x28] sm:$0xf]
    %v10408 = vld [vmem:[%s10396 + $0x2c] sm:$0xf]
    %v10409 = vld [vmem:[%s10396 + $0x30] sm:$0xf]
    %v10410 = vld [vmem:[%s10396 + $0x34] sm:$0xf]
    %v10411 = vld [vmem:[%s10396 + $0x38] sm:$0xf]
    %v10412 = vld [vmem:[%s10396 + $0x3c] sm:$0xf]
    %v10414 = vunpack.c.l.b16 %v10395
    %v10415 = vpack.c.b16 %v9416, %v10414
    %vm10416 = vcmask 1046528
    %v10417 = vrot.slane %v10415, 1
    %v10418 = vrot.slane %v9498, 1
    %v10419 = vsel %vm10416, %v10417, %v10418
    %v10420 = vrot.slane %v9499, 1
    %v10421 = vsel %vm10416, %v10418, %v10420
    %v10422 = vrot.slane %v9500, 1
    %v10423 = vsel %vm10416, %v10420, %v10422
    %v10424 = vrot.slane %v9501, 1
    %v10425 = vsel %vm10416, %v10422, %v10424
    %v10426 = vrot.slane %v9502, 1
    %v10427 = vsel %vm10416, %v10424, %v10426
    %v10428 = vrot.slane %v9503, 1
    %v10429 = vsel %vm10416, %v10426, %v10428
    %v10430 = vrot.slane %v9504, 1
    %v10431 = vsel %vm10416, %v10428, %v10430
    %v10432 = vrot.slane %v9505, 1
    %v10433 = vsel %vm10416, %v10430, %v10432
    %v10434 = vrot.slane %v9506, 1
    %v10435 = vsel %vm10416, %v10432, %v10434
    %v10436 = vrot.slane %v9507, 1
    %v10437 = vsel %vm10416, %v10434, %v10436
    %v10438 = vrot.slane %v9508, 1
    %v10439 = vsel %vm10416, %v10436, %v10438
    %v10440 = vrot.slane %v9509, 1
    %v10441 = vsel %vm10416, %v10438, %v10440
    %v10442 = vrot.slane %v9510, 1
    %v10443 = vsel %vm10416, %v10440, %v10442
    %v10444 = vrot.slane %v9511, 1
    %v10445 = vsel %vm10416, %v10442, %v10444
    %v10446 = vrot.slane %v9512, 1
    %v10447 = vsel %vm10416, %v10444, %v10446
    %v10448 = vrot.slane %v9513, 1
    %v10449 = vsel %vm10416, %v10446, %v10448
    %v10450 = vrot.slane %v9514, 1
    %v10451 = vsel %vm10416, %v10448, %v10450
    %v10452 = vrot.slane %v9515, 1
    %v10453 = vsel %vm10416, %v10450, %v10452
    %v10454 = vrot.slane %v9516, 1
    %v10455 = vsel %vm10416, %v10452, %v10454
    %v10456 = vrot.slane %v9517, 1
    %v10457 = vsel %vm10416, %v10454, %v10456
    %v10458 = vrot.slane %v9518, 1
    %v10459 = vsel %vm10416, %v10456, %v10458
    %v10460 = vrot.slane %v9519, 1
    %v10461 = vsel %vm10416, %v10458, %v10460
    %v10462 = vrot.slane %v9520, 1
    %v10463 = vsel %vm10416, %v10460, %v10462
    %v10464 = vrot.slane %v9521, 1
    %v10465 = vsel %vm10416, %v10462, %v10464
    %v10466 = vrot.slane %v9522, 1
    %v10467 = vsel %vm10416, %v10464, %v10466
    %v10468 = vrot.slane %v9523, 1
    %v10469 = vsel %vm10416, %v10466, %v10468
    %v10470 = vrot.slane %v9524, 1
    %v10471 = vsel %vm10416, %v10468, %v10470
    %v10472 = vrot.slane %v9525, 1
    %v10473 = vsel %vm10416, %v10470, %v10472
    %v10474 = vrot.slane %v9526, 1
    %v10475 = vsel %vm10416, %v10472, %v10474
    %v10476 = vrot.slane %v9527, 1
    %v10477 = vsel %vm10416, %v10474, %v10476
    %v10478 = vrot.slane %v9528, 1
    %v10479 = vsel %vm10416, %v10476, %v10478
    %v10480 = vrot.slane %v9529, 1
    %v10481 = vsel %vm10416, %v10478, %v10480
    %v10482 = vrot.slane %v9530, 1
    %v10483 = vsel %vm10416, %v10480, %v10482
    %v10484 = vrot.slane %v9531, 1
    %v10485 = vsel %vm10416, %v10482, %v10484
    %v10486 = vrot.slane %v9532, 1
    %v10487 = vsel %vm10416, %v10484, %v10486
    %v10488 = vrot.slane %v9533, 1
    %v10489 = vsel %vm10416, %v10486, %v10488
    %v10490 = vrot.slane %v9534, 1
    %v10491 = vsel %vm10416, %v10488, %v10490
    %v10492 = vrot.slane %v9535, 1
    %v10493 = vsel %vm10416, %v10490, %v10492
    %v10494 = vrot.slane %v9536, 1
    %v10495 = vsel %vm10416, %v10492, %v10494
    %v10496 = vrot.slane %v9537, 1
    %v10497 = vsel %vm10416, %v10494, %v10496
    %v10555 = vunpack.c.l.b16 %v10397
    %v10556 = vunpack.c.l.b16 %v10398
    %v10557 = vunpack.c.l.b16 %v10399
    %v10558 = vunpack.c.l.b16 %v10400
    %v10559 = vunpack.c.l.b16 %v10401
    %v10560 = vunpack.c.l.b16 %v10402
    %v10561 = vunpack.c.l.b16 %v10403
    %v10562 = vunpack.c.l.b16 %v10404
    %v10563 = vunpack.c.l.b16 %v10405
    %v10564 = vunpack.c.l.b16 %v10406
    %v10565 = vunpack.c.l.b16 %v10407
    %v10566 = vunpack.c.l.b16 %v10408
    %v10567 = vunpack.c.l.b16 %v10409
    %v10568 = vunpack.c.l.b16 %v10410
    %v10569 = vunpack.c.l.b16 %v10411
    %v10570 = vunpack.c.l.b16 %v10412
    %v10571 = vpack.c.b16 %v10556, %v10555
    %v10572 = vpack.c.b16 %v10558, %v10557
    %v10573 = vpack.c.b16 %v10560, %v10559
    %v10574 = vpack.c.b16 %v10562, %v10561
    %v10575 = vpack.c.b16 %v10564, %v10563
    %v10576 = vpack.c.b16 %v10566, %v10565
    %v10577 = vpack.c.b16 %v10568, %v10567
    %v10578 = vpack.c.b16 %v10570, %v10569
    %10587 = vmatprep.subr.bf16.mxu0 0
    %10588 = vmatpush1.bf16.msra.mxu0 %v10571
    %10589 = vmatprep.subr.bf16.mxu0 0
    %10590 = vmatpush1.bf16.msra.mxu0 %v10572
    %10591 = vmatprep.subr.bf16.mxu0 0
    %10592 = vmatpush1.bf16.msra.mxu0 %v10573
    %10593 = vmatprep.subr.bf16.mxu0 0
    %10594 = vmatpush1.bf16.msra.mxu0 %v10574
    %10595 = vmatprep.subr.bf16.mxu0 0
    %10596 = vmatpush1.bf16.msra.mxu0 %v10575
    %10597 = vmatprep.subr.bf16.mxu0 0
    %10598 = vmatpush1.bf16.msra.mxu0 %v10576
    %10599 = vmatprep.subr.bf16.mxu0 0
    %10600 = vmatpush1.bf16.msra.mxu0 %v10577
    %10601 = vmatprep.subr.bf16.mxu0 0
    %10602 = vmatpush1.bf16.msra.mxu0 %v10578
    %10603 = vmatprep.subr.bf16.mxu0 0
    %10604 = vmatpush1.bf16.msra.mxu0 0
    %10605 = vmatprep.subr.bf16.mxu0 0
    %10606 = vmatpush1.bf16.msra.mxu0 0
    %10607 = vmatprep.subr.bf16.mxu0 0
    %10608 = vmatpush1.bf16.msra.mxu0 0
    %10609 = vmatprep.subr.bf16.mxu0 0
    %10610 = vmatpush1.bf16.msra.mxu0 0
    %10611 = vmatprep.subr.bf16.mxu0 0
    %10612 = vmatpush1.bf16.msra.mxu0 0
    %10613 = vmatprep.subr.bf16.mxu0 0
    %10614 = vmatpush1.bf16.msra.mxu0 0
    %10615 = vmatprep.subr.bf16.mxu0 0
    %10616 = vmatpush1.bf16.msra.mxu0 0
    %10617 = vmatprep.subr.bf16.mxu0 0
    %10618 = vmatpush1.bf16.msra.mxu0 0
    %10619 = vmatprep.mubr.bf16.mxu0 0
    %10620 = vmatmul.mubr.bf16.gmra.mrb[0].mxu0 %v10419
    %v10621 = vpop.f32.mrb[0].mxu0
    %v10622 = vadd.f32 0.0, %v10621
    %v10623 = vpop.f32.mrb[0].mxu0
    %v10624 = vpop.f32.mrb[0].mxu0
    %v10625 = vadd.f32 0.0, %v10624
    %v10626 = vpop.f32.mrb[0].mxu0
    %10627 = vmatprep.mubr.bf16.mxu0 0
    %10628 = vmatmul.mubr.bf16.gmra.mrb[0].mxu0 %v10421
    %v10629 = vpop.f32.mrb[0].mxu0
    %v10630 = vadd.f32 0.0, %v10629
    %v10631 = vpop.f32.mrb[0].mxu0
    %v10632 = vpop.f32.mrb[0].mxu0
    %v10633 = vadd.f32 0.0, %v10632
    %v10634 = vpop.f32.mrb[0].mxu0
    %10635 = vmatprep.mubr.bf16.mxu0 0
    %10636 = vmatmul.mubr.bf16.gmra.mrb[0].mxu0 %v10423
    %v10637 = vpop.f32.mrb[0].mxu0
    %v10638 = vadd.f32 0.0, %v10637
    %v10639 = vpop.f32.mrb[0].mxu0
    %v10640 = vpop.f32.mrb[0].mxu0
    %v10641 = vadd.f32 0.0, %v10640
    %v10642 = vpop.f32.mrb[0].mxu0
    %10643 = vmatprep.mubr.bf16.mxu0 0
    %10644 = vmatmul.mubr.bf16.gmra.mrb[0].mxu0 %v10425
    %v10645 = vpop.f32.mrb[0].mxu0
    %v10646 = vadd.f32 0.0, %v10645
    %v10647 = vpop.f32.mrb[0].mxu0
    %v10648 = vpop.f32.mrb[0].mxu0
    %v10649 = vadd.f32 0.0, %v10648
    %v10650 = vpop.f32.mrb[0].mxu0
    %10651 = vmatprep.mubr.bf16.mxu0 0
    %10652 = vmatmul.mubr.bf16.gmra.mrb[0].mxu0 %v10427
    %v10653 = vpop.f32.mrb[0].mxu0
    %v10654 = vadd.f32 0.0, %v10653
    %v10655 = vpop.f32.mrb[0].mxu0
    %v10656 = vpop.f32.mrb[0].mxu0
    %v10657 = vadd.f32 0.0, %v10656
    %v10658 = vpop.f32.mrb[0].mxu0
    %10659 = vmatprep.mubr.bf16.mxu0 0
    %10660 = vmatmul.mubr.bf16.gmra.mrb[0].mxu0 %v10429
    %v10661 = vpop.f32.mrb[0].mxu0
    %v10662 = vadd.f32 0.0, %v10661
    %v10663 = vpop.f32.mrb[0].mxu0
    %v10664 = vpop.f32.mrb[0].mxu0
    %v10665 = vadd.f32 0.0, %v10664
    %v10666 = vpop.f32.mrb[0].mxu0
    %10667 = vmatprep.mubr.bf16.mxu0 0
    %10668 = vmatmul.mubr.bf16.gmra.mrb[0].mxu0 %v10431
    %v10669 = vpop.f32.mrb[0].mxu0
    %v10670 = vadd.f32 0.0, %v10669
    %v10671 = vpop.f32.mrb[0].mxu0
    %v10672 = vpop.f32.mrb[0].mxu0
    %v10673 = vadd.f32 0.0, %v10672
    %v10674 = vpop.f32.mrb[0].mxu0
    %10675 = vmatprep.mubr.bf16.mxu0 0
    %10676 = vmatmul.mubr.bf16.gmra.mrb[0].mxu0 %v10433
    %v10677 = vpop.f32.mrb[0].mxu0
    %v10678 = vadd.f32 0.0, %v10677
    %v10679 = vpop.f32.mrb[0].mxu0
    %v10680 = vpop.f32.mrb[0].mxu0
    %v10681 = vadd.f32 0.0, %v10680
    %v10682 = vpop.f32.mrb[0].mxu0
    %10683 = vmatprep.mubr.bf16.mxu0 0
    %10684 = vmatmul.mubr.bf16.gmra.mrb[0].mxu0 %v10435
    %v10685 = vpop.f32.mrb[0].mxu0
    %v10686 = vadd.f32 0.0, %v10685
    %v10687 = vpop.f32.mrb[0].mxu0
    %v10688 = vpop.f32.mrb[0].mxu0
    %v10689 = vadd.f32 0.0, %v10688
    %v10690 = vpop.f32.mrb[0].mxu0
    %10691 = vmatprep.mubr.bf16.mxu0 0
    %10692 = vmatmul.mubr.bf16.gmra.mrb[0].mxu0 %v10437
    %v10693 = vpop.f32.mrb[0].mxu0
    %v10694 = vadd.f32 0.0, %v10693
    %v10695 = vpop.f32.mrb[0].mxu0
    %v10696 = vpop.f32.mrb[0].mxu0
    %v10697 = vadd.f32 0.0, %v10696
    %v10698 = vpop.f32.mrb[0].mxu0
    %10699 = vmatprep.mubr.bf16.mxu0 0
    %10700 = vmatmul.mubr.bf16.gmra.mrb[0].mxu0 %v10439
    %v10701 = vpop.f32.mrb[0].mxu0
    %v10702 = vadd.f32 0.0, %v10701
    %v10703 = vpop.f32.mrb[0].mxu0
    %v10704 = vpop.f32.mrb[0].mxu0
    %v10705 = vadd.f32 0.0, %v10704
    %v10706 = vpop.f32.mrb[0].mxu0
    %10707 = vmatprep.mubr.bf16.mxu0 0
    %10708 = vmatmul.mubr.bf16.gmra.mrb[0].mxu0 %v10441
    %v10709 = vpop.f32.mrb[0].mxu0
    %v10710 = vadd.f32 0.0, %v10709
    %v10711 = vpop.f32.mrb[0].mxu0
    %v10712 = vpop.f32.mrb[0].mxu0
    %v10713 = vadd.f32 0.0, %v10712
    %v10714 = vpop.f32.mrb[0].mxu0
    %10715 = vmatprep.mubr.bf16.mxu0 0
    %10716 = vmatmul.mubr.bf16.gmra.mrb[0].mxu0 %v10443
    %v10717 = vpop.f32.mrb[0].mxu0
    %v10718 = vadd.f32 0.0, %v10717
    %v10719 = vpop.f32.mrb[0].mxu0
    %v10720 = vpop.f32.mrb[0].mxu0
    %v10721 = vadd.f32 0.0, %v10720
    %v10722 = vpop.f32.mrb[0].mxu0
    %10723 = vmatprep.mubr.bf16.mxu0 0
    %10724 = vmatmul.mubr.bf16.gmra.mrb[0].mxu0 %v10445
    %v10725 = vpop.f32.mrb[0].mxu0
    %v10726 = vadd.f32 0.0, %v10725
    %v10727 = vpop.f32.mrb[0].mxu0
    %v10728 = vpop.f32.mrb[0].mxu0
    %v10729 = vadd.f32 0.0, %v10728
    %v10730 = vpop.f32.mrb[0].mxu0
    %10731 = vmatprep.mubr.bf16.mxu0 0
    %10732 = vmatmul.mubr.bf16.gmra.mrb[0].mxu0 %v10447
    %v10733 = vpop.f32.mrb[0].mxu0
    %v10734 = vadd.f32 0.0, %v10733
    %v10735 = vpop.f32.mrb[0].mxu0
    %v10736 = vpop.f32.mrb[0].mxu0
    %v10737 = vadd.f32 0.0, %v10736
    %v10738 = vpop.f32.mrb[0].mxu0
    %10739 = vmatprep.mubr.bf16.mxu0 0
    %10740 = vmatmul.mubr.bf16.gmra.mrb[0].mxu0 %v10449
    %v10741 = vpop.f32.mrb[0].mxu0
    %v10742 = vadd.f32 0.0, %v10741
    %v10743 = vpop.f32.mrb[0].mxu0
    %v10744 = vpop.f32.mrb[0].mxu0
    %v10745 = vadd.f32 0.0, %v10744
    %v10746 = vpop.f32.mrb[0].mxu0
    %10747 = vmatprep.mubr.bf16.mxu0 0
    %10748 = vmatmul.mubr.bf16.gmra.mrb[0].mxu0 %v10451
    %v10749 = vpop.f32.mrb[0].mxu0
    %v10750 = vadd.f32 0.0, %v10749
    %v10751 = vpop.f32.mrb[0].mxu0
    %v10752 = vpop.f32.mrb[0].mxu0
    %v10753 = vadd.f32 0.0, %v10752
    %v10754 = vpop.f32.mrb[0].mxu0
    %10755 = vmatprep.mubr.bf16.mxu0 0
    %10756 = vmatmul.mubr.bf16.gmra.mrb[0].mxu0 %v10453
    %v10757 = vpop.f32.mrb[0].mxu0
    %v10758 = vadd.f32 0.0, %v10757
    %v10759 = vpop.f32.mrb[0].mxu0
    %v10760 = vpop.f32.mrb[0].mxu0
    %v10761 = vadd.f32 0.0, %v10760
    %v10762 = vpop.f32.mrb[0].mxu0
    %10763 = vmatprep.mubr.bf16.mxu0 0
    %10764 = vmatmul.mubr.bf16.gmra.mrb[0].mxu0 %v10455
    %v10765 = vpop.f32.mrb[0].mxu0
    %v10766 = vadd.f32 0.0, %v10765
    %v10767 = vpop.f32.mrb[0].mxu0
    %v10768 = vpop.f32.mrb[0].mxu0
    %v10769 = vadd.f32 0.0, %v10768
    %v10770 = vpop.f32.mrb[0].mxu0
    %10771 = vmatprep.mubr.bf16.mxu0 0
    %10772 = vmatmul.mubr.bf16.gmra.mrb[0].mxu0 %v10457
    %v10773 = vpop.f32.mrb[0].mxu0
    %v10774 = vadd.f32 0.0, %v10773
    %v10775 = vpop.f32.mrb[0].mxu0
    %v10776 = vpop.f32.mrb[0].mxu0
    %v10777 = vadd.f32 0.0, %v10776
    %v10778 = vpop.f32.mrb[0].mxu0
    %10779 = vmatprep.mubr.bf16.mxu0 0
    %10780 = vmatmul.mubr.bf16.gmra.mrb[0].mxu0 %v10459
    %v10781 = vpop.f32.mrb[0].mxu0
    %v10782 = vadd.f32 0.0, %v10781
    %v10783 = vpop.f32.mrb[0].mxu0
    %v10784 = vpop.f32.mrb[0].mxu0
    %v10785 = vadd.f32 0.0, %v10784
    %v10786 = vpop.f32.mrb[0].mxu0
    %10787 = vmatprep.mubr.bf16.mxu0 0
    %10788 = vmatmul.mubr.bf16.gmra.mrb[0].mxu0 %v10461
    %v10789 = vpop.f32.mrb[0].mxu0
    %v10790 = vadd.f32 0.0, %v10789
    %v10791 = vpop.f32.mrb[0].mxu0
    %v10792 = vpop.f32.mrb[0].mxu0
    %v10793 = vadd.f32 0.0, %v10792
    %v10794 = vpop.f32.mrb[0].mxu0
    %10795 = vmatprep.mubr.bf16.mxu0 0
    %10796 = vmatmul.mubr.bf16.gmra.mrb[0].mxu0 %v10463
    %v10797 = vpop.f32.mrb[0].mxu0
    %v10798 = vadd.f32 0.0, %v10797
    %v10799 = vpop.f32.mrb[0].mxu0
    %v10800 = vpop.f32.mrb[0].mxu0
    %v10801 = vadd.f32 0.0, %v10800
    %v10802 = vpop.f32.mrb[0].mxu0
    %10803 = vmatprep.mubr.bf16.mxu0 0
    %10804 = vmatmul.mubr.bf16.gmra.mrb[0].mxu0 %v10465
    %v10805 = vpop.f32.mrb[0].mxu0
    %v10806 = vadd.f32 0.0, %v10805
    %v10807 = vpop.f32.mrb[0].mxu0
    %v10808 = vpop.f32.mrb[0].mxu0
    %v10809 = vadd.f32 0.0, %v10808
    %v10810 = vpop.f32.mrb[0].mxu0
    %10811 = vmatprep.mubr.bf16.mxu0 0
    %10812 = vmatmul.mubr.bf16.gmra.mrb[0].mxu0 %v10467
    %v10813 = vpop.f32.mrb[0].mxu0
    %v10814 = vadd.f32 0.0, %v10813
    %v10815 = vpop.f32.mrb[0].mxu0
    %v10816 = vpop.f32.mrb[0].mxu0
    %v10817 = vadd.f32 0.0, %v10816
    %v10818 = vpop.f32.mrb[0].mxu0
    %10819 = vmatprep.mubr.bf16.mxu0 0
    %10820 = vmatmul.mubr.bf16.gmra.mrb[0].mxu0 %v10469
    %v10821 = vpop.f32.mrb[0].mxu0
    %v10822 = vadd.f32 0.0, %v10821
    %v10823 = vpop.f32.mrb[0].mxu0
    %v10824 = vpop.f32.mrb[0].mxu0
    %v10825 = vadd.f32 0.0, %v10824
    %v10826 = vpop.f32.mrb[0].mxu0
    %10827 = vmatprep.mubr.bf16.mxu0 0
    %10828 = vmatmul.mubr.bf16.gmra.mrb[0].mxu0 %v10471
    %v10829 = vpop.f32.mrb[0].mxu0
    %v10830 = vadd.f32 0.0, %v10829
    %v10831 = vpop.f32.mrb[0].mxu0
    %v10832 = vpop.f32.mrb[0].mxu0
    %v10833 = vadd.f32 0.0, %v10832
    %v10834 = vpop.f32.mrb[0].mxu0
    %10835 = vmatprep.mubr.bf16.mxu0 0
    %10836 = vmatmul.mubr.bf16.gmra.mrb[0].mxu0 %v10473
    %v10837 = vpop.f32.mrb[0].mxu0
    %v10838 = vadd.f32 0.0, %v10837
    %v10839 = vpop.f32.mrb[0].mxu0
    %v10840 = vpop.f32.mrb[0].mxu0
    %v10841 = vadd.f32 0.0, %v10840
    %v10842 = vpop.f32.mrb[0].mxu0
    %10843 = vmatprep.mubr.bf16.mxu0 0
    %10844 = vmatmul.mubr.bf16.gmra.mrb[0].mxu0 %v10475
    %v10845 = vpop.f32.mrb[0].mxu0
    %v10846 = vadd.f32 0.0, %v10845
    %v10847 = vpop.f32.mrb[0].mxu0
    %v10848 = vpop.f32.mrb[0].mxu0
    %v10849 = vadd.f32 0.0, %v10848
    %v10850 = vpop.f32.mrb[0].mxu0
    %10851 = vmatprep.mubr.bf16.mxu0 0
    %10852 = vmatmul.mubr.bf16.gmra.mrb[0].mxu0 %v10477
    %v10853 = vpop.f32.mrb[0].mxu0
    %v10854 = vadd.f32 0.0, %v10853
    %v10855 = vpop.f32.mrb[0].mxu0
    %v10856 = vpop.f32.mrb[0].mxu0
    %v10857 = vadd.f32 0.0, %v10856
    %v10858 = vpop.f32.mrb[0].mxu0
    %10859 = vmatprep.mubr.bf16.mxu0 0
    %10860 = vmatmul.mubr.bf16.gmra.mrb[0].mxu0 %v10479
    %v10861 = vpop.f32.mrb[0].mxu0
    %v10862 = vadd.f32 0.0, %v10861
    %v10863 = vpop.f32.mrb[0].mxu0
    %v10864 = vpop.f32.mrb[0].mxu0
    %v10865 = vadd.f32 0.0, %v10864
    %v10866 = vpop.f32.mrb[0].mxu0
    %10867 = vmatprep.mubr.bf16.mxu0 0
    %10868 = vmatmul.mubr.bf16.gmra.mrb[0].mxu0 %v10481
    %v10869 = vpop.f32.mrb[0].mxu0
    %v10870 = vadd.f32 0.0, %v10869
    %v10871 = vpop.f32.mrb[0].mxu0
    %v10872 = vpop.f32.mrb[0].mxu0
    %v10873 = vadd.f32 0.0, %v10872
    %v10874 = vpop.f32.mrb[0].mxu0
    %10875 = vmatprep.mubr.bf16.mxu0 0
    %10876 = vmatmul.mubr.bf16.gmra.mrb[0].mxu0 %v10483
    %v10877 = vpop.f32.mrb[0].mxu0
    %v10878 = vadd.f32 0.0, %v10877
    %v10879 = vpop.f32.mrb[0].mxu0
    %v10880 = vpop.f32.mrb[0].mxu0
    %v10881 = vadd.f32 0.0, %v10880
    %v10882 = vpop.f32.mrb[0].mxu0
    %10883 = vmatprep.mubr.bf16.mxu0 0
    %10884 = vmatmul.mubr.bf16.gmra.mrb[0].mxu0 %v10485
    %v10885 = vpop.f32.mrb[0].mxu0
    %v10886 = vadd.f32 0.0, %v10885
    %v10887 = vpop.f32.mrb[0].mxu0
    %v10888 = vpop.f32.mrb[0].mxu0
    %v10889 = vadd.f32 0.0, %v10888
    %v10890 = vpop.f32.mrb[0].mxu0
    %10891 = vmatprep.mubr.bf16.mxu0 0
    %10892 = vmatmul.mubr.bf16.gmra.mrb[0].mxu0 %v10487
    %v10893 = vpop.f32.mrb[0].mxu0
    %v10894 = vadd.f32 0.0, %v10893
    %v10895 = vpop.f32.mrb[0].mxu0
    %v10896 = vpop.f32.mrb[0].mxu0
    %v10897 = vadd.f32 0.0, %v10896
    %v10898 = vpop.f32.mrb[0].mxu0
    %10899 = vmatprep.mubr.bf16.mxu0 0
    %10900 = vmatmul.mubr.bf16.gmra.mrb[0].mxu0 %v10489
    %v10901 = vpop.f32.mrb[0].mxu0
    %v10902 = vadd.f32 0.0, %v10901
    %v10903 = vpop.f32.mrb[0].mxu0
    %v10904 = vpop.f32.mrb[0].mxu0
    %v10905 = vadd.f32 0.0, %v10904
    %v10906 = vpop.f32.mrb[0].mxu0
    %10907 = vmatprep.mubr.bf16.mxu0 0
    %10908 = vmatmul.mubr.bf16.gmra.mrb[0].mxu0 %v10491
    %v10909 = vpop.f32.mrb[0].mxu0
    %v10910 = vadd.f32 0.0, %v10909
    %v10911 = vpop.f32.mrb[0].mxu0
    %v10912 = vpop.f32.mrb[0].mxu0
    %v10913 = vadd.f32 0.0, %v10912
    %v10914 = vpop.f32.mrb[0].mxu0
    %10915 = vmatprep.mubr.bf16.mxu0 0
    %10916 = vmatmul.mubr.bf16.gmra.mrb[0].mxu0 %v10493
    %v10917 = vpop.f32.mrb[0].mxu0
    %v10918 = vadd.f32 0.0, %v10917
    %v10919 = vpop.f32.mrb[0].mxu0
    %v10920 = vpop.f32.mrb[0].mxu0
    %v10921 = vadd.f32 0.0, %v10920
    %v10922 = vpop.f32.mrb[0].mxu0
    %10923 = vmatprep.mubr.bf16.mxu0 0
    %10924 = vmatmul.mubr.bf16.gmra.mrb[0].mxu0 %v10495
    %v10925 = vpop.f32.mrb[0].mxu0
    %v10926 = vadd.f32 0.0, %v10925
    %v10927 = vpop.f32.mrb[0].mxu0
    %v10928 = vpop.f32.mrb[0].mxu0
    %v10929 = vadd.f32 0.0, %v10928
    %v10930 = vpop.f32.mrb[0].mxu0
    %10931 = vmatprep.mubr.bf16.mxu0 0
    %10932 = vmatmul.mubr.bf16.gmra.mrb[0].mxu0 %v10497
    %v10933 = vpop.f32.mrb[0].mxu0
    %v10934 = vadd.f32 0.0, %v10933
    %v10935 = vpop.f32.mrb[0].mxu0
    %v10936 = vpop.f32.mrb[0].mxu0
    %v10937 = vadd.f32 0.0, %v10936
    %v10938 = vpop.f32.mrb[0].mxu0
    %10939 = vmatprep.mubr.bf16.mxu0 0
    %10940 = vmatmul.mubr.bf16.gmra.mrb[0].mxu0 %v10496
    %v10941 = vpop.f32.mrb[0].mxu0
    %v10942 = vadd.f32 0.0, %v10941
    %v10943 = vpop.f32.mrb[0].mxu0
    %v10944 = vpop.f32.mrb[0].mxu0
    %v10945 = vpop.f32.mrb[0].mxu0
    %10946 = vdwg.mxu0
    %v10947 = vadd.f32 %v10314, %v10622
    %v10948 = vadd.f32 %v10315, %v10625
    %v10949 = vadd.f32 %v10316, %v10630
    %v10950 = vadd.f32 %v10317, %v10633
    %v10951 = vadd.f32 %v10318, %v10638
    %v10952 = vadd.f32 %v10319, %v10641
    %v10953 = vadd.f32 %v10320, %v10646
    %v10954 = vadd.f32 %v10321, %v10649
    %v10955 = vadd.f32 %v10322, %v10654
    %v10956 = vadd.f32 %v10323, %v10657
    %v10957 = vadd.f32 %v10324, %v10662
    %v10958 = vadd.f32 %v10325, %v10665
    %v10959 = vadd.f32 %v10326, %v10670
    %v10960 = vadd.f32 %v10327, %v10673
    %v10961 = vadd.f32 %v10328, %v10678
    %v10962 = vadd.f32 %v10329, %v10681
    %v10963 = vadd.f32 %v10330, %v10686
    %v10964 = vadd.f32 %v10331, %v10689
    %v10965 = vadd.f32 %v10332, %v10694
    %v10966 = vadd.f32 %v10333, %v10697
    %v10967 = vadd.f32 %v10334, %v10702
    %v10968 = vadd.f32 %v10335, %v10705
    %v10969 = vadd.f32 %v10336, %v10710
    %v10970 = vadd.f32 %v10337, %v10713
    %v10971 = vadd.f32 %v10338, %v10718
    %v10972 = vadd.f32 %v10339, %v10721
    %v10973 = vadd.f32 %v10340, %v10726
    %v10974 = vadd.f32 %v10341, %v10729
    %v10975 = vadd.f32 %v10342, %v10734
    %v10976 = vadd.f32 %v10343, %v10737
    %v10977 = vadd.f32 %v10344, %v10742
    %v10978 = vadd.f32 %v10345, %v10745
    %v10979 = vadd.f32 %v10346, %v10750
    %v10980 = vadd.f32 %v10347, %v10753
    %v10981 = vadd.f32 %v10348, %v10758
    %v10982 = vadd.f32 %v10349, %v10761
    %v10983 = vadd.f32 %v10350, %v10766
    %v10984 = vadd.f32 %v10351, %v10769
    %v10985 = vadd.f32 %v10352, %v10774
    %v10986 = vadd.f32 %v10353, %v10777
    %v10987 = vadd.f32 %v10354, %v10782
    %v10988 = vadd.f32 %v10355, %v10785
    %v10989 = vadd.f32 %v10356, %v10790
    %v10990 = vadd.f32 %v10357, %v10793
    %v10991 = vadd.f32 %v10358, %v10798
    %v10992 = vadd.f32 %v10359, %v10801
    %v10993 = vadd.f32 %v10360, %v10806
    %v10994 = vadd.f32 %v10361, %v10809
    %v10995 = vadd.f32 %v10362, %v10814
    %v10996 = vadd.f32 %v10363, %v10817
    %v10997 = vadd.f32 %v10364, %v10822
    %v10998 = vadd.f32 %v10365, %v10825
    %v10999 = vadd.f32 %v10366, %v10830
    %v11000 = vadd.f32 %v10367, %v10833
    %v11001 = vadd.f32 %v10368, %v10838
    %v11002 = vadd.f32 %v10369, %v10841
    %v11003 = vadd.f32 %v10370, %v10846
    %v11004 = vadd.f32 %v10371, %v10849
    %v11005 = vadd.f32 %v10372, %v10854
    %v11006 = vadd.f32 %v10373, %v10857
    %v11007 = vadd.f32 %v10374, %v10862
    %v11008 = vadd.f32 %v10375, %v10865
    %v11009 = vadd.f32 %v10376, %v10870
    %v11010 = vadd.f32 %v10377, %v10873
    %v11011 = vadd.f32 %v10378, %v10878
    %v11012 = vadd.f32 %v10379, %v10881
    %v11013 = vadd.f32 %v10380, %v10886
    %v11014 = vadd.f32 %v10381, %v10889
    %v11015 = vadd.f32 %v10382, %v10894
    %v11016 = vadd.f32 %v10383, %v10897
    %v11017 = vadd.f32 %v10384, %v10902
    %v11018 = vadd.f32 %v10385, %v10905
    %v11019 = vadd.f32 %v10386, %v10910
    %v11020 = vadd.f32 %v10387, %v10913
    %v11021 = vadd.f32 %v10388, %v10918
    %v11022 = vadd.f32 %v10389, %v10921
    %v11023 = vadd.f32 %v10390, %v10926
    %v11024 = vadd.f32 %v10391, %v10929
    %v11025 = vadd.f32 %v10392, %v10934
    %v11026 = vadd.f32 %v10393, %v10937
    %v11027 = vadd.f32 %v10394, %v10942
    %v11028 = vld [vmem:[#allocation2 + $0x158] sm:$0x3]
    %s11029 = scalar_lea.vmem [#allocation8], 512
    %v11030 = vld [vmem:[%s11029] sm:$0xf]
    %v11031 = vld [vmem:[%s11029 + $0x4] sm:$0xf]
    %v11032 = vld [vmem:[%s11029 + $0x8] sm:$0xf]
    %v11033 = vld [vmem:[%s11029 + $0xc] sm:$0xf]
    %v11034 = vld [vmem:[%s11029 + $0x10] sm:$0xf]
    %v11035 = vld [vmem:[%s11029 + $0x14] sm:$0xf]
    %v11036 = vld [vmem:[%s11029 + $0x18] sm:$0xf]
    %v11037 = vld [vmem:[%s11029 + $0x1c] sm:$0xf]
    %v11038 = vld [vmem:[%s11029 + $0x20] sm:$0xf]
    %v11039 = vld [vmem:[%s11029 + $0x24] sm:$0xf]
    %v11040 = vld [vmem:[%s11029 + $0x28] sm:$0xf]
    %v11041 = vld [vmem:[%s11029 + $0x2c] sm:$0xf]
    %v11042 = vld [vmem:[%s11029 + $0x30] sm:$0xf]
    %v11043 = vld [vmem:[%s11029 + $0x34] sm:$0xf]
    %v11044 = vld [vmem:[%s11029 + $0x38] sm:$0xf]
    %v11045 = vld [vmem:[%s11029 + $0x3c] sm:$0xf]
    %v11047 = vunpack.c.l.b16 %v11028
    %v11048 = vpack.c.b16 %v11047, %v9495
    %vm11049 = vsmask.f32 6400
    %v11051 = vshrl.u32 %v10415, 16
    %v11053 = vrot.slane %v11051, 1
    %v11054 = vshll.u32 %v10415, 16
    %v11056 = vrot.slane %v11054, 2
    %v11057 = vor.u32 %v11053, %v11056
    %v11058 = vrot.slane %v9550, 1
    %v11059 = vrot.slane %v9546, 2
    %v11060 = vor.u32 %v11058, %v11059
    %v11061 = vsel %vm11049, %v11057, %v11060
    %v11062 = vrot.slane %v9558, 1
    %v11063 = vrot.slane %v9554, 2
    %v11064 = vor.u32 %v11062, %v11063
    %v11065 = vsel %vm11049, %v11060, %v11064
    %v11066 = vrot.slane %v9566, 1
    %v11067 = vrot.slane %v9562, 2
    %v11068 = vor.u32 %v11066, %v11067
    %v11069 = vsel %vm11049, %v11064, %v11068
    %v11070 = vrot.slane %v9574, 1
    %v11071 = vrot.slane %v9570, 2
    %v11072 = vor.u32 %v11070, %v11071
    %v11073 = vsel %vm11049, %v11068, %v11072
    %v11074 = vrot.slane %v9582, 1
    %v11075 = vrot.slane %v9578, 2
    %v11076 = vor.u32 %v11074, %v11075
    %v11077 = vsel %vm11049, %v11072, %v11076
    %v11078 = vrot.slane %v9590, 1
    %v11079 = vrot.slane %v9586, 2
    %v11080 = vor.u32 %v11078, %v11079
    %v11081 = vsel %vm11049, %v11076, %v11080
    %v11082 = vrot.slane %v9598, 1
    %v11083 = vrot.slane %v9594, 2
    %v11084 = vor.u32 %v11082, %v11083
    %v11085 = vsel %vm11049, %v11080, %v11084
    %v11086 = vrot.slane %v9606, 1
    %v11087 = vrot.slane %v9602, 2
    %v11088 = vor.u32 %v11086, %v11087
    %v11089 = vsel %vm11049, %v11084, %v11088
    %v11090 = vrot.slane %v9614, 1
    %v11091 = vrot.slane %v9610, 2
    %v11092 = vor.u32 %v11090, %v11091
    %v11093 = vsel %vm11049, %v11088, %v11092
    %v11094 = vrot.slane %v9622, 1
    %v11095 = vrot.slane %v9618, 2
    %v11096 = vor.u32 %v11094, %v11095
    %v11097 = vsel %vm11049, %v11092, %v11096
    %v11098 = vrot.slane %v9630, 1
    %v11099 = vrot.slane %v9626, 2
    %v11100 = vor.u32 %v11098, %v11099
    %v11101 = vsel %vm11049, %v11096, %v11100
    %v11102 = vrot.slane %v9638, 1
    %v11103 = vrot.slane %v9634, 2
    %v11104 = vor.u32 %v11102, %v11103
    %v11105 = vsel %vm11049, %v11100, %v11104
    %v11106 = vrot.slane %v9646, 1
    %v11107 = vrot.slane %v9642, 2
    %v11108 = vor.u32 %v11106, %v11107
    %v11109 = vsel %vm11049, %v11104, %v11108
    %v11110 = vrot.slane %v9654, 1
    %v11111 = vrot.slane %v9650, 2
    %v11112 = vor.u32 %v11110, %v11111
    %v11113 = vsel %vm11049, %v11108, %v11112
    %v11114 = vrot.slane %v9662, 1
    %v11115 = vrot.slane %v9658, 2
    %v11116 = vor.u32 %v11114, %v11115
    %v11117 = vsel %vm11049, %v11112, %v11116
    %v11118 = vrot.slane %v9670, 1
    %v11119 = vrot.slane %v9666, 2
    %v11120 = vor.u32 %v11118, %v11119
    %v11121 = vsel %vm11049, %v11116, %v11120
    %v11122 = vrot.slane %v9678, 1
    %v11123 = vrot.slane %v9674, 2
    %v11124 = vor.u32 %v11122, %v11123
    %v11125 = vsel %vm11049, %v11120, %v11124
    %v11126 = vrot.slane %v9686, 1
    %v11127 = vrot.slane %v9682, 2
    %v11128 = vor.u32 %v11126, %v11127
    %v11129 = vsel %vm11049, %v11124, %v11128
    %v11130 = vrot.slane %v9694, 1
    %v11131 = vrot.slane %v9690, 2
    %v11132 = vor.u32 %v11130, %v11131
    %v11133 = vsel %vm11049, %v11128, %v11132
    %v11134 = vrot.slane %v9702, 1
    %v11135 = vrot.slane %v9698, 2
    %v11136 = vor.u32 %v11134, %v11135
    %v11137 = vsel %vm11049, %v11132, %v11136
    %v11138 = vrot.slane %v9710, 1
    %v11139 = vrot.slane %v9706, 2
    %v11140 = vor.u32 %v11138, %v11139
    %v11141 = vsel %vm11049, %v11136, %v11140
    %v11142 = vrot.slane %v9718, 1
    %v11143 = vrot.slane %v9714, 2
    %v11144 = vor.u32 %v11142, %v11143
    %v11145 = vsel %vm11049, %v11140, %v11144
    %v11146 = vrot.slane %v9726, 1
    %v11147 = vrot.slane %v9722, 2
    %v11148 = vor.u32 %v11146, %v11147
    %v11149 = vsel %vm11049, %v11144, %v11148
    %v11150 = vrot.slane %v9734, 1
    %v11151 = vrot.slane %v9730, 2
    %v11152 = vor.u32 %v11150, %v11151
    %v11153 = vsel %vm11049, %v11148, %v11152
    %v11154 = vrot.slane %v9742, 1
    %v11155 = vrot.slane %v9738, 2
    %v11156 = vor.u32 %v11154, %v11155
    %v11157 = vsel %vm11049, %v11152, %v11156
    %v11158 = vrot.slane %v9750, 1
    %v11159 = vrot.slane %v9746, 2
    %v11160 = vor.u32 %v11158, %v11159
    %v11161 = vsel %vm11049, %v11156, %v11160
    %v11162 = vrot.slane %v9758, 1
    %v11163 = vrot.slane %v9754, 2
    %v11164 = vor.u32 %v11162, %v11163
    %v11165 = vsel %vm11049, %v11160, %v11164
    %v11166 = vrot.slane %v9766, 1
    %v11167 = vrot.slane %v9762, 2
    %v11168 = vor.u32 %v11166, %v11167
    %v11169 = vsel %vm11049, %v11164, %v11168
    %v11170 = vrot.slane %v9774, 1
    %v11171 = vrot.slane %v9770, 2
    %v11172 = vor.u32 %v11170, %v11171
    %v11173 = vsel %vm11049, %v11168, %v11172
    %v11174 = vrot.slane %v9782, 1
    %v11175 = vrot.slane %v9778, 2
    %v11176 = vor.u32 %v11174, %v11175
    %v11177 = vsel %vm11049, %v11172, %v11176
    %v11178 = vrot.slane %v9790, 1
    %v11179 = vrot.slane %v9786, 2
    %v11180 = vor.u32 %v11178, %v11179
    %v11181 = vsel %vm11049, %v11176, %v11180
    %v11182 = vrot.slane %v9798, 1
    %v11183 = vrot.slane %v9794, 2
    %v11184 = vor.u32 %v11182, %v11183
    %v11185 = vsel %vm11049, %v11180, %v11184
    %v11186 = vrot.slane %v9806, 1
    %v11187 = vrot.slane %v9802, 2
    %v11188 = vor.u32 %v11186, %v11187
    %v11189 = vsel %vm11049, %v11184, %v11188
    %v11190 = vrot.slane %v9814, 1
    %v11191 = vrot.slane %v9810, 2
    %v11192 = vor.u32 %v11190, %v11191
    %v11193 = vsel %vm11049, %v11188, %v11192
    %v11194 = vrot.slane %v9822, 1
    %v11195 = vrot.slane %v9818, 2
    %v11196 = vor.u32 %v11194, %v11195
    %v11197 = vsel %vm11049, %v11192, %v11196
    %v11198 = vrot.slane %v9830, 1
    %v11199 = vrot.slane %v9826, 2
    %v11200 = vor.u32 %v11198, %v11199
    %v11201 = vsel %vm11049, %v11196, %v11200
    %v11202 = vrot.slane %v9838, 1
    %v11203 = vrot.slane %v9834, 2
    %v11204 = vor.u32 %v11202, %v11203
    %v11205 = vsel %vm11049, %v11200, %v11204
    %v11206 = vrot.slane %v9846, 1
    %v11207 = vrot.slane %v9842, 2
    %v11208 = vor.u32 %v11206, %v11207
    %v11209 = vsel %vm11049, %v11204, %v11208
    %v11210 = vrot.slane %v9854, 1
    %v11211 = vrot.slane %v9850, 2
    %v11212 = vor.u32 %v11210, %v11211
    %v11213 = vsel %vm11049, %v11208, %v11212
    %v11215 = vshrl.u32 %v11048, 16
    %v11217 = vrot.slane %v11215, 1
    %v11218 = vshll.u32 %v11048, 16
    %v11220 = vrot.slane %v11218, 2
    %v11221 = vor.u32 %v11217, %v11220
    %v11222 = vsel %vm11049, %v11212, %v11221
    %v11280 = vunpack.c.l.b16 %v11030
    %v11281 = vunpack.c.l.b16 %v11031
    %v11282 = vunpack.c.l.b16 %v11032
    %v11283 = vunpack.c.l.b16 %v11033
    %v11284 = vunpack.c.l.b16 %v11034
    %v11285 = vunpack.c.l.b16 %v11035
    %v11286 = vunpack.c.l.b16 %v11036
    %v11287 = vunpack.c.l.b16 %v11037
    %v11288 = vunpack.c.l.b16 %v11038
    %v11289 = vunpack.c.l.b16 %v11039
    %v11290 = vunpack.c.l.b16 %v11040
    %v11291 = vunpack.c.l.b16 %v11041
    %v11292 = vunpack.c.l.b16 %v11042
    %v11293 = vunpack.c.l.b16 %v11043
    %v11294 = vunpack.c.l.b16 %v11044
    %v11295 = vunpack.c.l.b16 %v11045
    %v11296 = vpack.c.b16 %v11281, %v11280
    %v11297 = vpack.c.b16 %v11283, %v11282
    %v11298 = vpack.c.b16 %v11285, %v11284
    %v11299 = vpack.c.b16 %v11287, %v11286
    %v11300 = vpack.c.b16 %v11289, %v11288
    %v11301 = vpack.c.b16 %v11291, %v11290
    %v11302 = vpack.c.b16 %v11293, %v11292
    %v11303 = vpack.c.b16 %v11295, %v11294
    %11312 = vmatprep.subr.bf16.mxu0 0
    %11313 = vmatpush1.bf16.msra.mxu0 %v11296
    %11314 = vmatprep.subr.bf16.mxu0 0
    %11315 = vmatpush1.bf16.msra.mxu0 %v11297
    %11316 = vmatprep.subr.bf16.mxu0 0
    %11317 = vmatpush1.bf16.msra.mxu0 %v11298
    %11318 = vmatprep.subr.bf16.mxu0 0
    %11319 = vmatpush1.bf16.msra.mxu0 %v11299
    %11320 = vmatprep.subr.bf16.mxu0 0
    %11321 = vmatpush1.bf16.msra.mxu0 %v11300
    %11322 = vmatprep.subr.bf16.mxu0 0
    %11323 = vmatpush1.bf16.msra.mxu0 %v11301
    %11324 = vmatprep.subr.bf16.mxu0 0
    %11325 = vmatpush1.bf16.msra.mxu0 %v11302
    %11326 = vmatprep.subr.bf16.mxu0 0
    %11327 = vmatpush1.bf16.msra.mxu0 %v11303
    %11328 = vmatprep.subr.bf16.mxu0 0
    %11329 = vmatpush1.bf16.msra.mxu0 0
    %11330 = vmatprep.subr.bf16.mxu0 0
    %11331 = vmatpush1.bf16.msra.mxu0 0
    %11332 = vmatprep.subr.bf16.mxu0 0
    %11333 = vmatpush1.bf16.msra.mxu0 0
    %11334 = vmatprep.subr.bf16.mxu0 0
    %11335 = vmatpush1.bf16.msra.mxu0 0
    %11336 = vmatprep.subr.bf16.mxu0 0
    %11337 = vmatpush1.bf16.msra.mxu0 0
    %11338 = vmatprep.subr.bf16.mxu0 0
    %11339 = vmatpush1.bf16.msra.mxu0 0
    %11340 = vmatprep.subr.bf16.mxu0 0
    %11341 = vmatpush1.bf16.msra.mxu0 0
    %11342 = vmatprep.subr.bf16.mxu0 0
    %11343 = vmatpush1.bf16.msra.mxu0 0
    %11344 = vmatprep.mubr.bf16.mxu0 0
    %11345 = vmatmul.mubr.bf16.gmra.mrb[0].mxu0 %v11061
    %v11346 = vpop.f32.mrb[0].mxu0
    %v11347 = vadd.f32 0.0, %v11346
    %v11348 = vpop.f32.mrb[0].mxu0
    %v11349 = vpop.f32.mrb[0].mxu0
    %v11350 = vadd.f32 0.0, %v11349
    %v11351 = vpop.f32.mrb[0].mxu0
    %11352 = vmatprep.mubr.bf16.mxu0 0
    %11353 = vmatmul.mubr.bf16.gmra.mrb[0].mxu0 %v11065
    %v11354 = vpop.f32.mrb[0].mxu0
    %v11355 = vadd.f32 0.0, %v11354
    %v11356 = vpop.f32.mrb[0].mxu0
    %v11357 = vpop.f32.mrb[0].mxu0
    %v11358 = vadd.f32 0.0, %v11357
    %v11359 = vpop.f32.mrb[0].mxu0
    %11360 = vmatprep.mubr.bf16.mxu0 0
    %11361 = vmatmul.mubr.bf16.gmra.mrb[0].mxu0 %v11069
    %v11362 = vpop.f32.mrb[0].mxu0
    %v11363 = vadd.f32 0.0, %v11362
    %v11364 = vpop.f32.mrb[0].mxu0
    %v11365 = vpop.f32.mrb[0].mxu0
    %v11366 = vadd.f32 0.0, %v11365
    %v11367 = vpop.f32.mrb[0].mxu0
    %11368 = vmatprep.mubr.bf16.mxu0 0
    %11369 = vmatmul.mubr.bf16.gmra.mrb[0].mxu0 %v11073
    %v11370 = vpop.f32.mrb[0].mxu0
    %v11371 = vadd.f32 0.0, %v11370
    %v11372 = vpop.f32.mrb[0].mxu0
    %v11373 = vpop.f32.mrb[0].mxu0
    %v11374 = vadd.f32 0.0, %v11373
    %v11375 = vpop.f32.mrb[0].mxu0
    %11376 = vmatprep.mubr.bf16.mxu0 0
    %11377 = vmatmul.mubr.bf16.gmra.mrb[0].mxu0 %v11077
    %v11378 = vpop.f32.mrb[0].mxu0
    %v11379 = vadd.f32 0.0, %v11378
    %v11380 = vpop.f32.mrb[0].mxu0
    %v11381 = vpop.f32.mrb[0].mxu0
    %v11382 = vadd.f32 0.0, %v11381
    %v11383 = vpop.f32.mrb[0].mxu0
    %11384 = vmatprep.mubr.bf16.mxu0 0
    %11385 = vmatmul.mubr.bf16.gmra.mrb[0].mxu0 %v11081
    %v11386 = vpop.f32.mrb[0].mxu0
    %v11387 = vadd.f32 0.0, %v11386
    %v11388 = vpop.f32.mrb[0].mxu0
    %v11389 = vpop.f32.mrb[0].mxu0
    %v11390 = vadd.f32 0.0, %v11389
    %v11391 = vpop.f32.mrb[0].mxu0
    %11392 = vmatprep.mubr.bf16.mxu0 0
    %11393 = vmatmul.mubr.bf16.gmra.mrb[0].mxu0 %v11085
    %v11394 = vpop.f32.mrb[0].mxu0
    %v11395 = vadd.f32 0.0, %v11394
    %v11396 = vpop.f32.mrb[0].mxu0
    %v11397 = vpop.f32.mrb[0].mxu0
    %v11398 = vadd.f32 0.0, %v11397
    %v11399 = vpop.f32.mrb[0].mxu0
    %11400 = vmatprep.mubr.bf16.mxu0 0
    %11401 = vmatmul.mubr.bf16.gmra.mrb[0].mxu0 %v11089
    %v11402 = vpop.f32.mrb[0].mxu0
    %v11403 = vadd.f32 0.0, %v11402
    %v11404 = vpop.f32.mrb[0].mxu0
    %v11405 = vpop.f32.mrb[0].mxu0
    %v11406 = vadd.f32 0.0, %v11405
    %v11407 = vpop.f32.mrb[0].mxu0
    %11408 = vmatprep.mubr.bf16.mxu0 0
    %11409 = vmatmul.mubr.bf16.gmra.mrb[0].mxu0 %v11093
    %v11410 = vpop.f32.mrb[0].mxu0
    %v11411 = vadd.f32 0.0, %v11410
    %v11412 = vpop.f32.mrb[0].mxu0
    %v11413 = vpop.f32.mrb[0].mxu0
    %v11414 = vadd.f32 0.0, %v11413
    %v11415 = vpop.f32.mrb[0].mxu0
    %11416 = vmatprep.mubr.bf16.mxu0 0
    %11417 = vmatmul.mubr.bf16.gmra.mrb[0].mxu0 %v11097
    %v11418 = vpop.f32.mrb[0].mxu0
    %v11419 = vadd.f32 0.0, %v11418
    %v11420 = vpop.f32.mrb[0].mxu0
    %v11421 = vpop.f32.mrb[0].mxu0
    %v11422 = vadd.f32 0.0, %v11421
    %v11423 = vpop.f32.mrb[0].mxu0
    %11424 = vmatprep.mubr.bf16.mxu0 0
    %11425 = vmatmul.mubr.bf16.gmra.mrb[0].mxu0 %v11101
    %v11426 = vpop.f32.mrb[0].mxu0
    %v11427 = vadd.f32 0.0, %v11426
    %v11428 = vpop.f32.mrb[0].mxu0
    %v11429 = vpop.f32.mrb[0].mxu0
    %v11430 = vadd.f32 0.0, %v11429
    %v11431 = vpop.f32.mrb[0].mxu0
    %11432 = vmatprep.mubr.bf16.mxu0 0
    %11433 = vmatmul.mubr.bf16.gmra.mrb[0].mxu0 %v11105
    %v11434 = vpop.f32.mrb[0].mxu0
    %v11435 = vadd.f32 0.0, %v11434
    %v11436 = vpop.f32.mrb[0].mxu0
    %v11437 = vpop.f32.mrb[0].mxu0
    %v11438 = vadd.f32 0.0, %v11437
    %v11439 = vpop.f32.mrb[0].mxu0
    %11440 = vmatprep.mubr.bf16.mxu0 0
    %11441 = vmatmul.mubr.bf16.gmra.mrb[0].mxu0 %v11109
    %v11442 = vpop.f32.mrb[0].mxu0
    %v11443 = vadd.f32 0.0, %v11442
    %v11444 = vpop.f32.mrb[0].mxu0
    %v11445 = vpop.f32.mrb[0].mxu0
    %v11446 = vadd.f32 0.0, %v11445
    %v11447 = vpop.f32.mrb[0].mxu0
    %11448 = vmatprep.mubr.bf16.mxu0 0
    %11449 = vmatmul.mubr.bf16.gmra.mrb[0].mxu0 %v11113
    %v11450 = vpop.f32.mrb[0].mxu0
    %v11451 = vadd.f32 0.0, %v11450
    %v11452 = vpop.f32.mrb[0].mxu0
    %v11453 = vpop.f32.mrb[0].mxu0
    %v11454 = vadd.f32 0.0, %v11453
    %v11455 = vpop.f32.mrb[0].mxu0
    %11456 = vmatprep.mubr.bf16.mxu0 0
    %11457 = vmatmul.mubr.bf16.gmra.mrb[0].mxu0 %v11117
    %v11458 = vpop.f32.mrb[0].mxu0
    %v11459 = vadd.f32 0.0, %v11458
    %v11460 = vpop.f32.mrb[0].mxu0
    %v11461 = vpop.f32.mrb[0].mxu0
    %v11462 = vadd.f32 0.0, %v11461
    %v11463 = vpop.f32.mrb[0].mxu0
    %11464 = vmatprep.mubr.bf16.mxu0 0
    %11465 = vmatmul.mubr.bf16.gmra.mrb[0].mxu0 %v11121
    %v11466 = vpop.f32.mrb[0].mxu0
    %v11467 = vadd.f32 0.0, %v11466
    %v11468 = vpop.f32.mrb[0].mxu0
    %v11469 = vpop.f32.mrb[0].mxu0
    %v11470 = vadd.f32 0.0, %v11469
    %v11471 = vpop.f32.mrb[0].mxu0
    %11472 = vmatprep.mubr.bf16.mxu0 0
    %11473 = vmatmul.mubr.bf16.gmra.mrb[0].mxu0 %v11125
    %v11474 = vpop.f32.mrb[0].mxu0
    %v11475 = vadd.f32 0.0, %v11474
    %v11476 = vpop.f32.mrb[0].mxu0
    %v11477 = vpop.f32.mrb[0].mxu0
    %v11478 = vadd.f32 0.0, %v11477
    %v11479 = vpop.f32.mrb[0].mxu0
    %11480 = vmatprep.mubr.bf16.mxu0 0
    %11481 = vmatmul.mubr.bf16.gmra.mrb[0].mxu0 %v11129
    %v11482 = vpop.f32.mrb[0].mxu0
    %v11483 = vadd.f32 0.0, %v11482
    %v11484 = vpop.f32.mrb[0].mxu0
    %v11485 = vpop.f32.mrb[0].mxu0
    %v11486 = vadd.f32 0.0, %v11485
    %v11487 = vpop.f32.mrb[0].mxu0
    %11488 = vmatprep.mubr.bf16.mxu0 0
    %11489 = vmatmul.mubr.bf16.gmra.mrb[0].mxu0 %v11133
    %v11490 = vpop.f32.mrb[0].mxu0
    %v11491 = vadd.f32 0.0, %v11490
    %v11492 = vpop.f32.mrb[0].mxu0
    %v11493 = vpop.f32.mrb[0].mxu0
    %v11494 = vadd.f32 0.0, %v11493
    %v11495 = vpop.f32.mrb[0].mxu0
    %11496 = vmatprep.mubr.bf16.mxu0 0
    %11497 = vmatmul.mubr.bf16.gmra.mrb[0].mxu0 %v11137
    %v11498 = vpop.f32.mrb[0].mxu0
    %v11499 = vadd.f32 0.0, %v11498
    %v11500 = vpop.f32.mrb[0].mxu0
    %v11501 = vpop.f32.mrb[0].mxu0
    %v11502 = vadd.f32 0.0, %v11501
    %v11503 = vpop.f32.mrb[0].mxu0
    %11504 = vmatprep.mubr.bf16.mxu0 0
    %11505 = vmatmul.mubr.bf16.gmra.mrb[0].mxu0 %v11141
    %v11506 = vpop.f32.mrb[0].mxu0
    %v11507 = vadd.f32 0.0, %v11506
    %v11508 = vpop.f32.mrb[0].mxu0
    %v11509 = vpop.f32.mrb[0].mxu0
    %v11510 = vadd.f32 0.0, %v11509
    %v11511 = vpop.f32.mrb[0].mxu0
    %11512 = vmatprep.mubr.bf16.mxu0 0
    %11513 = vmatmul.mubr.bf16.gmra.mrb[0].mxu0 %v11145
    %v11514 = vpop.f32.mrb[0].mxu0
    %v11515 = vadd.f32 0.0, %v11514
    %v11516 = vpop.f32.mrb[0].mxu0
    %v11517 = vpop.f32.mrb[0].mxu0
    %v11518 = vadd.f32 0.0, %v11517
    %v11519 = vpop.f32.mrb[0].mxu0
    %11520 = vmatprep.mubr.bf16.mxu0 0
    %11521 = vmatmul.mubr.bf16.gmra.mrb[0].mxu0 %v11149
    %v11522 = vpop.f32.mrb[0].mxu0
    %v11523 = vadd.f32 0.0, %v11522
    %v11524 = vpop.f32.mrb[0].mxu0
    %v11525 = vpop.f32.mrb[0].mxu0
    %v11526 = vadd.f32 0.0, %v11525
    %v11527 = vpop.f32.mrb[0].mxu0
    %11528 = vmatprep.mubr.bf16.mxu0 0
    %11529 = vmatmul.mubr.bf16.gmra.mrb[0].mxu0 %v11153
    %v11530 = vpop.f32.mrb[0].mxu0
    %v11531 = vadd.f32 0.0, %v11530
    %v11532 = vpop.f32.mrb[0].mxu0
    %v11533 = vpop.f32.mrb[0].mxu0
    %v11534 = vadd.f32 0.0, %v11533
    %v11535 = vpop.f32.mrb[0].mxu0
    %11536 = vmatprep.mubr.bf16.mxu0 0
    %11537 = vmatmul.mubr.bf16.gmra.mrb[0].mxu0 %v11157
    %v11538 = vpop.f32.mrb[0].mxu0
    %v11539 = vadd.f32 0.0, %v11538
    %v11540 = vpop.f32.mrb[0].mxu0
    %v11541 = vpop.f32.mrb[0].mxu0
    %v11542 = vadd.f32 0.0, %v11541
    %v11543 = vpop.f32.mrb[0].mxu0
    %11544 = vmatprep.mubr.bf16.mxu0 0
    %11545 = vmatmul.mubr.bf16.gmra.mrb[0].mxu0 %v11161
    %v11546 = vpop.f32.mrb[0].mxu0
    %v11547 = vadd.f32 0.0, %v11546
    %v11548 = vpop.f32.mrb[0].mxu0
    %v11549 = vpop.f32.mrb[0].mxu0
    %v11550 = vadd.f32 0.0, %v11549
    %v11551 = vpop.f32.mrb[0].mxu0
    %11552 = vmatprep.mubr.bf16.mxu0 0
    %11553 = vmatmul.mubr.bf16.gmra.mrb[0].mxu0 %v11165
    %v11554 = vpop.f32.mrb[0].mxu0
    %v11555 = vadd.f32 0.0, %v11554
    %v11556 = vpop.f32.mrb[0].mxu0
    %v11557 = vpop.f32.mrb[0].mxu0
    %v11558 = vadd.f32 0.0, %v11557
    %v11559 = vpop.f32.mrb[0].mxu0
    %11560 = vmatprep.mubr.bf16.mxu0 0
    %11561 = vmatmul.mubr.bf16.gmra.mrb[0].mxu0 %v11169
    %v11562 = vpop.f32.mrb[0].mxu0
    %v11563 = vadd.f32 0.0, %v11562
    %v11564 = vpop.f32.mrb[0].mxu0
    %v11565 = vpop.f32.mrb[0].mxu0
    %v11566 = vadd.f32 0.0, %v11565
    %v11567 = vpop.f32.mrb[0].mxu0
    %11568 = vmatprep.mubr.bf16.mxu0 0
    %11569 = vmatmul.mubr.bf16.gmra.mrb[0].mxu0 %v11173
    %v11570 = vpop.f32.mrb[0].mxu0
    %v11571 = vadd.f32 0.0, %v11570
    %v11572 = vpop.f32.mrb[0].mxu0
    %v11573 = vpop.f32.mrb[0].mxu0
    %v11574 = vadd.f32 0.0, %v11573
    %v11575 = vpop.f32.mrb[0].mxu0
    %11576 = vmatprep.mubr.bf16.mxu0 0
    %11577 = vmatmul.mubr.bf16.gmra.mrb[0].mxu0 %v11177
    %v11578 = vpop.f32.mrb[0].mxu0
    %v11579 = vadd.f32 0.0, %v11578
    %v11580 = vpop.f32.mrb[0].mxu0
    %v11581 = vpop.f32.mrb[0].mxu0
    %v11582 = vadd.f32 0.0, %v11581
    %v11583 = vpop.f32.mrb[0].mxu0
    %11584 = vmatprep.mubr.bf16.mxu0 0
    %11585 = vmatmul.mubr.bf16.gmra.mrb[0].mxu0 %v11181
    %v11586 = vpop.f32.mrb[0].mxu0
    %v11587 = vadd.f32 0.0, %v11586
    %v11588 = vpop.f32.mrb[0].mxu0
    %v11589 = vpop.f32.mrb[0].mxu0
    %v11590 = vadd.f32 0.0, %v11589
    %v11591 = vpop.f32.mrb[0].mxu0
    %11592 = vmatprep.mubr.bf16.mxu0 0
    %11593 = vmatmul.mubr.bf16.gmra.mrb[0].mxu0 %v11185
    %v11594 = vpop.f32.mrb[0].mxu0
    %v11595 = vadd.f32 0.0, %v11594
    %v11596 = vpop.f32.mrb[0].mxu0
    %v11597 = vpop.f32.mrb[0].mxu0
    %v11598 = vadd.f32 0.0, %v11597
    %v11599 = vpop.f32.mrb[0].mxu0
    %11600 = vmatprep.mubr.bf16.mxu0 0
    %11601 = vmatmul.mubr.bf16.gmra.mrb[0].mxu0 %v11189
    %v11602 = vpop.f32.mrb[0].mxu0
    %v11603 = vadd.f32 0.0, %v11602
    %v11604 = vpop.f32.mrb[0].mxu0
    %v11605 = vpop.f32.mrb[0].mxu0
    %v11606 = vadd.f32 0.0, %v11605
    %v11607 = vpop.f32.mrb[0].mxu0
    %11608 = vmatprep.mubr.bf16.mxu0 0
    %11609 = vmatmul.mubr.bf16.gmra.mrb[0].mxu0 %v11193
    %v11610 = vpop.f32.mrb[0].mxu0
    %v11611 = vadd.f32 0.0, %v11610
    %v11612 = vpop.f32.mrb[0].mxu0
    %v11613 = vpop.f32.mrb[0].mxu0
    %v11614 = vadd.f32 0.0, %v11613
    %v11615 = vpop.f32.mrb[0].mxu0
    %11616 = vmatprep.mubr.bf16.mxu0 0
    %11617 = vmatmul.mubr.bf16.gmra.mrb[0].mxu0 %v11197
    %v11618 = vpop.f32.mrb[0].mxu0
    %v11619 = vadd.f32 0.0, %v11618
    %v11620 = vpop.f32.mrb[0].mxu0
    %v11621 = vpop.f32.mrb[0].mxu0
    %v11622 = vadd.f32 0.0, %v11621
    %v11623 = vpop.f32.mrb[0].mxu0
    %11624 = vmatprep.mubr.bf16.mxu0 0
    %11625 = vmatmul.mubr.bf16.gmra.mrb[0].mxu0 %v11201
    %v11626 = vpop.f32.mrb[0].mxu0
    %v11627 = vadd.f32 0.0, %v11626
    %v11628 = vpop.f32.mrb[0].mxu0
    %v11629 = vpop.f32.mrb[0].mxu0
    %v11630 = vadd.f32 0.0, %v11629
    %v11631 = vpop.f32.mrb[0].mxu0
    %11632 = vmatprep.mubr.bf16.mxu0 0
    %11633 = vmatmul.mubr.bf16.gmra.mrb[0].mxu0 %v11205
    %v11634 = vpop.f32.mrb[0].mxu0
    %v11635 = vadd.f32 0.0, %v11634
    %v11636 = vpop.f32.mrb[0].mxu0
    %v11637 = vpop.f32.mrb[0].mxu0
    %v11638 = vadd.f32 0.0, %v11637
    %v11639 = vpop.f32.mrb[0].mxu0
    %11640 = vmatprep.mubr.bf16.mxu0 0
    %11641 = vmatmul.mubr.bf16.gmra.mrb[0].mxu0 %v11209
    %v11642 = vpop.f32.mrb[0].mxu0
    %v11643 = vadd.f32 0.0, %v11642
    %v11644 = vpop.f32.mrb[0].mxu0
    %v11645 = vpop.f32.mrb[0].mxu0
    %v11646 = vadd.f32 0.0, %v11645
    %v11647 = vpop.f32.mrb[0].mxu0
    %11648 = vmatprep.mubr.bf16.mxu0 0
    %11649 = vmatmul.mubr.bf16.gmra.mrb[0].mxu0 %v11213
    %v11650 = vpop.f32.mrb[0].mxu0
    %v11651 = vadd.f32 0.0, %v11650
    %v11652 = vpop.f32.mrb[0].mxu0
    %v11653 = vpop.f32.mrb[0].mxu0
    %v11654 = vadd.f32 0.0, %v11653
    %v11655 = vpop.f32.mrb[0].mxu0
    %11656 = vmatprep.mubr.bf16.mxu0 0
    %11657 = vmatmul.mubr.bf16.gmra.mrb[0].mxu0 %v11222
    %v11658 = vpop.f32.mrb[0].mxu0
    %v11659 = vadd.f32 0.0, %v11658
    %v11660 = vpop.f32.mrb[0].mxu0
    %v11661 = vpop.f32.mrb[0].mxu0
    %v11662 = vadd.f32 0.0, %v11661
    %v11663 = vpop.f32.mrb[0].mxu0
    %11664 = vmatprep.mubr.bf16.mxu0 0
    %11665 = vmatmul.mubr.bf16.gmra.mrb[0].mxu0 %v11221
    %v11666 = vpop.f32.mrb[0].mxu0
    %v11667 = vadd.f32 0.0, %v11666
    %v11668 = vpop.f32.mrb[0].mxu0
    %v11669 = vpop.f32.mrb[0].mxu0
    %v11670 = vpop.f32.mrb[0].mxu0
    %11671 = vdwg.mxu0
    %v11672 = vadd.f32 %v10947, %v11347
    %v11673 = vadd.f32 %v10948, %v11350
    %v11674 = vadd.f32 %v10949, %v11355
    %v11675 = vadd.f32 %v10950, %v11358
    %v11676 = vadd.f32 %v10951, %v11363
    %v11677 = vadd.f32 %v10952, %v11366
    %v11678 = vadd.f32 %v10953, %v11371
    %v11679 = vadd.f32 %v10954, %v11374
    %v11680 = vadd.f32 %v10955, %v11379
    %v11681 = vadd.f32 %v10956, %v11382
    %v11682 = vadd.f32 %v10957, %v11387
    %v11683 = vadd.f32 %v10958, %v11390
    %v11684 = vadd.f32 %v10959, %v11395
    %v11685 = vadd.f32 %v10960, %v11398
    %v11686 = vadd.f32 %v10961, %v11403
    %v11687 = vadd.f32 %v10962, %v11406
    %v11688 = vadd.f32 %v10963, %v11411
    %v11689 = vadd.f32 %v10964, %v11414
    %v11690 = vadd.f32 %v10965, %v11419
    %v11691 = vadd.f32 %v10966, %v11422
    %v11692 = vadd.f32 %v10967, %v11427
    %v11693 = vadd.f32 %v10968, %v11430
    %v11694 = vadd.f32 %v10969, %v11435
    %v11695 = vadd.f32 %v10970, %v11438
    %v11696 = vadd.f32 %v10971, %v11443
    %v11697 = vadd.f32 %v10972, %v11446
    %v11698 = vadd.f32 %v10973, %v11451
    %v11699 = vadd.f32 %v10974, %v11454
    %v11700 = vadd.f32 %v10975, %v11459
    %v11701 = vadd.f32 %v10976, %v11462
    %v11702 = vadd.f32 %v10977, %v11467
    %v11703 = vadd.f32 %v10978, %v11470
    %v11704 = vadd.f32 %v10979, %v11475
    %v11705 = vadd.f32 %v10980, %v11478
    %v11706 = vadd.f32 %v10981, %v11483
    %v11707 = vadd.f32 %v10982, %v11486
    %v11708 = vadd.f32 %v10983, %v11491
    %v11709 = vadd.f32 %v10984, %v11494
    %v11710 = vadd.f32 %v10985, %v11499
    %v11711 = vadd.f32 %v10986, %v11502
    %v11712 = vadd.f32 %v10987, %v11507
    %v11713 = vadd.f32 %v10988, %v11510
    %v11714 = vadd.f32 %v10989, %v11515
    %v11715 = vadd.f32 %v10990, %v11518
    %v11716 = vadd.f32 %v10991, %v11523
    %v11717 = vadd.f32 %v10992, %v11526
    %v11718 = vadd.f32 %v10993, %v11531
    %v11719 = vadd.f32 %v10994, %v11534
    %v11720 = vadd.f32 %v10995, %v11539
    %v11721 = vadd.f32 %v10996, %v11542
    %v11722 = vadd.f32 %v10997, %v11547
    %v11723 = vadd.f32 %v10998, %v11550
    %v11724 = vadd.f32 %v10999, %v11555
    %v11725 = vadd.f32 %v11000, %v11558
    %v11726 = vadd.f32 %v11001, %v11563
    %v11727 = vadd.f32 %v11002, %v11566
    %v11728 = vadd.f32 %v11003, %v11571
    %v11729 = vadd.f32 %v11004, %v11574
    %v11730 = vadd.f32 %v11005, %v11579
    %v11731 = vadd.f32 %v11006, %v11582
    %v11732 = vadd.f32 %v11007, %v11587
    %v11733 = vadd.f32 %v11008, %v11590
    %v11734 = vadd.f32 %v11009, %v11595
    %v11735 = vadd.f32 %v11010, %v11598
    %v11736 = vadd.f32 %v11011, %v11603
    %v11737 = vadd.f32 %v11012, %v11606
    %v11738 = vadd.f32 %v11013, %v11611
    %v11739 = vadd.f32 %v11014, %v11614
    %v11740 = vadd.f32 %v11015, %v11619
    %v11741 = vadd.f32 %v11016, %v11622
    %v11742 = vadd.f32 %v11017, %v11627
    %v11743 = vadd.f32 %v11018, %v11630
    %v11744 = vadd.f32 %v11019, %v11635
    %v11745 = vadd.f32 %v11020, %v11638
    %v11746 = vadd.f32 %v11021, %v11643
    %v11747 = vadd.f32 %v11022, %v11646
    %v11748 = vadd.f32 %v11023, %v11651
    %v11749 = vadd.f32 %v11024, %v11654
    %v11750 = vadd.f32 %v11025, %v11659
    %v11751 = vadd.f32 %v11026, %v11662
    %v11752 = vadd.f32 %v11027, %v11667
    %v11753 = vld [vmem:[%s4] sm:$0x1]
    %v11755 = vlaneseq
    %v11756 = vshrl.u32 %v11755, 7
    %v11757 = vsub.s32 0, %v11756
    %v11758 = vrot.slane %v11753, %v11757
    %v11760 = vadd.f32 %v11672, %v11758
    %v11761 = vadd.f32 %v11673, %v11758
    %v11762 = vadd.f32 %v11674, %v11758
    %v11763 = vadd.f32 %v11675, %v11758
    %v11764 = vadd.f32 %v11676, %v11758
    %v11765 = vadd.f32 %v11677, %v11758
    %v11766 = vadd.f32 %v11678, %v11758
    %v11767 = vadd.f32 %v11679, %v11758
    %v11768 = vadd.f32 %v11680, %v11758
    %v11769 = vadd.f32 %v11681, %v11758
    %v11770 = vadd.f32 %v11682, %v11758
    %v11771 = vadd.f32 %v11683, %v11758
    %v11772 = vadd.f32 %v11684, %v11758
    %v11773 = vadd.f32 %v11685, %v11758
    %v11774 = vadd.f32 %v11686, %v11758
    %v11775 = vadd.f32 %v11687, %v11758
    %v11776 = vadd.f32 %v11688, %v11758
    %v11777 = vadd.f32 %v11689, %v11758
    %v11778 = vadd.f32 %v11690, %v11758
    %v11779 = vadd.f32 %v11691, %v11758
    %v11780 = vadd.f32 %v11692, %v11758
    %v11781 = vadd.f32 %v11693, %v11758
    %v11782 = vadd.f32 %v11694, %v11758
    %v11783 = vadd.f32 %v11695, %v11758
    %v11784 = vadd.f32 %v11696, %v11758
    %v11785 = vadd.f32 %v11697, %v11758
    %v11786 = vadd.f32 %v11698, %v11758
    %v11787 = vadd.f32 %v11699, %v11758
    %v11788 = vadd.f32 %v11700, %v11758
    %v11789 = vadd.f32 %v11701, %v11758
    %v11790 = vadd.f32 %v11702, %v11758
    %v11791 = vadd.f32 %v11703, %v11758
    %v11792 = vadd.f32 %v11704, %v11758
    %v11793 = vadd.f32 %v11705, %v11758
    %v11794 = vadd.f32 %v11706, %v11758
    %v11795 = vadd.f32 %v11707, %v11758
    %v11796 = vadd.f32 %v11708, %v11758
    %v11797 = vadd.f32 %v11709, %v11758
    %v11798 = vadd.f32 %v11710, %v11758
    %v11799 = vadd.f32 %v11711, %v11758
    %v11800 = vadd.f32 %v11712, %v11758
    %v11801 = vadd.f32 %v11713, %v11758
    %v11802 = vadd.f32 %v11714, %v11758
    %v11803 = vadd.f32 %v11715, %v11758
    %v11804 = vadd.f32 %v11716, %v11758
    %v11805 = vadd.f32 %v11717, %v11758
    %v11806 = vadd.f32 %v11718, %v11758
    %v11807 = vadd.f32 %v11719, %v11758
    %v11808 = vadd.f32 %v11720, %v11758
    %v11809 = vadd.f32 %v11721, %v11758
    %v11810 = vadd.f32 %v11722, %v11758
    %v11811 = vadd.f32 %v11723, %v11758
    %v11812 = vadd.f32 %v11724, %v11758
    %v11813 = vadd.f32 %v11725, %v11758
    %v11814 = vadd.f32 %v11726, %v11758
    %v11815 = vadd.f32 %v11727, %v11758
    %v11816 = vadd.f32 %v11728, %v11758
    %v11817 = vadd.f32 %v11729, %v11758
    %v11818 = vadd.f32 %v11730, %v11758
    %v11819 = vadd.f32 %v11731, %v11758
    %v11820 = vadd.f32 %v11732, %v11758
    %v11821 = vadd.f32 %v11733, %v11758
    %v11822 = vadd.f32 %v11734, %v11758
    %v11823 = vadd.f32 %v11735, %v11758
    %v11824 = vadd.f32 %v11736, %v11758
    %v11825 = vadd.f32 %v11737, %v11758
    %v11826 = vadd.f32 %v11738, %v11758
    %v11827 = vadd.f32 %v11739, %v11758
    %v11828 = vadd.f32 %v11740, %v11758
    %v11829 = vadd.f32 %v11741, %v11758
    %v11830 = vadd.f32 %v11742, %v11758
    %v11831 = vadd.f32 %v11743, %v11758
    %v11832 = vadd.f32 %v11744, %v11758
    %v11833 = vadd.f32 %v11745, %v11758
    %v11834 = vadd.f32 %v11746, %v11758
    %v11835 = vadd.f32 %v11747, %v11758
    %v11836 = vadd.f32 %v11748, %v11758
    %v11837 = vadd.f32 %v11749, %v11758
    %v11838 = vadd.f32 %v11750, %v11758
    %v11839 = vadd.f32 %v11751, %v11758
    %v11840 = vadd.f32 %v11752, %v11758
    %v11841 = vmax.f32 %v11760, 0.0
    %v11842 = vmax.f32 %v11761, 0.0
    %v11843 = vmax.f32 %v11762, 0.0
    %v11844 = vmax.f32 %v11763, 0.0
    %v11845 = vmax.f32 %v11764, 0.0
    %v11846 = vmax.f32 %v11765, 0.0
    %v11847 = vmax.f32 %v11766, 0.0
    %v11848 = vmax.f32 %v11767, 0.0
    %v11849 = vmax.f32 %v11768, 0.0
    %v11850 = vmax.f32 %v11769, 0.0
    %v11851 = vmax.f32 %v11770, 0.0
    %v11852 = vmax.f32 %v11771, 0.0
    %v11853 = vmax.f32 %v11772, 0.0
    %v11854 = vmax.f32 %v11773, 0.0
    %v11855 = vmax.f32 %v11774, 0.0
    %v11856 = vmax.f32 %v11775, 0.0
    %v11857 = vmax.f32 %v11776, 0.0
    %v11858 = vmax.f32 %v11777, 0.0
    %v11859 = vmax.f32 %v11778, 0.0
    %v11860 = vmax.f32 %v11779, 0.0
    %v11861 = vmax.f32 %v11780, 0.0
    %v11862 = vmax.f32 %v11781, 0.0
    %v11863 = vmax.f32 %v11782, 0.0
    %v11864 = vmax.f32 %v11783, 0.0
    %v11865 = vmax.f32 %v11784, 0.0
    %v11866 = vmax.f32 %v11785, 0.0
    %v11867 = vmax.f32 %v11786, 0.0
    %v11868 = vmax.f32 %v11787, 0.0
    %v11869 = vmax.f32 %v11788, 0.0
    %v11870 = vmax.f32 %v11789, 0.0
    %v11871 = vmax.f32 %v11790, 0.0
    %v11872 = vmax.f32 %v11791, 0.0
    %v11873 = vmax.f32 %v11792, 0.0
    %v11874 = vmax.f32 %v11793, 0.0
    %v11875 = vmax.f32 %v11794, 0.0
    %v11876 = vmax.f32 %v11795, 0.0
    %v11877 = vmax.f32 %v11796, 0.0
    %v11878 = vmax.f32 %v11797, 0.0
    %v11879 = vmax.f32 %v11798, 0.0
    %v11880 = vmax.f32 %v11799, 0.0
    %v11881 = vmax.f32 %v11800, 0.0
    %v11882 = vmax.f32 %v11801, 0.0
    %v11883 = vmax.f32 %v11802, 0.0
    %v11884 = vmax.f32 %v11803, 0.0
    %v11885 = vmax.f32 %v11804, 0.0
    %v11886 = vmax.f32 %v11805, 0.0
    %v11887 = vmax.f32 %v11806, 0.0
    %v11888 = vmax.f32 %v11807, 0.0
    %v11889 = vmax.f32 %v11808, 0.0
    %v11890 = vmax.f32 %v11809, 0.0
    %v11891 = vmax.f32 %v11810, 0.0
    %v11892 = vmax.f32 %v11811, 0.0
    %v11893 = vmax.f32 %v11812, 0.0
    %v11894 = vmax.f32 %v11813, 0.0
    %v11895 = vmax.f32 %v11814, 0.0
    %v11896 = vmax.f32 %v11815, 0.0
    %v11897 = vmax.f32 %v11816, 0.0
    %v11898 = vmax.f32 %v11817, 0.0
    %v11899 = vmax.f32 %v11818, 0.0
    %v11900 = vmax.f32 %v11819, 0.0
    %v11901 = vmax.f32 %v11820, 0.0
    %v11902 = vmax.f32 %v11821, 0.0
    %v11903 = vmax.f32 %v11822, 0.0
    %v11904 = vmax.f32 %v11823, 0.0
    %v11905 = vmax.f32 %v11824, 0.0
    %v11906 = vmax.f32 %v11825, 0.0
    %v11907 = vmax.f32 %v11826, 0.0
    %v11908 = vmax.f32 %v11827, 0.0
    %v11909 = vmax.f32 %v11828, 0.0
    %v11910 = vmax.f32 %v11829, 0.0
    %v11911 = vmax.f32 %v11830, 0.0
    %v11912 = vmax.f32 %v11831, 0.0
    %v11913 = vmax.f32 %v11832, 0.0
    %v11914 = vmax.f32 %v11833, 0.0
    %v11915 = vmax.f32 %v11834, 0.0
    %v11916 = vmax.f32 %v11835, 0.0
    %v11917 = vmax.f32 %v11836, 0.0
    %v11918 = vmax.f32 %v11837, 0.0
    %v11919 = vmax.f32 %v11838, 0.0
    %v11920 = vmax.f32 %v11839, 0.0
    %v11921 = vmax.f32 %v11840, 0.0
    %v11922 = vmin.f32 %v11841, 6.0
    %v11923 = vmin.f32 %v11842, 6.0
    %v11924 = vmin.f32 %v11843, 6.0
    %v11925 = vmin.f32 %v11844, 6.0
    %v11926 = vmin.f32 %v11845, 6.0
    %v11927 = vmin.f32 %v11846, 6.0
    %v11928 = vmin.f32 %v11847, 6.0
    %v11929 = vmin.f32 %v11848, 6.0
    %v11930 = vmin.f32 %v11849, 6.0
    %v11931 = vmin.f32 %v11850, 6.0
    %v11932 = vmin.f32 %v11851, 6.0
    %v11933 = vmin.f32 %v11852, 6.0
    %v11934 = vmin.f32 %v11853, 6.0
    %v11935 = vmin.f32 %v11854, 6.0
    %v11936 = vmin.f32 %v11855, 6.0
    %v11937 = vmin.f32 %v11856, 6.0
    %v11938 = vmin.f32 %v11857, 6.0
    %v11939 = vmin.f32 %v11858, 6.0
    %v11940 = vmin.f32 %v11859, 6.0
    %v11941 = vmin.f32 %v11860, 6.0
    %v11942 = vmin.f32 %v11861, 6.0
    %v11943 = vmin.f32 %v11862, 6.0
    %v11944 = vmin.f32 %v11863, 6.0
    %v11945 = vmin.f32 %v11864, 6.0
    %v11946 = vmin.f32 %v11865, 6.0
    %v11947 = vmin.f32 %v11866, 6.0
    %v11948 = vmin.f32 %v11867, 6.0
    %v11949 = vmin.f32 %v11868, 6.0
    %v11950 = vmin.f32 %v11869, 6.0
    %v11951 = vmin.f32 %v11870, 6.0
    %v11952 = vmin.f32 %v11871, 6.0
    %v11953 = vmin.f32 %v11872, 6.0
    %v11954 = vmin.f32 %v11873, 6.0
    %v11955 = vmin.f32 %v11874, 6.0
    %v11956 = vmin.f32 %v11875, 6.0
    %v11957 = vmin.f32 %v11876, 6.0
    %v11958 = vmin.f32 %v11877, 6.0
    %v11959 = vmin.f32 %v11878, 6.0
    %v11960 = vmin.f32 %v11879, 6.0
    %v11961 = vmin.f32 %v11880, 6.0
    %v11962 = vmin.f32 %v11881, 6.0
    %v11963 = vmin.f32 %v11882, 6.0
    %v11964 = vmin.f32 %v11883, 6.0
    %v11965 = vmin.f32 %v11884, 6.0
    %v11966 = vmin.f32 %v11885, 6.0
    %v11967 = vmin.f32 %v11886, 6.0
    %v11968 = vmin.f32 %v11887, 6.0
    %v11969 = vmin.f32 %v11888, 6.0
    %v11970 = vmin.f32 %v11889, 6.0
    %v11971 = vmin.f32 %v11890, 6.0
    %v11972 = vmin.f32 %v11891, 6.0
    %v11973 = vmin.f32 %v11892, 6.0
    %v11974 = vmin.f32 %v11893, 6.0
    %v11975 = vmin.f32 %v11894, 6.0
    %v11976 = vmin.f32 %v11895, 6.0
    %v11977 = vmin.f32 %v11896, 6.0
    %v11978 = vmin.f32 %v11897, 6.0
    %v11979 = vmin.f32 %v11898, 6.0
    %v11980 = vmin.f32 %v11899, 6.0
    %v11981 = vmin.f32 %v11900, 6.0
    %v11982 = vmin.f32 %v11901, 6.0
    %v11983 = vmin.f32 %v11902, 6.0
    %v11984 = vmin.f32 %v11903, 6.0
    %v11985 = vmin.f32 %v11904, 6.0
    %v11986 = vmin.f32 %v11905, 6.0
    %v11987 = vmin.f32 %v11906, 6.0
    %v11988 = vmin.f32 %v11907, 6.0
    %v11989 = vmin.f32 %v11908, 6.0
    %v11990 = vmin.f32 %v11909, 6.0
    %v11991 = vmin.f32 %v11910, 6.0
    %v11992 = vmin.f32 %v11911, 6.0
    %v11993 = vmin.f32 %v11912, 6.0
    %v11994 = vmin.f32 %v11913, 6.0
    %v11995 = vmin.f32 %v11914, 6.0
    %v11996 = vmin.f32 %v11915, 6.0
    %v11997 = vmin.f32 %v11916, 6.0
    %v11998 = vmin.f32 %v11917, 6.0
    %v11999 = vmin.f32 %v11918, 6.0
    %v12000 = vmin.f32 %v11919, 6.0
    %v12001 = vmin.f32 %v11920, 6.0
    %v12002 = vmin.f32 %v11921, 6.0
    %v12003 = vpack.c.bf16 %v11923, %v11922
    %v12004 = vpack.c.bf16 %v11925, %v11924
    %v12005 = vpack.c.bf16 %v11927, %v11926
    %v12006 = vpack.c.bf16 %v11929, %v11928
    %v12007 = vpack.c.bf16 %v11931, %v11930
    %v12008 = vpack.c.bf16 %v11933, %v11932
    %v12009 = vpack.c.bf16 %v11935, %v11934
    %v12010 = vpack.c.bf16 %v11937, %v11936
    %v12011 = vpack.c.bf16 %v11939, %v11938
    %v12012 = vpack.c.bf16 %v11941, %v11940
    %v12013 = vpack.c.bf16 %v11943, %v11942
    %v12014 = vpack.c.bf16 %v11945, %v11944
    %v12015 = vpack.c.bf16 %v11947, %v11946
    %v12016 = vpack.c.bf16 %v11949, %v11948
    %v12017 = vpack.c.bf16 %v11951, %v11950
    %v12018 = vpack.c.bf16 %v11953, %v11952
    %v12019 = vpack.c.bf16 %v11955, %v11954
    %v12020 = vpack.c.bf16 %v11957, %v11956
    %v12021 = vpack.c.bf16 %v11959, %v11958
    %v12022 = vpack.c.bf16 %v11961, %v11960
    %v12023 = vpack.c.bf16 %v11963, %v11962
    %v12024 = vpack.c.bf16 %v11965, %v11964
    %v12025 = vpack.c.bf16 %v11967, %v11966
    %v12026 = vpack.c.bf16 %v11969, %v11968
    %v12027 = vpack.c.bf16 %v11971, %v11970
    %v12028 = vpack.c.bf16 %v11973, %v11972
    %v12029 = vpack.c.bf16 %v11975, %v11974
    %v12030 = vpack.c.bf16 %v11977, %v11976
    %v12031 = vpack.c.bf16 %v11979, %v11978
    %v12032 = vpack.c.bf16 %v11981, %v11980
    %v12033 = vpack.c.bf16 %v11983, %v11982
    %v12034 = vpack.c.bf16 %v11985, %v11984
    %v12035 = vpack.c.bf16 %v11987, %v11986
    %v12036 = vpack.c.bf16 %v11989, %v11988
    %v12037 = vpack.c.bf16 %v11991, %v11990
    %v12038 = vpack.c.bf16 %v11993, %v11992
    %v12039 = vpack.c.bf16 %v11995, %v11994
    %v12040 = vpack.c.bf16 %v11997, %v11996
    %v12041 = vpack.c.bf16 %v11999, %v11998
    %v12042 = vpack.c.bf16 %v12001, %v12000
    %v12043 = vpack.c.bf16 %v12002, %v12002
    %v12044 = vld [vmem:[#allocation9] sm:$0xf]
    %v12045 = vld [vmem:[#allocation9 + $0x4] sm:$0xf]
    %v12046 = vld [vmem:[#allocation9 + $0x8] sm:$0xf]
    %v12047 = vld [vmem:[#allocation9 + $0xc] sm:$0xf]
    %v12048 = vld [vmem:[#allocation9 + $0x10] sm:$0xf]
    %v12049 = vld [vmem:[#allocation9 + $0x14] sm:$0xf]
    %v12050 = vld [vmem:[#allocation9 + $0x18] sm:$0xf]
    %v12051 = vld [vmem:[#allocation9 + $0x1c] sm:$0xf]
    %v12052 = vld [vmem:[#allocation9 + $0x20] sm:$0xf]
    %v12053 = vld [vmem:[#allocation9 + $0x24] sm:$0xf]
    %v12054 = vld [vmem:[#allocation9 + $0x28] sm:$0xf]
    %v12055 = vld [vmem:[#allocation9 + $0x2c] sm:$0xf]
    %v12056 = vld [vmem:[#allocation9 + $0x30] sm:$0xf]
    %v12057 = vld [vmem:[#allocation9 + $0x34] sm:$0xf]
    %v12058 = vld [vmem:[#allocation9 + $0x38] sm:$0xf]
    %v12059 = vld [vmem:[#allocation9 + $0x3c] sm:$0xf]
    %v12060 = vld [vmem:[%s6] sm:$0x1]
    %v12062 = vlaneseq
    %v12063 = vshrl.u32 %v12062, 7
    %v12064 = vsub.s32 0, %v12063
    %v12065 = vrot.slane %v12060, %v12064
    %v12083 = vunpack.c.l.b16 %v12044
    %v12084 = vunpack.c.l.b16 %v12045
    %v12085 = vunpack.c.l.b16 %v12046
    %v12086 = vunpack.c.l.b16 %v12047
    %v12087 = vunpack.c.l.b16 %v12048
    %v12088 = vunpack.c.l.b16 %v12049
    %v12089 = vunpack.c.l.b16 %v12050
    %v12090 = vunpack.c.l.b16 %v12051
    %v12091 = vunpack.c.l.b16 %v12052
    %v12092 = vunpack.c.l.b16 %v12053
    %v12093 = vunpack.c.l.b16 %v12054
    %v12094 = vunpack.c.l.b16 %v12055
    %v12095 = vunpack.c.l.b16 %v12056
    %v12096 = vunpack.c.l.b16 %v12057
    %v12097 = vunpack.c.l.b16 %v12058
    %v12098 = vunpack.c.l.b16 %v12059
    %v12099 = vpack.c.b16 %v12084, %v12083
    %v12100 = vpack.c.b16 %v12086, %v12085
    %v12101 = vpack.c.b16 %v12088, %v12087
    %v12102 = vpack.c.b16 %v12090, %v12089
    %v12103 = vpack.c.b16 %v12092, %v12091
    %v12104 = vpack.c.b16 %v12094, %v12093
    %v12105 = vpack.c.b16 %v12096, %v12095
    %v12106 = vpack.c.b16 %v12098, %v12097
    %12115 = vmatprep.subr.bf16.mxu0 0
    %12116 = vmatpush1.bf16.msra.mxu0 %v12099
    %12117 = vmatprep.subr.bf16.mxu0 0
    %12118 = vmatpush1.bf16.msra.mxu0 %v12100
    %12119 = vmatprep.subr.bf16.mxu0 0
    %12120 = vmatpush1.bf16.msra.mxu0 %v12101
    %12121 = vmatprep.subr.bf16.mxu0 0
    %12122 = vmatpush1.bf16.msra.mxu0 %v12102
    %12123 = vmatprep.subr.bf16.mxu0 0
    %12124 = vmatpush1.bf16.msra.mxu0 %v12103
    %12125 = vmatprep.subr.bf16.mxu0 0
    %12126 = vmatpush1.bf16.msra.mxu0 %v12104
    %12127 = vmatprep.subr.bf16.mxu0 0
    %12128 = vmatpush1.bf16.msra.mxu0 %v12105
    %12129 = vmatprep.subr.bf16.mxu0 0
    %12130 = vmatpush1.bf16.msra.mxu0 %v12106
    %12131 = vmatprep.subr.bf16.mxu0 0
    %12132 = vmatpush1.bf16.msra.mxu0 0
    %12133 = vmatprep.subr.bf16.mxu0 0
    %12134 = vmatpush1.bf16.msra.mxu0 0
    %12135 = vmatprep.subr.bf16.mxu0 0
    %12136 = vmatpush1.bf16.msra.mxu0 0
    %12137 = vmatprep.subr.bf16.mxu0 0
    %12138 = vmatpush1.bf16.msra.mxu0 0
    %12139 = vmatprep.subr.bf16.mxu0 0
    %12140 = vmatpush1.bf16.msra.mxu0 0
    %12141 = vmatprep.subr.bf16.mxu0 0
    %12142 = vmatpush1.bf16.msra.mxu0 0
    %12143 = vmatprep.subr.bf16.mxu0 0
    %12144 = vmatpush1.bf16.msra.mxu0 0
    %12145 = vmatprep.subr.bf16.mxu0 0
    %12146 = vmatpush1.bf16.msra.mxu0 0
    %12147 = vmatprep.mubr.bf16.mxu0 0
    %12148 = vmatmul.mubr.bf16.gmra.mrb[0].mxu0 %v12003
    %v12149 = vpop.f32.mrb[0].mxu0
    %v12150 = vadd.f32 %v12065, %v12149
    %v12151 = vpop.f32.mrb[0].mxu0
    %v12152 = vpop.f32.mrb[0].mxu0
    %v12153 = vadd.f32 %v12065, %v12152
    %v12154 = vpop.f32.mrb[0].mxu0
    %12155 = vmatprep.mubr.bf16.mxu0 0
    %12156 = vmatmul.mubr.bf16.gmra.mrb[0].mxu0 %v12004
    %v12157 = vpop.f32.mrb[0].mxu0
    %v12158 = vadd.f32 %v12065, %v12157
    %v12159 = vpop.f32.mrb[0].mxu0
    %v12160 = vpop.f32.mrb[0].mxu0
    %v12161 = vadd.f32 %v12065, %v12160
    %v12162 = vpop.f32.mrb[0].mxu0
    %12163 = vmatprep.mubr.bf16.mxu0 0
    %12164 = vmatmul.mubr.bf16.gmra.mrb[0].mxu0 %v12005
    %v12165 = vpop.f32.mrb[0].mxu0
    %v12166 = vadd.f32 %v12065, %v12165
    %v12167 = vpop.f32.mrb[0].mxu0
    %v12168 = vpop.f32.mrb[0].mxu0
    %v12169 = vadd.f32 %v12065, %v12168
    %v12170 = vpop.f32.mrb[0].mxu0
    %12171 = vmatprep.mubr.bf16.mxu0 0
    %12172 = vmatmul.mubr.bf16.gmra.mrb[0].mxu0 %v12006
    %v12173 = vpop.f32.mrb[0].mxu0
    %v12174 = vadd.f32 %v12065, %v12173
    %v12175 = vpop.f32.mrb[0].mxu0
    %v12176 = vpop.f32.mrb[0].mxu0
    %v12177 = vadd.f32 %v12065, %v12176
    %v12178 = vpop.f32.mrb[0].mxu0
    %12179 = vmatprep.mubr.bf16.mxu0 0
    %12180 = vmatmul.mubr.bf16.gmra.mrb[0].mxu0 %v12007
    %v12181 = vpop.f32.mrb[0].mxu0
    %v12182 = vadd.f32 %v12065, %v12181
    %v12183 = vpop.f32.mrb[0].mxu0
    %v12184 = vpop.f32.mrb[0].mxu0
    %v12185 = vadd.f32 %v12065, %v12184
    %v12186 = vpop.f32.mrb[0].mxu0
    %12187 = vmatprep.mubr.bf16.mxu0 0
    %12188 = vmatmul.mubr.bf16.gmra.mrb[0].mxu0 %v12008
    %v12189 = vpop.f32.mrb[0].mxu0
    %v12190 = vadd.f32 %v12065, %v12189
    %v12191 = vpop.f32.mrb[0].mxu0
    %v12192 = vpop.f32.mrb[0].mxu0
    %v12193 = vadd.f32 %v12065, %v12192
    %v12194 = vpop.f32.mrb[0].mxu0
    %12195 = vmatprep.mubr.bf16.mxu0 0
    %12196 = vmatmul.mubr.bf16.gmra.mrb[0].mxu0 %v12009
    %v12197 = vpop.f32.mrb[0].mxu0
    %v12198 = vadd.f32 %v12065, %v12197
    %v12199 = vpop.f32.mrb[0].mxu0
    %v12200 = vpop.f32.mrb[0].mxu0
    %v12201 = vadd.f32 %v12065, %v12200
    %v12202 = vpop.f32.mrb[0].mxu0
    %12203 = vmatprep.mubr.bf16.mxu0 0
    %12204 = vmatmul.mubr.bf16.gmra.mrb[0].mxu0 %v12010
    %v12205 = vpop.f32.mrb[0].mxu0
    %v12206 = vadd.f32 %v12065, %v12205
    %v12207 = vpop.f32.mrb[0].mxu0
    %v12208 = vpop.f32.mrb[0].mxu0
    %v12209 = vadd.f32 %v12065, %v12208
    %v12210 = vpop.f32.mrb[0].mxu0
    %12211 = vmatprep.mubr.bf16.mxu0 0
    %12212 = vmatmul.mubr.bf16.gmra.mrb[0].mxu0 %v12011
    %v12213 = vpop.f32.mrb[0].mxu0
    %v12214 = vadd.f32 %v12065, %v12213
    %v12215 = vpop.f32.mrb[0].mxu0
    %v12216 = vpop.f32.mrb[0].mxu0
    %v12217 = vadd.f32 %v12065, %v12216
    %v12218 = vpop.f32.mrb[0].mxu0
    %12219 = vmatprep.mubr.bf16.mxu0 0
    %12220 = vmatmul.mubr.bf16.gmra.mrb[0].mxu0 %v12012
    %v12221 = vpop.f32.mrb[0].mxu0
    %v12222 = vadd.f32 %v12065, %v12221
    %v12223 = vpop.f32.mrb[0].mxu0
    %v12224 = vpop.f32.mrb[0].mxu0
    %v12225 = vadd.f32 %v12065, %v12224
    %v12226 = vpop.f32.mrb[0].mxu0
    %12227 = vmatprep.mubr.bf16.mxu0 0
    %12228 = vmatmul.mubr.bf16.gmra.mrb[0].mxu0 %v12013
    %v12229 = vpop.f32.mrb[0].mxu0
    %v12230 = vadd.f32 %v12065, %v12229
    %v12231 = vpop.f32.mrb[0].mxu0
    %v12232 = vpop.f32.mrb[0].mxu0
    %v12233 = vadd.f32 %v12065, %v12232
    %v12234 = vpop.f32.mrb[0].mxu0
    %12235 = vmatprep.mubr.bf16.mxu0 0
    %12236 = vmatmul.mubr.bf16.gmra.mrb[0].mxu0 %v12014
    %v12237 = vpop.f32.mrb[0].mxu0
    %v12238 = vadd.f32 %v12065, %v12237
    %v12239 = vpop.f32.mrb[0].mxu0
    %v12240 = vpop.f32.mrb[0].mxu0
    %v12241 = vadd.f32 %v12065, %v12240
    %v12242 = vpop.f32.mrb[0].mxu0
    %12243 = vmatprep.mubr.bf16.mxu0 0
    %12244 = vmatmul.mubr.bf16.gmra.mrb[0].mxu0 %v12015
    %v12245 = vpop.f32.mrb[0].mxu0
    %v12246 = vadd.f32 %v12065, %v12245
    %v12247 = vpop.f32.mrb[0].mxu0
    %v12248 = vpop.f32.mrb[0].mxu0
    %v12249 = vadd.f32 %v12065, %v12248
    %v12250 = vpop.f32.mrb[0].mxu0
    %12251 = vmatprep.mubr.bf16.mxu0 0
    %12252 = vmatmul.mubr.bf16.gmra.mrb[0].mxu0 %v12016
    %v12253 = vpop.f32.mrb[0].mxu0
    %v12254 = vadd.f32 %v12065, %v12253
    %v12255 = vpop.f32.mrb[0].mxu0
    %v12256 = vpop.f32.mrb[0].mxu0
    %v12257 = vadd.f32 %v12065, %v12256
    %v12258 = vpop.f32.mrb[0].mxu0
    %12259 = vmatprep.mubr.bf16.mxu0 0
    %12260 = vmatmul.mubr.bf16.gmra.mrb[0].mxu0 %v12017
    %v12261 = vpop.f32.mrb[0].mxu0
    %v12262 = vadd.f32 %v12065, %v12261
    %v12263 = vpop.f32.mrb[0].mxu0
    %v12264 = vpop.f32.mrb[0].mxu0
    %v12265 = vadd.f32 %v12065, %v12264
    %v12266 = vpop.f32.mrb[0].mxu0
    %12267 = vmatprep.mubr.bf16.mxu0 0
    %12268 = vmatmul.mubr.bf16.gmra.mrb[0].mxu0 %v12018
    %v12269 = vpop.f32.mrb[0].mxu0
    %v12270 = vadd.f32 %v12065, %v12269
    %v12271 = vpop.f32.mrb[0].mxu0
    %v12272 = vpop.f32.mrb[0].mxu0
    %v12273 = vadd.f32 %v12065, %v12272
    %v12274 = vpop.f32.mrb[0].mxu0
    %12275 = vmatprep.mubr.bf16.mxu0 0
    %12276 = vmatmul.mubr.bf16.gmra.mrb[0].mxu0 %v12019
    %v12277 = vpop.f32.mrb[0].mxu0
    %v12278 = vadd.f32 %v12065, %v12277
    %v12279 = vpop.f32.mrb[0].mxu0
    %v12280 = vpop.f32.mrb[0].mxu0
    %v12281 = vadd.f32 %v12065, %v12280
    %v12282 = vpop.f32.mrb[0].mxu0
    %12283 = vmatprep.mubr.bf16.mxu0 0
    %12284 = vmatmul.mubr.bf16.gmra.mrb[0].mxu0 %v12020
    %v12285 = vpop.f32.mrb[0].mxu0
    %v12286 = vadd.f32 %v12065, %v12285
    %v12287 = vpop.f32.mrb[0].mxu0
    %v12288 = vpop.f32.mrb[0].mxu0
    %v12289 = vadd.f32 %v12065, %v12288
    %v12290 = vpop.f32.mrb[0].mxu0
    %12291 = vmatprep.mubr.bf16.mxu0 0
    %12292 = vmatmul.mubr.bf16.gmra.mrb[0].mxu0 %v12021
    %v12293 = vpop.f32.mrb[0].mxu0
    %v12294 = vadd.f32 %v12065, %v12293
    %v12295 = vpop.f32.mrb[0].mxu0
    %v12296 = vpop.f32.mrb[0].mxu0
    %v12297 = vadd.f32 %v12065, %v12296
    %v12298 = vpop.f32.mrb[0].mxu0
    %12299 = vmatprep.mubr.bf16.mxu0 0
    %12300 = vmatmul.mubr.bf16.gmra.mrb[0].mxu0 %v12022
    %v12301 = vpop.f32.mrb[0].mxu0
    %v12302 = vadd.f32 %v12065, %v12301
    %v12303 = vpop.f32.mrb[0].mxu0
    %v12304 = vpop.f32.mrb[0].mxu0
    %v12305 = vadd.f32 %v12065, %v12304
    %v12306 = vpop.f32.mrb[0].mxu0
    %12307 = vmatprep.mubr.bf16.mxu0 0
    %12308 = vmatmul.mubr.bf16.gmra.mrb[0].mxu0 %v12023
    %v12309 = vpop.f32.mrb[0].mxu0
    %v12310 = vadd.f32 %v12065, %v12309
    %v12311 = vpop.f32.mrb[0].mxu0
    %v12312 = vpop.f32.mrb[0].mxu0
    %v12313 = vadd.f32 %v12065, %v12312
    %v12314 = vpop.f32.mrb[0].mxu0
    %12315 = vmatprep.mubr.bf16.mxu0 0
    %12316 = vmatmul.mubr.bf16.gmra.mrb[0].mxu0 %v12024
    %v12317 = vpop.f32.mrb[0].mxu0
    %v12318 = vadd.f32 %v12065, %v12317
    %v12319 = vpop.f32.mrb[0].mxu0
    %v12320 = vpop.f32.mrb[0].mxu0
    %v12321 = vadd.f32 %v12065, %v12320
    %v12322 = vpop.f32.mrb[0].mxu0
    %12323 = vmatprep.mubr.bf16.mxu0 0
    %12324 = vmatmul.mubr.bf16.gmra.mrb[0].mxu0 %v12025
    %v12325 = vpop.f32.mrb[0].mxu0
    %v12326 = vadd.f32 %v12065, %v12325
    %v12327 = vpop.f32.mrb[0].mxu0
    %v12328 = vpop.f32.mrb[0].mxu0
    %v12329 = vadd.f32 %v12065, %v12328
    %v12330 = vpop.f32.mrb[0].mxu0
    %12331 = vmatprep.mubr.bf16.mxu0 0
    %12332 = vmatmul.mubr.bf16.gmra.mrb[0].mxu0 %v12026
    %v12333 = vpop.f32.mrb[0].mxu0
    %v12334 = vadd.f32 %v12065, %v12333
    %v12335 = vpop.f32.mrb[0].mxu0
    %v12336 = vpop.f32.mrb[0].mxu0
    %v12337 = vadd.f32 %v12065, %v12336
    %v12338 = vpop.f32.mrb[0].mxu0
    %12339 = vmatprep.mubr.bf16.mxu0 0
    %12340 = vmatmul.mubr.bf16.gmra.mrb[0].mxu0 %v12027
    %v12341 = vpop.f32.mrb[0].mxu0
    %v12342 = vadd.f32 %v12065, %v12341
    %v12343 = vpop.f32.mrb[0].mxu0
    %v12344 = vpop.f32.mrb[0].mxu0
    %v12345 = vadd.f32 %v12065, %v12344
    %v12346 = vpop.f32.mrb[0].mxu0
    %12347 = vmatprep.mubr.bf16.mxu0 0
    %12348 = vmatmul.mubr.bf16.gmra.mrb[0].mxu0 %v12028
    %v12349 = vpop.f32.mrb[0].mxu0
    %v12350 = vadd.f32 %v12065, %v12349
    %v12351 = vpop.f32.mrb[0].mxu0
    %v12352 = vpop.f32.mrb[0].mxu0
    %v12353 = vadd.f32 %v12065, %v12352
    %v12354 = vpop.f32.mrb[0].mxu0
    %12355 = vmatprep.mubr.bf16.mxu0 0
    %12356 = vmatmul.mubr.bf16.gmra.mrb[0].mxu0 %v12029
    %v12357 = vpop.f32.mrb[0].mxu0
    %v12358 = vadd.f32 %v12065, %v12357
    %v12359 = vpop.f32.mrb[0].mxu0
    %v12360 = vpop.f32.mrb[0].mxu0
    %v12361 = vadd.f32 %v12065, %v12360
    %v12362 = vpop.f32.mrb[0].mxu0
    %12363 = vmatprep.mubr.bf16.mxu0 0
    %12364 = vmatmul.mubr.bf16.gmra.mrb[0].mxu0 %v12030
    %v12365 = vpop.f32.mrb[0].mxu0
    %v12366 = vadd.f32 %v12065, %v12365
    %v12367 = vpop.f32.mrb[0].mxu0
    %v12368 = vpop.f32.mrb[0].mxu0
    %v12369 = vadd.f32 %v12065, %v12368
    %v12370 = vpop.f32.mrb[0].mxu0
    %12371 = vmatprep.mubr.bf16.mxu0 0
    %12372 = vmatmul.mubr.bf16.gmra.mrb[0].mxu0 %v12031
    %v12373 = vpop.f32.mrb[0].mxu0
    %v12374 = vadd.f32 %v12065, %v12373
    %v12375 = vpop.f32.mrb[0].mxu0
    %v12376 = vpop.f32.mrb[0].mxu0
    %v12377 = vadd.f32 %v12065, %v12376
    %v12378 = vpop.f32.mrb[0].mxu0
    %12379 = vmatprep.mubr.bf16.mxu0 0
    %12380 = vmatmul.mubr.bf16.gmra.mrb[0].mxu0 %v12032
    %v12381 = vpop.f32.mrb[0].mxu0
    %v12382 = vadd.f32 %v12065, %v12381
    %v12383 = vpop.f32.mrb[0].mxu0
    %v12384 = vpop.f32.mrb[0].mxu0
    %v12385 = vadd.f32 %v12065, %v12384
    %v12386 = vpop.f32.mrb[0].mxu0
    %12387 = vmatprep.mubr.bf16.mxu0 0
    %12388 = vmatmul.mubr.bf16.gmra.mrb[0].mxu0 %v12033
    %v12389 = vpop.f32.mrb[0].mxu0
    %v12390 = vadd.f32 %v12065, %v12389
    %v12391 = vpop.f32.mrb[0].mxu0
    %v12392 = vpop.f32.mrb[0].mxu0
    %v12393 = vadd.f32 %v12065, %v12392
    %v12394 = vpop.f32.mrb[0].mxu0
    %12395 = vmatprep.mubr.bf16.mxu0 0
    %12396 = vmatmul.mubr.bf16.gmra.mrb[0].mxu0 %v12034
    %v12397 = vpop.f32.mrb[0].mxu0
    %v12398 = vadd.f32 %v12065, %v12397
    %v12399 = vpop.f32.mrb[0].mxu0
    %v12400 = vpop.f32.mrb[0].mxu0
    %v12401 = vadd.f32 %v12065, %v12400
    %v12402 = vpop.f32.mrb[0].mxu0
    %12403 = vmatprep.mubr.bf16.mxu0 0
    %12404 = vmatmul.mubr.bf16.gmra.mrb[0].mxu0 %v12035
    %v12405 = vpop.f32.mrb[0].mxu0
    %v12406 = vadd.f32 %v12065, %v12405
    %v12407 = vpop.f32.mrb[0].mxu0
    %v12408 = vpop.f32.mrb[0].mxu0
    %v12409 = vadd.f32 %v12065, %v12408
    %v12410 = vpop.f32.mrb[0].mxu0
    %12411 = vmatprep.mubr.bf16.mxu0 0
    %12412 = vmatmul.mubr.bf16.gmra.mrb[0].mxu0 %v12036
    %v12413 = vpop.f32.mrb[0].mxu0
    %v12414 = vadd.f32 %v12065, %v12413
    %v12415 = vpop.f32.mrb[0].mxu0
    %v12416 = vpop.f32.mrb[0].mxu0
    %v12417 = vadd.f32 %v12065, %v12416
    %v12418 = vpop.f32.mrb[0].mxu0
    %12419 = vmatprep.mubr.bf16.mxu0 0
    %12420 = vmatmul.mubr.bf16.gmra.mrb[0].mxu0 %v12037
    %v12421 = vpop.f32.mrb[0].mxu0
    %v12422 = vadd.f32 %v12065, %v12421
    %v12423 = vpop.f32.mrb[0].mxu0
    %v12424 = vpop.f32.mrb[0].mxu0
    %v12425 = vadd.f32 %v12065, %v12424
    %v12426 = vpop.f32.mrb[0].mxu0
    %12427 = vmatprep.mubr.bf16.mxu0 0
    %12428 = vmatmul.mubr.bf16.gmra.mrb[0].mxu0 %v12038
    %v12429 = vpop.f32.mrb[0].mxu0
    %v12430 = vadd.f32 %v12065, %v12429
    %v12431 = vpop.f32.mrb[0].mxu0
    %v12432 = vpop.f32.mrb[0].mxu0
    %v12433 = vadd.f32 %v12065, %v12432
    %v12434 = vpop.f32.mrb[0].mxu0
    %12435 = vmatprep.mubr.bf16.mxu0 0
    %12436 = vmatmul.mubr.bf16.gmra.mrb[0].mxu0 %v12039
    %v12437 = vpop.f32.mrb[0].mxu0
    %v12438 = vadd.f32 %v12065, %v12437
    %v12439 = vpop.f32.mrb[0].mxu0
    %v12440 = vpop.f32.mrb[0].mxu0
    %v12441 = vadd.f32 %v12065, %v12440
    %v12442 = vpop.f32.mrb[0].mxu0
    %12443 = vmatprep.mubr.bf16.mxu0 0
    %12444 = vmatmul.mubr.bf16.gmra.mrb[0].mxu0 %v12040
    %v12445 = vpop.f32.mrb[0].mxu0
    %v12446 = vadd.f32 %v12065, %v12445
    %v12447 = vpop.f32.mrb[0].mxu0
    %v12448 = vpop.f32.mrb[0].mxu0
    %v12449 = vadd.f32 %v12065, %v12448
    %v12450 = vpop.f32.mrb[0].mxu0
    %12451 = vmatprep.mubr.bf16.mxu0 0
    %12452 = vmatmul.mubr.bf16.gmra.mrb[0].mxu0 %v12041
    %v12453 = vpop.f32.mrb[0].mxu0
    %v12454 = vadd.f32 %v12065, %v12453
    %v12455 = vpop.f32.mrb[0].mxu0
    %v12456 = vpop.f32.mrb[0].mxu0
    %v12457 = vadd.f32 %v12065, %v12456
    %v12458 = vpop.f32.mrb[0].mxu0
    %12459 = vmatprep.mubr.bf16.mxu0 0
    %12460 = vmatmul.mubr.bf16.gmra.mrb[0].mxu0 %v12042
    %v12461 = vpop.f32.mrb[0].mxu0
    %v12462 = vadd.f32 %v12065, %v12461
    %v12463 = vpop.f32.mrb[0].mxu0
    %v12464 = vpop.f32.mrb[0].mxu0
    %v12465 = vadd.f32 %v12065, %v12464
    %v12466 = vpop.f32.mrb[0].mxu0
    %12467 = vmatprep.mubr.bf16.mxu0 0
    %12468 = vmatmul.mubr.bf16.gmra.mrb[0].mxu0 %v12043
    %v12469 = vpop.f32.mrb[0].mxu0
    %v12470 = vadd.f32 %v12065, %v12469
    %v12471 = vpop.f32.mrb[0].mxu0
    %v12472 = vpop.f32.mrb[0].mxu0
    %v12473 = vpop.f32.mrb[0].mxu0
    %12474 = vdwg.mxu0
    %v12475 = vmax.f32 %v12150, 0.0
    %v12476 = vmax.f32 %v12153, 0.0
    %v12477 = vmax.f32 %v12158, 0.0
    %v12478 = vmax.f32 %v12161, 0.0
    %v12479 = vmax.f32 %v12166, 0.0
    %v12480 = vmax.f32 %v12169, 0.0
    %v12481 = vmax.f32 %v12174, 0.0
    %v12482 = vmax.f32 %v12177, 0.0
    %v12483 = vmax.f32 %v12182, 0.0
    %v12484 = vmax.f32 %v12185, 0.0
    %v12485 = vmax.f32 %v12190, 0.0
    %v12486 = vmax.f32 %v12193, 0.0
    %v12487 = vmax.f32 %v12198, 0.0
    %v12488 = vmax.f32 %v12201, 0.0
    %v12489 = vmax.f32 %v12206, 0.0
    %v12490 = vmax.f32 %v12209, 0.0
    %v12491 = vmax.f32 %v12214, 0.0
    %v12492 = vmax.f32 %v12217, 0.0
    %v12493 = vmax.f32 %v12222, 0.0
    %v12494 = vmax.f32 %v12225, 0.0
    %v12495 = vmax.f32 %v12230, 0.0
    %v12496 = vmax.f32 %v12233, 0.0
    %v12497 = vmax.f32 %v12238, 0.0
    %v12498 = vmax.f32 %v12241, 0.0
    %v12499 = vmax.f32 %v12246, 0.0
    %v12500 = vmax.f32 %v12249, 0.0
    %v12501 = vmax.f32 %v12254, 0.0
    %v12502 = vmax.f32 %v12257, 0.0
    %v12503 = vmax.f32 %v12262, 0.0
    %v12504 = vmax.f32 %v12265, 0.0
    %v12505 = vmax.f32 %v12270, 0.0
    %v12506 = vmax.f32 %v12273, 0.0
    %v12507 = vmax.f32 %v12278, 0.0
    %v12508 = vmax.f32 %v12281, 0.0
    %v12509 = vmax.f32 %v12286, 0.0
    %v12510 = vmax.f32 %v12289, 0.0
    %v12511 = vmax.f32 %v12294, 0.0
    %v12512 = vmax.f32 %v12297, 0.0
    %v12513 = vmax.f32 %v12302, 0.0
    %v12514 = vmax.f32 %v12305, 0.0
    %v12515 = vmax.f32 %v12310, 0.0
    %v12516 = vmax.f32 %v12313, 0.0
    %v12517 = vmax.f32 %v12318, 0.0
    %v12518 = vmax.f32 %v12321, 0.0
    %v12519 = vmax.f32 %v12326, 0.0
    %v12520 = vmax.f32 %v12329, 0.0
    %v12521 = vmax.f32 %v12334, 0.0
    %v12522 = vmax.f32 %v12337, 0.0
    %v12523 = vmax.f32 %v12342, 0.0
    %v12524 = vmax.f32 %v12345, 0.0
    %v12525 = vmax.f32 %v12350, 0.0
    %v12526 = vmax.f32 %v12353, 0.0
    %v12527 = vmax.f32 %v12358, 0.0
    %v12528 = vmax.f32 %v12361, 0.0
    %v12529 = vmax.f32 %v12366, 0.0
    %v12530 = vmax.f32 %v12369, 0.0
    %v12531 = vmax.f32 %v12374, 0.0
    %v12532 = vmax.f32 %v12377, 0.0
    %v12533 = vmax.f32 %v12382, 0.0
    %v12534 = vmax.f32 %v12385, 0.0
    %v12535 = vmax.f32 %v12390, 0.0
    %v12536 = vmax.f32 %v12393, 0.0
    %v12537 = vmax.f32 %v12398, 0.0
    %v12538 = vmax.f32 %v12401, 0.0
    %v12539 = vmax.f32 %v12406, 0.0
    %v12540 = vmax.f32 %v12409, 0.0
    %v12541 = vmax.f32 %v12414, 0.0
    %v12542 = vmax.f32 %v12417, 0.0
    %v12543 = vmax.f32 %v12422, 0.0
    %v12544 = vmax.f32 %v12425, 0.0
    %v12545 = vmax.f32 %v12430, 0.0
    %v12546 = vmax.f32 %v12433, 0.0
    %v12547 = vmax.f32 %v12438, 0.0
    %v12548 = vmax.f32 %v12441, 0.0
    %v12549 = vmax.f32 %v12446, 0.0
    %v12550 = vmax.f32 %v12449, 0.0
    %v12551 = vmax.f32 %v12454, 0.0
    %v12552 = vmax.f32 %v12457, 0.0
    %v12553 = vmax.f32 %v12462, 0.0
    %v12554 = vmax.f32 %v12465, 0.0
    %v12555 = vmax.f32 %v12470, 0.0
    %v12556 = vmin.f32 %v12475, 6.0
    %v12557 = vmin.f32 %v12476, 6.0
    %v12558 = vmin.f32 %v12477, 6.0
    %v12559 = vmin.f32 %v12478, 6.0
    %v12560 = vmin.f32 %v12479, 6.0
    %v12561 = vmin.f32 %v12480, 6.0
    %v12562 = vmin.f32 %v12481, 6.0
    %v12563 = vmin.f32 %v12482, 6.0
    %v12564 = vmin.f32 %v12483, 6.0
    %v12565 = vmin.f32 %v12484, 6.0
    %v12566 = vmin.f32 %v12485, 6.0
    %v12567 = vmin.f32 %v12486, 6.0
    %v12568 = vmin.f32 %v12487, 6.0
    %v12569 = vmin.f32 %v12488, 6.0
    %v12570 = vmin.f32 %v12489, 6.0
    %v12571 = vmin.f32 %v12490, 6.0
    %v12572 = vmin.f32 %v12491, 6.0
    %v12573 = vmin.f32 %v12492, 6.0
    %v12574 = vmin.f32 %v12493, 6.0
    %v12575 = vmin.f32 %v12494, 6.0
    %v12576 = vmin.f32 %v12495, 6.0
    %v12577 = vmin.f32 %v12496, 6.0
    %v12578 = vmin.f32 %v12497, 6.0
    %v12579 = vmin.f32 %v12498, 6.0
    %v12580 = vmin.f32 %v12499, 6.0
    %v12581 = vmin.f32 %v12500, 6.0
    %v12582 = vmin.f32 %v12501, 6.0
    %v12583 = vmin.f32 %v12502, 6.0
    %v12584 = vmin.f32 %v12503, 6.0
    %v12585 = vmin.f32 %v12504, 6.0
    %v12586 = vmin.f32 %v12505, 6.0
    %v12587 = vmin.f32 %v12506, 6.0
    %v12588 = vmin.f32 %v12507, 6.0
    %v12589 = vmin.f32 %v12508, 6.0
    %v12590 = vmin.f32 %v12509, 6.0
    %v12591 = vmin.f32 %v12510, 6.0
    %v12592 = vmin.f32 %v12511, 6.0
    %v12593 = vmin.f32 %v12512, 6.0
    %v12594 = vmin.f32 %v12513, 6.0
    %v12595 = vmin.f32 %v12514, 6.0
    %v12596 = vmin.f32 %v12515, 6.0
    %v12597 = vmin.f32 %v12516, 6.0
    %v12598 = vmin.f32 %v12517, 6.0
    %v12599 = vmin.f32 %v12518, 6.0
    %v12600 = vmin.f32 %v12519, 6.0
    %v12601 = vmin.f32 %v12520, 6.0
    %v12602 = vmin.f32 %v12521, 6.0
    %v12603 = vmin.f32 %v12522, 6.0
    %v12604 = vmin.f32 %v12523, 6.0
    %v12605 = vmin.f32 %v12524, 6.0
    %v12606 = vmin.f32 %v12525, 6.0
    %v12607 = vmin.f32 %v12526, 6.0
    %v12608 = vmin.f32 %v12527, 6.0
    %v12609 = vmin.f32 %v12528, 6.0
    %v12610 = vmin.f32 %v12529, 6.0
    %v12611 = vmin.f32 %v12530, 6.0
    %v12612 = vmin.f32 %v12531, 6.0
    %v12613 = vmin.f32 %v12532, 6.0
    %v12614 = vmin.f32 %v12533, 6.0
    %v12615 = vmin.f32 %v12534, 6.0
    %v12616 = vmin.f32 %v12535, 6.0
    %v12617 = vmin.f32 %v12536, 6.0
    %v12618 = vmin.f32 %v12537, 6.0
    %v12619 = vmin.f32 %v12538, 6.0
    %v12620 = vmin.f32 %v12539, 6.0
    %v12621 = vmin.f32 %v12540, 6.0
    %v12622 = vmin.f32 %v12541, 6.0
    %v12623 = vmin.f32 %v12542, 6.0
    %v12624 = vmin.f32 %v12543, 6.0
    %v12625 = vmin.f32 %v12544, 6.0
    %v12626 = vmin.f32 %v12545, 6.0
    %v12627 = vmin.f32 %v12546, 6.0
    %v12628 = vmin.f32 %v12547, 6.0
    %v12629 = vmin.f32 %v12548, 6.0
    %v12630 = vmin.f32 %v12549, 6.0
    %v12631 = vmin.f32 %v12550, 6.0
    %v12632 = vmin.f32 %v12551, 6.0
    %v12633 = vmin.f32 %v12552, 6.0
    %v12634 = vmin.f32 %v12553, 6.0
    %v12635 = vmin.f32 %v12554, 6.0
    %v12636 = vmin.f32 %v12555, 6.0
    %v12637 = vld [vmem:[#allocation11] sm:$0xf]
    %v12638 = vld [vmem:[#allocation11 + $0x4] sm:$0xf]
    %v12639 = vld [vmem:[#allocation11 + $0x8] sm:$0xf]
    %v12640 = vld [vmem:[#allocation11 + $0xc] sm:$0xf]
    %v12641 = vld [vmem:[#allocation11 + $0x10] sm:$0xf]
    %v12642 = vld [vmem:[#allocation11 + $0x14] sm:$0xf]
    %v12643 = vld [vmem:[#allocation11 + $0x18] sm:$0xf]
    %v12644 = vld [vmem:[#allocation11 + $0x1c] sm:$0xf]
    %v12645 = vld [vmem:[#allocation11 + $0x20] sm:$0xf]
    %v12646 = vld [vmem:[#allocation11 + $0x24] sm:$0xf]
    %v12647 = vld [vmem:[#allocation11 + $0x28] sm:$0xf]
    %v12648 = vld [vmem:[#allocation11 + $0x2c] sm:$0xf]
    %v12649 = vld [vmem:[#allocation11 + $0x30] sm:$0xf]
    %v12650 = vld [vmem:[#allocation11 + $0x34] sm:$0xf]
    %v12651 = vld [vmem:[#allocation11 + $0x38] sm:$0xf]
    %v12652 = vld [vmem:[#allocation11 + $0x3c] sm:$0xf]
    %v12653 = vld [vmem:[#allocation11 + $0x40] sm:$0xf]
    %v12654 = vld [vmem:[#allocation11 + $0x44] sm:$0xf]
    %v12655 = vld [vmem:[#allocation11 + $0x48] sm:$0xf]
    %v12656 = vld [vmem:[#allocation11 + $0x4c] sm:$0xf]
    %v12657 = vld [vmem:[#allocation11 + $0x50] sm:$0xf]
    %v12658 = vld [vmem:[#allocation11 + $0x54] sm:$0xf]
    %v12659 = vld [vmem:[#allocation11 + $0x58] sm:$0xf]
    %v12660 = vld [vmem:[#allocation11 + $0x5c] sm:$0xf]
    %v12661 = vld [vmem:[#allocation11 + $0x60] sm:$0xf]
    %v12662 = vld [vmem:[#allocation11 + $0x64] sm:$0xf]
    %v12663 = vld [vmem:[#allocation11 + $0x68] sm:$0xf]
    %v12664 = vld [vmem:[#allocation11 + $0x6c] sm:$0xf]
    %v12665 = vld [vmem:[#allocation11 + $0x70] sm:$0xf]
    %v12666 = vld [vmem:[#allocation11 + $0x74] sm:$0xf]
    %v12667 = vld [vmem:[#allocation11 + $0x78] sm:$0xf]
    %v12668 = vld [vmem:[#allocation11 + $0x7c] sm:$0xf]
    %v12669 = vld [vmem:[#allocation11 + $0x80] sm:$0xf]
    %v12670 = vld [vmem:[#allocation11 + $0x84] sm:$0xf]
    %v12671 = vld [vmem:[#allocation11 + $0x88] sm:$0xf]
    %v12672 = vld [vmem:[#allocation11 + $0x8c] sm:$0xf]
    %v12673 = vld [vmem:[#allocation11 + $0x90] sm:$0xf]
    %v12674 = vld [vmem:[#allocation11 + $0x94] sm:$0xf]
    %v12675 = vld [vmem:[#allocation11 + $0x98] sm:$0xf]
    %v12676 = vld [vmem:[#allocation11 + $0x9c] sm:$0xf]
    %v12677 = vld [vmem:[#allocation11 + $0xa0] sm:$0xf]
    %v12678 = vld [vmem:[#allocation11 + $0xa4] sm:$0xf]
    %v12679 = vld [vmem:[#allocation11 + $0xa8] sm:$0xf]
    %v12680 = vld [vmem:[#allocation11 + $0xac] sm:$0xf]
    %v12681 = vld [vmem:[#allocation11 + $0xb0] sm:$0xf]
    %v12682 = vld [vmem:[#allocation11 + $0xb4] sm:$0xf]
    %v12683 = vld [vmem:[#allocation11 + $0xb8] sm:$0xf]
    %v12684 = vld [vmem:[#allocation11 + $0xbc] sm:$0xf]
    %v12685 = vld [vmem:[#allocation11 + $0xc0] sm:$0xf]
    %v12686 = vld [vmem:[#allocation11 + $0xc4] sm:$0xf]
    %v12687 = vld [vmem:[#allocation11 + $0xc8] sm:$0xf]
    %v12688 = vld [vmem:[#allocation11 + $0xcc] sm:$0xf]
    %v12689 = vld [vmem:[#allocation11 + $0xd0] sm:$0xf]
    %v12690 = vld [vmem:[#allocation11 + $0xd4] sm:$0xf]
    %v12691 = vld [vmem:[#allocation11 + $0xd8] sm:$0xf]
    %v12692 = vld [vmem:[#allocation11 + $0xdc] sm:$0xf]
    %v12693 = vld [vmem:[#allocation11 + $0xe0] sm:$0xf]
    %v12694 = vld [vmem:[#allocation11 + $0xe4] sm:$0xf]
    %v12695 = vld [vmem:[#allocation11 + $0xe8] sm:$0xf]
    %v12696 = vld [vmem:[#allocation11 + $0xec] sm:$0xf]
    %v12697 = vld [vmem:[#allocation11 + $0xf0] sm:$0xf]
    %v12698 = vld [vmem:[#allocation11 + $0xf4] sm:$0xf]
    %v12699 = vld [vmem:[#allocation11 + $0xf8] sm:$0xf]
    %v12700 = vld [vmem:[#allocation11 + $0xfc] sm:$0xf]
    %v12701 = vld [vmem:[#allocation11 + $0x100] sm:$0xf]
    %v12702 = vld [vmem:[#allocation11 + $0x104] sm:$0xf]
    %v12703 = vld [vmem:[#allocation11 + $0x108] sm:$0xf]
    %v12704 = vld [vmem:[#allocation11 + $0x10c] sm:$0xf]
    %v12705 = vld [vmem:[#allocation11 + $0x110] sm:$0xf]
    %v12706 = vld [vmem:[#allocation11 + $0x114] sm:$0xf]
    %v12707 = vld [vmem:[#allocation11 + $0x118] sm:$0xf]
    %v12708 = vld [vmem:[#allocation11 + $0x11c] sm:$0xf]
    %v12709 = vld [vmem:[#allocation11 + $0x120] sm:$0xf]
    %v12710 = vld [vmem:[#allocation11 + $0x124] sm:$0xf]
    %v12711 = vld [vmem:[#allocation11 + $0x128] sm:$0xf]
    %v12712 = vld [vmem:[#allocation11 + $0x12c] sm:$0xf]
    %v12713 = vld [vmem:[#allocation11 + $0x130] sm:$0xf]
    %v12714 = vld [vmem:[#allocation11 + $0x134] sm:$0xf]
    %v12715 = vld [vmem:[#allocation11 + $0x138] sm:$0xf]
    %v12716 = vld [vmem:[#allocation11 + $0x13c] sm:$0xf]
    %v12717 = vld [vmem:[#allocation11 + $0x140] sm:$0xf]
    %v12718 = vunpack.c.l.bf16 %v12637
    %v12719 = vunpack.c.l.bf16 %v12638
    %v12720 = vunpack.c.l.bf16 %v12639
    %v12721 = vunpack.c.l.bf16 %v12640
    %v12722 = vunpack.c.l.bf16 %v12641
    %v12723 = vunpack.c.l.bf16 %v12642
    %v12724 = vunpack.c.l.bf16 %v12643
    %v12725 = vunpack.c.l.bf16 %v12644
    %v12726 = vunpack.c.l.bf16 %v12645
    %v12727 = vunpack.c.l.bf16 %v12646
    %v12728 = vunpack.c.l.bf16 %v12647
    %v12729 = vunpack.c.l.bf16 %v12648
    %v12730 = vunpack.c.l.bf16 %v12649
    %v12731 = vunpack.c.l.bf16 %v12650
    %v12732 = vunpack.c.l.bf16 %v12651
    %v12733 = vunpack.c.l.bf16 %v12652
    %v12734 = vunpack.c.l.bf16 %v12653
    %v12735 = vunpack.c.l.bf16 %v12654
    %v12736 = vunpack.c.l.bf16 %v12655
    %v12737 = vunpack.c.l.bf16 %v12656
    %v12738 = vunpack.c.l.bf16 %v12657
    %v12739 = vunpack.c.l.bf16 %v12658
    %v12740 = vunpack.c.l.bf16 %v12659
    %v12741 = vunpack.c.l.bf16 %v12660
    %v12742 = vunpack.c.l.bf16 %v12661
    %v12743 = vunpack.c.l.bf16 %v12662
    %v12744 = vunpack.c.l.bf16 %v12663
    %v12745 = vunpack.c.l.bf16 %v12664
    %v12746 = vunpack.c.l.bf16 %v12665
    %v12747 = vunpack.c.l.bf16 %v12666
    %v12748 = vunpack.c.l.bf16 %v12667
    %v12749 = vunpack.c.l.bf16 %v12668
    %v12750 = vunpack.c.l.bf16 %v12669
    %v12751 = vunpack.c.l.bf16 %v12670
    %v12752 = vunpack.c.l.bf16 %v12671
    %v12753 = vunpack.c.l.bf16 %v12672
    %v12754 = vunpack.c.l.bf16 %v12673
    %v12755 = vunpack.c.l.bf16 %v12674
    %v12756 = vunpack.c.l.bf16 %v12675
    %v12757 = vunpack.c.l.bf16 %v12676
    %v12758 = vunpack.c.l.bf16 %v12677
    %v12759 = vunpack.c.l.bf16 %v12678
    %v12760 = vunpack.c.l.bf16 %v12679
    %v12761 = vunpack.c.l.bf16 %v12680
    %v12762 = vunpack.c.l.bf16 %v12681
    %v12763 = vunpack.c.l.bf16 %v12682
    %v12764 = vunpack.c.l.bf16 %v12683
    %v12765 = vunpack.c.l.bf16 %v12684
    %v12766 = vunpack.c.l.bf16 %v12685
    %v12767 = vunpack.c.l.bf16 %v12686
    %v12768 = vunpack.c.l.bf16 %v12687
    %v12769 = vunpack.c.l.bf16 %v12688
    %v12770 = vunpack.c.l.bf16 %v12689
    %v12771 = vunpack.c.l.bf16 %v12690
    %v12772 = vunpack.c.l.bf16 %v12691
    %v12773 = vunpack.c.l.bf16 %v12692
    %v12774 = vunpack.c.l.bf16 %v12693
    %v12775 = vunpack.c.l.bf16 %v12694
    %v12776 = vunpack.c.l.bf16 %v12695
    %v12777 = vunpack.c.l.bf16 %v12696
    %v12778 = vunpack.c.l.bf16 %v12697
    %v12779 = vunpack.c.l.bf16 %v12698
    %v12780 = vunpack.c.l.bf16 %v12699
    %v12781 = vunpack.c.l.bf16 %v12700
    %v12782 = vunpack.c.l.bf16 %v12701
    %v12783 = vunpack.c.l.bf16 %v12702
    %v12784 = vunpack.c.l.bf16 %v12703
    %v12785 = vunpack.c.l.bf16 %v12704
    %v12786 = vunpack.c.l.bf16 %v12705
    %v12787 = vunpack.c.l.bf16 %v12706
    %v12788 = vunpack.c.l.bf16 %v12707
    %v12789 = vunpack.c.l.bf16 %v12708
    %v12790 = vunpack.c.l.bf16 %v12709
    %v12791 = vunpack.c.l.bf16 %v12710
    %v12792 = vunpack.c.l.bf16 %v12711
    %v12793 = vunpack.c.l.bf16 %v12712
    %v12794 = vunpack.c.l.bf16 %v12713
    %v12795 = vunpack.c.l.bf16 %v12714
    %v12796 = vunpack.c.l.bf16 %v12715
    %v12797 = vunpack.c.l.bf16 %v12716
    %v12798 = vunpack.c.l.bf16 %v12717
    %v12799 = vadd.f32 %v12556, %v12718
    %v12800 = vadd.f32 %v12557, %v12719
    %v12801 = vadd.f32 %v12558, %v12720
    %v12802 = vadd.f32 %v12559, %v12721
    %v12803 = vadd.f32 %v12560, %v12722
    %v12804 = vadd.f32 %v12561, %v12723
    %v12805 = vadd.f32 %v12562, %v12724
    %v12806 = vadd.f32 %v12563, %v12725
    %v12807 = vadd.f32 %v12564, %v12726
    %v12808 = vadd.f32 %v12565, %v12727
    %v12809 = vadd.f32 %v12566, %v12728
    %v12810 = vadd.f32 %v12567, %v12729
    %v12811 = vadd.f32 %v12568, %v12730
    %v12812 = vadd.f32 %v12569, %v12731
    %v12813 = vadd.f32 %v12570, %v12732
    %v12814 = vadd.f32 %v12571, %v12733
    %v12815 = vadd.f32 %v12572, %v12734
    %v12816 = vadd.f32 %v12573, %v12735
    %v12817 = vadd.f32 %v12574, %v12736
    %v12818 = vadd.f32 %v12575, %v12737
    %v12819 = vadd.f32 %v12576, %v12738
    %v12820 = vadd.f32 %v12577, %v12739
    %v12821 = vadd.f32 %v12578, %v12740
    %v12822 = vadd.f32 %v12579, %v12741
    %v12823 = vadd.f32 %v12580, %v12742
    %v12824 = vadd.f32 %v12581, %v12743
    %v12825 = vadd.f32 %v12582, %v12744
    %v12826 = vadd.f32 %v12583, %v12745
    %v12827 = vadd.f32 %v12584, %v12746
    %v12828 = vadd.f32 %v12585, %v12747
    %v12829 = vadd.f32 %v12586, %v12748
    %v12830 = vadd.f32 %v12587, %v12749
    %v12831 = vadd.f32 %v12588, %v12750
    %v12832 = vadd.f32 %v12589, %v12751
    %v12833 = vadd.f32 %v12590, %v12752
    %v12834 = vadd.f32 %v12591, %v12753
    %v12835 = vadd.f32 %v12592, %v12754
    %v12836 = vadd.f32 %v12593, %v12755
    %v12837 = vadd.f32 %v12594, %v12756
    %v12838 = vadd.f32 %v12595, %v12757
    %v12839 = vadd.f32 %v12596, %v12758
    %v12840 = vadd.f32 %v12597, %v12759
    %v12841 = vadd.f32 %v12598, %v12760
    %v12842 = vadd.f32 %v12599, %v12761
    %v12843 = vadd.f32 %v12600, %v12762
    %v12844 = vadd.f32 %v12601, %v12763
    %v12845 = vadd.f32 %v12602, %v12764
    %v12846 = vadd.f32 %v12603, %v12765
    %v12847 = vadd.f32 %v12604, %v12766
    %v12848 = vadd.f32 %v12605, %v12767
    %v12849 = vadd.f32 %v12606, %v12768
    %v12850 = vadd.f32 %v12607, %v12769
    %v12851 = vadd.f32 %v12608, %v12770
    %v12852 = vadd.f32 %v12609, %v12771
    %v12853 = vadd.f32 %v12610, %v12772
    %v12854 = vadd.f32 %v12611, %v12773
    %v12855 = vadd.f32 %v12612, %v12774
    %v12856 = vadd.f32 %v12613, %v12775
    %v12857 = vadd.f32 %v12614, %v12776
    %v12858 = vadd.f32 %v12615, %v12777
    %v12859 = vadd.f32 %v12616, %v12778
    %v12860 = vadd.f32 %v12617, %v12779
    %v12861 = vadd.f32 %v12618, %v12780
    %v12862 = vadd.f32 %v12619, %v12781
    %v12863 = vadd.f32 %v12620, %v12782
    %v12864 = vadd.f32 %v12621, %v12783
    %v12865 = vadd.f32 %v12622, %v12784
    %v12866 = vadd.f32 %v12623, %v12785
    %v12867 = vadd.f32 %v12624, %v12786
    %v12868 = vadd.f32 %v12625, %v12787
    %v12869 = vadd.f32 %v12626, %v12788
    %v12870 = vadd.f32 %v12627, %v12789
    %v12871 = vadd.f32 %v12628, %v12790
    %v12872 = vadd.f32 %v12629, %v12791
    %v12873 = vadd.f32 %v12630, %v12792
    %v12874 = vadd.f32 %v12631, %v12793
    %v12875 = vadd.f32 %v12632, %v12794
    %v12876 = vadd.f32 %v12633, %v12795
    %v12877 = vadd.f32 %v12634, %v12796
    %v12878 = vadd.f32 %v12635, %v12797
    %v12879 = vadd.f32 %v12636, %v12798
    %v12880 = vpack.c.bf16 %v12800, %v12799
    %v12881 = vpack.c.bf16 %v12802, %v12801
    %v12882 = vpack.c.bf16 %v12804, %v12803
    %v12883 = vpack.c.bf16 %v12806, %v12805
    %v12884 = vpack.c.bf16 %v12808, %v12807
    %v12885 = vpack.c.bf16 %v12810, %v12809
    %v12886 = vpack.c.bf16 %v12812, %v12811
    %v12887 = vpack.c.bf16 %v12814, %v12813
    %v12888 = vpack.c.bf16 %v12816, %v12815
    %v12889 = vpack.c.bf16 %v12818, %v12817
    %v12890 = vpack.c.bf16 %v12820, %v12819
    %v12891 = vpack.c.bf16 %v12822, %v12821
    %v12892 = vpack.c.bf16 %v12824, %v12823
    %v12893 = vpack.c.bf16 %v12826, %v12825
    %v12894 = vpack.c.bf16 %v12828, %v12827
    %v12895 = vpack.c.bf16 %v12830, %v12829
    %v12896 = vpack.c.bf16 %v12832, %v12831
    %v12897 = vpack.c.bf16 %v12834, %v12833
    %v12898 = vpack.c.bf16 %v12836, %v12835
    %v12899 = vpack.c.bf16 %v12838, %v12837
    %v12900 = vpack.c.bf16 %v12840, %v12839
    %v12901 = vpack.c.bf16 %v12842, %v12841
    %v12902 = vpack.c.bf16 %v12844, %v12843
    %v12903 = vpack.c.bf16 %v12846, %v12845
    %v12904 = vpack.c.bf16 %v12848, %v12847
    %v12905 = vpack.c.bf16 %v12850, %v12849
    %v12906 = vpack.c.bf16 %v12852, %v12851
    %v12907 = vpack.c.bf16 %v12854, %v12853
    %v12908 = vpack.c.bf16 %v12856, %v12855
    %v12909 = vpack.c.bf16 %v12858, %v12857
    %v12910 = vpack.c.bf16 %v12860, %v12859
    %v12911 = vpack.c.bf16 %v12862, %v12861
    %v12912 = vpack.c.bf16 %v12864, %v12863
    %v12913 = vpack.c.bf16 %v12866, %v12865
    %v12914 = vpack.c.bf16 %v12868, %v12867
    %v12915 = vpack.c.bf16 %v12870, %v12869
    %v12916 = vpack.c.bf16 %v12872, %v12871
    %v12917 = vpack.c.bf16 %v12874, %v12873
    %v12918 = vpack.c.bf16 %v12876, %v12875
    %v12919 = vpack.c.bf16 %v12878, %v12877
    %v12920 = vpack.c.bf16 %v12879, %v12879
    %v12962 = vunpack.c.l.b16 %v12880
    %v12963 = vunpack.c.h.b16 %v12880
    %v12964 = vunpack.c.l.b16 %v12881
    %v12965 = vunpack.c.h.b16 %v12881
    %v12966 = vunpack.c.l.b16 %v12882
    %v12967 = vunpack.c.h.b16 %v12882
    %v12968 = vunpack.c.l.b16 %v12883
    %v12969 = vunpack.c.h.b16 %v12883
    %v12970 = vunpack.c.l.b16 %v12884
    %v12971 = vunpack.c.h.b16 %v12884
    %v12972 = vunpack.c.l.b16 %v12885
    %v12973 = vunpack.c.h.b16 %v12885
    %v12974 = vunpack.c.l.b16 %v12886
    %v12975 = vunpack.c.h.b16 %v12886
    %v12976 = vunpack.c.l.b16 %v12887
    %v12977 = vunpack.c.h.b16 %v12887
    %v12978 = vunpack.c.l.b16 %v12888
    %v12979 = vunpack.c.h.b16 %v12888
    %v12980 = vunpack.c.l.b16 %v12889
    %v12981 = vunpack.c.h.b16 %v12889
    %v12982 = vunpack.c.l.b16 %v12890
    %v12983 = vunpack.c.h.b16 %v12890
    %v12984 = vunpack.c.l.b16 %v12891
    %v12985 = vunpack.c.h.b16 %v12891
    %v12986 = vunpack.c.l.b16 %v12892
    %v12987 = vunpack.c.h.b16 %v12892
    %v12988 = vunpack.c.l.b16 %v12893
    %v12989 = vunpack.c.h.b16 %v12893
    %v12990 = vunpack.c.l.b16 %v12894
    %v12991 = vunpack.c.h.b16 %v12894
    %v12992 = vunpack.c.l.b16 %v12895
    %v12993 = vunpack.c.h.b16 %v12895
    %v12994 = vunpack.c.l.b16 %v12896
    %v12995 = vunpack.c.h.b16 %v12896
    %v12996 = vunpack.c.l.b16 %v12897
    %v12997 = vunpack.c.h.b16 %v12897
    %v12998 = vunpack.c.l.b16 %v12898
    %v12999 = vunpack.c.h.b16 %v12898
    %v13000 = vunpack.c.l.b16 %v12899
    %v13001 = vunpack.c.h.b16 %v12899
    %v13002 = vunpack.c.l.b16 %v12900
    %v13003 = vunpack.c.h.b16 %v12900
    %v13004 = vunpack.c.l.b16 %v12901
    %v13005 = vunpack.c.h.b16 %v12901
    %v13006 = vunpack.c.l.b16 %v12902
    %v13007 = vunpack.c.h.b16 %v12902
    %v13008 = vunpack.c.l.b16 %v12903
    %v13009 = vunpack.c.h.b16 %v12903
    %v13010 = vunpack.c.l.b16 %v12904
    %v13011 = vunpack.c.h.b16 %v12904
    %v13012 = vunpack.c.l.b16 %v12905
    %v13013 = vunpack.c.h.b16 %v12905
    %v13014 = vunpack.c.l.b16 %v12906
    %v13015 = vunpack.c.h.b16 %v12906
    %v13016 = vunpack.c.l.b16 %v12907
    %v13017 = vunpack.c.h.b16 %v12907
    %v13018 = vunpack.c.l.b16 %v12908
    %v13019 = vunpack.c.h.b16 %v12908
    %v13020 = vunpack.c.l.b16 %v12909
    %v13021 = vunpack.c.h.b16 %v12909
    %v13022 = vunpack.c.l.b16 %v12910
    %v13023 = vunpack.c.h.b16 %v12910
    %v13024 = vunpack.c.l.b16 %v12911
    %v13025 = vunpack.c.h.b16 %v12911
    %v13026 = vunpack.c.l.b16 %v12912
    %v13027 = vunpack.c.h.b16 %v12912
    %v13028 = vunpack.c.l.b16 %v12913
    %v13029 = vunpack.c.h.b16 %v12913
    %v13030 = vunpack.c.l.b16 %v12914
    %v13031 = vunpack.c.h.b16 %v12914
    %v13032 = vunpack.c.l.b16 %v12915
    %v13033 = vunpack.c.h.b16 %v12915
    %v13034 = vunpack.c.l.b16 %v12916
    %v13035 = vunpack.c.h.b16 %v12916
    %v13036 = vunpack.c.l.b16 %v12917
    %v13037 = vunpack.c.h.b16 %v12917
    %v13038 = vunpack.c.l.b16 %v12918
    %v13039 = vunpack.c.h.b16 %v12918
    %v13040 = vunpack.c.l.b16 %v12919
    %v13041 = vunpack.c.h.b16 %v12919
    %v13042 = vunpack.c.l.b16 %v12920
    %v13043 = vpack.c.b16 %v12962, %v12962
    %v13044 = vpack.c.b16 %v12963, %v12963
    %v13045 = vpack.c.b16 %v12964, %v12964
    %v13046 = vpack.c.b16 %v12965, %v12965
    %v13047 = vpack.c.b16 %v12966, %v12966
    %v13048 = vpack.c.b16 %v12967, %v12967
    %v13049 = vpack.c.b16 %v12968, %v12968
    %v13050 = vpack.c.b16 %v12969, %v12969
    %v13051 = vpack.c.b16 %v12970, %v12970
    %v13052 = vpack.c.b16 %v12971, %v12971
    %v13053 = vpack.c.b16 %v12972, %v12972
    %v13054 = vpack.c.b16 %v12973, %v12973
    %v13055 = vpack.c.b16 %v12974, %v12974
    %v13056 = vpack.c.b16 %v12975, %v12975
    %v13057 = vpack.c.b16 %v12976, %v12976
    %v13058 = vpack.c.b16 %v12977, %v12977
    %v13059 = vpack.c.b16 %v12978, %v12978
    %v13060 = vpack.c.b16 %v12979, %v12979
    %v13061 = vpack.c.b16 %v12980, %v12980
    %v13062 = vpack.c.b16 %v12981, %v12981
    %v13063 = vpack.c.b16 %v12982, %v12982
    %v13064 = vpack.c.b16 %v12983, %v12983
    %v13065 = vpack.c.b16 %v12984, %v12984
    %v13066 = vpack.c.b16 %v12985, %v12985
    %v13067 = vpack.c.b16 %v12986, %v12986
    %v13068 = vpack.c.b16 %v12987, %v12987
    %v13069 = vpack.c.b16 %v12988, %v12988
    %v13070 = vpack.c.b16 %v12989, %v12989
    %v13071 = vpack.c.b16 %v12990, %v12990
    %v13072 = vpack.c.b16 %v12991, %v12991
    %v13073 = vpack.c.b16 %v12992, %v12992
    %v13074 = vpack.c.b16 %v12993, %v12993
    %v13075 = vpack.c.b16 %v12994, %v12994
    %v13076 = vpack.c.b16 %v12995, %v12995
    %v13077 = vpack.c.b16 %v12996, %v12996
    %v13078 = vpack.c.b16 %v12997, %v12997
    %v13079 = vpack.c.b16 %v12998, %v12998
    %v13080 = vpack.c.b16 %v12999, %v12999
    %v13081 = vpack.c.b16 %v13000, %v13000
    %v13082 = vpack.c.b16 %v13001, %v13001
    %v13083 = vpack.c.b16 %v13002, %v13002
    %v13084 = vpack.c.b16 %v13003, %v13003
    %v13085 = vpack.c.b16 %v13004, %v13004
    %v13086 = vpack.c.b16 %v13005, %v13005
    %v13087 = vpack.c.b16 %v13006, %v13006
    %v13088 = vpack.c.b16 %v13007, %v13007
    %v13089 = vpack.c.b16 %v13008, %v13008
    %v13090 = vpack.c.b16 %v13009, %v13009
    %v13091 = vpack.c.b16 %v13010, %v13010
    %v13092 = vpack.c.b16 %v13011, %v13011
    %v13093 = vpack.c.b16 %v13012, %v13012
    %v13094 = vpack.c.b16 %v13013, %v13013
    %v13095 = vpack.c.b16 %v13014, %v13014
    %v13096 = vpack.c.b16 %v13015, %v13015
    %v13097 = vpack.c.b16 %v13016, %v13016
    %v13098 = vpack.c.b16 %v13017, %v13017
    %v13099 = vpack.c.b16 %v13018, %v13018
    %v13100 = vpack.c.b16 %v13019, %v13019
    %v13101 = vpack.c.b16 %v13020, %v13020
    %v13102 = vpack.c.b16 %v13021, %v13021
    %v13103 = vpack.c.b16 %v13022, %v13022
    %v13104 = vpack.c.b16 %v13023, %v13023
    %v13105 = vpack.c.b16 %v13024, %v13024
    %v13106 = vpack.c.b16 %v13025, %v13025
    %v13107 = vpack.c.b16 %v13026, %v13026
    %v13108 = vpack.c.b16 %v13027, %v13027
    %v13109 = vpack.c.b16 %v13028, %v13028
    %v13110 = vpack.c.b16 %v13029, %v13029
    %v13111 = vpack.c.b16 %v13030, %v13030
    %v13112 = vpack.c.b16 %v13031, %v13031
    %v13113 = vpack.c.b16 %v13032, %v13032
    %v13114 = vpack.c.b16 %v13033, %v13033
    %v13115 = vpack.c.b16 %v13034, %v13034
    %v13116 = vpack.c.b16 %v13035, %v13035
    %v13117 = vpack.c.b16 %v13036, %v13036
    %v13118 = vpack.c.b16 %v13037, %v13037
    %v13119 = vpack.c.b16 %v13038, %v13038
    %v13120 = vpack.c.b16 %v13039, %v13039
    %v13121 = vpack.c.b16 %v13040, %v13040
    %v13122 = vpack.c.b16 %v13041, %v13041
    %v13123 = vpack.c.b16 %v13042, %v13042
    %13205 = vst [vmem:[#allocation11] sm:$0xf] %v13043
    %13206 = vst [vmem:[#allocation11 + $0x4] sm:$0xf] %v13044
    %13207 = vst [vmem:[#allocation11 + $0x8] sm:$0xf] %v13045
    %13208 = vst [vmem:[#allocation11 + $0xc] sm:$0xf] %v13046
    %13209 = vst [vmem:[#allocation11 + $0x10] sm:$0xf] %v13047
    %13210 = vst [vmem:[#allocation11 + $0x14] sm:$0xf] %v13048
    %13211 = vst [vmem:[#allocation11 + $0x18] sm:$0xf] %v13049
    %13212 = vst [vmem:[#allocation11 + $0x1c] sm:$0xf] %v13050
    %13213 = vst [vmem:[#allocation11 + $0x20] sm:$0xf] %v13051
    %13214 = vst [vmem:[#allocation11 + $0x24] sm:$0xf] %v13052
    %13215 = vst [vmem:[#allocation11 + $0x28] sm:$0xf] %v13053
    %13216 = vst [vmem:[#allocation11 + $0x2c] sm:$0xf] %v13054
    %13217 = vst [vmem:[#allocation11 + $0x30] sm:$0xf] %v13055
    %13218 = vst [vmem:[#allocation11 + $0x34] sm:$0xf] %v13056
    %13219 = vst [vmem:[#allocation11 + $0x38] sm:$0xf] %v13057
    %13220 = vst [vmem:[#allocation11 + $0x3c] sm:$0xf] %v13058
    %13221 = vst [vmem:[#allocation11 + $0x40] sm:$0xf] %v13059
    %13222 = vst [vmem:[#allocation11 + $0x44] sm:$0xf] %v13060
    %13223 = vst [vmem:[#allocation11 + $0x48] sm:$0xf] %v13061
    %13224 = vst [vmem:[#allocation11 + $0x4c] sm:$0xf] %v13062
    %13225 = vst [vmem:[#allocation11 + $0x50] sm:$0xf] %v13063
    %13226 = vst [vmem:[#allocation11 + $0x54] sm:$0xf] %v13064
    %13227 = vst [vmem:[#allocation11 + $0x58] sm:$0xf] %v13065
    %13228 = vst [vmem:[#allocation11 + $0x5c] sm:$0xf] %v13066
    %13229 = vst [vmem:[#allocation11 + $0x60] sm:$0xf] %v13067
    %13230 = vst [vmem:[#allocation11 + $0x64] sm:$0xf] %v13068
    %13231 = vst [vmem:[#allocation11 + $0x68] sm:$0xf] %v13069
    %13232 = vst [vmem:[#allocation11 + $0x6c] sm:$0xf] %v13070
    %13233 = vst [vmem:[#allocation11 + $0x70] sm:$0xf] %v13071
    %13234 = vst [vmem:[#allocation11 + $0x74] sm:$0xf] %v13072
    %13235 = vst [vmem:[#allocation11 + $0x78] sm:$0xf] %v13073
    %13236 = vst [vmem:[#allocation11 + $0x7c] sm:$0xf] %v13074
    %13237 = vst [vmem:[#allocation11 + $0x80] sm:$0xf] %v13075
    %13238 = vst [vmem:[#allocation11 + $0x84] sm:$0xf] %v13076
    %13239 = vst [vmem:[#allocation11 + $0x88] sm:$0xf] %v13077
    %13240 = vst [vmem:[#allocation11 + $0x8c] sm:$0xf] %v13078
    %13241 = vst [vmem:[#allocation11 + $0x90] sm:$0xf] %v13079
    %13242 = vst [vmem:[#allocation11 + $0x94] sm:$0xf] %v13080
    %13243 = vst [vmem:[#allocation11 + $0x98] sm:$0xf] %v13081
    %13244 = vst [vmem:[#allocation11 + $0x9c] sm:$0xf] %v13082
    %13245 = vst [vmem:[#allocation11 + $0xa0] sm:$0xf] %v13083
    %13246 = vst [vmem:[#allocation11 + $0xa4] sm:$0xf] %v13084
    %13247 = vst [vmem:[#allocation11 + $0xa8] sm:$0xf] %v13085
    %13248 = vst [vmem:[#allocation11 + $0xac] sm:$0xf] %v13086
    %13249 = vst [vmem:[#allocation11 + $0xb0] sm:$0xf] %v13087
    %13250 = vst [vmem:[#allocation11 + $0xb4] sm:$0xf] %v13088
    %13251 = vst [vmem:[#allocation11 + $0xb8] sm:$0xf] %v13089
    %13252 = vst [vmem:[#allocation11 + $0xbc] sm:$0xf] %v13090
    %13253 = vst [vmem:[#allocation11 + $0xc0] sm:$0xf] %v13091
    %13254 = vst [vmem:[#allocation11 + $0xc4] sm:$0xf] %v13092
    %13255 = vst [vmem:[#allocation11 + $0xc8] sm:$0xf] %v13093
    %13256 = vst [vmem:[#allocation11 + $0xcc] sm:$0xf] %v13094
    %13257 = vst [vmem:[#allocation11 + $0xd0] sm:$0xf] %v13095
    %13258 = vst [vmem:[#allocation11 + $0xd4] sm:$0xf] %v13096
    %13259 = vst [vmem:[#allocation11 + $0xd8] sm:$0xf] %v13097
    %13260 = vst [vmem:[#allocation11 + $0xdc] sm:$0xf] %v13098
    %13261 = vst [vmem:[#allocation11 + $0xe0] sm:$0xf] %v13099
    %13262 = vst [vmem:[#allocation11 + $0xe4] sm:$0xf] %v13100
    %13263 = vst [vmem:[#allocation11 + $0xe8] sm:$0xf] %v13101
    %13264 = vst [vmem:[#allocation11 + $0xec] sm:$0xf] %v13102
    %13265 = vst [vmem:[#allocation11 + $0xf0] sm:$0xf] %v13103
    %13266 = vst [vmem:[#allocation11 + $0xf4] sm:$0xf] %v13104
    %13267 = vst [vmem:[#allocation11 + $0xf8] sm:$0xf] %v13105
    %13268 = vst [vmem:[#allocation11 + $0xfc] sm:$0xf] %v13106
    %13269 = vst [vmem:[#allocation11 + $0x100] sm:$0xf] %v13107
    %13270 = vst [vmem:[#allocation11 + $0x104] sm:$0xf] %v13108
    %13271 = vst [vmem:[#allocation11 + $0x108] sm:$0xf] %v13109
    %13272 = vst [vmem:[#allocation11 + $0x10c] sm:$0xf] %v13110
    %13273 = vst [vmem:[#allocation11 + $0x110] sm:$0xf] %v13111
    %13274 = vst [vmem:[#allocation11 + $0x114] sm:$0xf] %v13112
    %13275 = vst [vmem:[#allocation11 + $0x118] sm:$0xf] %v13113
    %13276 = vst [vmem:[#allocation11 + $0x11c] sm:$0xf] %v13114
    %13277 = vst [vmem:[#allocation11 + $0x120] sm:$0xf] %v13115
    %13278 = vst [vmem:[#allocation11 + $0x124] sm:$0xf] %v13116
    %13279 = vst [vmem:[#allocation11 + $0x128] sm:$0xf] %v13117
    %13280 = vst [vmem:[#allocation11 + $0x12c] sm:$0xf] %v13118
    %13281 = vst [vmem:[#allocation11 + $0x130] sm:$0xf] %v13119
    %13282 = vst [vmem:[#allocation11 + $0x134] sm:$0xf] %v13120
    %13283 = vst [vmem:[#allocation11 + $0x138] sm:$0xf] %v13121
    %13284 = vst [vmem:[#allocation11 + $0x13c] sm:$0xf] %v13122
    %13285 = vst [vmem:[#allocation11 + $0x140] sm:$0xf] %v13123
    // Predicated region
    $region46: #{tpu_custom_call.1} parent=1 // pred_check
      _
    $region47: #{tpu_custom_call.1} parent=1 // pred_check_branch
      %13287 = sbr.rel (0) target = $region49
    $region48: #{tpu_custom_call.1} parent=1 // pred_region
      %s13289 = ssub.s32 5184, 5184
      %13290 = vsyncadd [#allocation5], %s13289
      %s13291 = sshll.u32 [#allocation11], 4
      %s13292 = int_to_ptr.vmem [resolvable:$true] %s13291
      %13297 = dma.vmem_to_hbm [thread:$0]  %s13292, 5184, %s7, [#allocation5], 64, 64, 4
    $region49: #{tpu_custom_call.1} parent=1 // pred_fallthru
      _
    // Predicated region
    $region50: #{tpu_custom_call.1} parent=1 // pred_check
      _
    $region51: #{tpu_custom_call.1} parent=1 // pred_check_branch
      %13299 = sbr.rel (0) target = $region53
    $region52: #{tpu_custom_call.1} parent=1 // pred_region
      %13300 = dma.done [#allocation5], 5184
    $region53: #{tpu_custom_call.1} parent=1 // pred_fallthru
      _
    %13301 = vsyncpa [#allocation4], 1
    %13302 = vsyncpa [#allocation7], 1
    %13303 = vsyncpa [#allocation10], 1
    %13304 = vsyncpa [#allocation5], 1

</llo_original>
